<compile_context>
chip_gen: v7x
topology: tpu7x:2x2x1
jax: 0.10.0
libtpu: 0.0.40
codegen_flags: <defaults>
</compile_context>

<pallas_src>
import functools

import jax
import jax.numpy as jnp
from jax.experimental import pallas as pl
from jax.experimental.pallas import tpu as pltpu


def _round_up(x, m):
    return (x + m - 1) // m * m


# ----------------------------------------------------------------------------
# Pallas kernel: one MXU matmul per pixel tile with fused epilogue.
#   w_ref: (Cout, 27*Cin)  bf16, VMEM-resident
#   b_ref: (Cout, 1)       f32,  VMEM-resident
#   x_ref: (27*Cin, tp)    bf16
#   r_ref: (Cout, tp)      bf16 (optional residual)
#   o_ref: (Cout, tp)      bf16 (lane-dense store)
# ----------------------------------------------------------------------------
def _make_conv_kernel(relu: bool, res_scale: float, has_res: bool):
    def kernel(*refs):
        if has_res:
            w_ref, b_ref, x_ref, r_ref, o_ref = refs
        else:
            w_ref, b_ref, x_ref, o_ref = refs
            r_ref = None

        acc = jnp.dot(w_ref[...], x_ref[...],
                      preferred_element_type=jnp.float32)     # (Cout, tp) f32
        out = acc + b_ref[...]                                 # lane-broadcast
        if relu:
            out = jnp.maximum(out, 0.0)
        if res_scale != 1.0:
            out = out * jnp.float32(res_scale)
        if has_res:
            out = out + r_ref[...].astype(jnp.float32)
        o_ref[...] = out.astype(o_ref.dtype)

    return kernel


# ----------------------------------------------------------------------------
# 3x3x3 'same' conv3d with bias, channels-first layout.
#   x: (Cin, N, H, W, D) bf16      w: (3,3,3,Cin,Cout) f32     b: (Cout,) f32
#   residual: optional (Cout, N, H, W, D)
#   returns (Cout, N, H, W, D) bf16
# ----------------------------------------------------------------------------
def conv3d_pallas(x, w, b, *, relu=False, residual=None, res_scale=1.0,
                  tile_p=512):
    Cin, N, H, W, D = x.shape
    KH, KW, KD, _, Cout = w.shape
    P = N * H * W * D
    Kdim = KH * KW * KD * Cin

    # --- folded im2col: (27*Cin, P), tap-major / channel-minor rows ---------
    # TODO(synk): replace this XLA-side materialization with in-kernel halo
    # DMA (implicit im2col) to cut input HBM traffic by ~27x per layer.
    xp = jnp.pad(x, ((0, 0), (0, 0), (1, 1), (1, 1), (1, 1)))
    taps = [
        xp[:, :, kh:kh + H, kw:kw + W, kd:kd + D].reshape(Cin, P)
        for kh in range(KH) for kw in range(KW) for kd in range(KD)
    ]
    xcol = jnp.concatenate(taps, axis=0).astype(jnp.bfloat16)   # (Kdim, P)

    # Weights as (Cout, 27*Cin), layout matching the tap-major xcol rows.
    wcol = jnp.transpose(w, (4, 0, 1, 2, 3)).reshape(Cout, Kdim)
    wcol = wcol.astype(jnp.bfloat16)
    b2 = b.reshape(Cout, 1).astype(jnp.float32)

    # Pixel tiling: lane-dense tiles, tp a multiple of 128, remainder padded.
    tp = max(128, min(int(tile_p), _round_up(P, 128)))
    Ppad = _round_up(P, tp)
    if Ppad != P:
        xcol = jnp.pad(xcol, ((0, 0), (0, Ppad - P)))
    grid = (Ppad // tp,)

    in_specs = [
        pl.BlockSpec((Cout, Kdim), lambda i: (0, 0)),   # weights: VMEM-resident
        pl.BlockSpec((Cout, 1), lambda i: (0, 0)),      # bias:    VMEM-resident
        pl.BlockSpec((Kdim, tp), lambda i: (0, i)),     # activations tile
    ]
    inputs = [wcol, b2, xcol]

    has_res = residual is not None
    if has_res:
        r = residual.reshape(Cout, P).astype(jnp.bfloat16)
        if Ppad != P:
            r = jnp.pad(r, ((0, 0), (0, Ppad - P)))
        in_specs.append(pl.BlockSpec((Cout, tp), lambda i: (0, i)))
        inputs.append(r)

    out = pl.pallas_call(
        _make_conv_kernel(relu, float(res_scale), has_res),
        out_shape=jax.ShapeDtypeStruct((Cout, Ppad), jnp.bfloat16),
        grid_spec=pltpu.PrefetchScalarGridSpec(
            num_scalar_prefetch=0,
            grid=grid,
            in_specs=in_specs,
            out_specs=pl.BlockSpec((Cout, tp), lambda i: (0, i)),
        ),
        compiler_params=pltpu.CompilerParams(
            dimension_semantics=("parallel",)),
    )(*inputs)

    return out[:, :P].reshape(Cout, N, H, W, D)


# ----------------------------------------------------------------------------
# Deterministic parameter init (weights stored as (3,3,3,Cin,Cout)).
# ----------------------------------------------------------------------------
def _conv_params(key, cin, cout):
    k1, k2 = jax.random.split(key)
    w = jax.random.normal(k1, (3, 3, 3, cin, cout), jnp.float32) * 0.05
    b = jax.random.normal(k2, (cout,), jnp.float32) * 0.05
    return w, b


def init_params(key, in_channels, out_channels, hidden, scale, n_res_blocks):
    params = {}
    keys = jax.random.split(key, 3 + 2 * n_res_blocks + 2)
    ki = iter(keys)
    params["head"] = _conv_params(next(ki), in_channels, hidden)
    for i in range(n_res_blocks):
        params[f"rb{i}_c1"] = _conv_params(next(ki), hidden, hidden)
        params[f"rb{i}_c2"] = _conv_params(next(ki), hidden, hidden)
    params["body_tail"] = _conv_params(next(ki), hidden, hidden)
    params["tail_1"] = _conv_params(next(ki), hidden, hidden * scale)
    params["tail_2"] = _conv_params(next(ki), hidden, out_channels)
    return params


# ----------------------------------------------------------------------------
# Forward pass (mirrors EnhancedDeepResidualNetworkT.forward exactly).
# ----------------------------------------------------------------------------
def forward(x, params, *, hidden, out_channels, scale, n_res_blocks,
            res_scale=1.0, tile_p=512):
    # x: (B, c, h, w, d, t)  -- PyTorch layout of the module input.
    B, c, h, w, d, t = x.shape

    # permute(0,5,1,2,3,4).reshape(-1,c,h,w,d) -> channels-first (c, B*t, ...)
    xin = jnp.transpose(x, (1, 0, 5, 2, 3, 4)).reshape(c, B * t, h, w, d)
    xin = xin.astype(jnp.bfloat16)

    conv = functools.partial(conv3d_pallas, tile_p=tile_p)

    # head
    hfeat = conv(xin, *params["head"])

    # body: n_res_blocks * (conv -> relu -> conv, *res_scale, +skip), then conv
    # TODO(synk): fuse the whole body into one pallas_call with weights resident
    # in VMEM to avoid the per-layer HBM activation round trips.
    res = hfeat
    for i in range(n_res_blocks):
        mid = conv(res, *params[f"rb{i}_c1"], relu=True)
        res = conv(mid, *params[f"rb{i}_c2"], residual=res,
                   res_scale=res_scale)
    res = conv(res, *params["body_tail"], residual=hfeat)   # res += x

    # tail_1: (hidden*scale, B*t, h, w, d)
    y = conv(res, *params["tail_1"])
    # reshape(-1,t,c,scale,h,w,d).permute(0,1,3,2,4,5,6).reshape(-1,c,h,w,d)
    y = y.reshape(hidden, scale, B, t, h, w, d)
    y = jnp.transpose(y, (0, 2, 3, 1, 4, 5, 6)).reshape(
        hidden, B * t * scale, h, w, d)

    # tail_2: (out_channels, B*t*scale, h, w, d)
    z = conv(y, *params["tail_2"])
    # reshape(-1, t*scale, c, h, w, d).permute(0,2,3,4,5,1)
    z = z.reshape(out_channels, B, t * scale, h, w, d)
    z = jnp.transpose(z, (1, 0, 3, 4, 5, 2))   # (B, out_c, h, w, d, t*scale)
    return z.astype(jnp.float32)


# ----------------------------------------------------------------------------
if __name__ == "__main__":
    B, c, h, w, d, t = 2, 4, 8, 8, 8, 2
    hidden, out_channels, scale, n_res_blocks, res_scale = 32, 4, 2, 2, 1.0

    key = jax.random.PRNGKey(0)
    kx, kp = jax.random.split(key)
    x = jax.random.normal(kx, (B, c, h, w, d, t), jnp.float32)
    params = init_params(kp, c, out_channels, hidden, scale, n_res_blocks)

    fwd = functools.partial(forward, hidden=hidden, out_channels=out_channels,
                            scale=scale, n_res_blocks=n_res_blocks,
                            res_scale=res_scale)
    out = jax.block_until_ready(jax.jit(fwd)(x, params))

    assert out.shape == (B, out_channels, h, w, d, t * scale), out.shape
    assert bool(jnp.all(jnp.isfinite(out)))
    print("KERNEL_OK")
</pallas_src>

<mosaic_0001>
module attributes {stable_mosaic.version = 11 : i64} {
  func.func @kernel(%arg0: i32, %arg1: memref<32x108xbf16, #tpu.memory_space<vmem>>, %arg2: memref<32x1xf32, #tpu.memory_space<vmem>>, %arg3: memref<108x512xbf16, #tpu.memory_space<vmem>>, %arg4: memref<32x512xbf16, #tpu.memory_space<vmem>>) attributes {dimension_semantics = [#tpu.dimension_semantics<parallel>], iteration_bounds = array<i64: 4>, scalar_prefetch = 0 : i64, scratch_operands = 0 : i64, tpu.core_type = #tpu.core_type<tc>, window_params = [{pipeline_mode = #tpu.pipeline_mode<synchronous>, transform_indices = @transform_0, window_bounds = array<i64: 32, 108>}, {pipeline_mode = #tpu.pipeline_mode<synchronous>, transform_indices = @transform_1, window_bounds = array<i64: 32, 1>}, {transform_indices = @transform_2, window_bounds = array<i64: 108, 512>}, {transform_indices = @transform_3, window_bounds = array<i64: 32, 512>}]} {
    %c0 = arith.constant 0 : index
    %c0_0 = arith.constant 0 : index
    %0 = vector.load %arg1[%c0, %c0_0] : memref<32x108xbf16, #tpu.memory_space<vmem>>, vector<32x108xbf16>
    %c0_1 = arith.constant 0 : index
    %c0_2 = arith.constant 0 : index
    %1 = vector.load %arg3[%c0_1, %c0_2] : memref<108x512xbf16, #tpu.memory_space<vmem>>, vector<108x512xbf16>
    %cst = arith.constant dense<0.000000e+00> : vector<32x512xf32>
    %2 = tpu.matmul %0, %1, %cst {dimension_numbers = #tpu.dot_dimension_numbers<[1], [0], [0], [1], [0, 0, 1, 1], [], []>} : vector<32x108xbf16>, vector<108x512xbf16>, vector<32x512xf32> -> vector<32x512xf32>
    %c0_3 = arith.constant 0 : index
    %c0_4 = arith.constant 0 : index
    %3 = vector.load %arg2[%c0_3, %c0_4] : memref<32x1xf32, #tpu.memory_space<vmem>>, vector<32x1xf32>
    %4 = vector.broadcast %3 : vector<32x1xf32> to vector<32x512xf32>
    %5 = arith.addf %2, %4 : vector<32x512xf32>
    %6 = arith.truncf %5 : vector<32x512xf32> to vector<32x512xbf16>
    %c0_5 = arith.constant 0 : index
    %c0_6 = arith.constant 0 : index
    %7 = vector.load %arg4[%c0_5, %c0_6] : memref<32x512xbf16, #tpu.memory_space<vmem>>, vector<32x512xbf16>
    tpu.vector_store %arg4[%c0_5, %c0_6], %6 {strides = array<i32>} : memref<32x512xbf16, #tpu.memory_space<vmem>>, vector<32x512xbf16>,
    return
  }
  func.func @transform_0(%arg0: i32) -> (i32, i32) {
    %c0_i32 = arith.constant 0 : i32
    %c0_i32_0 = arith.constant 0 : i32
    %c0_i32_1 = arith.constant 0 : i32
    return %c0_i32, %c0_i32_0 : i32, i32
  }
  func.func @transform_1(%arg0: i32) -> (i32, i32) {
    %c0_i32 = arith.constant 0 : i32
    %c0_i32_0 = arith.constant 0 : i32
    %c0_i32_1 = arith.constant 0 : i32
    return %c0_i32, %c0_i32_0 : i32, i32
  }
  func.func @transform_2(%arg0: i32) -> (i32, i32) {
    %c0_i32 = arith.constant 0 : i32
    %c0_i32_0 = arith.constant 0 : i32
    return %c0_i32, %arg0 : i32, i32
  }
  func.func @transform_3(%arg0: i32) -> (i32, i32) {
    %c0_i32 = arith.constant 0 : i32
    %c0_i32_0 = arith.constant 0 : i32
    return %c0_i32, %arg0 : i32, i32
  }
}

module attributes {stable_mosaic.version = 11 : i64} {
  func.func @kernel(%arg0: i32, %arg1: memref<32x864xbf16, #tpu.memory_space<vmem>>, %arg2: memref<32x1xf32, #tpu.memory_space<vmem>>, %arg3: memref<864x512xbf16, #tpu.memory_space<vmem>>, %arg4: memref<32x512xbf16, #tpu.memory_space<vmem>>) attributes {dimension_semantics = [#tpu.dimension_semantics<parallel>], iteration_bounds = array<i64: 4>, scalar_prefetch = 0 : i64, scratch_operands = 0 : i64, tpu.core_type = #tpu.core_type<tc>, window_params = [{pipeline_mode = #tpu.pipeline_mode<synchronous>, transform_indices = @transform_0, window_bounds = array<i64: 32, 864>}, {pipeline_mode = #tpu.pipeline_mode<synchronous>, transform_indices = @transform_1, window_bounds = array<i64: 32, 1>}, {transform_indices = @transform_2, window_bounds = array<i64: 864, 512>}, {transform_indices = @transform_3, window_bounds = array<i64: 32, 512>}]} {
    %c0 = arith.constant 0 : index
    %c0_0 = arith.constant 0 : index
    %0 = vector.load %arg1[%c0, %c0_0] : memref<32x864xbf16, #tpu.memory_space<vmem>>, vector<32x864xbf16>
    %c0_1 = arith.constant 0 : index
    %c0_2 = arith.constant 0 : index
    %1 = vector.load %arg3[%c0_1, %c0_2] : memref<864x512xbf16, #tpu.memory_space<vmem>>, vector<864x512xbf16>
    %cst = arith.constant dense<0.000000e+00> : vector<32x512xf32>
    %2 = tpu.matmul %0, %1, %cst {dimension_numbers = #tpu.dot_dimension_numbers<[1], [0], [0], [1], [0, 0, 1, 1], [], []>} : vector<32x864xbf16>, vector<864x512xbf16>, vector<32x512xf32> -> vector<32x512xf32>
    %c0_3 = arith.constant 0 : index
    %c0_4 = arith.constant 0 : index
    %3 = vector.load %arg2[%c0_3, %c0_4] : memref<32x1xf32, #tpu.memory_space<vmem>>, vector<32x1xf32>
    %4 = vector.broadcast %3 : vector<32x1xf32> to vector<32x512xf32>
    %5 = arith.addf %2, %4 : vector<32x512xf32>
    %cst_5 = arith.constant 0.000000e+00 : f32
    %6 = vector.broadcast %cst_5 : f32 to vector<32x512xf32>
    %7 = arith.maximumf %5, %6 : vector<32x512xf32>
    %8 = arith.truncf %7 : vector<32x512xf32> to vector<32x512xbf16>
    %c0_6 = arith.constant 0 : index
    %c0_7 = arith.constant 0 : index
    %9 = vector.load %arg4[%c0_6, %c0_7] : memref<32x512xbf16, #tpu.memory_space<vmem>>, vector<32x512xbf16>
    tpu.vector_store %arg4[%c0_6, %c0_7], %8 {strides = array<i32>} : memref<32x512xbf16, #tpu.memory_space<vmem>>, vector<32x512xbf16>,
    return
  }
  func.func @transform_0(%arg0: i32) -> (i32, i32) {
    %c0_i32 = arith.constant 0 : i32
    %c0_i32_0 = arith.constant 0 : i32
    %c0_i32_1 = arith.constant 0 : i32
    return %c0_i32, %c0_i32_0 : i32, i32
  }
  func.func @transform_1(%arg0: i32) -> (i32, i32) {
    %c0_i32 = arith.constant 0 : i32
    %c0_i32_0 = arith.constant 0 : i32
    %c0_i32_1 = arith.constant 0 : i32
    return %c0_i32, %c0_i32_0 : i32, i32
  }
  func.func @transform_2(%arg0: i32) -> (i32, i32) {
    %c0_i32 = arith.constant 0 : i32
    %c0_i32_0 = arith.constant 0 : i32
    return %c0_i32, %arg0 : i32, i32
  }
  func.func @transform_3(%arg0: i32) -> (i32, i32) {
    %c0_i32 = arith.constant 0 : i32
    %c0_i32_0 = arith.constant 0 : i32
    return %c0_i32, %arg0 : i32, i32
  }
}

module attributes {stable_mosaic.version = 11 : i64} {
  func.func @kernel(%arg0: i32, %arg1: memref<32x864xbf16, #tpu.memory_space<vmem>>, %arg2: memref<32x1xf32, #tpu.memory_space<vmem>>, %arg3: memref<864x512xbf16, #tpu.memory_space<vmem>>, %arg4: memref<32x512xbf16, #tpu.memory_space<vmem>>, %arg5: memref<32x512xbf16, #tpu.memory_space<vmem>>) attributes {dimension_semantics = [#tpu.dimension_semantics<parallel>], iteration_bounds = array<i64: 4>, scalar_prefetch = 0 : i64, scratch_operands = 0 : i64, tpu.core_type = #tpu.core_type<tc>, window_params = [{pipeline_mode = #tpu.pipeline_mode<synchronous>, transform_indices = @transform_0, window_bounds = array<i64: 32, 864>}, {pipeline_mode = #tpu.pipeline_mode<synchronous>, transform_indices = @transform_1, window_bounds = array<i64: 32, 1>}, {transform_indices = @transform_2, window_bounds = array<i64: 864, 512>}, {transform_indices = @transform_3, window_bounds = array<i64: 32, 512>}, {transform_indices = @transform_4, window_bounds = array<i64: 32, 512>}]} {
    %c0 = arith.constant 0 : index
    %c0_0 = arith.constant 0 : index
    %0 = vector.load %arg1[%c0, %c0_0] : memref<32x864xbf16, #tpu.memory_space<vmem>>, vector<32x864xbf16>
    %c0_1 = arith.constant 0 : index
    %c0_2 = arith.constant 0 : index
    %1 = vector.load %arg3[%c0_1, %c0_2] : memref<864x512xbf16, #tpu.memory_space<vmem>>, vector<864x512xbf16>
    %cst = arith.constant dense<0.000000e+00> : vector<32x512xf32>
    %2 = tpu.matmul %0, %1, %cst {dimension_numbers = #tpu.dot_dimension_numbers<[1], [0], [0], [1], [0, 0, 1, 1], [], []>} : vector<32x864xbf16>, vector<864x512xbf16>, vector<32x512xf32> -> vector<32x512xf32>
    %c0_3 = arith.constant 0 : index
    %c0_4 = arith.constant 0 : index
    %3 = vector.load %arg2[%c0_3, %c0_4] : memref<32x1xf32, #tpu.memory_space<vmem>>, vector<32x1xf32>
    %4 = vector.broadcast %3 : vector<32x1xf32> to vector<32x512xf32>
    %5 = arith.addf %2, %4 : vector<32x512xf32>
    %c0_5 = arith.constant 0 : index
    %c0_6 = arith.constant 0 : index
    %6 = vector.load %arg4[%c0_5, %c0_6] : memref<32x512xbf16, #tpu.memory_space<vmem>>, vector<32x512xbf16>
    %7 = arith.extf %6 : vector<32x512xbf16> to vector<32x512xf32>
    %8 = arith.addf %5, %7 : vector<32x512xf32>
    %9 = arith.truncf %8 : vector<32x512xf32> to vector<32x512xbf16>
    %c0_7 = arith.constant 0 : index
    %c0_8 = arith.constant 0 : index
    %10 = vector.load %arg5[%c0_7, %c0_8] : memref<32x512xbf16, #tpu.memory_space<vmem>>, vector<32x512xbf16>
    tpu.vector_store %arg5[%c0_7, %c0_8], %9 {strides = array<i32>} : memref<32x512xbf16, #tpu.memory_space<vmem>>, vector<32x512xbf16>,
    return
  }
  func.func @transform_0(%arg0: i32) -> (i32, i32) {
    %c0_i32 = arith.constant 0 : i32
    %c0_i32_0 = arith.constant 0 : i32
    %c0_i32_1 = arith.constant 0 : i32
    return %c0_i32, %c0_i32_0 : i32, i32
  }
  func.func @transform_1(%arg0: i32) -> (i32, i32) {
    %c0_i32 = arith.constant 0 : i32
    %c0_i32_0 = arith.constant 0 : i32
    %c0_i32_1 = arith.constant 0 : i32
    return %c0_i32, %c0_i32_0 : i32, i32
  }
  func.func @transform_2(%arg0: i32) -> (i32, i32) {
    %c0_i32 = arith.constant 0 : i32
    %c0_i32_0 = arith.constant 0 : i32
    return %c0_i32, %arg0 : i32, i32
  }
  func.func @transform_3(%arg0: i32) -> (i32, i32) {
    %c0_i32 = arith.constant 0 : i32
    %c0_i32_0 = arith.constant 0 : i32
    return %c0_i32, %arg0 : i32, i32
  }
  func.func @transform_4(%arg0: i32) -> (i32, i32) {
    %c0_i32 = arith.constant 0 : i32
    %c0_i32_0 = arith.constant 0 : i32
    return %c0_i32, %arg0 : i32, i32
  }
}

module attributes {stable_mosaic.version = 11 : i64} {
  func.func @kernel(%arg0: i32, %arg1: memref<64x864xbf16, #tpu.memory_space<vmem>>, %arg2: memref<64x1xf32, #tpu.memory_space<vmem>>, %arg3: memref<864x512xbf16, #tpu.memory_space<vmem>>, %arg4: memref<64x512xbf16, #tpu.memory_space<vmem>>) attributes {dimension_semantics = [#tpu.dimension_semantics<parallel>], iteration_bounds = array<i64: 4>, scalar_prefetch = 0 : i64, scratch_operands = 0 : i64, tpu.core_type = #tpu.core_type<tc>, window_params = [{pipeline_mode = #tpu.pipeline_mode<synchronous>, transform_indices = @transform_0, window_bounds = array<i64: 64, 864>}, {pipeline_mode = #tpu.pipeline_mode<synchronous>, transform_indices = @transform_1, window_bounds = array<i64: 64, 1>}, {transform_indices = @transform_2, window_bounds = array<i64: 864, 512>}, {transform_indices = @transform_3, window_bounds = array<i64: 64, 512>}]} {
    %c0 = arith.constant 0 : index
    %c0_0 = arith.constant 0 : index
    %0 = vector.load %arg1[%c0, %c0_0] : memref<64x864xbf16, #tpu.memory_space<vmem>>, vector<64x864xbf16>
    %c0_1 = arith.constant 0 : index
    %c0_2 = arith.constant 0 : index
    %1 = vector.load %arg3[%c0_1, %c0_2] : memref<864x512xbf16, #tpu.memory_space<vmem>>, vector<864x512xbf16>
    %cst = arith.constant dense<0.000000e+00> : vector<64x512xf32>
    %2 = tpu.matmul %0, %1, %cst {dimension_numbers = #tpu.dot_dimension_numbers<[1], [0], [0], [1], [0, 0, 1, 1], [], []>} : vector<64x864xbf16>, vector<864x512xbf16>, vector<64x512xf32> -> vector<64x512xf32>
    %c0_3 = arith.constant 0 : index
    %c0_4 = arith.constant 0 : index
    %3 = vector.load %arg2[%c0_3, %c0_4] : memref<64x1xf32, #tpu.memory_space<vmem>>, vector<64x1xf32>
    %4 = vector.broadcast %3 : vector<64x1xf32> to vector<64x512xf32>
    %5 = arith.addf %2, %4 : vector<64x512xf32>
    %6 = arith.truncf %5 : vector<64x512xf32> to vector<64x512xbf16>
    %c0_5 = arith.constant 0 : index
    %c0_6 = arith.constant 0 : index
    %7 = vector.load %arg4[%c0_5, %c0_6] : memref<64x512xbf16, #tpu.memory_space<vmem>>, vector<64x512xbf16>
    tpu.vector_store %arg4[%c0_5, %c0_6], %6 {strides = array<i32>} : memref<64x512xbf16, #tpu.memory_space<vmem>>, vector<64x512xbf16>,
    return
  }
  func.func @transform_0(%arg0: i32) -> (i32, i32) {
    %c0_i32 = arith.constant 0 : i32
    %c0_i32_0 = arith.constant 0 : i32
    %c0_i32_1 = arith.constant 0 : i32
    return %c0_i32, %c0_i32_0 : i32, i32
  }
  func.func @transform_1(%arg0: i32) -> (i32, i32) {
    %c0_i32 = arith.constant 0 : i32
    %c0_i32_0 = arith.constant 0 : i32
    %c0_i32_1 = arith.constant 0 : i32
    return %c0_i32, %c0_i32_0 : i32, i32
  }
  func.func @transform_2(%arg0: i32) -> (i32, i32) {
    %c0_i32 = arith.constant 0 : i32
    %c0_i32_0 = arith.constant 0 : i32
    return %c0_i32, %arg0 : i32, i32
  }
  func.func @transform_3(%arg0: i32) -> (i32, i32) {
    %c0_i32 = arith.constant 0 : i32
    %c0_i32_0 = arith.constant 0 : i32
    return %c0_i32, %arg0 : i32, i32
  }
}

module attributes {stable_mosaic.version = 11 : i64} {
  func.func @kernel(%arg0: i32, %arg1: memref<4x864xbf16, #tpu.memory_space<vmem>>, %arg2: memref<4x1xf32, #tpu.memory_space<vmem>>, %arg3: memref<864x512xbf16, #tpu.memory_space<vmem>>, %arg4: memref<4x512xbf16, #tpu.memory_space<vmem>>) attributes {dimension_semantics = [#tpu.dimension_semantics<parallel>], iteration_bounds = array<i64: 8>, scalar_prefetch = 0 : i64, scratch_operands = 0 : i64, tpu.core_type = #tpu.core_type<tc>, window_params = [{pipeline_mode = #tpu.pipeline_mode<synchronous>, transform_indices = @transform_0, window_bounds = array<i64: 4, 864>}, {pipeline_mode = #tpu.pipeline_mode<synchronous>, transform_indices = @transform_1, window_bounds = array<i64: 4, 1>}, {transform_indices = @transform_2, window_bounds = array<i64: 864, 512>}, {transform_indices = @transform_3, window_bounds = array<i64: 4, 512>}]} {
    %c0 = arith.constant 0 : index
    %c0_0 = arith.constant 0 : index
    %0 = vector.load %arg1[%c0, %c0_0] : memref<4x864xbf16, #tpu.memory_space<vmem>>, vector<4x864xbf16>
    %c0_1 = arith.constant 0 : index
    %c0_2 = arith.constant 0 : index
    %1 = vector.load %arg3[%c0_1, %c0_2] : memref<864x512xbf16, #tpu.memory_space<vmem>>, vector<864x512xbf16>
    %cst = arith.constant dense<0.000000e+00> : vector<4x512xf32>
    %2 = tpu.matmul %0, %1, %cst {dimension_numbers = #tpu.dot_dimension_numbers<[1], [0], [0], [1], [0, 0, 1, 1], [], []>} : vector<4x864xbf16>, vector<864x512xbf16>, vector<4x512xf32> -> vector<4x512xf32>
    %c0_3 = arith.constant 0 : index
    %c0_4 = arith.constant 0 : index
    %3 = vector.load %arg2[%c0_3, %c0_4] : memref<4x1xf32, #tpu.memory_space<vmem>>, vector<4x1xf32>
    %4 = vector.broadcast %3 : vector<4x1xf32> to vector<4x512xf32>
    %5 = arith.addf %2, %4 : vector<4x512xf32>
    %6 = arith.truncf %5 : vector<4x512xf32> to vector<4x512xbf16>
    %c0_5 = arith.constant 0 : index
    %c0_6 = arith.constant 0 : index
    %7 = vector.load %arg4[%c0_5, %c0_6] : memref<4x512xbf16, #tpu.memory_space<vmem>>, vector<4x512xbf16>
    tpu.vector_store %arg4[%c0_5, %c0_6], %6 {strides = array<i32>} : memref<4x512xbf16, #tpu.memory_space<vmem>>, vector<4x512xbf16>,
    return
  }
  func.func @transform_0(%arg0: i32) -> (i32, i32) {
    %c0_i32 = arith.constant 0 : i32
    %c0_i32_0 = arith.constant 0 : i32
    %c0_i32_1 = arith.constant 0 : i32
    return %c0_i32, %c0_i32_0 : i32, i32
  }
  func.func @transform_1(%arg0: i32) -> (i32, i32) {
    %c0_i32 = arith.constant 0 : i32
    %c0_i32_0 = arith.constant 0 : i32
    %c0_i32_1 = arith.constant 0 : i32
    return %c0_i32, %c0_i32_0 : i32, i32
  }
  func.func @transform_2(%arg0: i32) -> (i32, i32) {
    %c0_i32 = arith.constant 0 : i32
    %c0_i32_0 = arith.constant 0 : i32
    return %c0_i32, %arg0 : i32, i32
  }
  func.func @transform_3(%arg0: i32) -> (i32, i32) {
    %c0_i32 = arith.constant 0 : i32
    %c0_i32_0 = arith.constant 0 : i32
    return %c0_i32, %arg0 : i32, i32
  }
}

</mosaic_0001>

<llo_original>
// kernel: forward.8
$region0: #{forward.8}
  #allocation0 [shape = 'u32[]', space=smem, size = 0x4, offset = 0x4, fixed_abs, tag = 'smem constant byte address 0x4 - core index']
  #allocation1 [shape = 'u32[144,128]{1,0:T(1,128)}', space=vmem, size = 0x12000, scoped, tag = 'internal scratch']
  %s0 = inlined_call_operand.vmem [shape: bf16[32,108], index: 0, kind: input, shape index: {}]
  %s1 = inlined_call_operand.vmem [shape: f32[32,1], index: 1, kind: input, shape index: {}]
  %s2 = inlined_call_operand.vmem [shape: bf16[108,2048], index: 2, kind: input, shape index: {}]
  %s3 = inlined_call_operand.vmem [shape: bf16[32,2048], index: 3, kind: output, shape index: {}]
  %s4 = sld [smem:[#allocation0]]
  $region87: #{forward.8} parent=0
    _
  %s6 = ssub.s32 1, %s4
  %s7 = scalar_select 0, %s6, %s4
  $region1: #{forward.8} parent=0
    #allocation2 [shape = 'u8[229376]{0}', space=vmem, size = 0x38000, scoped, tag = 'input window, operand 2']
    #allocation3 [shape = 'u8[65536]{0}', space=vmem, size = 0x10000, scoped, tag = 'output window, operand 0']
    loop: start=0, step=1, limit=6
    $region2: #{forward.8} parent=1 // loop_pre_header
      _
    $region3: #{forward.8} parent=1 // loop_header
      %s9 = sphi 0, %s13
      %p10 = scmp.ge.s32.totalorder %s9, 6
      %s17 = sphi 0, %s17
      %s19 = sphi 0, %s17
      %s20 = sphi 0, %s19
      %s34 = sphi 0, %s20
      %s38 = sphi 0, %s38
      %s40 = sphi 0, %s38
      %s41 = sphi 0, %s40
      %s55 = sphi 0, %s41
      %s61 = sphi 0, %s63
      %s64 = sphi 0, %s61
      %s65 = sphi 0, %s64
      %s81 = sphi 0, %s65
      %s87 = sphi 0, %s89
      %s90 = sphi 0, %s87
      %s91 = sphi 0, %s90
      %s107 = sphi 0, %s91
    $region4: #{forward.8} parent=1 // loop_header_branch
      %12 = sbr.rel (%p10) target = $region8
    $region5: #{forward.8} parent=1 // loop_body
      %s14 = ssub.s32 %s9, 1
      %s15 = ssub.s32 %s9, 2
      %s16 = sadd.s32 %s9, 1
      %s18 = sadd.s32 %s17, 1
      %p21 = scmp.eq.s32.totalorder %s9, 3
      %p22 = scmp.ne.s32.totalorder %s17, %s19
      %p23 = scmp.eq.s32.totalorder %s9, 0
      %p24 = por %p22, %p23
      %p25 = scmp.ne.s32.totalorder %s17, %s19
      %p26 = scmp.eq.s32.totalorder %s14, 3
      %p27 = por %p25, %p26
      %p28 = scmp.ne.s32.totalorder %s19, %s20
      %p29 = scmp.eq.s32.totalorder %s14, 0
      %p30 = por %p28, %p29
      %p31 = scmp.ne.s32.totalorder %s19, %s20
      %p32 = scmp.eq.s32.totalorder %s15, 3
      %p33 = por %p31, %p32
      %p35 = scmp.ne.s32.totalorder %s20, %s34
      %p36 = scmp.eq.s32.totalorder %s15, 0
      %p37 = por %p35, %p36
      %s39 = sadd.s32 %s38, 1
      %p42 = scmp.eq.s32.totalorder %s9, 3
      %p43 = scmp.ne.s32.totalorder %s38, %s40
      %p44 = scmp.eq.s32.totalorder %s9, 0
      %p45 = por %p43, %p44
      %p46 = scmp.ne.s32.totalorder %s38, %s40
      %p47 = scmp.eq.s32.totalorder %s14, 3
      %p48 = por %p46, %p47
      %p49 = scmp.ne.s32.totalorder %s40, %s41
      %p50 = scmp.eq.s32.totalorder %s14, 0
      %p51 = por %p49, %p50
      %p52 = scmp.ne.s32.totalorder %s40, %s41
      %p53 = scmp.eq.s32.totalorder %s15, 3
      %p54 = por %p52, %p53
      %p56 = scmp.ne.s32.totalorder %s41, %s55
      %p57 = scmp.eq.s32.totalorder %s15, 0
      %p58 = por %p56, %p57
      %s59 = ssub.s32 %s9, %s16
      %p60 = scmp.eq.s32.totalorder %s59, 0
      %s62 = sadd.s32 %s61, 1
      %s63 = scalar_select %p60, %s61, %s62
      %p66 = pneg %p60
      %p67 = scmp.eq.s32.totalorder %s9, 3
      %p68 = por %p66, %p67
      %p69 = scmp.ne.s32.totalorder %s61, %s64
      %p70 = scmp.eq.s32.totalorder %s9, 0
      %p71 = por %p69, %p70
      %p72 = scmp.ne.s32.totalorder %s61, %s64
      %p73 = scmp.eq.s32.totalorder %s14, 3
      %p74 = por %p72, %p73
      %p75 = scmp.ne.s32.totalorder %s64, %s65
      %p76 = scmp.eq.s32.totalorder %s14, 0
      %p77 = por %p75, %p76
      %p78 = scmp.ne.s32.totalorder %s64, %s65
      %p79 = scmp.eq.s32.totalorder %s15, 3
      %p80 = por %p78, %p79
      %p82 = scmp.ne.s32.totalorder %s65, %s81
      %p83 = scmp.eq.s32.totalorder %s15, 0
      %p84 = por %p82, %p83
      %s85 = ssub.s32 %s9, %s16
      %p86 = scmp.eq.s32.totalorder %s85, 0
      %s88 = sadd.s32 %s87, 1
      %s89 = scalar_select %p86, %s87, %s88
      %p92 = pneg %p86
      %p93 = scmp.eq.s32.totalorder %s9, 3
      %p94 = por %p92, %p93
      %p95 = scmp.ne.s32.totalorder %s87, %s90
      %p96 = scmp.eq.s32.totalorder %s9, 0
      %p97 = por %p95, %p96
      %p98 = scmp.ne.s32.totalorder %s87, %s90
      %p99 = scmp.eq.s32.totalorder %s14, 3
      %p100 = por %p98, %p99
      %p101 = scmp.ne.s32.totalorder %s90, %s91
      %p102 = scmp.eq.s32.totalorder %s14, 0
      %p103 = por %p101, %p102
      %p104 = scmp.ne.s32.totalorder %s90, %s91
      %p105 = scmp.eq.s32.totalorder %s15, 3
      %p106 = por %p104, %p105
      %p108 = scmp.ne.s32.totalorder %s91, %s107
      %p109 = scmp.eq.s32.totalorder %s15, 0
      %p110 = por %p108, %p109
      %p111 = scmp.le.s32.totalorder 1, %s9
      %p112 = scmp.lt.s32.totalorder %s9, 5
      %p113 = pnand %p111, %p112
      %p114 = pneg %p113
      // Predicated region
      $region9: #{forward.8} parent=5 // pred_check
        _
      $region10: #{forward.8} parent=5 // pred_check_branch
        %116 = sbr.rel (%p113) target = $region12
      $region11: #{forward.8} parent=5 // pred_region
        %s117 = ssub.s32 %s9, 1
        // Predicated region
        $region13: #{forward.8} parent=11 // pred_check
          %p118 = pneg %p30
        $region14: #{forward.8} parent=11 // pred_check_branch
          %120 = sbr.rel (%p118) target = $region16
        $region15: #{forward.8} parent=11 // pred_region
          _
        $region16: #{forward.8} parent=11 // pred_fallthru
          _
        // Predicated region
        $region17: #{forward.8} parent=11 // pred_check
          %p121 = pneg %p51
        $region18: #{forward.8} parent=11 // pred_check_branch
          %123 = sbr.rel (%p121) target = $region20
        $region19: #{forward.8} parent=11 // pred_region
          _
        $region20: #{forward.8} parent=11 // pred_fallthru
          _
      $region12: #{forward.8} parent=5 // pred_fallthru
        _
      %p124 = scmp.lt.s32.totalorder %s9, 4
      // Predicated region
      $region21: #{forward.8} parent=5 // pred_check
        %p125 = pneg %p124
      $region22: #{forward.8} parent=5 // pred_check_branch
        %127 = sbr.rel (%p125) target = $region24
      $region23: #{forward.8} parent=5 // pred_region
        // Predicated region
        $region25: #{forward.8} parent=23 // pred_check
          %p128 = pneg %p71
        $region26: #{forward.8} parent=23 // pred_check_branch
          %130 = sbr.rel (%p128) target = $region28
        $region27: #{forward.8} parent=23 // pred_region
          %s131 = sand.u32 %s61, 1
          %s132 = sand.u32 %s61, 1
          %s133 = smul.addr %s132, 224
          %s134 = scalar_lea.vmem [#allocation2], %s133
          %s135 = smul.u32 4, %s9
          %s136 = smul.addr %s135, 4
          %s137 = scalar_lea.vmem %s2, %s136
          // Predicated region
          $region29: #{forward.8} parent=27 // pred_check
            _
          $region30: #{forward.8} parent=27 // pred_check_branch
            %139 = sbr.rel (0) target = $region32
          $region31: #{forward.8} parent=27 // pred_region
            // Predicated region
            $region33: #{forward.8} parent=31 // pred_check
              _
            $region34: #{forward.8} parent=31 // pred_check_branch
              %141 = sbr.rel (0) target = $region36
            $region35: #{forward.8} parent=31 // pred_region
              loop: start=0, step=1, limit=1
              $region37: #{forward.8} parent=35 // loop_pre_header
                _
              $region38: #{forward.8} parent=35 // loop_header
                %s143 = sphi 0, %s147
                %p144 = scmp.ge.s32.totalorder %s143, 1
                %s148 = sphi %s137, %s137
                %s149 = sphi %s134, %s134
              $region39: #{forward.8} parent=35 // loop_header_branch
                %146 = sbr.rel (%p144) target = $region43
              $region40: #{forward.8} parent=35 // loop_body
                %v150 = vld [vmem:[%s148] sm:$0xff]
                %151 = vst [vmem:[%s149] sm:$0xff] %v150
                %v152 = vld [vmem:[%s148 + $0x8] sm:$0xff]
                %153 = vst [vmem:[%s149 + $0x8] sm:$0xff] %v152
                %v154 = vld [vmem:[%s148 + $0x40] sm:$0xff]
                %155 = vst [vmem:[%s149 + $0x10] sm:$0xff] %v154
                %v156 = vld [vmem:[%s148 + $0x48] sm:$0xff]
                %157 = vst [vmem:[%s149 + $0x18] sm:$0xff] %v156
                %v158 = vld [vmem:[%s148 + $0x80] sm:$0xff]
                %159 = vst [vmem:[%s149 + $0x20] sm:$0xff] %v158
                %v160 = vld [vmem:[%s148 + $0x88] sm:$0xff]
                %161 = vst [vmem:[%s149 + $0x28] sm:$0xff] %v160
                %v162 = vld [vmem:[%s148 + $0xc0] sm:$0xff]
                %163 = vst [vmem:[%s149 + $0x30] sm:$0xff] %v162
                %v164 = vld [vmem:[%s148 + $0xc8] sm:$0xff]
                %165 = vst [vmem:[%s149 + $0x38] sm:$0xff] %v164
                %v166 = vld [vmem:[%s148 + $0x100] sm:$0xff]
                %167 = vst [vmem:[%s149 + $0x40] sm:$0xff] %v166
                %v168 = vld [vmem:[%s148 + $0x108] sm:$0xff]
                %169 = vst [vmem:[%s149 + $0x48] sm:$0xff] %v168
                %v170 = vld [vmem:[%s148 + $0x140] sm:$0xff]
                %171 = vst [vmem:[%s149 + $0x50] sm:$0xff] %v170
                %v172 = vld [vmem:[%s148 + $0x148] sm:$0xff]
                %173 = vst [vmem:[%s149 + $0x58] sm:$0xff] %v172
                %v174 = vld [vmem:[%s148 + $0x180] sm:$0xff]
                %175 = vst [vmem:[%s149 + $0x60] sm:$0xff] %v174
                %v176 = vld [vmem:[%s148 + $0x188] sm:$0xff]
                %177 = vst [vmem:[%s149 + $0x68] sm:$0xff] %v176
                %v178 = vld [vmem:[%s148 + $0x1c0] sm:$0xff]
                %179 = vst [vmem:[%s149 + $0x70] sm:$0xff] %v178
                %v180 = vld [vmem:[%s148 + $0x1c8] sm:$0xff]
                %181 = vst [vmem:[%s149 + $0x78] sm:$0xff] %v180
                %v182 = vld [vmem:[%s148 + $0x200] sm:$0xff]
                %183 = vst [vmem:[%s149 + $0x80] sm:$0xff] %v182
                %v184 = vld [vmem:[%s148 + $0x208] sm:$0xff]
                %185 = vst [vmem:[%s149 + $0x88] sm:$0xff] %v184
                %v186 = vld [vmem:[%s148 + $0x240] sm:$0xff]
                %187 = vst [vmem:[%s149 + $0x90] sm:$0xff] %v186
                %v188 = vld [vmem:[%s148 + $0x248] sm:$0xff]
                %189 = vst [vmem:[%s149 + $0x98] sm:$0xff] %v188
                %v190 = vld [vmem:[%s148 + $0x280] sm:$0xff]
                %191 = vst [vmem:[%s149 + $0xa0] sm:$0xff] %v190
                %v192 = vld [vmem:[%s148 + $0x288] sm:$0xff]
                %193 = vst [vmem:[%s149 + $0xa8] sm:$0xff] %v192
                %v194 = vld [vmem:[%s148 + $0x2c0] sm:$0xff]
                %195 = vst [vmem:[%s149 + $0xb0] sm:$0xff] %v194
                %v196 = vld [vmem:[%s148 + $0x2c8] sm:$0xff]
                %197 = vst [vmem:[%s149 + $0xb8] sm:$0xff] %v196
                %v198 = vld [vmem:[%s148 + $0x300] sm:$0xff]
                %199 = vst [vmem:[%s149 + $0xc0] sm:$0xff] %v198
                %v200 = vld [vmem:[%s148 + $0x308] sm:$0xff]
                %201 = vst [vmem:[%s149 + $0xc8] sm:$0xff] %v200
                %v202 = vld [vmem:[%s148 + $0x340] sm:$0xff]
                %203 = vst [vmem:[%s149 + $0xd0] sm:$0xff] %v202
                %v204 = vld [vmem:[%s148 + $0x348] sm:$0xff]
                %205 = vst [vmem:[%s149 + $0xd8] sm:$0xff] %v204
              $region41: #{forward.8} parent=35 // loop_footer
                %s147 = sadd.s32 1, %s143
              $region42: #{forward.8} parent=35 // loop_footer_branch
                %142 = sbr.rel target = $region38
              $region43: #{forward.8} parent=35 // loop_exit
                _
            $region36: #{forward.8} parent=31 // pred_fallthru
              _
            // Predicated region
            $region44: #{forward.8} parent=31 // pred_check
              _
            $region45: #{forward.8} parent=31 // pred_check_branch
              %207 = sbr.rel target = $region47
            $region46: #{forward.8} parent=31 // pred_region
              _
            $region47: #{forward.8} parent=31 // pred_fallthru
              _
          $region32: #{forward.8} parent=27 // pred_fallthru
            _
          %208 = vnop
        $region28: #{forward.8} parent=23 // pred_fallthru
          _
      $region24: #{forward.8} parent=5 // pred_fallthru
        _
      %p209 = scmp.le.s32.totalorder 1, %s9
      %p210 = scmp.lt.s32.totalorder %s9, 5
      %p211 = pnand %p209, %p210
      %p212 = pneg %p211
      // Predicated region
      $region48: #{forward.8} parent=5 // pred_check
        _
      $region49: #{forward.8} parent=5 // pred_check_branch
        %214 = sbr.rel (%p211) target = $region51
      $region50: #{forward.8} parent=5 // pred_region
        %s215 = ssub.s32 %s9, 1
        %s216 = sand.u32 %s64, 1
        %s217 = sand.u32 %s64, 1
        %s218 = smul.addr %s217, 224
        %s219 = scalar_lea.vmem [#allocation2], %s218
        // Predicated region
        $region52: #{forward.8} parent=50 // pred_check
          %p220 = pneg %p77
        $region53: #{forward.8} parent=50 // pred_check_branch
          %222 = sbr.rel (%p220) target = $region55
        $region54: #{forward.8} parent=50 // pred_region
          _
        $region55: #{forward.8} parent=50 // pred_fallthru
          _
        %p223 = pneg %p30
        %p224 = pneg %p27
        %p225 = pneg %p51
        %p226 = pneg %p48
        %s227 = sand.u32 %s64, 1
        %s228 = sand.u32 %s64, 1
        %s229 = smul.addr %s228, 224
        %s230 = scalar_lea.vmem [#allocation2], %s229
        %p231 = pneg %p77
        %p232 = pneg %p74
        %p233 = pneg %p103
        %p234 = pneg %p100
        %s235 = sand.u32 %s90, 1
        %s236 = sand.u32 %s90, 1
        %s237 = smul.addr %s236, 64
        %s238 = scalar_lea.vmem [#allocation3], %s237
        %s239 = smul.u32 4, %s14
        %s240 = smul.u32 4, %s14
        %v242 = vld [vmem:[%s0] sm:$0xf]
        %v243 = vld [vmem:[%s0 + $0x4] sm:$0xf]
        %v244 = vld [vmem:[%s0 + $0x8] sm:$0xf]
        %v245 = vld [vmem:[%s0 + $0xc] sm:$0xf]
        %v246 = vld [vmem:[%s219] sm:$0xff]
        %v247 = vld [vmem:[%s219 + $0x8] sm:$0xff]
        %v248 = vld [vmem:[%s219 + $0x10] sm:$0xff]
        %v249 = vld [vmem:[%s219 + $0x18] sm:$0xff]
        %v250 = vld [vmem:[%s219 + $0x20] sm:$0xff]
        %v251 = vld [vmem:[%s219 + $0x28] sm:$0xff]
        %v252 = vld [vmem:[%s219 + $0x30] sm:$0xff]
        %v253 = vld [vmem:[%s219 + $0x38] sm:$0xff]
        %v254 = vld [vmem:[%s219 + $0x40] sm:$0xff]
        %v255 = vld [vmem:[%s219 + $0x48] sm:$0xff]
        %v256 = vld [vmem:[%s219 + $0x50] sm:$0xff]
        %v257 = vld [vmem:[%s219 + $0x58] sm:$0xff]
        %v258 = vld [vmem:[%s219 + $0x60] sm:$0xff]
        %v259 = vld [vmem:[%s219 + $0x68] sm:$0xff]
        %v260 = vld [vmem:[%s219 + $0x70] sm:$0xff]
        %v261 = vld [vmem:[%s219 + $0x78] sm:$0xff]
        %v262 = vld [vmem:[%s219 + $0x80] sm:$0xff]
        %v263 = vld [vmem:[%s219 + $0x88] sm:$0xff]
        %v264 = vld [vmem:[%s219 + $0x90] sm:$0xff]
        %v265 = vld [vmem:[%s219 + $0x98] sm:$0xff]
        %v266 = vld [vmem:[%s219 + $0xa0] sm:$0xff]
        %v267 = vld [vmem:[%s219 + $0xa8] sm:$0xff]
        %v268 = vld [vmem:[%s219 + $0xb0] sm:$0xff]
        %v269 = vld [vmem:[%s219 + $0xb8] sm:$0xff]
        %v270 = vld [vmem:[%s219 + $0xc0] sm:$0xff]
        %v271 = vld [vmem:[%s219 + $0xc8] sm:$0xff]
        %v272 = vld [vmem:[%s219 + $0xd0] sm:$0x33]
        %v273 = vld [vmem:[%s219 + $0xd8] sm:$0x33]
        %v274 = vld [vmem:[%s1] sm:$0xff]
        %v275 = vld [vmem:[%s1 + $0x8] sm:$0xff]
        %v276 = vld [vmem:[%s1 + $0x10] sm:$0xff]
        %v277 = vld [vmem:[%s1 + $0x18] sm:$0xff]
        %279 = vset.pattern.permute.xlu0 0
        %280 = vperm.xlu0 %279, %v274
        %v281 = vpop.permute.xlu0 %280
        %284 = vset.pattern.permute.xlu0 0
        %285 = vperm.xlu0 %284, %v275
        %v286 = vpop.permute.xlu0 %285
        %289 = vset.pattern.permute.xlu0 0
        %290 = vperm.xlu0 %289, %v276
        %v291 = vpop.permute.xlu0 %290
        %294 = vset.pattern.permute.xlu0 0
        %295 = vperm.xlu0 %294, %v277
        %v296 = vpop.permute.xlu0 %295
        %v302 = vunpack.c.l.b16 %v242
        %v303 = vunpack.c.l.b16 %v243
        %v304 = vunpack.c.l.b16 %v244
        %v305 = vunpack.c.l.b16 %v245
        %v306 = vpack.c.b16 %v303, %v302
        %v307 = vpack.c.b16 %v305, %v304
        %v336 = vunpack.c.l.b16 %v246
        %v337 = vunpack.c.h.b16 %v246
        %v338 = vunpack.c.l.b16 %v247
        %v339 = vunpack.c.h.b16 %v247
        %v340 = vunpack.c.l.b16 %v248
        %v341 = vunpack.c.h.b16 %v248
        %v342 = vunpack.c.l.b16 %v249
        %v343 = vunpack.c.h.b16 %v249
        %v344 = vunpack.c.l.b16 %v250
        %v345 = vunpack.c.h.b16 %v250
        %v346 = vunpack.c.l.b16 %v251
        %v347 = vunpack.c.h.b16 %v251
        %v348 = vunpack.c.l.b16 %v252
        %v349 = vunpack.c.h.b16 %v252
        %v350 = vunpack.c.l.b16 %v253
        %v351 = vunpack.c.h.b16 %v253
        %v352 = vunpack.c.l.b16 %v254
        %v353 = vunpack.c.h.b16 %v254
        %v354 = vunpack.c.l.b16 %v255
        %v355 = vunpack.c.h.b16 %v255
        %v356 = vunpack.c.l.b16 %v256
        %v357 = vunpack.c.h.b16 %v256
        %v358 = vunpack.c.l.b16 %v257
        %v359 = vunpack.c.h.b16 %v257
        %v360 = vunpack.c.l.b16 %v258
        %v361 = vunpack.c.h.b16 %v258
        %v362 = vunpack.c.l.b16 %v259
        %v363 = vunpack.c.h.b16 %v259
        %v364 = vunpack.c.l.b16 %v260
        %v365 = vunpack.c.h.b16 %v260
        %v366 = vunpack.c.l.b16 %v261
        %v367 = vunpack.c.h.b16 %v261
        %v368 = vunpack.c.l.b16 %v262
        %v369 = vunpack.c.h.b16 %v262
        %v370 = vunpack.c.l.b16 %v263
        %v371 = vunpack.c.h.b16 %v263
        %v372 = vunpack.c.l.b16 %v264
        %v373 = vunpack.c.h.b16 %v264
        %v374 = vunpack.c.l.b16 %v265
        %v375 = vunpack.c.h.b16 %v265
        %v376 = vunpack.c.l.b16 %v266
        %v377 = vunpack.c.h.b16 %v266
        %v378 = vunpack.c.l.b16 %v267
        %v379 = vunpack.c.h.b16 %v267
        %v380 = vunpack.c.l.b16 %v268
        %v381 = vunpack.c.h.b16 %v268
        %v382 = vunpack.c.l.b16 %v269
        %v383 = vunpack.c.h.b16 %v269
        %v384 = vunpack.c.l.b16 %v270
        %v385 = vunpack.c.h.b16 %v270
        %v386 = vunpack.c.l.b16 %v271
        %v387 = vunpack.c.h.b16 %v271
        %v388 = vunpack.c.l.b16 %v272
        %v389 = vunpack.c.h.b16 %v272
        %v390 = vunpack.c.l.b16 %v273
        %v391 = vunpack.c.h.b16 %v273
        %v392 = vpack.c.b16 %v340, %v336
        %v393 = vpack.c.b16 %v341, %v337
        %v394 = vpack.c.b16 %v342, %v338
        %v395 = vpack.c.b16 %v343, %v339
        %v396 = vpack.c.b16 %v348, %v344
        %v397 = vpack.c.b16 %v349, %v345
        %v398 = vpack.c.b16 %v350, %v346
        %v399 = vpack.c.b16 %v351, %v347
        %v400 = vpack.c.b16 %v356, %v352
        %v401 = vpack.c.b16 %v357, %v353
        %v402 = vpack.c.b16 %v358, %v354
        %v403 = vpack.c.b16 %v359, %v355
        %v404 = vpack.c.b16 %v364, %v360
        %v405 = vpack.c.b16 %v365, %v361
        %v406 = vpack.c.b16 %v366, %v362
        %v407 = vpack.c.b16 %v367, %v363
        %v408 = vpack.c.b16 %v372, %v368
        %v409 = vpack.c.b16 %v373, %v369
        %v410 = vpack.c.b16 %v374, %v370
        %v411 = vpack.c.b16 %v375, %v371
        %v412 = vpack.c.b16 %v380, %v376
        %v413 = vpack.c.b16 %v381, %v377
        %v414 = vpack.c.b16 %v382, %v378
        %v415 = vpack.c.b16 %v383, %v379
        %v416 = vpack.c.b16 %v388, %v384
        %v417 = vpack.c.b16 %v389, %v385
        %v418 = vpack.c.b16 %v390, %v386
        %v419 = vpack.c.b16 %v391, %v387
        %vm444 = vcmask 883712
        %v446 = vsel %vm444, %v306, 0
        %v449 = vsel %vm444, %v307, 0
        %vm451 = vcmask 1045504
        %v453 = vsel %vm451, %v416, 0
        %v456 = vsel %vm451, %v417, 0
        %v459 = vsel %vm451, %v418, 0
        %v462 = vsel %vm451, %v419, 0
        %464 = vmatprep.subr.bf16.mxu0 %v393
        %465 = vmatpush1.bf16.msra.mxu0 %v392
        %466 = vmatprep.subr.bf16.mxu0 %v397
        %467 = vmatpush1.bf16.msra.mxu0 %v396
        %468 = vmatprep.subr.bf16.mxu0 %v401
        %469 = vmatpush1.bf16.msra.mxu0 %v400
        %470 = vmatprep.subr.bf16.mxu0 %v405
        %471 = vmatpush1.bf16.msra.mxu0 %v404
        %472 = vmatprep.subr.bf16.mxu0 %v409
        %473 = vmatpush1.bf16.msra.mxu0 %v408
        %474 = vmatprep.subr.bf16.mxu0 %v413
        %475 = vmatpush1.bf16.msra.mxu0 %v412
        %476 = vmatprep.subr.bf16.mxu0 %v456
        %477 = vmatpush1.bf16.msra.mxu0 %v453
        %478 = vmatprep.subr.bf16.mxu0 0
        %479 = vmatpush1.bf16.msra.mxu0 0
        %480 = vmatprep.subr.bf16.mxu0 0
        %481 = vmatpush1.bf16.msra.mxu0 0
        %482 = vmatprep.subr.bf16.mxu0 0
        %483 = vmatpush1.bf16.msra.mxu0 0
        %484 = vmatprep.subr.bf16.mxu0 0
        %485 = vmatpush1.bf16.msra.mxu0 0
        %486 = vmatprep.subr.bf16.mxu0 0
        %487 = vmatpush1.bf16.msra.mxu0 0
        %488 = vmatprep.subr.bf16.mxu0 0
        %489 = vmatpush1.bf16.msra.mxu0 0
        %490 = vmatprep.subr.bf16.mxu0 0
        %491 = vmatpush1.bf16.msra.mxu0 0
        %492 = vmatprep.subr.bf16.mxu0 0
        %493 = vmatpush1.bf16.msra.mxu0 0
        %494 = vmatprep.subr.bf16.mxu0 0
        %495 = vmatpush1.bf16.msra.mxu0 0
        %496 = vmatprep.mubr.bf16.mxu0 0
        %497 = vmatmul.mubr.bf16.gmra.mrb[0].mxu0 %v446
        %v498 = vpop.f32.mrb[0].mxu0
        %v499 = vadd.f32 %v281, %v498
        %v500 = vpop.f32.mrb[0].mxu0
        %v501 = vadd.f32 %v281, %v500
        %v502 = vpop.f32.mrb[0].mxu0
        %v503 = vadd.f32 %v286, %v502
        %v504 = vpop.f32.mrb[0].mxu0
        %v505 = vadd.f32 %v286, %v504
        %506 = vmatprep.mubr.bf16.mxu0 0
        %507 = vmatmul.mubr.bf16.gmra.mrb[0].mxu0 %v449
        %v508 = vpop.f32.mrb[0].mxu0
        %v509 = vadd.f32 %v291, %v508
        %v510 = vpop.f32.mrb[0].mxu0
        %v511 = vadd.f32 %v291, %v510
        %v512 = vpop.f32.mrb[0].mxu0
        %v513 = vadd.f32 %v296, %v512
        %v514 = vpop.f32.mrb[0].mxu0
        %v515 = vadd.f32 %v296, %v514
        %516 = vdwg.mxu0
        %517 = vmatprep.subr.bf16.mxu0 %v395
        %518 = vmatpush1.bf16.msra.mxu0 %v394
        %519 = vmatprep.subr.bf16.mxu0 %v399
        %520 = vmatpush1.bf16.msra.mxu0 %v398
        %521 = vmatprep.subr.bf16.mxu0 %v403
        %522 = vmatpush1.bf16.msra.mxu0 %v402
        %523 = vmatprep.subr.bf16.mxu0 %v407
        %524 = vmatpush1.bf16.msra.mxu0 %v406
        %525 = vmatprep.subr.bf16.mxu0 %v411
        %526 = vmatpush1.bf16.msra.mxu0 %v410
        %527 = vmatprep.subr.bf16.mxu0 %v415
        %528 = vmatpush1.bf16.msra.mxu0 %v414
        %529 = vmatprep.subr.bf16.mxu0 %v462
        %530 = vmatpush1.bf16.msra.mxu0 %v459
        %531 = vmatprep.subr.bf16.mxu0 0
        %532 = vmatpush1.bf16.msra.mxu0 0
        %533 = vmatprep.subr.bf16.mxu0 0
        %534 = vmatpush1.bf16.msra.mxu0 0
        %535 = vmatprep.subr.bf16.mxu0 0
        %536 = vmatpush1.bf16.msra.mxu0 0
        %537 = vmatprep.subr.bf16.mxu0 0
        %538 = vmatpush1.bf16.msra.mxu0 0
        %539 = vmatprep.subr.bf16.mxu0 0
        %540 = vmatpush1.bf16.msra.mxu0 0
        %541 = vmatprep.subr.bf16.mxu0 0
        %542 = vmatpush1.bf16.msra.mxu0 0
        %543 = vmatprep.subr.bf16.mxu0 0
        %544 = vmatpush1.bf16.msra.mxu0 0
        %545 = vmatprep.subr.bf16.mxu0 0
        %546 = vmatpush1.bf16.msra.mxu0 0
        %547 = vmatprep.subr.bf16.mxu0 0
        %548 = vmatpush1.bf16.msra.mxu0 0
        %549 = vmatprep.mubr.bf16.mxu0 0
        %550 = vmatmul.mubr.bf16.gmra.mrb[0].mxu0 %v446
        %v551 = vpop.f32.mrb[0].mxu0
        %v552 = vadd.f32 %v281, %v551
        %v553 = vpop.f32.mrb[0].mxu0
        %v554 = vadd.f32 %v281, %v553
        %v555 = vpop.f32.mrb[0].mxu0
        %v556 = vadd.f32 %v286, %v555
        %v557 = vpop.f32.mrb[0].mxu0
        %v558 = vadd.f32 %v286, %v557
        %559 = vmatprep.mubr.bf16.mxu0 0
        %560 = vmatmul.mubr.bf16.gmra.mrb[0].mxu0 %v449
        %v561 = vpop.f32.mrb[0].mxu0
        %v562 = vadd.f32 %v291, %v561
        %v563 = vpop.f32.mrb[0].mxu0
        %v564 = vadd.f32 %v291, %v563
        %v565 = vpop.f32.mrb[0].mxu0
        %v566 = vadd.f32 %v296, %v565
        %v567 = vpop.f32.mrb[0].mxu0
        %v568 = vadd.f32 %v296, %v567
        %569 = vdwg.mxu0
        %v570 = vpack.c.bf16 %v503, %v499
        %v571 = vpack.c.bf16 %v505, %v501
        %v572 = vpack.c.bf16 %v556, %v552
        %v573 = vpack.c.bf16 %v558, %v554
        %v574 = vpack.c.bf16 %v513, %v509
        %v575 = vpack.c.bf16 %v515, %v511
        %v576 = vpack.c.bf16 %v566, %v562
        %v577 = vpack.c.bf16 %v568, %v564
        %v586 = vunpack.c.l.b16 %v570
        %v587 = vunpack.c.l.b16 %v571
        %v588 = vunpack.c.l.b16 %v572
        %v589 = vunpack.c.l.b16 %v573
        %v590 = vunpack.c.h.b16 %v570
        %v591 = vunpack.c.h.b16 %v571
        %v592 = vunpack.c.h.b16 %v572
        %v593 = vunpack.c.h.b16 %v573
        %v594 = vunpack.c.l.b16 %v574
        %v595 = vunpack.c.l.b16 %v575
        %v596 = vunpack.c.l.b16 %v576
        %v597 = vunpack.c.l.b16 %v577
        %v598 = vunpack.c.h.b16 %v574
        %v599 = vunpack.c.h.b16 %v575
        %v600 = vunpack.c.h.b16 %v576
        %v601 = vunpack.c.h.b16 %v577
        %v602 = vpack.c.b16 %v587, %v586
        %v603 = vpack.c.b16 %v589, %v588
        %v604 = vpack.c.b16 %v591, %v590
        %v605 = vpack.c.b16 %v593, %v592
        %v606 = vpack.c.b16 %v595, %v594
        %v607 = vpack.c.b16 %v597, %v596
        %v608 = vpack.c.b16 %v599, %v598
        %v609 = vpack.c.b16 %v601, %v600
        %618 = vst [vmem:[%s238] sm:$0xff] %v602
        %619 = vst [vmem:[%s238 + $0x8] sm:$0xff] %v603
        %620 = vst [vmem:[%s238 + $0x10] sm:$0xff] %v604
        %621 = vst [vmem:[%s238 + $0x18] sm:$0xff] %v605
        %622 = vst [vmem:[%s238 + $0x20] sm:$0xff] %v606
        %623 = vst [vmem:[%s238 + $0x28] sm:$0xff] %v607
        %624 = vst [vmem:[%s238 + $0x30] sm:$0xff] %v608
        %625 = vst [vmem:[%s238 + $0x38] sm:$0xff] %v609
        %s626 = sand.u32 %s90, 1
        %s627 = sand.u32 %s90, 1
        %s628 = smul.addr %s627, 64
        %s629 = scalar_lea.vmem [#allocation3], %s628
        // Predicated region
        $region56: #{forward.8} parent=50 // pred_check
          %p630 = pneg %p100
        $region57: #{forward.8} parent=50 // pred_check_branch
          %632 = sbr.rel (%p630) target = $region59
        $region58: #{forward.8} parent=50 // pred_region
          %s633 = smul.u32 4, %s14
          %s634 = smul.addr %s633, 4
          %s635 = scalar_lea.vmem %s3, %s634
          // Predicated region
          $region60: #{forward.8} parent=58 // pred_check
            _
          $region61: #{forward.8} parent=58 // pred_check_branch
            %637 = sbr.rel (0) target = $region63
          $region62: #{forward.8} parent=58 // pred_region
            // Predicated region
            $region64: #{forward.8} parent=62 // pred_check
              _
            $region65: #{forward.8} parent=62 // pred_check_branch
              %639 = sbr.rel (0) target = $region67
            $region66: #{forward.8} parent=62 // pred_region
              loop: start=0, step=1, limit=1
              $region68: #{forward.8} parent=66 // loop_pre_header
                _
              $region69: #{forward.8} parent=66 // loop_header
                %s641 = sphi 0, %s645
                %p642 = scmp.ge.s32.totalorder %s641, 1
                %s646 = sphi %s629, %s629
                %s647 = sphi %s635, %s635
              $region70: #{forward.8} parent=66 // loop_header_branch
                %644 = sbr.rel (%p642) target = $region74
              $region71: #{forward.8} parent=66 // loop_body
                %v648 = vld [vmem:[%s646] sm:$0xff]
                %649 = vst [vmem:[%s647] sm:$0xff] %v648
                %v650 = vld [vmem:[%s646 + $0x8] sm:$0xff]
                %651 = vst [vmem:[%s647 + $0x8] sm:$0xff] %v650
                %v652 = vld [vmem:[%s646 + $0x10] sm:$0xff]
                %653 = vst [vmem:[%s647 + $0x40] sm:$0xff] %v652
                %v654 = vld [vmem:[%s646 + $0x18] sm:$0xff]
                %655 = vst [vmem:[%s647 + $0x48] sm:$0xff] %v654
                %v656 = vld [vmem:[%s646 + $0x20] sm:$0xff]
                %657 = vst [vmem:[%s647 + $0x80] sm:$0xff] %v656
                %v658 = vld [vmem:[%s646 + $0x28] sm:$0xff]
                %659 = vst [vmem:[%s647 + $0x88] sm:$0xff] %v658
                %v660 = vld [vmem:[%s646 + $0x30] sm:$0xff]
                %661 = vst [vmem:[%s647 + $0xc0] sm:$0xff] %v660
                %v662 = vld [vmem:[%s646 + $0x38] sm:$0xff]
                %663 = vst [vmem:[%s647 + $0xc8] sm:$0xff] %v662
              $region72: #{forward.8} parent=66 // loop_footer
                %s645 = sadd.s32 1, %s641
              $region73: #{forward.8} parent=66 // loop_footer_branch
                %640 = sbr.rel target = $region69
              $region74: #{forward.8} parent=66 // loop_exit
                _
            $region67: #{forward.8} parent=62 // pred_fallthru
              _
            // Predicated region
            $region75: #{forward.8} parent=62 // pred_check
              _
            $region76: #{forward.8} parent=62 // pred_check_branch
              %665 = sbr.rel target = $region78
            $region77: #{forward.8} parent=62 // pred_region
              _
            $region78: #{forward.8} parent=62 // pred_fallthru
              _
          $region63: #{forward.8} parent=58 // pred_fallthru
            _
          %666 = vnop
        $region59: #{forward.8} parent=50 // pred_fallthru
          _
      $region51: #{forward.8} parent=5 // pred_fallthru
        _
      %p667 = scmp.le.s32.totalorder 2, %s9
      // Predicated region
      $region79: #{forward.8} parent=5 // pred_check
        %p668 = pneg %p667
      $region80: #{forward.8} parent=5 // pred_check_branch
        %670 = sbr.rel (%p668) target = $region82
      $region81: #{forward.8} parent=5 // pred_region
        %s671 = ssub.s32 %s9, 2
        // Predicated region
        $region83: #{forward.8} parent=81 // pred_check
          %p672 = pneg %p106
        $region84: #{forward.8} parent=81 // pred_check_branch
          %674 = sbr.rel (%p672) target = $region86
        $region85: #{forward.8} parent=81 // pred_region
          %s675 = sand.u32 %s91, 1
          %s676 = sand.u32 %s91, 1
          %s677 = smul.addr %s676, 64
          %s678 = scalar_lea.vmem [#allocation3], %s677
        $region86: #{forward.8} parent=81 // pred_fallthru
          _
      $region82: #{forward.8} parent=5 // pred_fallthru
        _
    $region6: #{forward.8} parent=1 // loop_footer
      %s13 = sadd.s32 1, %s9
    $region7: #{forward.8} parent=1 // loop_footer_branch
      %8 = sbr.rel target = $region3
    $region8: #{forward.8} parent=1 // loop_exit
      _

// kernel: forward.9
$region0: #{forward.9}
  #allocation0 [shape = 'u32[]', space=smem, size = 0x4, offset = 0x4, fixed_abs, tag = 'smem constant byte address 0x4 - core index']
  #allocation1 [shape = 'u32[144,128]{1,0:T(1,128)}', space=vmem, size = 0x12000, scoped, tag = 'internal scratch']
  %s0 = inlined_call_operand.vmem [shape: bf16[32,864], index: 0, kind: input, shape index: {}]
  %s1 = inlined_call_operand.vmem [shape: f32[32,1], index: 1, kind: input, shape index: {}]
  %s2 = inlined_call_operand.vmem [shape: bf16[864,2048], index: 2, kind: input, shape index: {}]
  %s3 = inlined_call_operand.vmem [shape: bf16[32,2048], index: 3, kind: output, shape index: {}]
  %s4 = sld [smem:[#allocation0]]
  $region87: #{forward.9} parent=0
    _
  %s6 = ssub.s32 1, %s4
  %s7 = scalar_select 0, %s6, %s4
  $region1: #{forward.9} parent=0
    #allocation2 [shape = 'u8[1769472]{0}', space=vmem, size = 0x1b0000, scoped, tag = 'input window, operand 2']
    #allocation3 [shape = 'u8[65536]{0}', space=vmem, size = 0x10000, scoped, tag = 'output window, operand 0']
    loop: start=0, step=1, limit=6
    $region2: #{forward.9} parent=1 // loop_pre_header
      _
    $region3: #{forward.9} parent=1 // loop_header
      %s9 = sphi 0, %s13
      %p10 = scmp.ge.s32.totalorder %s9, 6
      %s17 = sphi 0, %s17
      %s19 = sphi 0, %s17
      %s20 = sphi 0, %s19
      %s34 = sphi 0, %s20
      %s38 = sphi 0, %s38
      %s40 = sphi 0, %s38
      %s41 = sphi 0, %s40
      %s55 = sphi 0, %s41
      %s61 = sphi 0, %s63
      %s64 = sphi 0, %s61
      %s65 = sphi 0, %s64
      %s81 = sphi 0, %s65
      %s87 = sphi 0, %s89
      %s90 = sphi 0, %s87
      %s91 = sphi 0, %s90
      %s107 = sphi 0, %s91
    $region4: #{forward.9} parent=1 // loop_header_branch
      %12 = sbr.rel (%p10) target = $region8
    $region5: #{forward.9} parent=1 // loop_body
      %s14 = ssub.s32 %s9, 1
      %s15 = ssub.s32 %s9, 2
      %s16 = sadd.s32 %s9, 1
      %s18 = sadd.s32 %s17, 1
      %p21 = scmp.eq.s32.totalorder %s9, 3
      %p22 = scmp.ne.s32.totalorder %s17, %s19
      %p23 = scmp.eq.s32.totalorder %s9, 0
      %p24 = por %p22, %p23
      %p25 = scmp.ne.s32.totalorder %s17, %s19
      %p26 = scmp.eq.s32.totalorder %s14, 3
      %p27 = por %p25, %p26
      %p28 = scmp.ne.s32.totalorder %s19, %s20
      %p29 = scmp.eq.s32.totalorder %s14, 0
      %p30 = por %p28, %p29
      %p31 = scmp.ne.s32.totalorder %s19, %s20
      %p32 = scmp.eq.s32.totalorder %s15, 3
      %p33 = por %p31, %p32
      %p35 = scmp.ne.s32.totalorder %s20, %s34
      %p36 = scmp.eq.s32.totalorder %s15, 0
      %p37 = por %p35, %p36
      %s39 = sadd.s32 %s38, 1
      %p42 = scmp.eq.s32.totalorder %s9, 3
      %p43 = scmp.ne.s32.totalorder %s38, %s40
      %p44 = scmp.eq.s32.totalorder %s9, 0
      %p45 = por %p43, %p44
      %p46 = scmp.ne.s32.totalorder %s38, %s40
      %p47 = scmp.eq.s32.totalorder %s14, 3
      %p48 = por %p46, %p47
      %p49 = scmp.ne.s32.totalorder %s40, %s41
      %p50 = scmp.eq.s32.totalorder %s14, 0
      %p51 = por %p49, %p50
      %p52 = scmp.ne.s32.totalorder %s40, %s41
      %p53 = scmp.eq.s32.totalorder %s15, 3
      %p54 = por %p52, %p53
      %p56 = scmp.ne.s32.totalorder %s41, %s55
      %p57 = scmp.eq.s32.totalorder %s15, 0
      %p58 = por %p56, %p57
      %s59 = ssub.s32 %s9, %s16
      %p60 = scmp.eq.s32.totalorder %s59, 0
      %s62 = sadd.s32 %s61, 1
      %s63 = scalar_select %p60, %s61, %s62
      %p66 = pneg %p60
      %p67 = scmp.eq.s32.totalorder %s9, 3
      %p68 = por %p66, %p67
      %p69 = scmp.ne.s32.totalorder %s61, %s64
      %p70 = scmp.eq.s32.totalorder %s9, 0
      %p71 = por %p69, %p70
      %p72 = scmp.ne.s32.totalorder %s61, %s64
      %p73 = scmp.eq.s32.totalorder %s14, 3
      %p74 = por %p72, %p73
      %p75 = scmp.ne.s32.totalorder %s64, %s65
      %p76 = scmp.eq.s32.totalorder %s14, 0
      %p77 = por %p75, %p76
      %p78 = scmp.ne.s32.totalorder %s64, %s65
      %p79 = scmp.eq.s32.totalorder %s15, 3
      %p80 = por %p78, %p79
      %p82 = scmp.ne.s32.totalorder %s65, %s81
      %p83 = scmp.eq.s32.totalorder %s15, 0
      %p84 = por %p82, %p83
      %s85 = ssub.s32 %s9, %s16
      %p86 = scmp.eq.s32.totalorder %s85, 0
      %s88 = sadd.s32 %s87, 1
      %s89 = scalar_select %p86, %s87, %s88
      %p92 = pneg %p86
      %p93 = scmp.eq.s32.totalorder %s9, 3
      %p94 = por %p92, %p93
      %p95 = scmp.ne.s32.totalorder %s87, %s90
      %p96 = scmp.eq.s32.totalorder %s9, 0
      %p97 = por %p95, %p96
      %p98 = scmp.ne.s32.totalorder %s87, %s90
      %p99 = scmp.eq.s32.totalorder %s14, 3
      %p100 = por %p98, %p99
      %p101 = scmp.ne.s32.totalorder %s90, %s91
      %p102 = scmp.eq.s32.totalorder %s14, 0
      %p103 = por %p101, %p102
      %p104 = scmp.ne.s32.totalorder %s90, %s91
      %p105 = scmp.eq.s32.totalorder %s15, 3
      %p106 = por %p104, %p105
      %p108 = scmp.ne.s32.totalorder %s91, %s107
      %p109 = scmp.eq.s32.totalorder %s15, 0
      %p110 = por %p108, %p109
      %p111 = scmp.le.s32.totalorder 1, %s9
      %p112 = scmp.lt.s32.totalorder %s9, 5
      %p113 = pnand %p111, %p112
      %p114 = pneg %p113
      // Predicated region
      $region9: #{forward.9} parent=5 // pred_check
        _
      $region10: #{forward.9} parent=5 // pred_check_branch
        %116 = sbr.rel (%p113) target = $region12
      $region11: #{forward.9} parent=5 // pred_region
        %s117 = ssub.s32 %s9, 1
        // Predicated region
        $region13: #{forward.9} parent=11 // pred_check
          %p118 = pneg %p30
        $region14: #{forward.9} parent=11 // pred_check_branch
          %120 = sbr.rel (%p118) target = $region16
        $region15: #{forward.9} parent=11 // pred_region
          _
        $region16: #{forward.9} parent=11 // pred_fallthru
          _
        // Predicated region
        $region17: #{forward.9} parent=11 // pred_check
          %p121 = pneg %p51
        $region18: #{forward.9} parent=11 // pred_check_branch
          %123 = sbr.rel (%p121) target = $region20
        $region19: #{forward.9} parent=11 // pred_region
          _
        $region20: #{forward.9} parent=11 // pred_fallthru
          _
      $region12: #{forward.9} parent=5 // pred_fallthru
        _
      %p124 = scmp.lt.s32.totalorder %s9, 4
      // Predicated region
      $region21: #{forward.9} parent=5 // pred_check
        %p125 = pneg %p124
      $region22: #{forward.9} parent=5 // pred_check_branch
        %127 = sbr.rel (%p125) target = $region24
      $region23: #{forward.9} parent=5 // pred_region
        // Predicated region
        $region25: #{forward.9} parent=23 // pred_check
          %p128 = pneg %p71
        $region26: #{forward.9} parent=23 // pred_check_branch
          %130 = sbr.rel (%p128) target = $region28
        $region27: #{forward.9} parent=23 // pred_region
          %s131 = sand.u32 %s61, 1
          %s132 = sand.u32 %s61, 1
          %s133 = smul.addr %s132, 1728
          %s134 = scalar_lea.vmem [#allocation2], %s133
          %s135 = smul.u32 4, %s9
          %s136 = smul.addr %s135, 4
          %s137 = scalar_lea.vmem %s2, %s136
          // Predicated region
          $region29: #{forward.9} parent=27 // pred_check
            _
          $region30: #{forward.9} parent=27 // pred_check_branch
            %139 = sbr.rel (0) target = $region32
          $region31: #{forward.9} parent=27 // pred_region
            // Predicated region
            $region33: #{forward.9} parent=31 // pred_check
              _
            $region34: #{forward.9} parent=31 // pred_check_branch
              %141 = sbr.rel (0) target = $region36
            $region35: #{forward.9} parent=31 // pred_region
              loop: start=0, step=1, limit=1
              $region37: #{forward.9} parent=35 // loop_pre_header
                _
              $region38: #{forward.9} parent=35 // loop_header
                %s143 = sphi 0, %s147
                %p144 = scmp.ge.s32.totalorder %s143, 1
                %s148 = sphi %s137, %s137
                %s149 = sphi %s134, %s134
              $region39: #{forward.9} parent=35 // loop_header_branch
                %146 = sbr.rel (%p144) target = $region43
              $region40: #{forward.9} parent=35 // loop_body
                %v150 = vld [vmem:[%s148] sm:$0xff]
                %151 = vst [vmem:[%s149] sm:$0xff] %v150
                %v152 = vld [vmem:[%s148 + $0x8] sm:$0xff]
                %153 = vst [vmem:[%s149 + $0x8] sm:$0xff] %v152
                %v154 = vld [vmem:[%s148 + $0x40] sm:$0xff]
                %155 = vst [vmem:[%s149 + $0x10] sm:$0xff] %v154
                %v156 = vld [vmem:[%s148 + $0x48] sm:$0xff]
                %157 = vst [vmem:[%s149 + $0x18] sm:$0xff] %v156
                %v158 = vld [vmem:[%s148 + $0x80] sm:$0xff]
                %159 = vst [vmem:[%s149 + $0x20] sm:$0xff] %v158
                %v160 = vld [vmem:[%s148 + $0x88] sm:$0xff]
                %161 = vst [vmem:[%s149 + $0x28] sm:$0xff] %v160
                %v162 = vld [vmem:[%s148 + $0xc0] sm:$0xff]
                %163 = vst [vmem:[%s149 + $0x30] sm:$0xff] %v162
                %v164 = vld [vmem:[%s148 + $0xc8] sm:$0xff]
                %165 = vst [vmem:[%s149 + $0x38] sm:$0xff] %v164
                %v166 = vld [vmem:[%s148 + $0x100] sm:$0xff]
                %167 = vst [vmem:[%s149 + $0x40] sm:$0xff] %v166
                %v168 = vld [vmem:[%s148 + $0x108] sm:$0xff]
                %169 = vst [vmem:[%s149 + $0x48] sm:$0xff] %v168
                %v170 = vld [vmem:[%s148 + $0x140] sm:$0xff]
                %171 = vst [vmem:[%s149 + $0x50] sm:$0xff] %v170
                %v172 = vld [vmem:[%s148 + $0x148] sm:$0xff]
                %173 = vst [vmem:[%s149 + $0x58] sm:$0xff] %v172
                %v174 = vld [vmem:[%s148 + $0x180] sm:$0xff]
                %175 = vst [vmem:[%s149 + $0x60] sm:$0xff] %v174
                %v176 = vld [vmem:[%s148 + $0x188] sm:$0xff]
                %177 = vst [vmem:[%s149 + $0x68] sm:$0xff] %v176
                %v178 = vld [vmem:[%s148 + $0x1c0] sm:$0xff]
                %179 = vst [vmem:[%s149 + $0x70] sm:$0xff] %v178
                %v180 = vld [vmem:[%s148 + $0x1c8] sm:$0xff]
                %181 = vst [vmem:[%s149 + $0x78] sm:$0xff] %v180
                %v182 = vld [vmem:[%s148 + $0x200] sm:$0xff]
                %183 = vst [vmem:[%s149 + $0x80] sm:$0xff] %v182
                %v184 = vld [vmem:[%s148 + $0x208] sm:$0xff]
                %185 = vst [vmem:[%s149 + $0x88] sm:$0xff] %v184
                %v186 = vld [vmem:[%s148 + $0x240] sm:$0xff]
                %187 = vst [vmem:[%s149 + $0x90] sm:$0xff] %v186
                %v188 = vld [vmem:[%s148 + $0x248] sm:$0xff]
                %189 = vst [vmem:[%s149 + $0x98] sm:$0xff] %v188
                %v190 = vld [vmem:[%s148 + $0x280] sm:$0xff]
                %191 = vst [vmem:[%s149 + $0xa0] sm:$0xff] %v190
                %v192 = vld [vmem:[%s148 + $0x288] sm:$0xff]
                %193 = vst [vmem:[%s149 + $0xa8] sm:$0xff] %v192
                %v194 = vld [vmem:[%s148 + $0x2c0] sm:$0xff]
                %195 = vst [vmem:[%s149 + $0xb0] sm:$0xff] %v194
                %v196 = vld [vmem:[%s148 + $0x2c8] sm:$0xff]
                %197 = vst [vmem:[%s149 + $0xb8] sm:$0xff] %v196
                %v198 = vld [vmem:[%s148 + $0x300] sm:$0xff]
                %199 = vst [vmem:[%s149 + $0xc0] sm:$0xff] %v198
                %v200 = vld [vmem:[%s148 + $0x308] sm:$0xff]
                %201 = vst [vmem:[%s149 + $0xc8] sm:$0xff] %v200
                %v202 = vld [vmem:[%s148 + $0x340] sm:$0xff]
                %203 = vst [vmem:[%s149 + $0xd0] sm:$0xff] %v202
                %v204 = vld [vmem:[%s148 + $0x348] sm:$0xff]
                %205 = vst [vmem:[%s149 + $0xd8] sm:$0xff] %v204
                %v206 = vld [vmem:[%s148 + $0x380] sm:$0xff]
                %207 = vst [vmem:[%s149 + $0xe0] sm:$0xff] %v206
                %v208 = vld [vmem:[%s148 + $0x388] sm:$0xff]
                %209 = vst [vmem:[%s149 + $0xe8] sm:$0xff] %v208
                %v210 = vld [vmem:[%s148 + $0x3c0] sm:$0xff]
                %211 = vst [vmem:[%s149 + $0xf0] sm:$0xff] %v210
                %v212 = vld [vmem:[%s148 + $0x3c8] sm:$0xff]
                %213 = vst [vmem:[%s149 + $0xf8] sm:$0xff] %v212
                %v214 = vld [vmem:[%s148 + $0x400] sm:$0xff]
                %215 = vst [vmem:[%s149 + $0x100] sm:$0xff] %v214
                %v216 = vld [vmem:[%s148 + $0x408] sm:$0xff]
                %217 = vst [vmem:[%s149 + $0x108] sm:$0xff] %v216
                %v218 = vld [vmem:[%s148 + $0x440] sm:$0xff]
                %219 = vst [vmem:[%s149 + $0x110] sm:$0xff] %v218
                %v220 = vld [vmem:[%s148 + $0x448] sm:$0xff]
                %221 = vst [vmem:[%s149 + $0x118] sm:$0xff] %v220
                %v222 = vld [vmem:[%s148 + $0x480] sm:$0xff]
                %223 = vst [vmem:[%s149 + $0x120] sm:$0xff] %v222
                %v224 = vld [vmem:[%s148 + $0x488] sm:$0xff]
                %225 = vst [vmem:[%s149 + $0x128] sm:$0xff] %v224
                %v226 = vld [vmem:[%s148 + $0x4c0] sm:$0xff]
                %227 = vst [vmem:[%s149 + $0x130] sm:$0xff] %v226
                %v228 = vld [vmem:[%s148 + $0x4c8] sm:$0xff]
                %229 = vst [vmem:[%s149 + $0x138] sm:$0xff] %v228
                %v230 = vld [vmem:[%s148 + $0x500] sm:$0xff]
                %231 = vst [vmem:[%s149 + $0x140] sm:$0xff] %v230
                %v232 = vld [vmem:[%s148 + $0x508] sm:$0xff]
                %233 = vst [vmem:[%s149 + $0x148] sm:$0xff] %v232
                %v234 = vld [vmem:[%s148 + $0x540] sm:$0xff]
                %235 = vst [vmem:[%s149 + $0x150] sm:$0xff] %v234
                %v236 = vld [vmem:[%s148 + $0x548] sm:$0xff]
                %237 = vst [vmem:[%s149 + $0x158] sm:$0xff] %v236
                %v238 = vld [vmem:[%s148 + $0x580] sm:$0xff]
                %239 = vst [vmem:[%s149 + $0x160] sm:$0xff] %v238
                %v240 = vld [vmem:[%s148 + $0x588] sm:$0xff]
                %241 = vst [vmem:[%s149 + $0x168] sm:$0xff] %v240
                %v242 = vld [vmem:[%s148 + $0x5c0] sm:$0xff]
                %243 = vst [vmem:[%s149 + $0x170] sm:$0xff] %v242
                %v244 = vld [vmem:[%s148 + $0x5c8] sm:$0xff]
                %245 = vst [vmem:[%s149 + $0x178] sm:$0xff] %v244
                %v246 = vld [vmem:[%s148 + $0x600] sm:$0xff]
                %247 = vst [vmem:[%s149 + $0x180] sm:$0xff] %v246
                %v248 = vld [vmem:[%s148 + $0x608] sm:$0xff]
                %249 = vst [vmem:[%s149 + $0x188] sm:$0xff] %v248
                %v250 = vld [vmem:[%s148 + $0x640] sm:$0xff]
                %251 = vst [vmem:[%s149 + $0x190] sm:$0xff] %v250
                %v252 = vld [vmem:[%s148 + $0x648] sm:$0xff]
                %253 = vst [vmem:[%s149 + $0x198] sm:$0xff] %v252
                %v254 = vld [vmem:[%s148 + $0x680] sm:$0xff]
                %255 = vst [vmem:[%s149 + $0x1a0] sm:$0xff] %v254
                %v256 = vld [vmem:[%s148 + $0x688] sm:$0xff]
                %257 = vst [vmem:[%s149 + $0x1a8] sm:$0xff] %v256
                %v258 = vld [vmem:[%s148 + $0x6c0] sm:$0xff]
                %259 = vst [vmem:[%s149 + $0x1b0] sm:$0xff] %v258
                %v260 = vld [vmem:[%s148 + $0x6c8] sm:$0xff]
                %261 = vst [vmem:[%s149 + $0x1b8] sm:$0xff] %v260
                %v262 = vld [vmem:[%s148 + $0x700] sm:$0xff]
                %263 = vst [vmem:[%s149 + $0x1c0] sm:$0xff] %v262
                %v264 = vld [vmem:[%s148 + $0x708] sm:$0xff]
                %265 = vst [vmem:[%s149 + $0x1c8] sm:$0xff] %v264
                %v266 = vld [vmem:[%s148 + $0x740] sm:$0xff]
                %267 = vst [vmem:[%s149 + $0x1d0] sm:$0xff] %v266
                %v268 = vld [vmem:[%s148 + $0x748] sm:$0xff]
                %269 = vst [vmem:[%s149 + $0x1d8] sm:$0xff] %v268
                %v270 = vld [vmem:[%s148 + $0x780] sm:$0xff]
                %271 = vst [vmem:[%s149 + $0x1e0] sm:$0xff] %v270
                %v272 = vld [vmem:[%s148 + $0x788] sm:$0xff]
                %273 = vst [vmem:[%s149 + $0x1e8] sm:$0xff] %v272
                %v274 = vld [vmem:[%s148 + $0x7c0] sm:$0xff]
                %275 = vst [vmem:[%s149 + $0x1f0] sm:$0xff] %v274
                %v276 = vld [vmem:[%s148 + $0x7c8] sm:$0xff]
                %277 = vst [vmem:[%s149 + $0x1f8] sm:$0xff] %v276
                %v278 = vld [vmem:[%s148 + $0x800] sm:$0xff]
                %279 = vst [vmem:[%s149 + $0x200] sm:$0xff] %v278
                %v280 = vld [vmem:[%s148 + $0x808] sm:$0xff]
                %281 = vst [vmem:[%s149 + $0x208] sm:$0xff] %v280
                %v282 = vld [vmem:[%s148 + $0x840] sm:$0xff]
                %283 = vst [vmem:[%s149 + $0x210] sm:$0xff] %v282
                %v284 = vld [vmem:[%s148 + $0x848] sm:$0xff]
                %285 = vst [vmem:[%s149 + $0x218] sm:$0xff] %v284
                %v286 = vld [vmem:[%s148 + $0x880] sm:$0xff]
                %287 = vst [vmem:[%s149 + $0x220] sm:$0xff] %v286
                %v288 = vld [vmem:[%s148 + $0x888] sm:$0xff]
                %289 = vst [vmem:[%s149 + $0x228] sm:$0xff] %v288
                %v290 = vld [vmem:[%s148 + $0x8c0] sm:$0xff]
                %291 = vst [vmem:[%s149 + $0x230] sm:$0xff] %v290
                %v292 = vld [vmem:[%s148 + $0x8c8] sm:$0xff]
                %293 = vst [vmem:[%s149 + $0x238] sm:$0xff] %v292
                %v294 = vld [vmem:[%s148 + $0x900] sm:$0xff]
                %295 = vst [vmem:[%s149 + $0x240] sm:$0xff] %v294
                %v296 = vld [vmem:[%s148 + $0x908] sm:$0xff]
                %297 = vst [vmem:[%s149 + $0x248] sm:$0xff] %v296
                %v298 = vld [vmem:[%s148 + $0x940] sm:$0xff]
                %299 = vst [vmem:[%s149 + $0x250] sm:$0xff] %v298
                %v300 = vld [vmem:[%s148 + $0x948] sm:$0xff]
                %301 = vst [vmem:[%s149 + $0x258] sm:$0xff] %v300
                %v302 = vld [vmem:[%s148 + $0x980] sm:$0xff]
                %303 = vst [vmem:[%s149 + $0x260] sm:$0xff] %v302
                %v304 = vld [vmem:[%s148 + $0x988] sm:$0xff]
                %305 = vst [vmem:[%s149 + $0x268] sm:$0xff] %v304
                %v306 = vld [vmem:[%s148 + $0x9c0] sm:$0xff]
                %307 = vst [vmem:[%s149 + $0x270] sm:$0xff] %v306
                %v308 = vld [vmem:[%s148 + $0x9c8] sm:$0xff]
                %309 = vst [vmem:[%s149 + $0x278] sm:$0xff] %v308
                %v310 = vld [vmem:[%s148 + $0xa00] sm:$0xff]
                %311 = vst [vmem:[%s149 + $0x280] sm:$0xff] %v310
                %v312 = vld [vmem:[%s148 + $0xa08] sm:$0xff]
                %313 = vst [vmem:[%s149 + $0x288] sm:$0xff] %v312
                %v314 = vld [vmem:[%s148 + $0xa40] sm:$0xff]
                %315 = vst [vmem:[%s149 + $0x290] sm:$0xff] %v314
                %v316 = vld [vmem:[%s148 + $0xa48] sm:$0xff]
                %317 = vst [vmem:[%s149 + $0x298] sm:$0xff] %v316
                %v318 = vld [vmem:[%s148 + $0xa80] sm:$0xff]
                %319 = vst [vmem:[%s149 + $0x2a0] sm:$0xff] %v318
                %v320 = vld [vmem:[%s148 + $0xa88] sm:$0xff]
                %321 = vst [vmem:[%s149 + $0x2a8] sm:$0xff] %v320
                %v322 = vld [vmem:[%s148 + $0xac0] sm:$0xff]
                %323 = vst [vmem:[%s149 + $0x2b0] sm:$0xff] %v322
                %v324 = vld [vmem:[%s148 + $0xac8] sm:$0xff]
                %325 = vst [vmem:[%s149 + $0x2b8] sm:$0xff] %v324
                %v326 = vld [vmem:[%s148 + $0xb00] sm:$0xff]
                %327 = vst [vmem:[%s149 + $0x2c0] sm:$0xff] %v326
                %v328 = vld [vmem:[%s148 + $0xb08] sm:$0xff]
                %329 = vst [vmem:[%s149 + $0x2c8] sm:$0xff] %v328
                %v330 = vld [vmem:[%s148 + $0xb40] sm:$0xff]
                %331 = vst [vmem:[%s149 + $0x2d0] sm:$0xff] %v330
                %v332 = vld [vmem:[%s148 + $0xb48] sm:$0xff]
                %333 = vst [vmem:[%s149 + $0x2d8] sm:$0xff] %v332
                %v334 = vld [vmem:[%s148 + $0xb80] sm:$0xff]
                %335 = vst [vmem:[%s149 + $0x2e0] sm:$0xff] %v334
                %v336 = vld [vmem:[%s148 + $0xb88] sm:$0xff]
                %337 = vst [vmem:[%s149 + $0x2e8] sm:$0xff] %v336
                %v338 = vld [vmem:[%s148 + $0xbc0] sm:$0xff]
                %339 = vst [vmem:[%s149 + $0x2f0] sm:$0xff] %v338
                %v340 = vld [vmem:[%s148 + $0xbc8] sm:$0xff]
                %341 = vst [vmem:[%s149 + $0x2f8] sm:$0xff] %v340
                %v342 = vld [vmem:[%s148 + $0xc00] sm:$0xff]
                %343 = vst [vmem:[%s149 + $0x300] sm:$0xff] %v342
                %v344 = vld [vmem:[%s148 + $0xc08] sm:$0xff]
                %345 = vst [vmem:[%s149 + $0x308] sm:$0xff] %v344
                %v346 = vld [vmem:[%s148 + $0xc40] sm:$0xff]
                %347 = vst [vmem:[%s149 + $0x310] sm:$0xff] %v346
                %v348 = vld [vmem:[%s148 + $0xc48] sm:$0xff]
                %349 = vst [vmem:[%s149 + $0x318] sm:$0xff] %v348
                %v350 = vld [vmem:[%s148 + $0xc80] sm:$0xff]
                %351 = vst [vmem:[%s149 + $0x320] sm:$0xff] %v350
                %v352 = vld [vmem:[%s148 + $0xc88] sm:$0xff]
                %353 = vst [vmem:[%s149 + $0x328] sm:$0xff] %v352
                %v354 = vld [vmem:[%s148 + $0xcc0] sm:$0xff]
                %355 = vst [vmem:[%s149 + $0x330] sm:$0xff] %v354
                %v356 = vld [vmem:[%s148 + $0xcc8] sm:$0xff]
                %357 = vst [vmem:[%s149 + $0x338] sm:$0xff] %v356
                %v358 = vld [vmem:[%s148 + $0xd00] sm:$0xff]
                %359 = vst [vmem:[%s149 + $0x340] sm:$0xff] %v358
                %v360 = vld [vmem:[%s148 + $0xd08] sm:$0xff]
                %361 = vst [vmem:[%s149 + $0x348] sm:$0xff] %v360
                %v362 = vld [vmem:[%s148 + $0xd40] sm:$0xff]
                %363 = vst [vmem:[%s149 + $0x350] sm:$0xff] %v362
                %v364 = vld [vmem:[%s148 + $0xd48] sm:$0xff]
                %365 = vst [vmem:[%s149 + $0x358] sm:$0xff] %v364
                %v366 = vld [vmem:[%s148 + $0xd80] sm:$0xff]
                %367 = vst [vmem:[%s149 + $0x360] sm:$0xff] %v366
                %v368 = vld [vmem:[%s148 + $0xd88] sm:$0xff]
                %369 = vst [vmem:[%s149 + $0x368] sm:$0xff] %v368
                %v370 = vld [vmem:[%s148 + $0xdc0] sm:$0xff]
                %371 = vst [vmem:[%s149 + $0x370] sm:$0xff] %v370
                %v372 = vld [vmem:[%s148 + $0xdc8] sm:$0xff]
                %373 = vst [vmem:[%s149 + $0x378] sm:$0xff] %v372
                %v374 = vld [vmem:[%s148 + $0xe00] sm:$0xff]
                %375 = vst [vmem:[%s149 + $0x380] sm:$0xff] %v374
                %v376 = vld [vmem:[%s148 + $0xe08] sm:$0xff]
                %377 = vst [vmem:[%s149 + $0x388] sm:$0xff] %v376
                %v378 = vld [vmem:[%s148 + $0xe40] sm:$0xff]
                %379 = vst [vmem:[%s149 + $0x390] sm:$0xff] %v378
                %v380 = vld [vmem:[%s148 + $0xe48] sm:$0xff]
                %381 = vst [vmem:[%s149 + $0x398] sm:$0xff] %v380
                %v382 = vld [vmem:[%s148 + $0xe80] sm:$0xff]
                %383 = vst [vmem:[%s149 + $0x3a0] sm:$0xff] %v382
                %v384 = vld [vmem:[%s148 + $0xe88] sm:$0xff]
                %385 = vst [vmem:[%s149 + $0x3a8] sm:$0xff] %v384
                %v386 = vld [vmem:[%s148 + $0xec0] sm:$0xff]
                %387 = vst [vmem:[%s149 + $0x3b0] sm:$0xff] %v386
                %v388 = vld [vmem:[%s148 + $0xec8] sm:$0xff]
                %389 = vst [vmem:[%s149 + $0x3b8] sm:$0xff] %v388
                %v390 = vld [vmem:[%s148 + $0xf00] sm:$0xff]
                %391 = vst [vmem:[%s149 + $0x3c0] sm:$0xff] %v390
                %v392 = vld [vmem:[%s148 + $0xf08] sm:$0xff]
                %393 = vst [vmem:[%s149 + $0x3c8] sm:$0xff] %v392
                %v394 = vld [vmem:[%s148 + $0xf40] sm:$0xff]
                %395 = vst [vmem:[%s149 + $0x3d0] sm:$0xff] %v394
                %v396 = vld [vmem:[%s148 + $0xf48] sm:$0xff]
                %397 = vst [vmem:[%s149 + $0x3d8] sm:$0xff] %v396
                %v398 = vld [vmem:[%s148 + $0xf80] sm:$0xff]
                %399 = vst [vmem:[%s149 + $0x3e0] sm:$0xff] %v398
                %v400 = vld [vmem:[%s148 + $0xf88] sm:$0xff]
                %401 = vst [vmem:[%s149 + $0x3e8] sm:$0xff] %v400
                %v402 = vld [vmem:[%s148 + $0xfc0] sm:$0xff]
                %403 = vst [vmem:[%s149 + $0x3f0] sm:$0xff] %v402
                %v404 = vld [vmem:[%s148 + $0xfc8] sm:$0xff]
                %405 = vst [vmem:[%s149 + $0x3f8] sm:$0xff] %v404
                %v406 = vld [vmem:[%s148 + $0x1000] sm:$0xff]
                %407 = vst [vmem:[%s149 + $0x400] sm:$0xff] %v406
                %v408 = vld [vmem:[%s148 + $0x1008] sm:$0xff]
                %409 = vst [vmem:[%s149 + $0x408] sm:$0xff] %v408
                %v410 = vld [vmem:[%s148 + $0x1040] sm:$0xff]
                %411 = vst [vmem:[%s149 + $0x410] sm:$0xff] %v410
                %v412 = vld [vmem:[%s148 + $0x1048] sm:$0xff]
                %413 = vst [vmem:[%s149 + $0x418] sm:$0xff] %v412
                %v414 = vld [vmem:[%s148 + $0x1080] sm:$0xff]
                %415 = vst [vmem:[%s149 + $0x420] sm:$0xff] %v414
                %v416 = vld [vmem:[%s148 + $0x1088] sm:$0xff]
                %417 = vst [vmem:[%s149 + $0x428] sm:$0xff] %v416
                %v418 = vld [vmem:[%s148 + $0x10c0] sm:$0xff]
                %419 = vst [vmem:[%s149 + $0x430] sm:$0xff] %v418
                %v420 = vld [vmem:[%s148 + $0x10c8] sm:$0xff]
                %421 = vst [vmem:[%s149 + $0x438] sm:$0xff] %v420
                %v422 = vld [vmem:[%s148 + $0x1100] sm:$0xff]
                %423 = vst [vmem:[%s149 + $0x440] sm:$0xff] %v422
                %v424 = vld [vmem:[%s148 + $0x1108] sm:$0xff]
                %425 = vst [vmem:[%s149 + $0x448] sm:$0xff] %v424
                %v426 = vld [vmem:[%s148 + $0x1140] sm:$0xff]
                %427 = vst [vmem:[%s149 + $0x450] sm:$0xff] %v426
                %v428 = vld [vmem:[%s148 + $0x1148] sm:$0xff]
                %429 = vst [vmem:[%s149 + $0x458] sm:$0xff] %v428
                %v430 = vld [vmem:[%s148 + $0x1180] sm:$0xff]
                %431 = vst [vmem:[%s149 + $0x460] sm:$0xff] %v430
                %v432 = vld [vmem:[%s148 + $0x1188] sm:$0xff]
                %433 = vst [vmem:[%s149 + $0x468] sm:$0xff] %v432
                %v434 = vld [vmem:[%s148 + $0x11c0] sm:$0xff]
                %435 = vst [vmem:[%s149 + $0x470] sm:$0xff] %v434
                %v436 = vld [vmem:[%s148 + $0x11c8] sm:$0xff]
                %437 = vst [vmem:[%s149 + $0x478] sm:$0xff] %v436
                %v438 = vld [vmem:[%s148 + $0x1200] sm:$0xff]
                %439 = vst [vmem:[%s149 + $0x480] sm:$0xff] %v438
                %v440 = vld [vmem:[%s148 + $0x1208] sm:$0xff]
                %441 = vst [vmem:[%s149 + $0x488] sm:$0xff] %v440
                %v442 = vld [vmem:[%s148 + $0x1240] sm:$0xff]
                %443 = vst [vmem:[%s149 + $0x490] sm:$0xff] %v442
                %v444 = vld [vmem:[%s148 + $0x1248] sm:$0xff]
                %445 = vst [vmem:[%s149 + $0x498] sm:$0xff] %v444
                %v446 = vld [vmem:[%s148 + $0x1280] sm:$0xff]
                %447 = vst [vmem:[%s149 + $0x4a0] sm:$0xff] %v446
                %v448 = vld [vmem:[%s148 + $0x1288] sm:$0xff]
                %449 = vst [vmem:[%s149 + $0x4a8] sm:$0xff] %v448
                %v450 = vld [vmem:[%s148 + $0x12c0] sm:$0xff]
                %451 = vst [vmem:[%s149 + $0x4b0] sm:$0xff] %v450
                %v452 = vld [vmem:[%s148 + $0x12c8] sm:$0xff]
                %453 = vst [vmem:[%s149 + $0x4b8] sm:$0xff] %v452
                %v454 = vld [vmem:[%s148 + $0x1300] sm:$0xff]
                %455 = vst [vmem:[%s149 + $0x4c0] sm:$0xff] %v454
                %v456 = vld [vmem:[%s148 + $0x1308] sm:$0xff]
                %457 = vst [vmem:[%s149 + $0x4c8] sm:$0xff] %v456
                %v458 = vld [vmem:[%s148 + $0x1340] sm:$0xff]
                %459 = vst [vmem:[%s149 + $0x4d0] sm:$0xff] %v458
                %v460 = vld [vmem:[%s148 + $0x1348] sm:$0xff]
                %461 = vst [vmem:[%s149 + $0x4d8] sm:$0xff] %v460
                %v462 = vld [vmem:[%s148 + $0x1380] sm:$0xff]
                %463 = vst [vmem:[%s149 + $0x4e0] sm:$0xff] %v462
                %v464 = vld [vmem:[%s148 + $0x1388] sm:$0xff]
                %465 = vst [vmem:[%s149 + $0x4e8] sm:$0xff] %v464
                %v466 = vld [vmem:[%s148 + $0x13c0] sm:$0xff]
                %467 = vst [vmem:[%s149 + $0x4f0] sm:$0xff] %v466
                %v468 = vld [vmem:[%s148 + $0x13c8] sm:$0xff]
                %469 = vst [vmem:[%s149 + $0x4f8] sm:$0xff] %v468
                %v470 = vld [vmem:[%s148 + $0x1400] sm:$0xff]
                %471 = vst [vmem:[%s149 + $0x500] sm:$0xff] %v470
                %v472 = vld [vmem:[%s148 + $0x1408] sm:$0xff]
                %473 = vst [vmem:[%s149 + $0x508] sm:$0xff] %v472
                %v474 = vld [vmem:[%s148 + $0x1440] sm:$0xff]
                %475 = vst [vmem:[%s149 + $0x510] sm:$0xff] %v474
                %v476 = vld [vmem:[%s148 + $0x1448] sm:$0xff]
                %477 = vst [vmem:[%s149 + $0x518] sm:$0xff] %v476
                %v478 = vld [vmem:[%s148 + $0x1480] sm:$0xff]
                %479 = vst [vmem:[%s149 + $0x520] sm:$0xff] %v478
                %v480 = vld [vmem:[%s148 + $0x1488] sm:$0xff]
                %481 = vst [vmem:[%s149 + $0x528] sm:$0xff] %v480
                %v482 = vld [vmem:[%s148 + $0x14c0] sm:$0xff]
                %483 = vst [vmem:[%s149 + $0x530] sm:$0xff] %v482
                %v484 = vld [vmem:[%s148 + $0x14c8] sm:$0xff]
                %485 = vst [vmem:[%s149 + $0x538] sm:$0xff] %v484
                %v486 = vld [vmem:[%s148 + $0x1500] sm:$0xff]
                %487 = vst [vmem:[%s149 + $0x540] sm:$0xff] %v486
                %v488 = vld [vmem:[%s148 + $0x1508] sm:$0xff]
                %489 = vst [vmem:[%s149 + $0x548] sm:$0xff] %v488
                %v490 = vld [vmem:[%s148 + $0x1540] sm:$0xff]
                %491 = vst [vmem:[%s149 + $0x550] sm:$0xff] %v490
                %v492 = vld [vmem:[%s148 + $0x1548] sm:$0xff]
                %493 = vst [vmem:[%s149 + $0x558] sm:$0xff] %v492
                %v494 = vld [vmem:[%s148 + $0x1580] sm:$0xff]
                %495 = vst [vmem:[%s149 + $0x560] sm:$0xff] %v494
                %v496 = vld [vmem:[%s148 + $0x1588] sm:$0xff]
                %497 = vst [vmem:[%s149 + $0x568] sm:$0xff] %v496
                %v498 = vld [vmem:[%s148 + $0x15c0] sm:$0xff]
                %499 = vst [vmem:[%s149 + $0x570] sm:$0xff] %v498
                %v500 = vld [vmem:[%s148 + $0x15c8] sm:$0xff]
                %501 = vst [vmem:[%s149 + $0x578] sm:$0xff] %v500
                %v502 = vld [vmem:[%s148 + $0x1600] sm:$0xff]
                %503 = vst [vmem:[%s149 + $0x580] sm:$0xff] %v502
                %v504 = vld [vmem:[%s148 + $0x1608] sm:$0xff]
                %505 = vst [vmem:[%s149 + $0x588] sm:$0xff] %v504
                %v506 = vld [vmem:[%s148 + $0x1640] sm:$0xff]
                %507 = vst [vmem:[%s149 + $0x590] sm:$0xff] %v506
                %v508 = vld [vmem:[%s148 + $0x1648] sm:$0xff]
                %509 = vst [vmem:[%s149 + $0x598] sm:$0xff] %v508
                %v510 = vld [vmem:[%s148 + $0x1680] sm:$0xff]
                %511 = vst [vmem:[%s149 + $0x5a0] sm:$0xff] %v510
                %v512 = vld [vmem:[%s148 + $0x1688] sm:$0xff]
                %513 = vst [vmem:[%s149 + $0x5a8] sm:$0xff] %v512
                %v514 = vld [vmem:[%s148 + $0x16c0] sm:$0xff]
                %515 = vst [vmem:[%s149 + $0x5b0] sm:$0xff] %v514
                %v516 = vld [vmem:[%s148 + $0x16c8] sm:$0xff]
                %517 = vst [vmem:[%s149 + $0x5b8] sm:$0xff] %v516
                %v518 = vld [vmem:[%s148 + $0x1700] sm:$0xff]
                %519 = vst [vmem:[%s149 + $0x5c0] sm:$0xff] %v518
                %v520 = vld [vmem:[%s148 + $0x1708] sm:$0xff]
                %521 = vst [vmem:[%s149 + $0x5c8] sm:$0xff] %v520
                %v522 = vld [vmem:[%s148 + $0x1740] sm:$0xff]
                %523 = vst [vmem:[%s149 + $0x5d0] sm:$0xff] %v522
                %v524 = vld [vmem:[%s148 + $0x1748] sm:$0xff]
                %525 = vst [vmem:[%s149 + $0x5d8] sm:$0xff] %v524
                %v526 = vld [vmem:[%s148 + $0x1780] sm:$0xff]
                %527 = vst [vmem:[%s149 + $0x5e0] sm:$0xff] %v526
                %v528 = vld [vmem:[%s148 + $0x1788] sm:$0xff]
                %529 = vst [vmem:[%s149 + $0x5e8] sm:$0xff] %v528
                %v530 = vld [vmem:[%s148 + $0x17c0] sm:$0xff]
                %531 = vst [vmem:[%s149 + $0x5f0] sm:$0xff] %v530
                %v532 = vld [vmem:[%s148 + $0x17c8] sm:$0xff]
                %533 = vst [vmem:[%s149 + $0x5f8] sm:$0xff] %v532
                %v534 = vld [vmem:[%s148 + $0x1800] sm:$0xff]
                %535 = vst [vmem:[%s149 + $0x600] sm:$0xff] %v534
                %v536 = vld [vmem:[%s148 + $0x1808] sm:$0xff]
                %537 = vst [vmem:[%s149 + $0x608] sm:$0xff] %v536
                %v538 = vld [vmem:[%s148 + $0x1840] sm:$0xff]
                %539 = vst [vmem:[%s149 + $0x610] sm:$0xff] %v538
                %v540 = vld [vmem:[%s148 + $0x1848] sm:$0xff]
                %541 = vst [vmem:[%s149 + $0x618] sm:$0xff] %v540
                %v542 = vld [vmem:[%s148 + $0x1880] sm:$0xff]
                %543 = vst [vmem:[%s149 + $0x620] sm:$0xff] %v542
                %v544 = vld [vmem:[%s148 + $0x1888] sm:$0xff]
                %545 = vst [vmem:[%s149 + $0x628] sm:$0xff] %v544
                %v546 = vld [vmem:[%s148 + $0x18c0] sm:$0xff]
                %547 = vst [vmem:[%s149 + $0x630] sm:$0xff] %v546
                %v548 = vld [vmem:[%s148 + $0x18c8] sm:$0xff]
                %549 = vst [vmem:[%s149 + $0x638] sm:$0xff] %v548
                %v550 = vld [vmem:[%s148 + $0x1900] sm:$0xff]
                %551 = vst [vmem:[%s149 + $0x640] sm:$0xff] %v550
                %v552 = vld [vmem:[%s148 + $0x1908] sm:$0xff]
                %553 = vst [vmem:[%s149 + $0x648] sm:$0xff] %v552
                %v554 = vld [vmem:[%s148 + $0x1940] sm:$0xff]
                %555 = vst [vmem:[%s149 + $0x650] sm:$0xff] %v554
                %v556 = vld [vmem:[%s148 + $0x1948] sm:$0xff]
                %557 = vst [vmem:[%s149 + $0x658] sm:$0xff] %v556
                %v558 = vld [vmem:[%s148 + $0x1980] sm:$0xff]
                %559 = vst [vmem:[%s149 + $0x660] sm:$0xff] %v558
                %v560 = vld [vmem:[%s148 + $0x1988] sm:$0xff]
                %561 = vst [vmem:[%s149 + $0x668] sm:$0xff] %v560
                %v562 = vld [vmem:[%s148 + $0x19c0] sm:$0xff]
                %563 = vst [vmem:[%s149 + $0x670] sm:$0xff] %v562
                %v564 = vld [vmem:[%s148 + $0x19c8] sm:$0xff]
                %565 = vst [vmem:[%s149 + $0x678] sm:$0xff] %v564
                %v566 = vld [vmem:[%s148 + $0x1a00] sm:$0xff]
                %567 = vst [vmem:[%s149 + $0x680] sm:$0xff] %v566
                %v568 = vld [vmem:[%s148 + $0x1a08] sm:$0xff]
                %569 = vst [vmem:[%s149 + $0x688] sm:$0xff] %v568
                %v570 = vld [vmem:[%s148 + $0x1a40] sm:$0xff]
                %571 = vst [vmem:[%s149 + $0x690] sm:$0xff] %v570
                %v572 = vld [vmem:[%s148 + $0x1a48] sm:$0xff]
                %573 = vst [vmem:[%s149 + $0x698] sm:$0xff] %v572
                %v574 = vld [vmem:[%s148 + $0x1a80] sm:$0xff]
                %575 = vst [vmem:[%s149 + $0x6a0] sm:$0xff] %v574
                %v576 = vld [vmem:[%s148 + $0x1a88] sm:$0xff]
                %577 = vst [vmem:[%s149 + $0x6a8] sm:$0xff] %v576
                %v578 = vld [vmem:[%s148 + $0x1ac0] sm:$0xff]
                %579 = vst [vmem:[%s149 + $0x6b0] sm:$0xff] %v578
                %v580 = vld [vmem:[%s148 + $0x1ac8] sm:$0xff]
                %581 = vst [vmem:[%s149 + $0x6b8] sm:$0xff] %v580
              $region41: #{forward.9} parent=35 // loop_footer
                %s147 = sadd.s32 1, %s143
              $region42: #{forward.9} parent=35 // loop_footer_branch
                %142 = sbr.rel target = $region38
              $region43: #{forward.9} parent=35 // loop_exit
                _
            $region36: #{forward.9} parent=31 // pred_fallthru
              _
            // Predicated region
            $region44: #{forward.9} parent=31 // pred_check
              _
            $region45: #{forward.9} parent=31 // pred_check_branch
              %583 = sbr.rel target = $region47
            $region46: #{forward.9} parent=31 // pred_region
              _
            $region47: #{forward.9} parent=31 // pred_fallthru
              _
          $region32: #{forward.9} parent=27 // pred_fallthru
            _
          %584 = vnop
        $region28: #{forward.9} parent=23 // pred_fallthru
          _
      $region24: #{forward.9} parent=5 // pred_fallthru
        _
      %p585 = scmp.le.s32.totalorder 1, %s9
      %p586 = scmp.lt.s32.totalorder %s9, 5
      %p587 = pnand %p585, %p586
      %p588 = pneg %p587
      // Predicated region
      $region48: #{forward.9} parent=5 // pred_check
        _
      $region49: #{forward.9} parent=5 // pred_check_branch
        %590 = sbr.rel (%p587) target = $region51
      $region50: #{forward.9} parent=5 // pred_region
        %s591 = ssub.s32 %s9, 1
        %s592 = sand.u32 %s64, 1
        %s593 = sand.u32 %s64, 1
        %s594 = smul.addr %s593, 1728
        %s595 = scalar_lea.vmem [#allocation2], %s594
        // Predicated region
        $region52: #{forward.9} parent=50 // pred_check
          %p596 = pneg %p77
        $region53: #{forward.9} parent=50 // pred_check_branch
          %598 = sbr.rel (%p596) target = $region55
        $region54: #{forward.9} parent=50 // pred_region
          _
        $region55: #{forward.9} parent=50 // pred_fallthru
          _
        %p599 = pneg %p30
        %p600 = pneg %p27
        %p601 = pneg %p51
        %p602 = pneg %p48
        %s603 = sand.u32 %s64, 1
        %s604 = sand.u32 %s64, 1
        %s605 = smul.addr %s604, 1728
        %s606 = scalar_lea.vmem [#allocation2], %s605
        %p607 = pneg %p77
        %p608 = pneg %p74
        %p609 = pneg %p103
        %p610 = pneg %p100
        %s611 = sand.u32 %s90, 1
        %s612 = sand.u32 %s90, 1
        %s613 = smul.addr %s612, 64
        %s614 = scalar_lea.vmem [#allocation3], %s613
        %s615 = smul.u32 4, %s14
        %s616 = smul.u32 4, %s14
        %v618 = vld [vmem:[%s0] sm:$0xff]
        %v619 = vld [vmem:[%s0 + $0x8] sm:$0xff]
        %v620 = vld [vmem:[%s0 + $0x10] sm:$0xff]
        %v621 = vld [vmem:[%s0 + $0x18] sm:$0xf]
        %v622 = vld [vmem:[%s0 + $0x1c] sm:$0xff]
        %v623 = vld [vmem:[%s0 + $0x24] sm:$0xff]
        %v624 = vld [vmem:[%s0 + $0x2c] sm:$0xff]
        %v625 = vld [vmem:[%s0 + $0x34] sm:$0xf]
        %v626 = vld [vmem:[%s0 + $0x38] sm:$0xff]
        %v627 = vld [vmem:[%s0 + $0x40] sm:$0xff]
        %v628 = vld [vmem:[%s0 + $0x48] sm:$0xff]
        %v629 = vld [vmem:[%s0 + $0x50] sm:$0xf]
        %v630 = vld [vmem:[%s0 + $0x54] sm:$0xff]
        %v631 = vld [vmem:[%s0 + $0x5c] sm:$0xff]
        %v632 = vld [vmem:[%s0 + $0x64] sm:$0xff]
        %v633 = vld [vmem:[%s0 + $0x6c] sm:$0xf]
        %v634 = vld [vmem:[%s595] sm:$0xff]
        %v635 = vld [vmem:[%s595 + $0x8] sm:$0xff]
        %v636 = vld [vmem:[%s595 + $0x10] sm:$0xff]
        %v637 = vld [vmem:[%s595 + $0x18] sm:$0xff]
        %v638 = vld [vmem:[%s595 + $0x20] sm:$0xff]
        %v639 = vld [vmem:[%s595 + $0x28] sm:$0xff]
        %v640 = vld [vmem:[%s595 + $0x30] sm:$0xff]
        %v641 = vld [vmem:[%s595 + $0x38] sm:$0xff]
        %v642 = vld [vmem:[%s595 + $0x40] sm:$0xff]
        %v643 = vld [vmem:[%s595 + $0x48] sm:$0xff]
        %v644 = vld [vmem:[%s595 + $0x50] sm:$0xff]
        %v645 = vld [vmem:[%s595 + $0x58] sm:$0xff]
        %v646 = vld [vmem:[%s595 + $0x60] sm:$0xff]
        %v647 = vld [vmem:[%s595 + $0x68] sm:$0xff]
        %v648 = vld [vmem:[%s595 + $0x70] sm:$0xff]
        %v649 = vld [vmem:[%s595 + $0x78] sm:$0xff]
        %v650 = vld [vmem:[%s595 + $0x80] sm:$0xff]
        %v651 = vld [vmem:[%s595 + $0x88] sm:$0xff]
        %v652 = vld [vmem:[%s595 + $0x90] sm:$0xff]
        %v653 = vld [vmem:[%s595 + $0x98] sm:$0xff]
        %v654 = vld [vmem:[%s595 + $0xa0] sm:$0xff]
        %v655 = vld [vmem:[%s595 + $0xa8] sm:$0xff]
        %v656 = vld [vmem:[%s595 + $0xb0] sm:$0xff]
        %v657 = vld [vmem:[%s595 + $0xb8] sm:$0xff]
        %v658 = vld [vmem:[%s595 + $0xc0] sm:$0xff]
        %v659 = vld [vmem:[%s595 + $0xc8] sm:$0xff]
        %v660 = vld [vmem:[%s595 + $0xd0] sm:$0xff]
        %v661 = vld [vmem:[%s595 + $0xd8] sm:$0xff]
        %v662 = vld [vmem:[%s595 + $0xe0] sm:$0xff]
        %v663 = vld [vmem:[%s595 + $0xe8] sm:$0xff]
        %v664 = vld [vmem:[%s595 + $0xf0] sm:$0xff]
        %v665 = vld [vmem:[%s595 + $0xf8] sm:$0xff]
        %v666 = vld [vmem:[%s595 + $0x100] sm:$0xff]
        %v667 = vld [vmem:[%s595 + $0x108] sm:$0xff]
        %v668 = vld [vmem:[%s595 + $0x110] sm:$0xff]
        %v669 = vld [vmem:[%s595 + $0x118] sm:$0xff]
        %v670 = vld [vmem:[%s595 + $0x120] sm:$0xff]
        %v671 = vld [vmem:[%s595 + $0x128] sm:$0xff]
        %v672 = vld [vmem:[%s595 + $0x130] sm:$0xff]
        %v673 = vld [vmem:[%s595 + $0x138] sm:$0xff]
        %v674 = vld [vmem:[%s595 + $0x140] sm:$0xff]
        %v675 = vld [vmem:[%s595 + $0x148] sm:$0xff]
        %v676 = vld [vmem:[%s595 + $0x150] sm:$0xff]
        %v677 = vld [vmem:[%s595 + $0x158] sm:$0xff]
        %v678 = vld [vmem:[%s595 + $0x160] sm:$0xff]
        %v679 = vld [vmem:[%s595 + $0x168] sm:$0xff]
        %v680 = vld [vmem:[%s595 + $0x170] sm:$0xff]
        %v681 = vld [vmem:[%s595 + $0x178] sm:$0xff]
        %v682 = vld [vmem:[%s595 + $0x180] sm:$0xff]
        %v683 = vld [vmem:[%s595 + $0x188] sm:$0xff]
        %v684 = vld [vmem:[%s595 + $0x190] sm:$0xff]
        %v685 = vld [vmem:[%s595 + $0x198] sm:$0xff]
        %v686 = vld [vmem:[%s595 + $0x1a0] sm:$0xff]
        %v687 = vld [vmem:[%s595 + $0x1a8] sm:$0xff]
        %v688 = vld [vmem:[%s595 + $0x1b0] sm:$0xff]
        %v689 = vld [vmem:[%s595 + $0x1b8] sm:$0xff]
        %v690 = vld [vmem:[%s595 + $0x1c0] sm:$0xff]
        %v691 = vld [vmem:[%s595 + $0x1c8] sm:$0xff]
        %v692 = vld [vmem:[%s595 + $0x1d0] sm:$0xff]
        %v693 = vld [vmem:[%s595 + $0x1d8] sm:$0xff]
        %v694 = vld [vmem:[%s595 + $0x1e0] sm:$0xff]
        %v695 = vld [vmem:[%s595 + $0x1e8] sm:$0xff]
        %v696 = vld [vmem:[%s595 + $0x1f0] sm:$0xff]
        %v697 = vld [vmem:[%s595 + $0x1f8] sm:$0xff]
        %v698 = vld [vmem:[%s595 + $0x200] sm:$0xff]
        %v699 = vld [vmem:[%s595 + $0x208] sm:$0xff]
        %v700 = vld [vmem:[%s595 + $0x210] sm:$0xff]
        %v701 = vld [vmem:[%s595 + $0x218] sm:$0xff]
        %v702 = vld [vmem:[%s595 + $0x220] sm:$0xff]
        %v703 = vld [vmem:[%s595 + $0x228] sm:$0xff]
        %v704 = vld [vmem:[%s595 + $0x230] sm:$0xff]
        %v705 = vld [vmem:[%s595 + $0x238] sm:$0xff]
        %v706 = vld [vmem:[%s595 + $0x240] sm:$0xff]
        %v707 = vld [vmem:[%s595 + $0x248] sm:$0xff]
        %v708 = vld [vmem:[%s595 + $0x250] sm:$0xff]
        %v709 = vld [vmem:[%s595 + $0x258] sm:$0xff]
        %v710 = vld [vmem:[%s595 + $0x260] sm:$0xff]
        %v711 = vld [vmem:[%s595 + $0x268] sm:$0xff]
        %v712 = vld [vmem:[%s595 + $0x270] sm:$0xff]
        %v713 = vld [vmem:[%s595 + $0x278] sm:$0xff]
        %v714 = vld [vmem:[%s595 + $0x280] sm:$0xff]
        %v715 = vld [vmem:[%s595 + $0x288] sm:$0xff]
        %v716 = vld [vmem:[%s595 + $0x290] sm:$0xff]
        %v717 = vld [vmem:[%s595 + $0x298] sm:$0xff]
        %v718 = vld [vmem:[%s595 + $0x2a0] sm:$0xff]
        %v719 = vld [vmem:[%s595 + $0x2a8] sm:$0xff]
        %v720 = vld [vmem:[%s595 + $0x2b0] sm:$0xff]
        %v721 = vld [vmem:[%s595 + $0x2b8] sm:$0xff]
        %v722 = vld [vmem:[%s595 + $0x2c0] sm:$0xff]
        %v723 = vld [vmem:[%s595 + $0x2c8] sm:$0xff]
        %v724 = vld [vmem:[%s595 + $0x2d0] sm:$0xff]
        %v725 = vld [vmem:[%s595 + $0x2d8] sm:$0xff]
        %v726 = vld [vmem:[%s595 + $0x2e0] sm:$0xff]
        %v727 = vld [vmem:[%s595 + $0x2e8] sm:$0xff]
        %v728 = vld [vmem:[%s595 + $0x2f0] sm:$0xff]
        %v729 = vld [vmem:[%s595 + $0x2f8] sm:$0xff]
        %v730 = vld [vmem:[%s595 + $0x300] sm:$0xff]
        %v731 = vld [vmem:[%s595 + $0x308] sm:$0xff]
        %v732 = vld [vmem:[%s595 + $0x310] sm:$0xff]
        %v733 = vld [vmem:[%s595 + $0x318] sm:$0xff]
        %v734 = vld [vmem:[%s595 + $0x320] sm:$0xff]
        %v735 = vld [vmem:[%s595 + $0x328] sm:$0xff]
        %v736 = vld [vmem:[%s595 + $0x330] sm:$0xff]
        %v737 = vld [vmem:[%s595 + $0x338] sm:$0xff]
        %v738 = vld [vmem:[%s595 + $0x340] sm:$0xff]
        %v739 = vld [vmem:[%s595 + $0x348] sm:$0xff]
        %v740 = vld [vmem:[%s595 + $0x350] sm:$0xff]
        %v741 = vld [vmem:[%s595 + $0x358] sm:$0xff]
        %v742 = vld [vmem:[%s595 + $0x360] sm:$0xff]
        %v743 = vld [vmem:[%s595 + $0x368] sm:$0xff]
        %v744 = vld [vmem:[%s595 + $0x370] sm:$0xff]
        %v745 = vld [vmem:[%s595 + $0x378] sm:$0xff]
        %v746 = vld [vmem:[%s595 + $0x380] sm:$0xff]
        %v747 = vld [vmem:[%s595 + $0x388] sm:$0xff]
        %v748 = vld [vmem:[%s595 + $0x390] sm:$0xff]
        %v749 = vld [vmem:[%s595 + $0x398] sm:$0xff]
        %v750 = vld [vmem:[%s595 + $0x3a0] sm:$0xff]
        %v751 = vld [vmem:[%s595 + $0x3a8] sm:$0xff]
        %v752 = vld [vmem:[%s595 + $0x3b0] sm:$0xff]
        %v753 = vld [vmem:[%s595 + $0x3b8] sm:$0xff]
        %v754 = vld [vmem:[%s595 + $0x3c0] sm:$0xff]
        %v755 = vld [vmem:[%s595 + $0x3c8] sm:$0xff]
        %v756 = vld [vmem:[%s595 + $0x3d0] sm:$0xff]
        %v757 = vld [vmem:[%s595 + $0x3d8] sm:$0xff]
        %v758 = vld [vmem:[%s595 + $0x3e0] sm:$0xff]
        %v759 = vld [vmem:[%s595 + $0x3e8] sm:$0xff]
        %v760 = vld [vmem:[%s595 + $0x3f0] sm:$0xff]
        %v761 = vld [vmem:[%s595 + $0x3f8] sm:$0xff]
        %v762 = vld [vmem:[%s595 + $0x400] sm:$0xff]
        %v763 = vld [vmem:[%s595 + $0x408] sm:$0xff]
        %v764 = vld [vmem:[%s595 + $0x410] sm:$0xff]
        %v765 = vld [vmem:[%s595 + $0x418] sm:$0xff]
        %v766 = vld [vmem:[%s595 + $0x420] sm:$0xff]
        %v767 = vld [vmem:[%s595 + $0x428] sm:$0xff]
        %v768 = vld [vmem:[%s595 + $0x430] sm:$0xff]
        %v769 = vld [vmem:[%s595 + $0x438] sm:$0xff]
        %v770 = vld [vmem:[%s595 + $0x440] sm:$0xff]
        %v771 = vld [vmem:[%s595 + $0x448] sm:$0xff]
        %v772 = vld [vmem:[%s595 + $0x450] sm:$0xff]
        %v773 = vld [vmem:[%s595 + $0x458] sm:$0xff]
        %v774 = vld [vmem:[%s595 + $0x460] sm:$0xff]
        %v775 = vld [vmem:[%s595 + $0x468] sm:$0xff]
        %v776 = vld [vmem:[%s595 + $0x470] sm:$0xff]
        %v777 = vld [vmem:[%s595 + $0x478] sm:$0xff]
        %v778 = vld [vmem:[%s595 + $0x480] sm:$0xff]
        %v779 = vld [vmem:[%s595 + $0x488] sm:$0xff]
        %v780 = vld [vmem:[%s595 + $0x490] sm:$0xff]
        %v781 = vld [vmem:[%s595 + $0x498] sm:$0xff]
        %v782 = vld [vmem:[%s595 + $0x4a0] sm:$0xff]
        %v783 = vld [vmem:[%s595 + $0x4a8] sm:$0xff]
        %v784 = vld [vmem:[%s595 + $0x4b0] sm:$0xff]
        %v785 = vld [vmem:[%s595 + $0x4b8] sm:$0xff]
        %v786 = vld [vmem:[%s595 + $0x4c0] sm:$0xff]
        %v787 = vld [vmem:[%s595 + $0x4c8] sm:$0xff]
        %v788 = vld [vmem:[%s595 + $0x4d0] sm:$0xff]
        %v789 = vld [vmem:[%s595 + $0x4d8] sm:$0xff]
        %v790 = vld [vmem:[%s595 + $0x4e0] sm:$0xff]
        %v791 = vld [vmem:[%s595 + $0x4e8] sm:$0xff]
        %v792 = vld [vmem:[%s595 + $0x4f0] sm:$0xff]
        %v793 = vld [vmem:[%s595 + $0x4f8] sm:$0xff]
        %v794 = vld [vmem:[%s595 + $0x500] sm:$0xff]
        %v795 = vld [vmem:[%s595 + $0x508] sm:$0xff]
        %v796 = vld [vmem:[%s595 + $0x510] sm:$0xff]
        %v797 = vld [vmem:[%s595 + $0x518] sm:$0xff]
        %v798 = vld [vmem:[%s595 + $0x520] sm:$0xff]
        %v799 = vld [vmem:[%s595 + $0x528] sm:$0xff]
        %v800 = vld [vmem:[%s595 + $0x530] sm:$0xff]
        %v801 = vld [vmem:[%s595 + $0x538] sm:$0xff]
        %v802 = vld [vmem:[%s595 + $0x540] sm:$0xff]
        %v803 = vld [vmem:[%s595 + $0x548] sm:$0xff]
        %v804 = vld [vmem:[%s595 + $0x550] sm:$0xff]
        %v805 = vld [vmem:[%s595 + $0x558] sm:$0xff]
        %v806 = vld [vmem:[%s595 + $0x560] sm:$0xff]
        %v807 = vld [vmem:[%s595 + $0x568] sm:$0xff]
        %v808 = vld [vmem:[%s595 + $0x570] sm:$0xff]
        %v809 = vld [vmem:[%s595 + $0x578] sm:$0xff]
        %v810 = vld [vmem:[%s595 + $0x580] sm:$0xff]
        %v811 = vld [vmem:[%s595 + $0x588] sm:$0xff]
        %v812 = vld [vmem:[%s595 + $0x590] sm:$0xff]
        %v813 = vld [vmem:[%s595 + $0x598] sm:$0xff]
        %v814 = vld [vmem:[%s595 + $0x5a0] sm:$0xff]
        %v815 = vld [vmem:[%s595 + $0x5a8] sm:$0xff]
        %v816 = vld [vmem:[%s595 + $0x5b0] sm:$0xff]
        %v817 = vld [vmem:[%s595 + $0x5b8] sm:$0xff]
        %v818 = vld [vmem:[%s595 + $0x5c0] sm:$0xff]
        %v819 = vld [vmem:[%s595 + $0x5c8] sm:$0xff]
        %v820 = vld [vmem:[%s595 + $0x5d0] sm:$0xff]
        %v821 = vld [vmem:[%s595 + $0x5d8] sm:$0xff]
        %v822 = vld [vmem:[%s595 + $0x5e0] sm:$0xff]
        %v823 = vld [vmem:[%s595 + $0x5e8] sm:$0xff]
        %v824 = vld [vmem:[%s595 + $0x5f0] sm:$0xff]
        %v825 = vld [vmem:[%s595 + $0x5f8] sm:$0xff]
        %v826 = vld [vmem:[%s595 + $0x600] sm:$0xff]
        %v827 = vld [vmem:[%s595 + $0x608] sm:$0xff]
        %v828 = vld [vmem:[%s595 + $0x610] sm:$0xff]
        %v829 = vld [vmem:[%s595 + $0x618] sm:$0xff]
        %v830 = vld [vmem:[%s595 + $0x620] sm:$0xff]
        %v831 = vld [vmem:[%s595 + $0x628] sm:$0xff]
        %v832 = vld [vmem:[%s595 + $0x630] sm:$0xff]
        %v833 = vld [vmem:[%s595 + $0x638] sm:$0xff]
        %v834 = vld [vmem:[%s595 + $0x640] sm:$0xff]
        %v835 = vld [vmem:[%s595 + $0x648] sm:$0xff]
        %v836 = vld [vmem:[%s595 + $0x650] sm:$0xff]
        %v837 = vld [vmem:[%s595 + $0x658] sm:$0xff]
        %v838 = vld [vmem:[%s595 + $0x660] sm:$0xff]
        %v839 = vld [vmem:[%s595 + $0x668] sm:$0xff]
        %v840 = vld [vmem:[%s595 + $0x670] sm:$0xff]
        %v841 = vld [vmem:[%s595 + $0x678] sm:$0xff]
        %v842 = vld [vmem:[%s595 + $0x680] sm:$0xff]
        %v843 = vld [vmem:[%s595 + $0x688] sm:$0xff]
        %v844 = vld [vmem:[%s595 + $0x690] sm:$0xff]
        %v845 = vld [vmem:[%s595 + $0x698] sm:$0xff]
        %v846 = vld [vmem:[%s595 + $0x6a0] sm:$0xff]
        %v847 = vld [vmem:[%s595 + $0x6a8] sm:$0xff]
        %v848 = vld [vmem:[%s595 + $0x6b0] sm:$0xff]
        %v849 = vld [vmem:[%s595 + $0x6b8] sm:$0xff]
        %v850 = vld [vmem:[%s1] sm:$0xff]
        %v851 = vld [vmem:[%s1 + $0x8] sm:$0xff]
        %v852 = vld [vmem:[%s1 + $0x10] sm:$0xff]
        %v853 = vld [vmem:[%s1 + $0x18] sm:$0xff]
        %855 = vset.pattern.permute.xlu0 0
        %856 = vperm.xlu0 %855, %v850
        %v857 = vpop.permute.xlu0 %856
        %860 = vset.pattern.permute.xlu0 0
        %861 = vperm.xlu0 %860, %v851
        %v862 = vpop.permute.xlu0 %861
        %865 = vset.pattern.permute.xlu0 0
        %866 = vperm.xlu0 %865, %v852
        %v867 = vpop.permute.xlu0 %866
        %870 = vset.pattern.permute.xlu0 0
        %871 = vperm.xlu0 %870, %v853
        %v872 = vpop.permute.xlu0 %871
        %v890 = vunpack.c.l.b16 %v618
        %v891 = vunpack.c.h.b16 %v618
        %v892 = vunpack.c.l.b16 %v619
        %v893 = vunpack.c.h.b16 %v619
        %v894 = vunpack.c.l.b16 %v620
        %v895 = vunpack.c.h.b16 %v620
        %v896 = vunpack.c.l.b16 %v621
        %v897 = vunpack.c.l.b16 %v622
        %v898 = vunpack.c.h.b16 %v622
        %v899 = vunpack.c.l.b16 %v623
        %v900 = vunpack.c.h.b16 %v623
        %v901 = vunpack.c.l.b16 %v624
        %v902 = vunpack.c.h.b16 %v624
        %v903 = vunpack.c.l.b16 %v625
        %v904 = vunpack.c.l.b16 %v626
        %v905 = vunpack.c.h.b16 %v626
        %v906 = vunpack.c.l.b16 %v627
        %v907 = vunpack.c.h.b16 %v627
        %v908 = vunpack.c.l.b16 %v628
        %v909 = vunpack.c.h.b16 %v628
        %v910 = vunpack.c.l.b16 %v629
        %v911 = vunpack.c.l.b16 %v630
        %v912 = vunpack.c.h.b16 %v630
        %v913 = vunpack.c.l.b16 %v631
        %v914 = vunpack.c.h.b16 %v631
        %v915 = vunpack.c.l.b16 %v632
        %v916 = vunpack.c.h.b16 %v632
        %v917 = vunpack.c.l.b16 %v633
        %v918 = vpack.c.b16 %v897, %v890
        %v919 = vpack.c.b16 %v898, %v891
        %v920 = vpack.c.b16 %v899, %v892
        %v921 = vpack.c.b16 %v900, %v893
        %v922 = vpack.c.b16 %v901, %v894
        %v923 = vpack.c.b16 %v902, %v895
        %v924 = vpack.c.b16 %v903, %v896
        %v925 = vpack.c.b16 %v911, %v904
        %v926 = vpack.c.b16 %v912, %v905
        %v927 = vpack.c.b16 %v913, %v906
        %v928 = vpack.c.b16 %v914, %v907
        %v929 = vpack.c.b16 %v915, %v908
        %v930 = vpack.c.b16 %v916, %v909
        %v931 = vpack.c.b16 %v917, %v910
        %v1160 = vunpack.c.l.b16 %v634
        %v1161 = vunpack.c.h.b16 %v634
        %v1162 = vunpack.c.l.b16 %v635
        %v1163 = vunpack.c.h.b16 %v635
        %v1164 = vunpack.c.l.b16 %v636
        %v1165 = vunpack.c.h.b16 %v636
        %v1166 = vunpack.c.l.b16 %v637
        %v1167 = vunpack.c.h.b16 %v637
        %v1168 = vunpack.c.l.b16 %v638
        %v1169 = vunpack.c.h.b16 %v638
        %v1170 = vunpack.c.l.b16 %v639
        %v1171 = vunpack.c.h.b16 %v639
        %v1172 = vunpack.c.l.b16 %v640
        %v1173 = vunpack.c.h.b16 %v640
        %v1174 = vunpack.c.l.b16 %v641
        %v1175 = vunpack.c.h.b16 %v641
        %v1176 = vunpack.c.l.b16 %v642
        %v1177 = vunpack.c.h.b16 %v642
        %v1178 = vunpack.c.l.b16 %v643
        %v1179 = vunpack.c.h.b16 %v643
        %v1180 = vunpack.c.l.b16 %v644
        %v1181 = vunpack.c.h.b16 %v644
        %v1182 = vunpack.c.l.b16 %v645
        %v1183 = vunpack.c.h.b16 %v645
        %v1184 = vunpack.c.l.b16 %v646
        %v1185 = vunpack.c.h.b16 %v646
        %v1186 = vunpack.c.l.b16 %v647
        %v1187 = vunpack.c.h.b16 %v647
        %v1188 = vunpack.c.l.b16 %v648
        %v1189 = vunpack.c.h.b16 %v648
        %v1190 = vunpack.c.l.b16 %v649
        %v1191 = vunpack.c.h.b16 %v649
        %v1192 = vunpack.c.l.b16 %v650
        %v1193 = vunpack.c.h.b16 %v650
        %v1194 = vunpack.c.l.b16 %v651
        %v1195 = vunpack.c.h.b16 %v651
        %v1196 = vunpack.c.l.b16 %v652
        %v1197 = vunpack.c.h.b16 %v652
        %v1198 = vunpack.c.l.b16 %v653
        %v1199 = vunpack.c.h.b16 %v653
        %v1200 = vunpack.c.l.b16 %v654
        %v1201 = vunpack.c.h.b16 %v654
        %v1202 = vunpack.c.l.b16 %v655
        %v1203 = vunpack.c.h.b16 %v655
        %v1204 = vunpack.c.l.b16 %v656
        %v1205 = vunpack.c.h.b16 %v656
        %v1206 = vunpack.c.l.b16 %v657
        %v1207 = vunpack.c.h.b16 %v657
        %v1208 = vunpack.c.l.b16 %v658
        %v1209 = vunpack.c.h.b16 %v658
        %v1210 = vunpack.c.l.b16 %v659
        %v1211 = vunpack.c.h.b16 %v659
        %v1212 = vunpack.c.l.b16 %v660
        %v1213 = vunpack.c.h.b16 %v660
        %v1214 = vunpack.c.l.b16 %v661
        %v1215 = vunpack.c.h.b16 %v661
        %v1216 = vunpack.c.l.b16 %v662
        %v1217 = vunpack.c.h.b16 %v662
        %v1218 = vunpack.c.l.b16 %v663
        %v1219 = vunpack.c.h.b16 %v663
        %v1220 = vunpack.c.l.b16 %v664
        %v1221 = vunpack.c.h.b16 %v664
        %v1222 = vunpack.c.l.b16 %v665
        %v1223 = vunpack.c.h.b16 %v665
        %v1224 = vunpack.c.l.b16 %v666
        %v1225 = vunpack.c.h.b16 %v666
        %v1226 = vunpack.c.l.b16 %v667
        %v1227 = vunpack.c.h.b16 %v667
        %v1228 = vunpack.c.l.b16 %v668
        %v1229 = vunpack.c.h.b16 %v668
        %v1230 = vunpack.c.l.b16 %v669
        %v1231 = vunpack.c.h.b16 %v669
        %v1232 = vunpack.c.l.b16 %v670
        %v1233 = vunpack.c.h.b16 %v670
        %v1234 = vunpack.c.l.b16 %v671
        %v1235 = vunpack.c.h.b16 %v671
        %v1236 = vunpack.c.l.b16 %v672
        %v1237 = vunpack.c.h.b16 %v672
        %v1238 = vunpack.c.l.b16 %v673
        %v1239 = vunpack.c.h.b16 %v673
        %v1240 = vunpack.c.l.b16 %v674
        %v1241 = vunpack.c.h.b16 %v674
        %v1242 = vunpack.c.l.b16 %v675
        %v1243 = vunpack.c.h.b16 %v675
        %v1244 = vunpack.c.l.b16 %v676
        %v1245 = vunpack.c.h.b16 %v676
        %v1246 = vunpack.c.l.b16 %v677
        %v1247 = vunpack.c.h.b16 %v677
        %v1248 = vunpack.c.l.b16 %v678
        %v1249 = vunpack.c.h.b16 %v678
        %v1250 = vunpack.c.l.b16 %v679
        %v1251 = vunpack.c.h.b16 %v679
        %v1252 = vunpack.c.l.b16 %v680
        %v1253 = vunpack.c.h.b16 %v680
        %v1254 = vunpack.c.l.b16 %v681
        %v1255 = vunpack.c.h.b16 %v681
        %v1256 = vunpack.c.l.b16 %v682
        %v1257 = vunpack.c.h.b16 %v682
        %v1258 = vunpack.c.l.b16 %v683
        %v1259 = vunpack.c.h.b16 %v683
        %v1260 = vunpack.c.l.b16 %v684
        %v1261 = vunpack.c.h.b16 %v684
        %v1262 = vunpack.c.l.b16 %v685
        %v1263 = vunpack.c.h.b16 %v685
        %v1264 = vunpack.c.l.b16 %v686
        %v1265 = vunpack.c.h.b16 %v686
        %v1266 = vunpack.c.l.b16 %v687
        %v1267 = vunpack.c.h.b16 %v687
        %v1268 = vunpack.c.l.b16 %v688
        %v1269 = vunpack.c.h.b16 %v688
        %v1270 = vunpack.c.l.b16 %v689
        %v1271 = vunpack.c.h.b16 %v689
        %v1272 = vunpack.c.l.b16 %v690
        %v1273 = vunpack.c.h.b16 %v690
        %v1274 = vunpack.c.l.b16 %v691
        %v1275 = vunpack.c.h.b16 %v691
        %v1276 = vunpack.c.l.b16 %v692
        %v1277 = vunpack.c.h.b16 %v692
        %v1278 = vunpack.c.l.b16 %v693
        %v1279 = vunpack.c.h.b16 %v693
        %v1280 = vunpack.c.l.b16 %v694
        %v1281 = vunpack.c.h.b16 %v694
        %v1282 = vunpack.c.l.b16 %v695
        %v1283 = vunpack.c.h.b16 %v695
        %v1284 = vunpack.c.l.b16 %v696
        %v1285 = vunpack.c.h.b16 %v696
        %v1286 = vunpack.c.l.b16 %v697
        %v1287 = vunpack.c.h.b16 %v697
        %v1288 = vunpack.c.l.b16 %v698
        %v1289 = vunpack.c.h.b16 %v698
        %v1290 = vunpack.c.l.b16 %v699
        %v1291 = vunpack.c.h.b16 %v699
        %v1292 = vunpack.c.l.b16 %v700
        %v1293 = vunpack.c.h.b16 %v700
        %v1294 = vunpack.c.l.b16 %v701
        %v1295 = vunpack.c.h.b16 %v701
        %v1296 = vunpack.c.l.b16 %v702
        %v1297 = vunpack.c.h.b16 %v702
        %v1298 = vunpack.c.l.b16 %v703
        %v1299 = vunpack.c.h.b16 %v703
        %v1300 = vunpack.c.l.b16 %v704
        %v1301 = vunpack.c.h.b16 %v704
        %v1302 = vunpack.c.l.b16 %v705
        %v1303 = vunpack.c.h.b16 %v705
        %v1304 = vunpack.c.l.b16 %v706
        %v1305 = vunpack.c.h.b16 %v706
        %v1306 = vunpack.c.l.b16 %v707
        %v1307 = vunpack.c.h.b16 %v707
        %v1308 = vunpack.c.l.b16 %v708
        %v1309 = vunpack.c.h.b16 %v708
        %v1310 = vunpack.c.l.b16 %v709
        %v1311 = vunpack.c.h.b16 %v709
        %v1312 = vunpack.c.l.b16 %v710
        %v1313 = vunpack.c.h.b16 %v710
        %v1314 = vunpack.c.l.b16 %v711
        %v1315 = vunpack.c.h.b16 %v711
        %v1316 = vunpack.c.l.b16 %v712
        %v1317 = vunpack.c.h.b16 %v712
        %v1318 = vunpack.c.l.b16 %v713
        %v1319 = vunpack.c.h.b16 %v713
        %v1320 = vunpack.c.l.b16 %v714
        %v1321 = vunpack.c.h.b16 %v714
        %v1322 = vunpack.c.l.b16 %v715
        %v1323 = vunpack.c.h.b16 %v715
        %v1324 = vunpack.c.l.b16 %v716
        %v1325 = vunpack.c.h.b16 %v716
        %v1326 = vunpack.c.l.b16 %v717
        %v1327 = vunpack.c.h.b16 %v717
        %v1328 = vunpack.c.l.b16 %v718
        %v1329 = vunpack.c.h.b16 %v718
        %v1330 = vunpack.c.l.b16 %v719
        %v1331 = vunpack.c.h.b16 %v719
        %v1332 = vunpack.c.l.b16 %v720
        %v1333 = vunpack.c.h.b16 %v720
        %v1334 = vunpack.c.l.b16 %v721
        %v1335 = vunpack.c.h.b16 %v721
        %v1336 = vunpack.c.l.b16 %v722
        %v1337 = vunpack.c.h.b16 %v722
        %v1338 = vunpack.c.l.b16 %v723
        %v1339 = vunpack.c.h.b16 %v723
        %v1340 = vunpack.c.l.b16 %v724
        %v1341 = vunpack.c.h.b16 %v724
        %v1342 = vunpack.c.l.b16 %v725
        %v1343 = vunpack.c.h.b16 %v725
        %v1344 = vunpack.c.l.b16 %v726
        %v1345 = vunpack.c.h.b16 %v726
        %v1346 = vunpack.c.l.b16 %v727
        %v1347 = vunpack.c.h.b16 %v727
        %v1348 = vunpack.c.l.b16 %v728
        %v1349 = vunpack.c.h.b16 %v728
        %v1350 = vunpack.c.l.b16 %v729
        %v1351 = vunpack.c.h.b16 %v729
        %v1352 = vunpack.c.l.b16 %v730
        %v1353 = vunpack.c.h.b16 %v730
        %v1354 = vunpack.c.l.b16 %v731
        %v1355 = vunpack.c.h.b16 %v731
        %v1356 = vunpack.c.l.b16 %v732
        %v1357 = vunpack.c.h.b16 %v732
        %v1358 = vunpack.c.l.b16 %v733
        %v1359 = vunpack.c.h.b16 %v733
        %v1360 = vunpack.c.l.b16 %v734
        %v1361 = vunpack.c.h.b16 %v734
        %v1362 = vunpack.c.l.b16 %v735
        %v1363 = vunpack.c.h.b16 %v735
        %v1364 = vunpack.c.l.b16 %v736
        %v1365 = vunpack.c.h.b16 %v736
        %v1366 = vunpack.c.l.b16 %v737
        %v1367 = vunpack.c.h.b16 %v737
        %v1368 = vunpack.c.l.b16 %v738
        %v1369 = vunpack.c.h.b16 %v738
        %v1370 = vunpack.c.l.b16 %v739
        %v1371 = vunpack.c.h.b16 %v739
        %v1372 = vunpack.c.l.b16 %v740
        %v1373 = vunpack.c.h.b16 %v740
        %v1374 = vunpack.c.l.b16 %v741
        %v1375 = vunpack.c.h.b16 %v741
        %v1376 = vunpack.c.l.b16 %v742
        %v1377 = vunpack.c.h.b16 %v742
        %v1378 = vunpack.c.l.b16 %v743
        %v1379 = vunpack.c.h.b16 %v743
        %v1380 = vunpack.c.l.b16 %v744
        %v1381 = vunpack.c.h.b16 %v744
        %v1382 = vunpack.c.l.b16 %v745
        %v1383 = vunpack.c.h.b16 %v745
        %v1384 = vunpack.c.l.b16 %v746
        %v1385 = vunpack.c.h.b16 %v746
        %v1386 = vunpack.c.l.b16 %v747
        %v1387 = vunpack.c.h.b16 %v747
        %v1388 = vunpack.c.l.b16 %v748
        %v1389 = vunpack.c.h.b16 %v748
        %v1390 = vunpack.c.l.b16 %v749
        %v1391 = vunpack.c.h.b16 %v749
        %v1392 = vunpack.c.l.b16 %v750
        %v1393 = vunpack.c.h.b16 %v750
        %v1394 = vunpack.c.l.b16 %v751
        %v1395 = vunpack.c.h.b16 %v751
        %v1396 = vunpack.c.l.b16 %v752
        %v1397 = vunpack.c.h.b16 %v752
        %v1398 = vunpack.c.l.b16 %v753
        %v1399 = vunpack.c.h.b16 %v753
        %v1400 = vunpack.c.l.b16 %v754
        %v1401 = vunpack.c.h.b16 %v754
        %v1402 = vunpack.c.l.b16 %v755
        %v1403 = vunpack.c.h.b16 %v755
        %v1404 = vunpack.c.l.b16 %v756
        %v1405 = vunpack.c.h.b16 %v756
        %v1406 = vunpack.c.l.b16 %v757
        %v1407 = vunpack.c.h.b16 %v757
        %v1408 = vunpack.c.l.b16 %v758
        %v1409 = vunpack.c.h.b16 %v758
        %v1410 = vunpack.c.l.b16 %v759
        %v1411 = vunpack.c.h.b16 %v759
        %v1412 = vunpack.c.l.b16 %v760
        %v1413 = vunpack.c.h.b16 %v760
        %v1414 = vunpack.c.l.b16 %v761
        %v1415 = vunpack.c.h.b16 %v761
        %v1416 = vunpack.c.l.b16 %v762
        %v1417 = vunpack.c.h.b16 %v762
        %v1418 = vunpack.c.l.b16 %v763
        %v1419 = vunpack.c.h.b16 %v763
        %v1420 = vunpack.c.l.b16 %v764
        %v1421 = vunpack.c.h.b16 %v764
        %v1422 = vunpack.c.l.b16 %v765
        %v1423 = vunpack.c.h.b16 %v765
        %v1424 = vunpack.c.l.b16 %v766
        %v1425 = vunpack.c.h.b16 %v766
        %v1426 = vunpack.c.l.b16 %v767
        %v1427 = vunpack.c.h.b16 %v767
        %v1428 = vunpack.c.l.b16 %v768
        %v1429 = vunpack.c.h.b16 %v768
        %v1430 = vunpack.c.l.b16 %v769
        %v1431 = vunpack.c.h.b16 %v769
        %v1432 = vunpack.c.l.b16 %v770
        %v1433 = vunpack.c.h.b16 %v770
        %v1434 = vunpack.c.l.b16 %v771
        %v1435 = vunpack.c.h.b16 %v771
        %v1436 = vunpack.c.l.b16 %v772
        %v1437 = vunpack.c.h.b16 %v772
        %v1438 = vunpack.c.l.b16 %v773
        %v1439 = vunpack.c.h.b16 %v773
        %v1440 = vunpack.c.l.b16 %v774
        %v1441 = vunpack.c.h.b16 %v774
        %v1442 = vunpack.c.l.b16 %v775
        %v1443 = vunpack.c.h.b16 %v775
        %v1444 = vunpack.c.l.b16 %v776
        %v1445 = vunpack.c.h.b16 %v776
        %v1446 = vunpack.c.l.b16 %v777
        %v1447 = vunpack.c.h.b16 %v777
        %v1448 = vunpack.c.l.b16 %v778
        %v1449 = vunpack.c.h.b16 %v778
        %v1450 = vunpack.c.l.b16 %v779
        %v1451 = vunpack.c.h.b16 %v779
        %v1452 = vunpack.c.l.b16 %v780
        %v1453 = vunpack.c.h.b16 %v780
        %v1454 = vunpack.c.l.b16 %v781
        %v1455 = vunpack.c.h.b16 %v781
        %v1456 = vunpack.c.l.b16 %v782
        %v1457 = vunpack.c.h.b16 %v782
        %v1458 = vunpack.c.l.b16 %v783
        %v1459 = vunpack.c.h.b16 %v783
        %v1460 = vunpack.c.l.b16 %v784
        %v1461 = vunpack.c.h.b16 %v784
        %v1462 = vunpack.c.l.b16 %v785
        %v1463 = vunpack.c.h.b16 %v785
        %v1464 = vunpack.c.l.b16 %v786
        %v1465 = vunpack.c.h.b16 %v786
        %v1466 = vunpack.c.l.b16 %v787
        %v1467 = vunpack.c.h.b16 %v787
        %v1468 = vunpack.c.l.b16 %v788
        %v1469 = vunpack.c.h.b16 %v788
        %v1470 = vunpack.c.l.b16 %v789
        %v1471 = vunpack.c.h.b16 %v789
        %v1472 = vunpack.c.l.b16 %v790
        %v1473 = vunpack.c.h.b16 %v790
        %v1474 = vunpack.c.l.b16 %v791
        %v1475 = vunpack.c.h.b16 %v791
        %v1476 = vunpack.c.l.b16 %v792
        %v1477 = vunpack.c.h.b16 %v792
        %v1478 = vunpack.c.l.b16 %v793
        %v1479 = vunpack.c.h.b16 %v793
        %v1480 = vunpack.c.l.b16 %v794
        %v1481 = vunpack.c.h.b16 %v794
        %v1482 = vunpack.c.l.b16 %v795
        %v1483 = vunpack.c.h.b16 %v795
        %v1484 = vunpack.c.l.b16 %v796
        %v1485 = vunpack.c.h.b16 %v796
        %v1486 = vunpack.c.l.b16 %v797
        %v1487 = vunpack.c.h.b16 %v797
        %v1488 = vunpack.c.l.b16 %v798
        %v1489 = vunpack.c.h.b16 %v798
        %v1490 = vunpack.c.l.b16 %v799
        %v1491 = vunpack.c.h.b16 %v799
        %v1492 = vunpack.c.l.b16 %v800
        %v1493 = vunpack.c.h.b16 %v800
        %v1494 = vunpack.c.l.b16 %v801
        %v1495 = vunpack.c.h.b16 %v801
        %v1496 = vunpack.c.l.b16 %v802
        %v1497 = vunpack.c.h.b16 %v802
        %v1498 = vunpack.c.l.b16 %v803
        %v1499 = vunpack.c.h.b16 %v803
        %v1500 = vunpack.c.l.b16 %v804
        %v1501 = vunpack.c.h.b16 %v804
        %v1502 = vunpack.c.l.b16 %v805
        %v1503 = vunpack.c.h.b16 %v805
        %v1504 = vunpack.c.l.b16 %v806
        %v1505 = vunpack.c.h.b16 %v806
        %v1506 = vunpack.c.l.b16 %v807
        %v1507 = vunpack.c.h.b16 %v807
        %v1508 = vunpack.c.l.b16 %v808
        %v1509 = vunpack.c.h.b16 %v808
        %v1510 = vunpack.c.l.b16 %v809
        %v1511 = vunpack.c.h.b16 %v809
        %v1512 = vunpack.c.l.b16 %v810
        %v1513 = vunpack.c.h.b16 %v810
        %v1514 = vunpack.c.l.b16 %v811
        %v1515 = vunpack.c.h.b16 %v811
        %v1516 = vunpack.c.l.b16 %v812
        %v1517 = vunpack.c.h.b16 %v812
        %v1518 = vunpack.c.l.b16 %v813
        %v1519 = vunpack.c.h.b16 %v813
        %v1520 = vunpack.c.l.b16 %v814
        %v1521 = vunpack.c.h.b16 %v814
        %v1522 = vunpack.c.l.b16 %v815
        %v1523 = vunpack.c.h.b16 %v815
        %v1524 = vunpack.c.l.b16 %v816
        %v1525 = vunpack.c.h.b16 %v816
        %v1526 = vunpack.c.l.b16 %v817
        %v1527 = vunpack.c.h.b16 %v817
        %v1528 = vunpack.c.l.b16 %v818
        %v1529 = vunpack.c.h.b16 %v818
        %v1530 = vunpack.c.l.b16 %v819
        %v1531 = vunpack.c.h.b16 %v819
        %v1532 = vunpack.c.l.b16 %v820
        %v1533 = vunpack.c.h.b16 %v820
        %v1534 = vunpack.c.l.b16 %v821
        %v1535 = vunpack.c.h.b16 %v821
        %v1536 = vunpack.c.l.b16 %v822
        %v1537 = vunpack.c.h.b16 %v822
        %v1538 = vunpack.c.l.b16 %v823
        %v1539 = vunpack.c.h.b16 %v823
        %v1540 = vunpack.c.l.b16 %v824
        %v1541 = vunpack.c.h.b16 %v824
        %v1542 = vunpack.c.l.b16 %v825
        %v1543 = vunpack.c.h.b16 %v825
        %v1544 = vunpack.c.l.b16 %v826
        %v1545 = vunpack.c.h.b16 %v826
        %v1546 = vunpack.c.l.b16 %v827
        %v1547 = vunpack.c.h.b16 %v827
        %v1548 = vunpack.c.l.b16 %v828
        %v1549 = vunpack.c.h.b16 %v828
        %v1550 = vunpack.c.l.b16 %v829
        %v1551 = vunpack.c.h.b16 %v829
        %v1552 = vunpack.c.l.b16 %v830
        %v1553 = vunpack.c.h.b16 %v830
        %v1554 = vunpack.c.l.b16 %v831
        %v1555 = vunpack.c.h.b16 %v831
        %v1556 = vunpack.c.l.b16 %v832
        %v1557 = vunpack.c.h.b16 %v832
        %v1558 = vunpack.c.l.b16 %v833
        %v1559 = vunpack.c.h.b16 %v833
        %v1560 = vunpack.c.l.b16 %v834
        %v1561 = vunpack.c.h.b16 %v834
        %v1562 = vunpack.c.l.b16 %v835
        %v1563 = vunpack.c.h.b16 %v835
        %v1564 = vunpack.c.l.b16 %v836
        %v1565 = vunpack.c.h.b16 %v836
        %v1566 = vunpack.c.l.b16 %v837
        %v1567 = vunpack.c.h.b16 %v837
        %v1568 = vunpack.c.l.b16 %v838
        %v1569 = vunpack.c.h.b16 %v838
        %v1570 = vunpack.c.l.b16 %v839
        %v1571 = vunpack.c.h.b16 %v839
        %v1572 = vunpack.c.l.b16 %v840
        %v1573 = vunpack.c.h.b16 %v840
        %v1574 = vunpack.c.l.b16 %v841
        %v1575 = vunpack.c.h.b16 %v841
        %v1576 = vunpack.c.l.b16 %v842
        %v1577 = vunpack.c.h.b16 %v842
        %v1578 = vunpack.c.l.b16 %v843
        %v1579 = vunpack.c.h.b16 %v843
        %v1580 = vunpack.c.l.b16 %v844
        %v1581 = vunpack.c.h.b16 %v844
        %v1582 = vunpack.c.l.b16 %v845
        %v1583 = vunpack.c.h.b16 %v845
        %v1584 = vunpack.c.l.b16 %v846
        %v1585 = vunpack.c.h.b16 %v846
        %v1586 = vunpack.c.l.b16 %v847
        %v1587 = vunpack.c.h.b16 %v847
        %v1588 = vunpack.c.l.b16 %v848
        %v1589 = vunpack.c.h.b16 %v848
        %v1590 = vunpack.c.l.b16 %v849
        %v1591 = vunpack.c.h.b16 %v849
        %v1592 = vpack.c.b16 %v1164, %v1160
        %v1593 = vpack.c.b16 %v1165, %v1161
        %v1594 = vpack.c.b16 %v1166, %v1162
        %v1595 = vpack.c.b16 %v1167, %v1163
        %v1596 = vpack.c.b16 %v1172, %v1168
        %v1597 = vpack.c.b16 %v1173, %v1169
        %v1598 = vpack.c.b16 %v1174, %v1170
        %v1599 = vpack.c.b16 %v1175, %v1171
        %v1600 = vpack.c.b16 %v1180, %v1176
        %v1601 = vpack.c.b16 %v1181, %v1177
        %v1602 = vpack.c.b16 %v1182, %v1178
        %v1603 = vpack.c.b16 %v1183, %v1179
        %v1604 = vpack.c.b16 %v1188, %v1184
        %v1605 = vpack.c.b16 %v1189, %v1185
        %v1606 = vpack.c.b16 %v1190, %v1186
        %v1607 = vpack.c.b16 %v1191, %v1187
        %v1608 = vpack.c.b16 %v1196, %v1192
        %v1609 = vpack.c.b16 %v1197, %v1193
        %v1610 = vpack.c.b16 %v1198, %v1194
        %v1611 = vpack.c.b16 %v1199, %v1195
        %v1612 = vpack.c.b16 %v1204, %v1200
        %v1613 = vpack.c.b16 %v1205, %v1201
        %v1614 = vpack.c.b16 %v1206, %v1202
        %v1615 = vpack.c.b16 %v1207, %v1203
        %v1616 = vpack.c.b16 %v1212, %v1208
        %v1617 = vpack.c.b16 %v1213, %v1209
        %v1618 = vpack.c.b16 %v1214, %v1210
        %v1619 = vpack.c.b16 %v1215, %v1211
        %v1620 = vpack.c.b16 %v1220, %v1216
        %v1621 = vpack.c.b16 %v1221, %v1217
        %v1622 = vpack.c.b16 %v1222, %v1218
        %v1623 = vpack.c.b16 %v1223, %v1219
        %v1624 = vpack.c.b16 %v1228, %v1224
        %v1625 = vpack.c.b16 %v1229, %v1225
        %v1626 = vpack.c.b16 %v1230, %v1226
        %v1627 = vpack.c.b16 %v1231, %v1227
        %v1628 = vpack.c.b16 %v1236, %v1232
        %v1629 = vpack.c.b16 %v1237, %v1233
        %v1630 = vpack.c.b16 %v1238, %v1234
        %v1631 = vpack.c.b16 %v1239, %v1235
        %v1632 = vpack.c.b16 %v1244, %v1240
        %v1633 = vpack.c.b16 %v1245, %v1241
        %v1634 = vpack.c.b16 %v1246, %v1242
        %v1635 = vpack.c.b16 %v1247, %v1243
        %v1636 = vpack.c.b16 %v1252, %v1248
        %v1637 = vpack.c.b16 %v1253, %v1249
        %v1638 = vpack.c.b16 %v1254, %v1250
        %v1639 = vpack.c.b16 %v1255, %v1251
        %v1640 = vpack.c.b16 %v1260, %v1256
        %v1641 = vpack.c.b16 %v1261, %v1257
        %v1642 = vpack.c.b16 %v1262, %v1258
        %v1643 = vpack.c.b16 %v1263, %v1259
        %v1644 = vpack.c.b16 %v1268, %v1264
        %v1645 = vpack.c.b16 %v1269, %v1265
        %v1646 = vpack.c.b16 %v1270, %v1266
        %v1647 = vpack.c.b16 %v1271, %v1267
        %v1648 = vpack.c.b16 %v1276, %v1272
        %v1649 = vpack.c.b16 %v1277, %v1273
        %v1650 = vpack.c.b16 %v1278, %v1274
        %v1651 = vpack.c.b16 %v1279, %v1275
        %v1652 = vpack.c.b16 %v1284, %v1280
        %v1653 = vpack.c.b16 %v1285, %v1281
        %v1654 = vpack.c.b16 %v1286, %v1282
        %v1655 = vpack.c.b16 %v1287, %v1283
        %v1656 = vpack.c.b16 %v1292, %v1288
        %v1657 = vpack.c.b16 %v1293, %v1289
        %v1658 = vpack.c.b16 %v1294, %v1290
        %v1659 = vpack.c.b16 %v1295, %v1291
        %v1660 = vpack.c.b16 %v1300, %v1296
        %v1661 = vpack.c.b16 %v1301, %v1297
        %v1662 = vpack.c.b16 %v1302, %v1298
        %v1663 = vpack.c.b16 %v1303, %v1299
        %v1664 = vpack.c.b16 %v1308, %v1304
        %v1665 = vpack.c.b16 %v1309, %v1305
        %v1666 = vpack.c.b16 %v1310, %v1306
        %v1667 = vpack.c.b16 %v1311, %v1307
        %v1668 = vpack.c.b16 %v1316, %v1312
        %v1669 = vpack.c.b16 %v1317, %v1313
        %v1670 = vpack.c.b16 %v1318, %v1314
        %v1671 = vpack.c.b16 %v1319, %v1315
        %v1672 = vpack.c.b16 %v1324, %v1320
        %v1673 = vpack.c.b16 %v1325, %v1321
        %v1674 = vpack.c.b16 %v1326, %v1322
        %v1675 = vpack.c.b16 %v1327, %v1323
        %v1676 = vpack.c.b16 %v1332, %v1328
        %v1677 = vpack.c.b16 %v1333, %v1329
        %v1678 = vpack.c.b16 %v1334, %v1330
        %v1679 = vpack.c.b16 %v1335, %v1331
        %v1680 = vpack.c.b16 %v1340, %v1336
        %v1681 = vpack.c.b16 %v1341, %v1337
        %v1682 = vpack.c.b16 %v1342, %v1338
        %v1683 = vpack.c.b16 %v1343, %v1339
        %v1684 = vpack.c.b16 %v1348, %v1344
        %v1685 = vpack.c.b16 %v1349, %v1345
        %v1686 = vpack.c.b16 %v1350, %v1346
        %v1687 = vpack.c.b16 %v1351, %v1347
        %v1688 = vpack.c.b16 %v1356, %v1352
        %v1689 = vpack.c.b16 %v1357, %v1353
        %v1690 = vpack.c.b16 %v1358, %v1354
        %v1691 = vpack.c.b16 %v1359, %v1355
        %v1692 = vpack.c.b16 %v1364, %v1360
        %v1693 = vpack.c.b16 %v1365, %v1361
        %v1694 = vpack.c.b16 %v1366, %v1362
        %v1695 = vpack.c.b16 %v1367, %v1363
        %v1696 = vpack.c.b16 %v1372, %v1368
        %v1697 = vpack.c.b16 %v1373, %v1369
        %v1698 = vpack.c.b16 %v1374, %v1370
        %v1699 = vpack.c.b16 %v1375, %v1371
        %v1700 = vpack.c.b16 %v1380, %v1376
        %v1701 = vpack.c.b16 %v1381, %v1377
        %v1702 = vpack.c.b16 %v1382, %v1378
        %v1703 = vpack.c.b16 %v1383, %v1379
        %v1704 = vpack.c.b16 %v1388, %v1384
        %v1705 = vpack.c.b16 %v1389, %v1385
        %v1706 = vpack.c.b16 %v1390, %v1386
        %v1707 = vpack.c.b16 %v1391, %v1387
        %v1708 = vpack.c.b16 %v1396, %v1392
        %v1709 = vpack.c.b16 %v1397, %v1393
        %v1710 = vpack.c.b16 %v1398, %v1394
        %v1711 = vpack.c.b16 %v1399, %v1395
        %v1712 = vpack.c.b16 %v1404, %v1400
        %v1713 = vpack.c.b16 %v1405, %v1401
        %v1714 = vpack.c.b16 %v1406, %v1402
        %v1715 = vpack.c.b16 %v1407, %v1403
        %v1716 = vpack.c.b16 %v1412, %v1408
        %v1717 = vpack.c.b16 %v1413, %v1409
        %v1718 = vpack.c.b16 %v1414, %v1410
        %v1719 = vpack.c.b16 %v1415, %v1411
        %v1720 = vpack.c.b16 %v1420, %v1416
        %v1721 = vpack.c.b16 %v1421, %v1417
        %v1722 = vpack.c.b16 %v1422, %v1418
        %v1723 = vpack.c.b16 %v1423, %v1419
        %v1724 = vpack.c.b16 %v1428, %v1424
        %v1725 = vpack.c.b16 %v1429, %v1425
        %v1726 = vpack.c.b16 %v1430, %v1426
        %v1727 = vpack.c.b16 %v1431, %v1427
        %v1728 = vpack.c.b16 %v1436, %v1432
        %v1729 = vpack.c.b16 %v1437, %v1433
        %v1730 = vpack.c.b16 %v1438, %v1434
        %v1731 = vpack.c.b16 %v1439, %v1435
        %v1732 = vpack.c.b16 %v1444, %v1440
        %v1733 = vpack.c.b16 %v1445, %v1441
        %v1734 = vpack.c.b16 %v1446, %v1442
        %v1735 = vpack.c.b16 %v1447, %v1443
        %v1736 = vpack.c.b16 %v1452, %v1448
        %v1737 = vpack.c.b16 %v1453, %v1449
        %v1738 = vpack.c.b16 %v1454, %v1450
        %v1739 = vpack.c.b16 %v1455, %v1451
        %v1740 = vpack.c.b16 %v1460, %v1456
        %v1741 = vpack.c.b16 %v1461, %v1457
        %v1742 = vpack.c.b16 %v1462, %v1458
        %v1743 = vpack.c.b16 %v1463, %v1459
        %v1744 = vpack.c.b16 %v1468, %v1464
        %v1745 = vpack.c.b16 %v1469, %v1465
        %v1746 = vpack.c.b16 %v1470, %v1466
        %v1747 = vpack.c.b16 %v1471, %v1467
        %v1748 = vpack.c.b16 %v1476, %v1472
        %v1749 = vpack.c.b16 %v1477, %v1473
        %v1750 = vpack.c.b16 %v1478, %v1474
        %v1751 = vpack.c.b16 %v1479, %v1475
        %v1752 = vpack.c.b16 %v1484, %v1480
        %v1753 = vpack.c.b16 %v1485, %v1481
        %v1754 = vpack.c.b16 %v1486, %v1482
        %v1755 = vpack.c.b16 %v1487, %v1483
        %v1756 = vpack.c.b16 %v1492, %v1488
        %v1757 = vpack.c.b16 %v1493, %v1489
        %v1758 = vpack.c.b16 %v1494, %v1490
        %v1759 = vpack.c.b16 %v1495, %v1491
        %v1760 = vpack.c.b16 %v1500, %v1496
        %v1761 = vpack.c.b16 %v1501, %v1497
        %v1762 = vpack.c.b16 %v1502, %v1498
        %v1763 = vpack.c.b16 %v1503, %v1499
        %v1764 = vpack.c.b16 %v1508, %v1504
        %v1765 = vpack.c.b16 %v1509, %v1505
        %v1766 = vpack.c.b16 %v1510, %v1506
        %v1767 = vpack.c.b16 %v1511, %v1507
        %v1768 = vpack.c.b16 %v1516, %v1512
        %v1769 = vpack.c.b16 %v1517, %v1513
        %v1770 = vpack.c.b16 %v1518, %v1514
        %v1771 = vpack.c.b16 %v1519, %v1515
        %v1772 = vpack.c.b16 %v1524, %v1520
        %v1773 = vpack.c.b16 %v1525, %v1521
        %v1774 = vpack.c.b16 %v1526, %v1522
        %v1775 = vpack.c.b16 %v1527, %v1523
        %v1776 = vpack.c.b16 %v1532, %v1528
        %v1777 = vpack.c.b16 %v1533, %v1529
        %v1778 = vpack.c.b16 %v1534, %v1530
        %v1779 = vpack.c.b16 %v1535, %v1531
        %v1780 = vpack.c.b16 %v1540, %v1536
        %v1781 = vpack.c.b16 %v1541, %v1537
        %v1782 = vpack.c.b16 %v1542, %v1538
        %v1783 = vpack.c.b16 %v1543, %v1539
        %v1784 = vpack.c.b16 %v1548, %v1544
        %v1785 = vpack.c.b16 %v1549, %v1545
        %v1786 = vpack.c.b16 %v1550, %v1546
        %v1787 = vpack.c.b16 %v1551, %v1547
        %v1788 = vpack.c.b16 %v1556, %v1552
        %v1789 = vpack.c.b16 %v1557, %v1553
        %v1790 = vpack.c.b16 %v1558, %v1554
        %v1791 = vpack.c.b16 %v1559, %v1555
        %v1792 = vpack.c.b16 %v1564, %v1560
        %v1793 = vpack.c.b16 %v1565, %v1561
        %v1794 = vpack.c.b16 %v1566, %v1562
        %v1795 = vpack.c.b16 %v1567, %v1563
        %v1796 = vpack.c.b16 %v1572, %v1568
        %v1797 = vpack.c.b16 %v1573, %v1569
        %v1798 = vpack.c.b16 %v1574, %v1570
        %v1799 = vpack.c.b16 %v1575, %v1571
        %v1800 = vpack.c.b16 %v1580, %v1576
        %v1801 = vpack.c.b16 %v1581, %v1577
        %v1802 = vpack.c.b16 %v1582, %v1578
        %v1803 = vpack.c.b16 %v1583, %v1579
        %v1804 = vpack.c.b16 %v1588, %v1584
        %v1805 = vpack.c.b16 %v1589, %v1585
        %v1806 = vpack.c.b16 %v1590, %v1586
        %v1807 = vpack.c.b16 %v1591, %v1587
        %vm2024 = vcmask 785408
        %v2026 = vsel %vm2024, %v924, 0
        %v2029 = vsel %vm2024, %v931, 0
        %2031 = vmatprep.subr.bf16.mxu0 %v1593
        %2032 = vmatpush1.bf16.msra.mxu0 %v1592
        %2033 = vmatprep.subr.bf16.mxu0 %v1597
        %2034 = vmatpush1.bf16.msra.mxu0 %v1596
        %2035 = vmatprep.subr.bf16.mxu0 %v1601
        %2036 = vmatpush1.bf16.msra.mxu0 %v1600
        %2037 = vmatprep.subr.bf16.mxu0 %v1605
        %2038 = vmatpush1.bf16.msra.mxu0 %v1604
        %2039 = vmatprep.subr.bf16.mxu0 %v1609
        %2040 = vmatpush1.bf16.msra.mxu0 %v1608
        %2041 = vmatprep.subr.bf16.mxu0 %v1613
        %2042 = vmatpush1.bf16.msra.mxu0 %v1612
        %2043 = vmatprep.subr.bf16.mxu0 %v1617
        %2044 = vmatpush1.bf16.msra.mxu0 %v1616
        %2045 = vmatprep.subr.bf16.mxu0 %v1621
        %2046 = vmatpush1.bf16.msra.mxu0 %v1620
        %2047 = vmatprep.subr.bf16.mxu0 %v1625
        %2048 = vmatpush1.bf16.msra.mxu0 %v1624
        %2049 = vmatprep.subr.bf16.mxu0 %v1629
        %2050 = vmatpush1.bf16.msra.mxu0 %v1628
        %2051 = vmatprep.subr.bf16.mxu0 %v1633
        %2052 = vmatpush1.bf16.msra.mxu0 %v1632
        %2053 = vmatprep.subr.bf16.mxu0 %v1637
        %2054 = vmatpush1.bf16.msra.mxu0 %v1636
        %2055 = vmatprep.subr.bf16.mxu0 %v1641
        %2056 = vmatpush1.bf16.msra.mxu0 %v1640
        %2057 = vmatprep.subr.bf16.mxu0 %v1645
        %2058 = vmatpush1.bf16.msra.mxu0 %v1644
        %2059 = vmatprep.subr.bf16.mxu0 %v1649
        %2060 = vmatpush1.bf16.msra.mxu0 %v1648
        %2061 = vmatprep.subr.bf16.mxu0 %v1653
        %2062 = vmatpush1.bf16.msra.mxu0 %v1652
        %2063 = vmatprep.mubr.bf16.mxu0 %v919
        %2064 = vmatmul.mubr.bf16.gmra.mrb[0].mxu0 %v918
        %v2065 = vpop.f32.mrb[0].mxu0
        %v2066 = vadd.f32 %v857, %v2065
        %v2067 = vpop.f32.mrb[0].mxu0
        %v2068 = vadd.f32 %v857, %v2067
        %v2069 = vpop.f32.mrb[0].mxu0
        %v2070 = vadd.f32 %v862, %v2069
        %v2071 = vpop.f32.mrb[0].mxu0
        %v2072 = vadd.f32 %v862, %v2071
        %2073 = vmatprep.mubr.bf16.mxu0 %v926
        %2074 = vmatmul.mubr.bf16.gmra.mrb[0].mxu0 %v925
        %v2075 = vpop.f32.mrb[0].mxu0
        %v2076 = vadd.f32 %v867, %v2075
        %v2077 = vpop.f32.mrb[0].mxu0
        %v2078 = vadd.f32 %v867, %v2077
        %v2079 = vpop.f32.mrb[0].mxu0
        %v2080 = vadd.f32 %v872, %v2079
        %v2081 = vpop.f32.mrb[0].mxu0
        %v2082 = vadd.f32 %v872, %v2081
        %2083 = vdwg.mxu0
        %2084 = vmatprep.subr.bf16.mxu0 %v1657
        %2085 = vmatpush1.bf16.msra.mxu0 %v1656
        %2086 = vmatprep.subr.bf16.mxu0 %v1661
        %2087 = vmatpush1.bf16.msra.mxu0 %v1660
        %2088 = vmatprep.subr.bf16.mxu0 %v1665
        %2089 = vmatpush1.bf16.msra.mxu0 %v1664
        %2090 = vmatprep.subr.bf16.mxu0 %v1669
        %2091 = vmatpush1.bf16.msra.mxu0 %v1668
        %2092 = vmatprep.subr.bf16.mxu0 %v1673
        %2093 = vmatpush1.bf16.msra.mxu0 %v1672
        %2094 = vmatprep.subr.bf16.mxu0 %v1677
        %2095 = vmatpush1.bf16.msra.mxu0 %v1676
        %2096 = vmatprep.subr.bf16.mxu0 %v1681
        %2097 = vmatpush1.bf16.msra.mxu0 %v1680
        %2098 = vmatprep.subr.bf16.mxu0 %v1685
        %2099 = vmatpush1.bf16.msra.mxu0 %v1684
        %2100 = vmatprep.subr.bf16.mxu0 %v1689
        %2101 = vmatpush1.bf16.msra.mxu0 %v1688
        %2102 = vmatprep.subr.bf16.mxu0 %v1693
        %2103 = vmatpush1.bf16.msra.mxu0 %v1692
        %2104 = vmatprep.subr.bf16.mxu0 %v1697
        %2105 = vmatpush1.bf16.msra.mxu0 %v1696
        %2106 = vmatprep.subr.bf16.mxu0 %v1701
        %2107 = vmatpush1.bf16.msra.mxu0 %v1700
        %2108 = vmatprep.subr.bf16.mxu0 %v1705
        %2109 = vmatpush1.bf16.msra.mxu0 %v1704
        %2110 = vmatprep.subr.bf16.mxu0 %v1709
        %2111 = vmatpush1.bf16.msra.mxu0 %v1708
        %2112 = vmatprep.subr.bf16.mxu0 %v1713
        %2113 = vmatpush1.bf16.msra.mxu0 %v1712
        %2114 = vmatprep.subr.bf16.mxu0 %v1717
        %2115 = vmatpush1.bf16.msra.mxu0 %v1716
        %2116 = vmatprep.mubr.bf16.mxu0 %v921
        %2117 = vmatmul.mubr.bf16.gmra.mrb[0].mxu0 %v920
        %v2118 = vpop.f32.mrb[0].mxu0
        %v2119 = vadd.f32 %v2066, %v2118
        %v2120 = vpop.f32.mrb[0].mxu0
        %v2121 = vadd.f32 %v2068, %v2120
        %v2122 = vpop.f32.mrb[0].mxu0
        %v2123 = vadd.f32 %v2070, %v2122
        %v2124 = vpop.f32.mrb[0].mxu0
        %v2125 = vadd.f32 %v2072, %v2124
        %2126 = vmatprep.mubr.bf16.mxu0 %v928
        %2127 = vmatmul.mubr.bf16.gmra.mrb[0].mxu0 %v927
        %v2128 = vpop.f32.mrb[0].mxu0
        %v2129 = vadd.f32 %v2076, %v2128
        %v2130 = vpop.f32.mrb[0].mxu0
        %v2131 = vadd.f32 %v2078, %v2130
        %v2132 = vpop.f32.mrb[0].mxu0
        %v2133 = vadd.f32 %v2080, %v2132
        %v2134 = vpop.f32.mrb[0].mxu0
        %v2135 = vadd.f32 %v2082, %v2134
        %2136 = vdwg.mxu0
        %2137 = vmatprep.subr.bf16.mxu0 %v1721
        %2138 = vmatpush1.bf16.msra.mxu0 %v1720
        %2139 = vmatprep.subr.bf16.mxu0 %v1725
        %2140 = vmatpush1.bf16.msra.mxu0 %v1724
        %2141 = vmatprep.subr.bf16.mxu0 %v1729
        %2142 = vmatpush1.bf16.msra.mxu0 %v1728
        %2143 = vmatprep.subr.bf16.mxu0 %v1733
        %2144 = vmatpush1.bf16.msra.mxu0 %v1732
        %2145 = vmatprep.subr.bf16.mxu0 %v1737
        %2146 = vmatpush1.bf16.msra.mxu0 %v1736
        %2147 = vmatprep.subr.bf16.mxu0 %v1741
        %2148 = vmatpush1.bf16.msra.mxu0 %v1740
        %2149 = vmatprep.subr.bf16.mxu0 %v1745
        %2150 = vmatpush1.bf16.msra.mxu0 %v1744
        %2151 = vmatprep.subr.bf16.mxu0 %v1749
        %2152 = vmatpush1.bf16.msra.mxu0 %v1748
        %2153 = vmatprep.subr.bf16.mxu0 %v1753
        %2154 = vmatpush1.bf16.msra.mxu0 %v1752
        %2155 = vmatprep.subr.bf16.mxu0 %v1757
        %2156 = vmatpush1.bf16.msra.mxu0 %v1756
        %2157 = vmatprep.subr.bf16.mxu0 %v1761
        %2158 = vmatpush1.bf16.msra.mxu0 %v1760
        %2159 = vmatprep.subr.bf16.mxu0 %v1765
        %2160 = vmatpush1.bf16.msra.mxu0 %v1764
        %2161 = vmatprep.subr.bf16.mxu0 %v1769
        %2162 = vmatpush1.bf16.msra.mxu0 %v1768
        %2163 = vmatprep.subr.bf16.mxu0 %v1773
        %2164 = vmatpush1.bf16.msra.mxu0 %v1772
        %2165 = vmatprep.subr.bf16.mxu0 %v1777
        %2166 = vmatpush1.bf16.msra.mxu0 %v1776
        %2167 = vmatprep.subr.bf16.mxu0 %v1781
        %2168 = vmatpush1.bf16.msra.mxu0 %v1780
        %2169 = vmatprep.mubr.bf16.mxu0 %v923
        %2170 = vmatmul.mubr.bf16.gmra.mrb[0].mxu0 %v922
        %v2171 = vpop.f32.mrb[0].mxu0
        %v2172 = vadd.f32 %v2119, %v2171
        %v2173 = vpop.f32.mrb[0].mxu0
        %v2174 = vadd.f32 %v2121, %v2173
        %v2175 = vpop.f32.mrb[0].mxu0
        %v2176 = vadd.f32 %v2123, %v2175
        %v2177 = vpop.f32.mrb[0].mxu0
        %v2178 = vadd.f32 %v2125, %v2177
        %2179 = vmatprep.mubr.bf16.mxu0 %v930
        %2180 = vmatmul.mubr.bf16.gmra.mrb[0].mxu0 %v929
        %v2181 = vpop.f32.mrb[0].mxu0
        %v2182 = vadd.f32 %v2129, %v2181
        %v2183 = vpop.f32.mrb[0].mxu0
        %v2184 = vadd.f32 %v2131, %v2183
        %v2185 = vpop.f32.mrb[0].mxu0
        %v2186 = vadd.f32 %v2133, %v2185
        %v2187 = vpop.f32.mrb[0].mxu0
        %v2188 = vadd.f32 %v2135, %v2187
        %2189 = vdwg.mxu0
        %2190 = vmatprep.subr.bf16.mxu0 %v1785
        %2191 = vmatpush1.bf16.msra.mxu0 %v1784
        %2192 = vmatprep.subr.bf16.mxu0 %v1789
        %2193 = vmatpush1.bf16.msra.mxu0 %v1788
        %2194 = vmatprep.subr.bf16.mxu0 %v1793
        %2195 = vmatpush1.bf16.msra.mxu0 %v1792
        %2196 = vmatprep.subr.bf16.mxu0 %v1797
        %2197 = vmatpush1.bf16.msra.mxu0 %v1796
        %2198 = vmatprep.subr.bf16.mxu0 %v1801
        %2199 = vmatpush1.bf16.msra.mxu0 %v1800
        %2200 = vmatprep.subr.bf16.mxu0 %v1805
        %2201 = vmatpush1.bf16.msra.mxu0 %v1804
        %2202 = vmatprep.subr.bf16.mxu0 0
        %2203 = vmatpush1.bf16.msra.mxu0 0
        %2204 = vmatprep.subr.bf16.mxu0 0
        %2205 = vmatpush1.bf16.msra.mxu0 0
        %2206 = vmatprep.subr.bf16.mxu0 0
        %2207 = vmatpush1.bf16.msra.mxu0 0
        %2208 = vmatprep.subr.bf16.mxu0 0
        %2209 = vmatpush1.bf16.msra.mxu0 0
        %2210 = vmatprep.subr.bf16.mxu0 0
        %2211 = vmatpush1.bf16.msra.mxu0 0
        %2212 = vmatprep.subr.bf16.mxu0 0
        %2213 = vmatpush1.bf16.msra.mxu0 0
        %2214 = vmatprep.subr.bf16.mxu0 0
        %2215 = vmatpush1.bf16.msra.mxu0 0
        %2216 = vmatprep.subr.bf16.mxu0 0
        %2217 = vmatpush1.bf16.msra.mxu0 0
        %2218 = vmatprep.subr.bf16.mxu0 0
        %2219 = vmatpush1.bf16.msra.mxu0 0
        %2220 = vmatprep.subr.bf16.mxu0 0
        %2221 = vmatpush1.bf16.msra.mxu0 0
        %2222 = vmatprep.mubr.bf16.mxu0 0
        %2223 = vmatmul.mubr.bf16.gmra.mrb[0].mxu0 %v2026
        %v2224 = vpop.f32.mrb[0].mxu0
        %v2225 = vadd.f32 %v2172, %v2224
        %v2226 = vpop.f32.mrb[0].mxu0
        %v2227 = vadd.f32 %v2174, %v2226
        %v2228 = vpop.f32.mrb[0].mxu0
        %v2229 = vadd.f32 %v2176, %v2228
        %v2230 = vpop.f32.mrb[0].mxu0
        %v2231 = vadd.f32 %v2178, %v2230
        %2232 = vmatprep.mubr.bf16.mxu0 0
        %2233 = vmatmul.mubr.bf16.gmra.mrb[0].mxu0 %v2029
        %v2234 = vpop.f32.mrb[0].mxu0
        %v2235 = vadd.f32 %v2182, %v2234
        %v2236 = vpop.f32.mrb[0].mxu0
        %v2237 = vadd.f32 %v2184, %v2236
        %v2238 = vpop.f32.mrb[0].mxu0
        %v2239 = vadd.f32 %v2186, %v2238
        %v2240 = vpop.f32.mrb[0].mxu0
        %v2241 = vadd.f32 %v2188, %v2240
        %2242 = vdwg.mxu0
        %2243 = vmatprep.subr.bf16.mxu0 %v1595
        %2244 = vmatpush1.bf16.msra.mxu0 %v1594
        %2245 = vmatprep.subr.bf16.mxu0 %v1599
        %2246 = vmatpush1.bf16.msra.mxu0 %v1598
        %2247 = vmatprep.subr.bf16.mxu0 %v1603
        %2248 = vmatpush1.bf16.msra.mxu0 %v1602
        %2249 = vmatprep.subr.bf16.mxu0 %v1607
        %2250 = vmatpush1.bf16.msra.mxu0 %v1606
        %2251 = vmatprep.subr.bf16.mxu0 %v1611
        %2252 = vmatpush1.bf16.msra.mxu0 %v1610
        %2253 = vmatprep.subr.bf16.mxu0 %v1615
        %2254 = vmatpush1.bf16.msra.mxu0 %v1614
        %2255 = vmatprep.subr.bf16.mxu0 %v1619
        %2256 = vmatpush1.bf16.msra.mxu0 %v1618
        %2257 = vmatprep.subr.bf16.mxu0 %v1623
        %2258 = vmatpush1.bf16.msra.mxu0 %v1622
        %2259 = vmatprep.subr.bf16.mxu0 %v1627
        %2260 = vmatpush1.bf16.msra.mxu0 %v1626
        %2261 = vmatprep.subr.bf16.mxu0 %v1631
        %2262 = vmatpush1.bf16.msra.mxu0 %v1630
        %2263 = vmatprep.subr.bf16.mxu0 %v1635
        %2264 = vmatpush1.bf16.msra.mxu0 %v1634
        %2265 = vmatprep.subr.bf16.mxu0 %v1639
        %2266 = vmatpush1.bf16.msra.mxu0 %v1638
        %2267 = vmatprep.subr.bf16.mxu0 %v1643
        %2268 = vmatpush1.bf16.msra.mxu0 %v1642
        %2269 = vmatprep.subr.bf16.mxu0 %v1647
        %2270 = vmatpush1.bf16.msra.mxu0 %v1646
        %2271 = vmatprep.subr.bf16.mxu0 %v1651
        %2272 = vmatpush1.bf16.msra.mxu0 %v1650
        %2273 = vmatprep.subr.bf16.mxu0 %v1655
        %2274 = vmatpush1.bf16.msra.mxu0 %v1654
        %2275 = vmatprep.mubr.bf16.mxu0 %v919
        %2276 = vmatmul.mubr.bf16.gmra.mrb[0].mxu0 %v918
        %v2277 = vpop.f32.mrb[0].mxu0
        %v2278 = vadd.f32 %v857, %v2277
        %v2279 = vpop.f32.mrb[0].mxu0
        %v2280 = vadd.f32 %v857, %v2279
        %v2281 = vpop.f32.mrb[0].mxu0
        %v2282 = vadd.f32 %v862, %v2281
        %v2283 = vpop.f32.mrb[0].mxu0
        %v2284 = vadd.f32 %v862, %v2283
        %2285 = vmatprep.mubr.bf16.mxu0 %v926
        %2286 = vmatmul.mubr.bf16.gmra.mrb[0].mxu0 %v925
        %v2287 = vpop.f32.mrb[0].mxu0
        %v2288 = vadd.f32 %v867, %v2287
        %v2289 = vpop.f32.mrb[0].mxu0
        %v2290 = vadd.f32 %v867, %v2289
        %v2291 = vpop.f32.mrb[0].mxu0
        %v2292 = vadd.f32 %v872, %v2291
        %v2293 = vpop.f32.mrb[0].mxu0
        %v2294 = vadd.f32 %v872, %v2293
        %2295 = vdwg.mxu0
        %2296 = vmatprep.subr.bf16.mxu0 %v1659
        %2297 = vmatpush1.bf16.msra.mxu0 %v1658
        %2298 = vmatprep.subr.bf16.mxu0 %v1663
        %2299 = vmatpush1.bf16.msra.mxu0 %v1662
        %2300 = vmatprep.subr.bf16.mxu0 %v1667
        %2301 = vmatpush1.bf16.msra.mxu0 %v1666
        %2302 = vmatprep.subr.bf16.mxu0 %v1671
        %2303 = vmatpush1.bf16.msra.mxu0 %v1670
        %2304 = vmatprep.subr.bf16.mxu0 %v1675
        %2305 = vmatpush1.bf16.msra.mxu0 %v1674
        %2306 = vmatprep.subr.bf16.mxu0 %v1679
        %2307 = vmatpush1.bf16.msra.mxu0 %v1678
        %2308 = vmatprep.subr.bf16.mxu0 %v1683
        %2309 = vmatpush1.bf16.msra.mxu0 %v1682
        %2310 = vmatprep.subr.bf16.mxu0 %v1687
        %2311 = vmatpush1.bf16.msra.mxu0 %v1686
        %2312 = vmatprep.subr.bf16.mxu0 %v1691
        %2313 = vmatpush1.bf16.msra.mxu0 %v1690
        %2314 = vmatprep.subr.bf16.mxu0 %v1695
        %2315 = vmatpush1.bf16.msra.mxu0 %v1694
        %2316 = vmatprep.subr.bf16.mxu0 %v1699
        %2317 = vmatpush1.bf16.msra.mxu0 %v1698
        %2318 = vmatprep.subr.bf16.mxu0 %v1703
        %2319 = vmatpush1.bf16.msra.mxu0 %v1702
        %2320 = vmatprep.subr.bf16.mxu0 %v1707
        %2321 = vmatpush1.bf16.msra.mxu0 %v1706
        %2322 = vmatprep.subr.bf16.mxu0 %v1711
        %2323 = vmatpush1.bf16.msra.mxu0 %v1710
        %2324 = vmatprep.subr.bf16.mxu0 %v1715
        %2325 = vmatpush1.bf16.msra.mxu0 %v1714
        %2326 = vmatprep.subr.bf16.mxu0 %v1719
        %2327 = vmatpush1.bf16.msra.mxu0 %v1718
        %2328 = vmatprep.mubr.bf16.mxu0 %v921
        %2329 = vmatmul.mubr.bf16.gmra.mrb[0].mxu0 %v920
        %v2330 = vpop.f32.mrb[0].mxu0
        %v2331 = vadd.f32 %v2278, %v2330
        %v2332 = vpop.f32.mrb[0].mxu0
        %v2333 = vadd.f32 %v2280, %v2332
        %v2334 = vpop.f32.mrb[0].mxu0
        %v2335 = vadd.f32 %v2282, %v2334
        %v2336 = vpop.f32.mrb[0].mxu0
        %v2337 = vadd.f32 %v2284, %v2336
        %2338 = vmatprep.mubr.bf16.mxu0 %v928
        %2339 = vmatmul.mubr.bf16.gmra.mrb[0].mxu0 %v927
        %v2340 = vpop.f32.mrb[0].mxu0
        %v2341 = vadd.f32 %v2288, %v2340
        %v2342 = vpop.f32.mrb[0].mxu0
        %v2343 = vadd.f32 %v2290, %v2342
        %v2344 = vpop.f32.mrb[0].mxu0
        %v2345 = vadd.f32 %v2292, %v2344
        %v2346 = vpop.f32.mrb[0].mxu0
        %v2347 = vadd.f32 %v2294, %v2346
        %2348 = vdwg.mxu0
        %2349 = vmatprep.subr.bf16.mxu0 %v1723
        %2350 = vmatpush1.bf16.msra.mxu0 %v1722
        %2351 = vmatprep.subr.bf16.mxu0 %v1727
        %2352 = vmatpush1.bf16.msra.mxu0 %v1726
        %2353 = vmatprep.subr.bf16.mxu0 %v1731
        %2354 = vmatpush1.bf16.msra.mxu0 %v1730
        %2355 = vmatprep.subr.bf16.mxu0 %v1735
        %2356 = vmatpush1.bf16.msra.mxu0 %v1734
        %2357 = vmatprep.subr.bf16.mxu0 %v1739
        %2358 = vmatpush1.bf16.msra.mxu0 %v1738
        %2359 = vmatprep.subr.bf16.mxu0 %v1743
        %2360 = vmatpush1.bf16.msra.mxu0 %v1742
        %2361 = vmatprep.subr.bf16.mxu0 %v1747
        %2362 = vmatpush1.bf16.msra.mxu0 %v1746
        %2363 = vmatprep.subr.bf16.mxu0 %v1751
        %2364 = vmatpush1.bf16.msra.mxu0 %v1750
        %2365 = vmatprep.subr.bf16.mxu0 %v1755
        %2366 = vmatpush1.bf16.msra.mxu0 %v1754
        %2367 = vmatprep.subr.bf16.mxu0 %v1759
        %2368 = vmatpush1.bf16.msra.mxu0 %v1758
        %2369 = vmatprep.subr.bf16.mxu0 %v1763
        %2370 = vmatpush1.bf16.msra.mxu0 %v1762
        %2371 = vmatprep.subr.bf16.mxu0 %v1767
        %2372 = vmatpush1.bf16.msra.mxu0 %v1766
        %2373 = vmatprep.subr.bf16.mxu0 %v1771
        %2374 = vmatpush1.bf16.msra.mxu0 %v1770
        %2375 = vmatprep.subr.bf16.mxu0 %v1775
        %2376 = vmatpush1.bf16.msra.mxu0 %v1774
        %2377 = vmatprep.subr.bf16.mxu0 %v1779
        %2378 = vmatpush1.bf16.msra.mxu0 %v1778
        %2379 = vmatprep.subr.bf16.mxu0 %v1783
        %2380 = vmatpush1.bf16.msra.mxu0 %v1782
        %2381 = vmatprep.mubr.bf16.mxu0 %v923
        %2382 = vmatmul.mubr.bf16.gmra.mrb[0].mxu0 %v922
        %v2383 = vpop.f32.mrb[0].mxu0
        %v2384 = vadd.f32 %v2331, %v2383
        %v2385 = vpop.f32.mrb[0].mxu0
        %v2386 = vadd.f32 %v2333, %v2385
        %v2387 = vpop.f32.mrb[0].mxu0
        %v2388 = vadd.f32 %v2335, %v2387
        %v2389 = vpop.f32.mrb[0].mxu0
        %v2390 = vadd.f32 %v2337, %v2389
        %2391 = vmatprep.mubr.bf16.mxu0 %v930
        %2392 = vmatmul.mubr.bf16.gmra.mrb[0].mxu0 %v929
        %v2393 = vpop.f32.mrb[0].mxu0
        %v2394 = vadd.f32 %v2341, %v2393
        %v2395 = vpop.f32.mrb[0].mxu0
        %v2396 = vadd.f32 %v2343, %v2395
        %v2397 = vpop.f32.mrb[0].mxu0
        %v2398 = vadd.f32 %v2345, %v2397
        %v2399 = vpop.f32.mrb[0].mxu0
        %v2400 = vadd.f32 %v2347, %v2399
        %2401 = vdwg.mxu0
        %2402 = vmatprep.subr.bf16.mxu0 %v1787
        %2403 = vmatpush1.bf16.msra.mxu0 %v1786
        %2404 = vmatprep.subr.bf16.mxu0 %v1791
        %2405 = vmatpush1.bf16.msra.mxu0 %v1790
        %2406 = vmatprep.subr.bf16.mxu0 %v1795
        %2407 = vmatpush1.bf16.msra.mxu0 %v1794
        %2408 = vmatprep.subr.bf16.mxu0 %v1799
        %2409 = vmatpush1.bf16.msra.mxu0 %v1798
        %2410 = vmatprep.subr.bf16.mxu0 %v1803
        %2411 = vmatpush1.bf16.msra.mxu0 %v1802
        %2412 = vmatprep.subr.bf16.mxu0 %v1807
        %2413 = vmatpush1.bf16.msra.mxu0 %v1806
        %2414 = vmatprep.subr.bf16.mxu0 0
        %2415 = vmatpush1.bf16.msra.mxu0 0
        %2416 = vmatprep.subr.bf16.mxu0 0
        %2417 = vmatpush1.bf16.msra.mxu0 0
        %2418 = vmatprep.subr.bf16.mxu0 0
        %2419 = vmatpush1.bf16.msra.mxu0 0
        %2420 = vmatprep.subr.bf16.mxu0 0
        %2421 = vmatpush1.bf16.msra.mxu0 0
        %2422 = vmatprep.subr.bf16.mxu0 0
        %2423 = vmatpush1.bf16.msra.mxu0 0
        %2424 = vmatprep.subr.bf16.mxu0 0
        %2425 = vmatpush1.bf16.msra.mxu0 0
        %2426 = vmatprep.subr.bf16.mxu0 0
        %2427 = vmatpush1.bf16.msra.mxu0 0
        %2428 = vmatprep.subr.bf16.mxu0 0
        %2429 = vmatpush1.bf16.msra.mxu0 0
        %2430 = vmatprep.subr.bf16.mxu0 0
        %2431 = vmatpush1.bf16.msra.mxu0 0
        %2432 = vmatprep.subr.bf16.mxu0 0
        %2433 = vmatpush1.bf16.msra.mxu0 0
        %2434 = vmatprep.mubr.bf16.mxu0 0
        %2435 = vmatmul.mubr.bf16.gmra.mrb[0].mxu0 %v2026
        %v2436 = vpop.f32.mrb[0].mxu0
        %v2437 = vadd.f32 %v2384, %v2436
        %v2438 = vpop.f32.mrb[0].mxu0
        %v2439 = vadd.f32 %v2386, %v2438
        %v2440 = vpop.f32.mrb[0].mxu0
        %v2441 = vadd.f32 %v2388, %v2440
        %v2442 = vpop.f32.mrb[0].mxu0
        %v2443 = vadd.f32 %v2390, %v2442
        %2444 = vmatprep.mubr.bf16.mxu0 0
        %2445 = vmatmul.mubr.bf16.gmra.mrb[0].mxu0 %v2029
        %v2446 = vpop.f32.mrb[0].mxu0
        %v2447 = vadd.f32 %v2394, %v2446
        %v2448 = vpop.f32.mrb[0].mxu0
        %v2449 = vadd.f32 %v2396, %v2448
        %v2450 = vpop.f32.mrb[0].mxu0
        %v2451 = vadd.f32 %v2398, %v2450
        %v2452 = vpop.f32.mrb[0].mxu0
        %v2453 = vadd.f32 %v2400, %v2452
        %2454 = vdwg.mxu0
        %v2455 = vmax.f32 %v2225, 0.0
        %v2456 = vmax.f32 %v2227, 0.0
        %v2457 = vmax.f32 %v2437, 0.0
        %v2458 = vmax.f32 %v2439, 0.0
        %v2459 = vmax.f32 %v2229, 0.0
        %v2460 = vmax.f32 %v2231, 0.0
        %v2461 = vmax.f32 %v2441, 0.0
        %v2462 = vmax.f32 %v2443, 0.0
        %v2463 = vmax.f32 %v2235, 0.0
        %v2464 = vmax.f32 %v2237, 0.0
        %v2465 = vmax.f32 %v2447, 0.0
        %v2466 = vmax.f32 %v2449, 0.0
        %v2467 = vmax.f32 %v2239, 0.0
        %v2468 = vmax.f32 %v2241, 0.0
        %v2469 = vmax.f32 %v2451, 0.0
        %v2470 = vmax.f32 %v2453, 0.0
        %v2471 = vpack.c.bf16 %v2459, %v2455
        %v2472 = vpack.c.bf16 %v2460, %v2456
        %v2473 = vpack.c.bf16 %v2461, %v2457
        %v2474 = vpack.c.bf16 %v2462, %v2458
        %v2475 = vpack.c.bf16 %v2467, %v2463
        %v2476 = vpack.c.bf16 %v2468, %v2464
        %v2477 = vpack.c.bf16 %v2469, %v2465
        %v2478 = vpack.c.bf16 %v2470, %v2466
        %v2487 = vunpack.c.l.b16 %v2471
        %v2488 = vunpack.c.l.b16 %v2472
        %v2489 = vunpack.c.l.b16 %v2473
        %v2490 = vunpack.c.l.b16 %v2474
        %v2491 = vunpack.c.h.b16 %v2471
        %v2492 = vunpack.c.h.b16 %v2472
        %v2493 = vunpack.c.h.b16 %v2473
        %v2494 = vunpack.c.h.b16 %v2474
        %v2495 = vunpack.c.l.b16 %v2475
        %v2496 = vunpack.c.l.b16 %v2476
        %v2497 = vunpack.c.l.b16 %v2477
        %v2498 = vunpack.c.l.b16 %v2478
        %v2499 = vunpack.c.h.b16 %v2475
        %v2500 = vunpack.c.h.b16 %v2476
        %v2501 = vunpack.c.h.b16 %v2477
        %v2502 = vunpack.c.h.b16 %v2478
        %v2503 = vpack.c.b16 %v2488, %v2487
        %v2504 = vpack.c.b16 %v2490, %v2489
        %v2505 = vpack.c.b16 %v2492, %v2491
        %v2506 = vpack.c.b16 %v2494, %v2493
        %v2507 = vpack.c.b16 %v2496, %v2495
        %v2508 = vpack.c.b16 %v2498, %v2497
        %v2509 = vpack.c.b16 %v2500, %v2499
        %v2510 = vpack.c.b16 %v2502, %v2501
        %2519 = vst [vmem:[%s614] sm:$0xff] %v2503
        %2520 = vst [vmem:[%s614 + $0x8] sm:$0xff] %v2504
        %2521 = vst [vmem:[%s614 + $0x10] sm:$0xff] %v2505
        %2522 = vst [vmem:[%s614 + $0x18] sm:$0xff] %v2506
        %2523 = vst [vmem:[%s614 + $0x20] sm:$0xff] %v2507
        %2524 = vst [vmem:[%s614 + $0x28] sm:$0xff] %v2508
        %2525 = vst [vmem:[%s614 + $0x30] sm:$0xff] %v2509
        %2526 = vst [vmem:[%s614 + $0x38] sm:$0xff] %v2510
        %s2527 = sand.u32 %s90, 1
        %s2528 = sand.u32 %s90, 1
        %s2529 = smul.addr %s2528, 64
        %s2530 = scalar_lea.vmem [#allocation3], %s2529
        // Predicated region
        $region56: #{forward.9} parent=50 // pred_check
          %p2531 = pneg %p100
        $region57: #{forward.9} parent=50 // pred_check_branch
          %2533 = sbr.rel (%p2531) target = $region59
        $region58: #{forward.9} parent=50 // pred_region
          %s2534 = smul.u32 4, %s14
          %s2535 = smul.addr %s2534, 4
          %s2536 = scalar_lea.vmem %s3, %s2535
          // Predicated region
          $region60: #{forward.9} parent=58 // pred_check
            _
          $region61: #{forward.9} parent=58 // pred_check_branch
            %2538 = sbr.rel (0) target = $region63
          $region62: #{forward.9} parent=58 // pred_region
            // Predicated region
            $region64: #{forward.9} parent=62 // pred_check
              _
            $region65: #{forward.9} parent=62 // pred_check_branch
              %2540 = sbr.rel (0) target = $region67
            $region66: #{forward.9} parent=62 // pred_region
              loop: start=0, step=1, limit=1
              $region68: #{forward.9} parent=66 // loop_pre_header
                _
              $region69: #{forward.9} parent=66 // loop_header
                %s2542 = sphi 0, %s2546
                %p2543 = scmp.ge.s32.totalorder %s2542, 1
                %s2547 = sphi %s2530, %s2530
                %s2548 = sphi %s2536, %s2536
              $region70: #{forward.9} parent=66 // loop_header_branch
                %2545 = sbr.rel (%p2543) target = $region74
              $region71: #{forward.9} parent=66 // loop_body
                %v2549 = vld [vmem:[%s2547] sm:$0xff]
                %2550 = vst [vmem:[%s2548] sm:$0xff] %v2549
                %v2551 = vld [vmem:[%s2547 + $0x8] sm:$0xff]
                %2552 = vst [vmem:[%s2548 + $0x8] sm:$0xff] %v2551
                %v2553 = vld [vmem:[%s2547 + $0x10] sm:$0xff]
                %2554 = vst [vmem:[%s2548 + $0x40] sm:$0xff] %v2553
                %v2555 = vld [vmem:[%s2547 + $0x18] sm:$0xff]
                %2556 = vst [vmem:[%s2548 + $0x48] sm:$0xff] %v2555
                %v2557 = vld [vmem:[%s2547 + $0x20] sm:$0xff]
                %2558 = vst [vmem:[%s2548 + $0x80] sm:$0xff] %v2557
                %v2559 = vld [vmem:[%s2547 + $0x28] sm:$0xff]
                %2560 = vst [vmem:[%s2548 + $0x88] sm:$0xff] %v2559
                %v2561 = vld [vmem:[%s2547 + $0x30] sm:$0xff]
                %2562 = vst [vmem:[%s2548 + $0xc0] sm:$0xff] %v2561
                %v2563 = vld [vmem:[%s2547 + $0x38] sm:$0xff]
                %2564 = vst [vmem:[%s2548 + $0xc8] sm:$0xff] %v2563
              $region72: #{forward.9} parent=66 // loop_footer
                %s2546 = sadd.s32 1, %s2542
              $region73: #{forward.9} parent=66 // loop_footer_branch
                %2541 = sbr.rel target = $region69
              $region74: #{forward.9} parent=66 // loop_exit
                _
            $region67: #{forward.9} parent=62 // pred_fallthru
              _
            // Predicated region
            $region75: #{forward.9} parent=62 // pred_check
              _
            $region76: #{forward.9} parent=62 // pred_check_branch
              %2566 = sbr.rel target = $region78
            $region77: #{forward.9} parent=62 // pred_region
              _
            $region78: #{forward.9} parent=62 // pred_fallthru
              _
          $region63: #{forward.9} parent=58 // pred_fallthru
            _
          %2567 = vnop
        $region59: #{forward.9} parent=50 // pred_fallthru
          _
      $region51: #{forward.9} parent=5 // pred_fallthru
        _
      %p2568 = scmp.le.s32.totalorder 2, %s9
      // Predicated region
      $region79: #{forward.9} parent=5 // pred_check
        %p2569 = pneg %p2568
      $region80: #{forward.9} parent=5 // pred_check_branch
        %2571 = sbr.rel (%p2569) target = $region82
      $region81: #{forward.9} parent=5 // pred_region
        %s2572 = ssub.s32 %s9, 2
        // Predicated region
        $region83: #{forward.9} parent=81 // pred_check
          %p2573 = pneg %p106
        $region84: #{forward.9} parent=81 // pred_check_branch
          %2575 = sbr.rel (%p2573) target = $region86
        $region85: #{forward.9} parent=81 // pred_region
          %s2576 = sand.u32 %s91, 1
          %s2577 = sand.u32 %s91, 1
          %s2578 = smul.addr %s2577, 64
          %s2579 = scalar_lea.vmem [#allocation3], %s2578
        $region86: #{forward.9} parent=81 // pred_fallthru
          _
      $region82: #{forward.9} parent=5 // pred_fallthru
        _
    $region6: #{forward.9} parent=1 // loop_footer
      %s13 = sadd.s32 1, %s9
    $region7: #{forward.9} parent=1 // loop_footer_branch
      %8 = sbr.rel target = $region3
    $region8: #{forward.9} parent=1 // loop_exit
      _

// kernel: forward.10
$region0: #{forward.10}
  #allocation0 [shape = 'u32[]', space=smem, size = 0x4, offset = 0x4, fixed_abs, tag = 'smem constant byte address 0x4 - core index']
  #allocation1 [shape = 'u32[144,128]{1,0:T(1,128)}', space=vmem, size = 0x12000, scoped, tag = 'internal scratch']
  %s0 = inlined_call_operand.vmem [shape: bf16[32,864], index: 0, kind: input, shape index: {}]
  %s1 = inlined_call_operand.vmem [shape: f32[32,1], index: 1, kind: input, shape index: {}]
  %s2 = inlined_call_operand.vmem [shape: bf16[864,2048], index: 2, kind: input, shape index: {}]
  %s3 = inlined_call_operand.vmem [shape: bf16[32,2048], index: 3, kind: input, shape index: {}]
  %s4 = inlined_call_operand.vmem [shape: bf16[32,2048], index: 4, kind: output, shape index: {}]
  %s5 = sld [smem:[#allocation0]]
  $region114: #{forward.10} parent=0
    _
  %s7 = ssub.s32 1, %s5
  %s8 = scalar_select 0, %s7, %s5
  $region1: #{forward.10} parent=0
    #allocation2 [shape = 'u8[1769472]{0}', space=vmem, size = 0x1b0000, scoped, tag = 'input window, operand 2']
    #allocation3 [shape = 'u8[65536]{0}', space=vmem, size = 0x10000, scoped, tag = 'input window, operand 3']
    #allocation4 [shape = 'u8[65536]{0}', space=vmem, size = 0x10000, scoped, tag = 'output window, operand 0']
    loop: start=0, step=1, limit=6
    $region2: #{forward.10} parent=1 // loop_pre_header
      _
    $region3: #{forward.10} parent=1 // loop_header
      %s10 = sphi 0, %s14
      %p11 = scmp.ge.s32.totalorder %s10, 6
      %s18 = sphi 0, %s18
      %s20 = sphi 0, %s18
      %s21 = sphi 0, %s20
      %s35 = sphi 0, %s21
      %s39 = sphi 0, %s39
      %s41 = sphi 0, %s39
      %s42 = sphi 0, %s41
      %s56 = sphi 0, %s42
      %s62 = sphi 0, %s64
      %s65 = sphi 0, %s62
      %s66 = sphi 0, %s65
      %s82 = sphi 0, %s66
      %s88 = sphi 0, %s90
      %s91 = sphi 0, %s88
      %s92 = sphi 0, %s91
      %s108 = sphi 0, %s92
      %s114 = sphi 0, %s116
      %s117 = sphi 0, %s114
      %s118 = sphi 0, %s117
      %s134 = sphi 0, %s118
    $region4: #{forward.10} parent=1 // loop_header_branch
      %13 = sbr.rel (%p11) target = $region8
    $region5: #{forward.10} parent=1 // loop_body
      %s15 = ssub.s32 %s10, 1
      %s16 = ssub.s32 %s10, 2
      %s17 = sadd.s32 %s10, 1
      %s19 = sadd.s32 %s18, 1
      %p22 = scmp.eq.s32.totalorder %s10, 3
      %p23 = scmp.ne.s32.totalorder %s18, %s20
      %p24 = scmp.eq.s32.totalorder %s10, 0
      %p25 = por %p23, %p24
      %p26 = scmp.ne.s32.totalorder %s18, %s20
      %p27 = scmp.eq.s32.totalorder %s15, 3
      %p28 = por %p26, %p27
      %p29 = scmp.ne.s32.totalorder %s20, %s21
      %p30 = scmp.eq.s32.totalorder %s15, 0
      %p31 = por %p29, %p30
      %p32 = scmp.ne.s32.totalorder %s20, %s21
      %p33 = scmp.eq.s32.totalorder %s16, 3
      %p34 = por %p32, %p33
      %p36 = scmp.ne.s32.totalorder %s21, %s35
      %p37 = scmp.eq.s32.totalorder %s16, 0
      %p38 = por %p36, %p37
      %s40 = sadd.s32 %s39, 1
      %p43 = scmp.eq.s32.totalorder %s10, 3
      %p44 = scmp.ne.s32.totalorder %s39, %s41
      %p45 = scmp.eq.s32.totalorder %s10, 0
      %p46 = por %p44, %p45
      %p47 = scmp.ne.s32.totalorder %s39, %s41
      %p48 = scmp.eq.s32.totalorder %s15, 3
      %p49 = por %p47, %p48
      %p50 = scmp.ne.s32.totalorder %s41, %s42
      %p51 = scmp.eq.s32.totalorder %s15, 0
      %p52 = por %p50, %p51
      %p53 = scmp.ne.s32.totalorder %s41, %s42
      %p54 = scmp.eq.s32.totalorder %s16, 3
      %p55 = por %p53, %p54
      %p57 = scmp.ne.s32.totalorder %s42, %s56
      %p58 = scmp.eq.s32.totalorder %s16, 0
      %p59 = por %p57, %p58
      %s60 = ssub.s32 %s10, %s17
      %p61 = scmp.eq.s32.totalorder %s60, 0
      %s63 = sadd.s32 %s62, 1
      %s64 = scalar_select %p61, %s62, %s63
      %p67 = pneg %p61
      %p68 = scmp.eq.s32.totalorder %s10, 3
      %p69 = por %p67, %p68
      %p70 = scmp.ne.s32.totalorder %s62, %s65
      %p71 = scmp.eq.s32.totalorder %s10, 0
      %p72 = por %p70, %p71
      %p73 = scmp.ne.s32.totalorder %s62, %s65
      %p74 = scmp.eq.s32.totalorder %s15, 3
      %p75 = por %p73, %p74
      %p76 = scmp.ne.s32.totalorder %s65, %s66
      %p77 = scmp.eq.s32.totalorder %s15, 0
      %p78 = por %p76, %p77
      %p79 = scmp.ne.s32.totalorder %s65, %s66
      %p80 = scmp.eq.s32.totalorder %s16, 3
      %p81 = por %p79, %p80
      %p83 = scmp.ne.s32.totalorder %s66, %s82
      %p84 = scmp.eq.s32.totalorder %s16, 0
      %p85 = por %p83, %p84
      %s86 = ssub.s32 %s10, %s17
      %p87 = scmp.eq.s32.totalorder %s86, 0
      %s89 = sadd.s32 %s88, 1
      %s90 = scalar_select %p87, %s88, %s89
      %p93 = pneg %p87
      %p94 = scmp.eq.s32.totalorder %s10, 3
      %p95 = por %p93, %p94
      %p96 = scmp.ne.s32.totalorder %s88, %s91
      %p97 = scmp.eq.s32.totalorder %s10, 0
      %p98 = por %p96, %p97
      %p99 = scmp.ne.s32.totalorder %s88, %s91
      %p100 = scmp.eq.s32.totalorder %s15, 3
      %p101 = por %p99, %p100
      %p102 = scmp.ne.s32.totalorder %s91, %s92
      %p103 = scmp.eq.s32.totalorder %s15, 0
      %p104 = por %p102, %p103
      %p105 = scmp.ne.s32.totalorder %s91, %s92
      %p106 = scmp.eq.s32.totalorder %s16, 3
      %p107 = por %p105, %p106
      %p109 = scmp.ne.s32.totalorder %s92, %s108
      %p110 = scmp.eq.s32.totalorder %s16, 0
      %p111 = por %p109, %p110
      %s112 = ssub.s32 %s10, %s17
      %p113 = scmp.eq.s32.totalorder %s112, 0
      %s115 = sadd.s32 %s114, 1
      %s116 = scalar_select %p113, %s114, %s115
      %p119 = pneg %p113
      %p120 = scmp.eq.s32.totalorder %s10, 3
      %p121 = por %p119, %p120
      %p122 = scmp.ne.s32.totalorder %s114, %s117
      %p123 = scmp.eq.s32.totalorder %s10, 0
      %p124 = por %p122, %p123
      %p125 = scmp.ne.s32.totalorder %s114, %s117
      %p126 = scmp.eq.s32.totalorder %s15, 3
      %p127 = por %p125, %p126
      %p128 = scmp.ne.s32.totalorder %s117, %s118
      %p129 = scmp.eq.s32.totalorder %s15, 0
      %p130 = por %p128, %p129
      %p131 = scmp.ne.s32.totalorder %s117, %s118
      %p132 = scmp.eq.s32.totalorder %s16, 3
      %p133 = por %p131, %p132
      %p135 = scmp.ne.s32.totalorder %s118, %s134
      %p136 = scmp.eq.s32.totalorder %s16, 0
      %p137 = por %p135, %p136
      %p138 = scmp.le.s32.totalorder 1, %s10
      %p139 = scmp.lt.s32.totalorder %s10, 5
      %p140 = pnand %p138, %p139
      %p141 = pneg %p140
      // Predicated region
      $region9: #{forward.10} parent=5 // pred_check
        _
      $region10: #{forward.10} parent=5 // pred_check_branch
        %143 = sbr.rel (%p140) target = $region12
      $region11: #{forward.10} parent=5 // pred_region
        %s144 = ssub.s32 %s10, 1
        // Predicated region
        $region13: #{forward.10} parent=11 // pred_check
          %p145 = pneg %p31
        $region14: #{forward.10} parent=11 // pred_check_branch
          %147 = sbr.rel (%p145) target = $region16
        $region15: #{forward.10} parent=11 // pred_region
          _
        $region16: #{forward.10} parent=11 // pred_fallthru
          _
        // Predicated region
        $region17: #{forward.10} parent=11 // pred_check
          %p148 = pneg %p52
        $region18: #{forward.10} parent=11 // pred_check_branch
          %150 = sbr.rel (%p148) target = $region20
        $region19: #{forward.10} parent=11 // pred_region
          _
        $region20: #{forward.10} parent=11 // pred_fallthru
          _
      $region12: #{forward.10} parent=5 // pred_fallthru
        _
      %p151 = scmp.lt.s32.totalorder %s10, 4
      // Predicated region
      $region21: #{forward.10} parent=5 // pred_check
        %p152 = pneg %p151
      $region22: #{forward.10} parent=5 // pred_check_branch
        %154 = sbr.rel (%p152) target = $region24
      $region23: #{forward.10} parent=5 // pred_region
        // Predicated region
        $region25: #{forward.10} parent=23 // pred_check
          %p155 = pneg %p72
        $region26: #{forward.10} parent=23 // pred_check_branch
          %157 = sbr.rel (%p155) target = $region28
        $region27: #{forward.10} parent=23 // pred_region
          %s158 = sand.u32 %s62, 1
          %s159 = sand.u32 %s62, 1
          %s160 = smul.addr %s159, 1728
          %s161 = scalar_lea.vmem [#allocation2], %s160
          %s162 = smul.u32 4, %s10
          %s163 = smul.addr %s162, 4
          %s164 = scalar_lea.vmem %s2, %s163
          // Predicated region
          $region29: #{forward.10} parent=27 // pred_check
            _
          $region30: #{forward.10} parent=27 // pred_check_branch
            %166 = sbr.rel (0) target = $region32
          $region31: #{forward.10} parent=27 // pred_region
            // Predicated region
            $region33: #{forward.10} parent=31 // pred_check
              _
            $region34: #{forward.10} parent=31 // pred_check_branch
              %168 = sbr.rel (0) target = $region36
            $region35: #{forward.10} parent=31 // pred_region
              loop: start=0, step=1, limit=1
              $region37: #{forward.10} parent=35 // loop_pre_header
                _
              $region38: #{forward.10} parent=35 // loop_header
                %s170 = sphi 0, %s174
                %p171 = scmp.ge.s32.totalorder %s170, 1
                %s175 = sphi %s164, %s164
                %s176 = sphi %s161, %s161
              $region39: #{forward.10} parent=35 // loop_header_branch
                %173 = sbr.rel (%p171) target = $region43
              $region40: #{forward.10} parent=35 // loop_body
                %v177 = vld [vmem:[%s175] sm:$0xff]
                %178 = vst [vmem:[%s176] sm:$0xff] %v177
                %v179 = vld [vmem:[%s175 + $0x8] sm:$0xff]
                %180 = vst [vmem:[%s176 + $0x8] sm:$0xff] %v179
                %v181 = vld [vmem:[%s175 + $0x40] sm:$0xff]
                %182 = vst [vmem:[%s176 + $0x10] sm:$0xff] %v181
                %v183 = vld [vmem:[%s175 + $0x48] sm:$0xff]
                %184 = vst [vmem:[%s176 + $0x18] sm:$0xff] %v183
                %v185 = vld [vmem:[%s175 + $0x80] sm:$0xff]
                %186 = vst [vmem:[%s176 + $0x20] sm:$0xff] %v185
                %v187 = vld [vmem:[%s175 + $0x88] sm:$0xff]
                %188 = vst [vmem:[%s176 + $0x28] sm:$0xff] %v187
                %v189 = vld [vmem:[%s175 + $0xc0] sm:$0xff]
                %190 = vst [vmem:[%s176 + $0x30] sm:$0xff] %v189
                %v191 = vld [vmem:[%s175 + $0xc8] sm:$0xff]
                %192 = vst [vmem:[%s176 + $0x38] sm:$0xff] %v191
                %v193 = vld [vmem:[%s175 + $0x100] sm:$0xff]
                %194 = vst [vmem:[%s176 + $0x40] sm:$0xff] %v193
                %v195 = vld [vmem:[%s175 + $0x108] sm:$0xff]
                %196 = vst [vmem:[%s176 + $0x48] sm:$0xff] %v195
                %v197 = vld [vmem:[%s175 + $0x140] sm:$0xff]
                %198 = vst [vmem:[%s176 + $0x50] sm:$0xff] %v197
                %v199 = vld [vmem:[%s175 + $0x148] sm:$0xff]
                %200 = vst [vmem:[%s176 + $0x58] sm:$0xff] %v199
                %v201 = vld [vmem:[%s175 + $0x180] sm:$0xff]
                %202 = vst [vmem:[%s176 + $0x60] sm:$0xff] %v201
                %v203 = vld [vmem:[%s175 + $0x188] sm:$0xff]
                %204 = vst [vmem:[%s176 + $0x68] sm:$0xff] %v203
                %v205 = vld [vmem:[%s175 + $0x1c0] sm:$0xff]
                %206 = vst [vmem:[%s176 + $0x70] sm:$0xff] %v205
                %v207 = vld [vmem:[%s175 + $0x1c8] sm:$0xff]
                %208 = vst [vmem:[%s176 + $0x78] sm:$0xff] %v207
                %v209 = vld [vmem:[%s175 + $0x200] sm:$0xff]
                %210 = vst [vmem:[%s176 + $0x80] sm:$0xff] %v209
                %v211 = vld [vmem:[%s175 + $0x208] sm:$0xff]
                %212 = vst [vmem:[%s176 + $0x88] sm:$0xff] %v211
                %v213 = vld [vmem:[%s175 + $0x240] sm:$0xff]
                %214 = vst [vmem:[%s176 + $0x90] sm:$0xff] %v213
                %v215 = vld [vmem:[%s175 + $0x248] sm:$0xff]
                %216 = vst [vmem:[%s176 + $0x98] sm:$0xff] %v215
                %v217 = vld [vmem:[%s175 + $0x280] sm:$0xff]
                %218 = vst [vmem:[%s176 + $0xa0] sm:$0xff] %v217
                %v219 = vld [vmem:[%s175 + $0x288] sm:$0xff]
                %220 = vst [vmem:[%s176 + $0xa8] sm:$0xff] %v219
                %v221 = vld [vmem:[%s175 + $0x2c0] sm:$0xff]
                %222 = vst [vmem:[%s176 + $0xb0] sm:$0xff] %v221
                %v223 = vld [vmem:[%s175 + $0x2c8] sm:$0xff]
                %224 = vst [vmem:[%s176 + $0xb8] sm:$0xff] %v223
                %v225 = vld [vmem:[%s175 + $0x300] sm:$0xff]
                %226 = vst [vmem:[%s176 + $0xc0] sm:$0xff] %v225
                %v227 = vld [vmem:[%s175 + $0x308] sm:$0xff]
                %228 = vst [vmem:[%s176 + $0xc8] sm:$0xff] %v227
                %v229 = vld [vmem:[%s175 + $0x340] sm:$0xff]
                %230 = vst [vmem:[%s176 + $0xd0] sm:$0xff] %v229
                %v231 = vld [vmem:[%s175 + $0x348] sm:$0xff]
                %232 = vst [vmem:[%s176 + $0xd8] sm:$0xff] %v231
                %v233 = vld [vmem:[%s175 + $0x380] sm:$0xff]
                %234 = vst [vmem:[%s176 + $0xe0] sm:$0xff] %v233
                %v235 = vld [vmem:[%s175 + $0x388] sm:$0xff]
                %236 = vst [vmem:[%s176 + $0xe8] sm:$0xff] %v235
                %v237 = vld [vmem:[%s175 + $0x3c0] sm:$0xff]
                %238 = vst [vmem:[%s176 + $0xf0] sm:$0xff] %v237
                %v239 = vld [vmem:[%s175 + $0x3c8] sm:$0xff]
                %240 = vst [vmem:[%s176 + $0xf8] sm:$0xff] %v239
                %v241 = vld [vmem:[%s175 + $0x400] sm:$0xff]
                %242 = vst [vmem:[%s176 + $0x100] sm:$0xff] %v241
                %v243 = vld [vmem:[%s175 + $0x408] sm:$0xff]
                %244 = vst [vmem:[%s176 + $0x108] sm:$0xff] %v243
                %v245 = vld [vmem:[%s175 + $0x440] sm:$0xff]
                %246 = vst [vmem:[%s176 + $0x110] sm:$0xff] %v245
                %v247 = vld [vmem:[%s175 + $0x448] sm:$0xff]
                %248 = vst [vmem:[%s176 + $0x118] sm:$0xff] %v247
                %v249 = vld [vmem:[%s175 + $0x480] sm:$0xff]
                %250 = vst [vmem:[%s176 + $0x120] sm:$0xff] %v249
                %v251 = vld [vmem:[%s175 + $0x488] sm:$0xff]
                %252 = vst [vmem:[%s176 + $0x128] sm:$0xff] %v251
                %v253 = vld [vmem:[%s175 + $0x4c0] sm:$0xff]
                %254 = vst [vmem:[%s176 + $0x130] sm:$0xff] %v253
                %v255 = vld [vmem:[%s175 + $0x4c8] sm:$0xff]
                %256 = vst [vmem:[%s176 + $0x138] sm:$0xff] %v255
                %v257 = vld [vmem:[%s175 + $0x500] sm:$0xff]
                %258 = vst [vmem:[%s176 + $0x140] sm:$0xff] %v257
                %v259 = vld [vmem:[%s175 + $0x508] sm:$0xff]
                %260 = vst [vmem:[%s176 + $0x148] sm:$0xff] %v259
                %v261 = vld [vmem:[%s175 + $0x540] sm:$0xff]
                %262 = vst [vmem:[%s176 + $0x150] sm:$0xff] %v261
                %v263 = vld [vmem:[%s175 + $0x548] sm:$0xff]
                %264 = vst [vmem:[%s176 + $0x158] sm:$0xff] %v263
                %v265 = vld [vmem:[%s175 + $0x580] sm:$0xff]
                %266 = vst [vmem:[%s176 + $0x160] sm:$0xff] %v265
                %v267 = vld [vmem:[%s175 + $0x588] sm:$0xff]
                %268 = vst [vmem:[%s176 + $0x168] sm:$0xff] %v267
                %v269 = vld [vmem:[%s175 + $0x5c0] sm:$0xff]
                %270 = vst [vmem:[%s176 + $0x170] sm:$0xff] %v269
                %v271 = vld [vmem:[%s175 + $0x5c8] sm:$0xff]
                %272 = vst [vmem:[%s176 + $0x178] sm:$0xff] %v271
                %v273 = vld [vmem:[%s175 + $0x600] sm:$0xff]
                %274 = vst [vmem:[%s176 + $0x180] sm:$0xff] %v273
                %v275 = vld [vmem:[%s175 + $0x608] sm:$0xff]
                %276 = vst [vmem:[%s176 + $0x188] sm:$0xff] %v275
                %v277 = vld [vmem:[%s175 + $0x640] sm:$0xff]
                %278 = vst [vmem:[%s176 + $0x190] sm:$0xff] %v277
                %v279 = vld [vmem:[%s175 + $0x648] sm:$0xff]
                %280 = vst [vmem:[%s176 + $0x198] sm:$0xff] %v279
                %v281 = vld [vmem:[%s175 + $0x680] sm:$0xff]
                %282 = vst [vmem:[%s176 + $0x1a0] sm:$0xff] %v281
                %v283 = vld [vmem:[%s175 + $0x688] sm:$0xff]
                %284 = vst [vmem:[%s176 + $0x1a8] sm:$0xff] %v283
                %v285 = vld [vmem:[%s175 + $0x6c0] sm:$0xff]
                %286 = vst [vmem:[%s176 + $0x1b0] sm:$0xff] %v285
                %v287 = vld [vmem:[%s175 + $0x6c8] sm:$0xff]
                %288 = vst [vmem:[%s176 + $0x1b8] sm:$0xff] %v287
                %v289 = vld [vmem:[%s175 + $0x700] sm:$0xff]
                %290 = vst [vmem:[%s176 + $0x1c0] sm:$0xff] %v289
                %v291 = vld [vmem:[%s175 + $0x708] sm:$0xff]
                %292 = vst [vmem:[%s176 + $0x1c8] sm:$0xff] %v291
                %v293 = vld [vmem:[%s175 + $0x740] sm:$0xff]
                %294 = vst [vmem:[%s176 + $0x1d0] sm:$0xff] %v293
                %v295 = vld [vmem:[%s175 + $0x748] sm:$0xff]
                %296 = vst [vmem:[%s176 + $0x1d8] sm:$0xff] %v295
                %v297 = vld [vmem:[%s175 + $0x780] sm:$0xff]
                %298 = vst [vmem:[%s176 + $0x1e0] sm:$0xff] %v297
                %v299 = vld [vmem:[%s175 + $0x788] sm:$0xff]
                %300 = vst [vmem:[%s176 + $0x1e8] sm:$0xff] %v299
                %v301 = vld [vmem:[%s175 + $0x7c0] sm:$0xff]
                %302 = vst [vmem:[%s176 + $0x1f0] sm:$0xff] %v301
                %v303 = vld [vmem:[%s175 + $0x7c8] sm:$0xff]
                %304 = vst [vmem:[%s176 + $0x1f8] sm:$0xff] %v303
                %v305 = vld [vmem:[%s175 + $0x800] sm:$0xff]
                %306 = vst [vmem:[%s176 + $0x200] sm:$0xff] %v305
                %v307 = vld [vmem:[%s175 + $0x808] sm:$0xff]
                %308 = vst [vmem:[%s176 + $0x208] sm:$0xff] %v307
                %v309 = vld [vmem:[%s175 + $0x840] sm:$0xff]
                %310 = vst [vmem:[%s176 + $0x210] sm:$0xff] %v309
                %v311 = vld [vmem:[%s175 + $0x848] sm:$0xff]
                %312 = vst [vmem:[%s176 + $0x218] sm:$0xff] %v311
                %v313 = vld [vmem:[%s175 + $0x880] sm:$0xff]
                %314 = vst [vmem:[%s176 + $0x220] sm:$0xff] %v313
                %v315 = vld [vmem:[%s175 + $0x888] sm:$0xff]
                %316 = vst [vmem:[%s176 + $0x228] sm:$0xff] %v315
                %v317 = vld [vmem:[%s175 + $0x8c0] sm:$0xff]
                %318 = vst [vmem:[%s176 + $0x230] sm:$0xff] %v317
                %v319 = vld [vmem:[%s175 + $0x8c8] sm:$0xff]
                %320 = vst [vmem:[%s176 + $0x238] sm:$0xff] %v319
                %v321 = vld [vmem:[%s175 + $0x900] sm:$0xff]
                %322 = vst [vmem:[%s176 + $0x240] sm:$0xff] %v321
                %v323 = vld [vmem:[%s175 + $0x908] sm:$0xff]
                %324 = vst [vmem:[%s176 + $0x248] sm:$0xff] %v323
                %v325 = vld [vmem:[%s175 + $0x940] sm:$0xff]
                %326 = vst [vmem:[%s176 + $0x250] sm:$0xff] %v325
                %v327 = vld [vmem:[%s175 + $0x948] sm:$0xff]
                %328 = vst [vmem:[%s176 + $0x258] sm:$0xff] %v327
                %v329 = vld [vmem:[%s175 + $0x980] sm:$0xff]
                %330 = vst [vmem:[%s176 + $0x260] sm:$0xff] %v329
                %v331 = vld [vmem:[%s175 + $0x988] sm:$0xff]
                %332 = vst [vmem:[%s176 + $0x268] sm:$0xff] %v331
                %v333 = vld [vmem:[%s175 + $0x9c0] sm:$0xff]
                %334 = vst [vmem:[%s176 + $0x270] sm:$0xff] %v333
                %v335 = vld [vmem:[%s175 + $0x9c8] sm:$0xff]
                %336 = vst [vmem:[%s176 + $0x278] sm:$0xff] %v335
                %v337 = vld [vmem:[%s175 + $0xa00] sm:$0xff]
                %338 = vst [vmem:[%s176 + $0x280] sm:$0xff] %v337
                %v339 = vld [vmem:[%s175 + $0xa08] sm:$0xff]
                %340 = vst [vmem:[%s176 + $0x288] sm:$0xff] %v339
                %v341 = vld [vmem:[%s175 + $0xa40] sm:$0xff]
                %342 = vst [vmem:[%s176 + $0x290] sm:$0xff] %v341
                %v343 = vld [vmem:[%s175 + $0xa48] sm:$0xff]
                %344 = vst [vmem:[%s176 + $0x298] sm:$0xff] %v343
                %v345 = vld [vmem:[%s175 + $0xa80] sm:$0xff]
                %346 = vst [vmem:[%s176 + $0x2a0] sm:$0xff] %v345
                %v347 = vld [vmem:[%s175 + $0xa88] sm:$0xff]
                %348 = vst [vmem:[%s176 + $0x2a8] sm:$0xff] %v347
                %v349 = vld [vmem:[%s175 + $0xac0] sm:$0xff]
                %350 = vst [vmem:[%s176 + $0x2b0] sm:$0xff] %v349
                %v351 = vld [vmem:[%s175 + $0xac8] sm:$0xff]
                %352 = vst [vmem:[%s176 + $0x2b8] sm:$0xff] %v351
                %v353 = vld [vmem:[%s175 + $0xb00] sm:$0xff]
                %354 = vst [vmem:[%s176 + $0x2c0] sm:$0xff] %v353
                %v355 = vld [vmem:[%s175 + $0xb08] sm:$0xff]
                %356 = vst [vmem:[%s176 + $0x2c8] sm:$0xff] %v355
                %v357 = vld [vmem:[%s175 + $0xb40] sm:$0xff]
                %358 = vst [vmem:[%s176 + $0x2d0] sm:$0xff] %v357
                %v359 = vld [vmem:[%s175 + $0xb48] sm:$0xff]
                %360 = vst [vmem:[%s176 + $0x2d8] sm:$0xff] %v359
                %v361 = vld [vmem:[%s175 + $0xb80] sm:$0xff]
                %362 = vst [vmem:[%s176 + $0x2e0] sm:$0xff] %v361
                %v363 = vld [vmem:[%s175 + $0xb88] sm:$0xff]
                %364 = vst [vmem:[%s176 + $0x2e8] sm:$0xff] %v363
                %v365 = vld [vmem:[%s175 + $0xbc0] sm:$0xff]
                %366 = vst [vmem:[%s176 + $0x2f0] sm:$0xff] %v365
                %v367 = vld [vmem:[%s175 + $0xbc8] sm:$0xff]
                %368 = vst [vmem:[%s176 + $0x2f8] sm:$0xff] %v367
                %v369 = vld [vmem:[%s175 + $0xc00] sm:$0xff]
                %370 = vst [vmem:[%s176 + $0x300] sm:$0xff] %v369
                %v371 = vld [vmem:[%s175 + $0xc08] sm:$0xff]
                %372 = vst [vmem:[%s176 + $0x308] sm:$0xff] %v371
                %v373 = vld [vmem:[%s175 + $0xc40] sm:$0xff]
                %374 = vst [vmem:[%s176 + $0x310] sm:$0xff] %v373
                %v375 = vld [vmem:[%s175 + $0xc48] sm:$0xff]
                %376 = vst [vmem:[%s176 + $0x318] sm:$0xff] %v375
                %v377 = vld [vmem:[%s175 + $0xc80] sm:$0xff]
                %378 = vst [vmem:[%s176 + $0x320] sm:$0xff] %v377
                %v379 = vld [vmem:[%s175 + $0xc88] sm:$0xff]
                %380 = vst [vmem:[%s176 + $0x328] sm:$0xff] %v379
                %v381 = vld [vmem:[%s175 + $0xcc0] sm:$0xff]
                %382 = vst [vmem:[%s176 + $0x330] sm:$0xff] %v381
                %v383 = vld [vmem:[%s175 + $0xcc8] sm:$0xff]
                %384 = vst [vmem:[%s176 + $0x338] sm:$0xff] %v383
                %v385 = vld [vmem:[%s175 + $0xd00] sm:$0xff]
                %386 = vst [vmem:[%s176 + $0x340] sm:$0xff] %v385
                %v387 = vld [vmem:[%s175 + $0xd08] sm:$0xff]
                %388 = vst [vmem:[%s176 + $0x348] sm:$0xff] %v387
                %v389 = vld [vmem:[%s175 + $0xd40] sm:$0xff]
                %390 = vst [vmem:[%s176 + $0x350] sm:$0xff] %v389
                %v391 = vld [vmem:[%s175 + $0xd48] sm:$0xff]
                %392 = vst [vmem:[%s176 + $0x358] sm:$0xff] %v391
                %v393 = vld [vmem:[%s175 + $0xd80] sm:$0xff]
                %394 = vst [vmem:[%s176 + $0x360] sm:$0xff] %v393
                %v395 = vld [vmem:[%s175 + $0xd88] sm:$0xff]
                %396 = vst [vmem:[%s176 + $0x368] sm:$0xff] %v395
                %v397 = vld [vmem:[%s175 + $0xdc0] sm:$0xff]
                %398 = vst [vmem:[%s176 + $0x370] sm:$0xff] %v397
                %v399 = vld [vmem:[%s175 + $0xdc8] sm:$0xff]
                %400 = vst [vmem:[%s176 + $0x378] sm:$0xff] %v399
                %v401 = vld [vmem:[%s175 + $0xe00] sm:$0xff]
                %402 = vst [vmem:[%s176 + $0x380] sm:$0xff] %v401
                %v403 = vld [vmem:[%s175 + $0xe08] sm:$0xff]
                %404 = vst [vmem:[%s176 + $0x388] sm:$0xff] %v403
                %v405 = vld [vmem:[%s175 + $0xe40] sm:$0xff]
                %406 = vst [vmem:[%s176 + $0x390] sm:$0xff] %v405
                %v407 = vld [vmem:[%s175 + $0xe48] sm:$0xff]
                %408 = vst [vmem:[%s176 + $0x398] sm:$0xff] %v407
                %v409 = vld [vmem:[%s175 + $0xe80] sm:$0xff]
                %410 = vst [vmem:[%s176 + $0x3a0] sm:$0xff] %v409
                %v411 = vld [vmem:[%s175 + $0xe88] sm:$0xff]
                %412 = vst [vmem:[%s176 + $0x3a8] sm:$0xff] %v411
                %v413 = vld [vmem:[%s175 + $0xec0] sm:$0xff]
                %414 = vst [vmem:[%s176 + $0x3b0] sm:$0xff] %v413
                %v415 = vld [vmem:[%s175 + $0xec8] sm:$0xff]
                %416 = vst [vmem:[%s176 + $0x3b8] sm:$0xff] %v415
                %v417 = vld [vmem:[%s175 + $0xf00] sm:$0xff]
                %418 = vst [vmem:[%s176 + $0x3c0] sm:$0xff] %v417
                %v419 = vld [vmem:[%s175 + $0xf08] sm:$0xff]
                %420 = vst [vmem:[%s176 + $0x3c8] sm:$0xff] %v419
                %v421 = vld [vmem:[%s175 + $0xf40] sm:$0xff]
                %422 = vst [vmem:[%s176 + $0x3d0] sm:$0xff] %v421
                %v423 = vld [vmem:[%s175 + $0xf48] sm:$0xff]
                %424 = vst [vmem:[%s176 + $0x3d8] sm:$0xff] %v423
                %v425 = vld [vmem:[%s175 + $0xf80] sm:$0xff]
                %426 = vst [vmem:[%s176 + $0x3e0] sm:$0xff] %v425
                %v427 = vld [vmem:[%s175 + $0xf88] sm:$0xff]
                %428 = vst [vmem:[%s176 + $0x3e8] sm:$0xff] %v427
                %v429 = vld [vmem:[%s175 + $0xfc0] sm:$0xff]
                %430 = vst [vmem:[%s176 + $0x3f0] sm:$0xff] %v429
                %v431 = vld [vmem:[%s175 + $0xfc8] sm:$0xff]
                %432 = vst [vmem:[%s176 + $0x3f8] sm:$0xff] %v431
                %v433 = vld [vmem:[%s175 + $0x1000] sm:$0xff]
                %434 = vst [vmem:[%s176 + $0x400] sm:$0xff] %v433
                %v435 = vld [vmem:[%s175 + $0x1008] sm:$0xff]
                %436 = vst [vmem:[%s176 + $0x408] sm:$0xff] %v435
                %v437 = vld [vmem:[%s175 + $0x1040] sm:$0xff]
                %438 = vst [vmem:[%s176 + $0x410] sm:$0xff] %v437
                %v439 = vld [vmem:[%s175 + $0x1048] sm:$0xff]
                %440 = vst [vmem:[%s176 + $0x418] sm:$0xff] %v439
                %v441 = vld [vmem:[%s175 + $0x1080] sm:$0xff]
                %442 = vst [vmem:[%s176 + $0x420] sm:$0xff] %v441
                %v443 = vld [vmem:[%s175 + $0x1088] sm:$0xff]
                %444 = vst [vmem:[%s176 + $0x428] sm:$0xff] %v443
                %v445 = vld [vmem:[%s175 + $0x10c0] sm:$0xff]
                %446 = vst [vmem:[%s176 + $0x430] sm:$0xff] %v445
                %v447 = vld [vmem:[%s175 + $0x10c8] sm:$0xff]
                %448 = vst [vmem:[%s176 + $0x438] sm:$0xff] %v447
                %v449 = vld [vmem:[%s175 + $0x1100] sm:$0xff]
                %450 = vst [vmem:[%s176 + $0x440] sm:$0xff] %v449
                %v451 = vld [vmem:[%s175 + $0x1108] sm:$0xff]
                %452 = vst [vmem:[%s176 + $0x448] sm:$0xff] %v451
                %v453 = vld [vmem:[%s175 + $0x1140] sm:$0xff]
                %454 = vst [vmem:[%s176 + $0x450] sm:$0xff] %v453
                %v455 = vld [vmem:[%s175 + $0x1148] sm:$0xff]
                %456 = vst [vmem:[%s176 + $0x458] sm:$0xff] %v455
                %v457 = vld [vmem:[%s175 + $0x1180] sm:$0xff]
                %458 = vst [vmem:[%s176 + $0x460] sm:$0xff] %v457
                %v459 = vld [vmem:[%s175 + $0x1188] sm:$0xff]
                %460 = vst [vmem:[%s176 + $0x468] sm:$0xff] %v459
                %v461 = vld [vmem:[%s175 + $0x11c0] sm:$0xff]
                %462 = vst [vmem:[%s176 + $0x470] sm:$0xff] %v461
                %v463 = vld [vmem:[%s175 + $0x11c8] sm:$0xff]
                %464 = vst [vmem:[%s176 + $0x478] sm:$0xff] %v463
                %v465 = vld [vmem:[%s175 + $0x1200] sm:$0xff]
                %466 = vst [vmem:[%s176 + $0x480] sm:$0xff] %v465
                %v467 = vld [vmem:[%s175 + $0x1208] sm:$0xff]
                %468 = vst [vmem:[%s176 + $0x488] sm:$0xff] %v467
                %v469 = vld [vmem:[%s175 + $0x1240] sm:$0xff]
                %470 = vst [vmem:[%s176 + $0x490] sm:$0xff] %v469
                %v471 = vld [vmem:[%s175 + $0x1248] sm:$0xff]
                %472 = vst [vmem:[%s176 + $0x498] sm:$0xff] %v471
                %v473 = vld [vmem:[%s175 + $0x1280] sm:$0xff]
                %474 = vst [vmem:[%s176 + $0x4a0] sm:$0xff] %v473
                %v475 = vld [vmem:[%s175 + $0x1288] sm:$0xff]
                %476 = vst [vmem:[%s176 + $0x4a8] sm:$0xff] %v475
                %v477 = vld [vmem:[%s175 + $0x12c0] sm:$0xff]
                %478 = vst [vmem:[%s176 + $0x4b0] sm:$0xff] %v477
                %v479 = vld [vmem:[%s175 + $0x12c8] sm:$0xff]
                %480 = vst [vmem:[%s176 + $0x4b8] sm:$0xff] %v479
                %v481 = vld [vmem:[%s175 + $0x1300] sm:$0xff]
                %482 = vst [vmem:[%s176 + $0x4c0] sm:$0xff] %v481
                %v483 = vld [vmem:[%s175 + $0x1308] sm:$0xff]
                %484 = vst [vmem:[%s176 + $0x4c8] sm:$0xff] %v483
                %v485 = vld [vmem:[%s175 + $0x1340] sm:$0xff]
                %486 = vst [vmem:[%s176 + $0x4d0] sm:$0xff] %v485
                %v487 = vld [vmem:[%s175 + $0x1348] sm:$0xff]
                %488 = vst [vmem:[%s176 + $0x4d8] sm:$0xff] %v487
                %v489 = vld [vmem:[%s175 + $0x1380] sm:$0xff]
                %490 = vst [vmem:[%s176 + $0x4e0] sm:$0xff] %v489
                %v491 = vld [vmem:[%s175 + $0x1388] sm:$0xff]
                %492 = vst [vmem:[%s176 + $0x4e8] sm:$0xff] %v491
                %v493 = vld [vmem:[%s175 + $0x13c0] sm:$0xff]
                %494 = vst [vmem:[%s176 + $0x4f0] sm:$0xff] %v493
                %v495 = vld [vmem:[%s175 + $0x13c8] sm:$0xff]
                %496 = vst [vmem:[%s176 + $0x4f8] sm:$0xff] %v495
                %v497 = vld [vmem:[%s175 + $0x1400] sm:$0xff]
                %498 = vst [vmem:[%s176 + $0x500] sm:$0xff] %v497
                %v499 = vld [vmem:[%s175 + $0x1408] sm:$0xff]
                %500 = vst [vmem:[%s176 + $0x508] sm:$0xff] %v499
                %v501 = vld [vmem:[%s175 + $0x1440] sm:$0xff]
                %502 = vst [vmem:[%s176 + $0x510] sm:$0xff] %v501
                %v503 = vld [vmem:[%s175 + $0x1448] sm:$0xff]
                %504 = vst [vmem:[%s176 + $0x518] sm:$0xff] %v503
                %v505 = vld [vmem:[%s175 + $0x1480] sm:$0xff]
                %506 = vst [vmem:[%s176 + $0x520] sm:$0xff] %v505
                %v507 = vld [vmem:[%s175 + $0x1488] sm:$0xff]
                %508 = vst [vmem:[%s176 + $0x528] sm:$0xff] %v507
                %v509 = vld [vmem:[%s175 + $0x14c0] sm:$0xff]
                %510 = vst [vmem:[%s176 + $0x530] sm:$0xff] %v509
                %v511 = vld [vmem:[%s175 + $0x14c8] sm:$0xff]
                %512 = vst [vmem:[%s176 + $0x538] sm:$0xff] %v511
                %v513 = vld [vmem:[%s175 + $0x1500] sm:$0xff]
                %514 = vst [vmem:[%s176 + $0x540] sm:$0xff] %v513
                %v515 = vld [vmem:[%s175 + $0x1508] sm:$0xff]
                %516 = vst [vmem:[%s176 + $0x548] sm:$0xff] %v515
                %v517 = vld [vmem:[%s175 + $0x1540] sm:$0xff]
                %518 = vst [vmem:[%s176 + $0x550] sm:$0xff] %v517
                %v519 = vld [vmem:[%s175 + $0x1548] sm:$0xff]
                %520 = vst [vmem:[%s176 + $0x558] sm:$0xff] %v519
                %v521 = vld [vmem:[%s175 + $0x1580] sm:$0xff]
                %522 = vst [vmem:[%s176 + $0x560] sm:$0xff] %v521
                %v523 = vld [vmem:[%s175 + $0x1588] sm:$0xff]
                %524 = vst [vmem:[%s176 + $0x568] sm:$0xff] %v523
                %v525 = vld [vmem:[%s175 + $0x15c0] sm:$0xff]
                %526 = vst [vmem:[%s176 + $0x570] sm:$0xff] %v525
                %v527 = vld [vmem:[%s175 + $0x15c8] sm:$0xff]
                %528 = vst [vmem:[%s176 + $0x578] sm:$0xff] %v527
                %v529 = vld [vmem:[%s175 + $0x1600] sm:$0xff]
                %530 = vst [vmem:[%s176 + $0x580] sm:$0xff] %v529
                %v531 = vld [vmem:[%s175 + $0x1608] sm:$0xff]
                %532 = vst [vmem:[%s176 + $0x588] sm:$0xff] %v531
                %v533 = vld [vmem:[%s175 + $0x1640] sm:$0xff]
                %534 = vst [vmem:[%s176 + $0x590] sm:$0xff] %v533
                %v535 = vld [vmem:[%s175 + $0x1648] sm:$0xff]
                %536 = vst [vmem:[%s176 + $0x598] sm:$0xff] %v535
                %v537 = vld [vmem:[%s175 + $0x1680] sm:$0xff]
                %538 = vst [vmem:[%s176 + $0x5a0] sm:$0xff] %v537
                %v539 = vld [vmem:[%s175 + $0x1688] sm:$0xff]
                %540 = vst [vmem:[%s176 + $0x5a8] sm:$0xff] %v539
                %v541 = vld [vmem:[%s175 + $0x16c0] sm:$0xff]
                %542 = vst [vmem:[%s176 + $0x5b0] sm:$0xff] %v541
                %v543 = vld [vmem:[%s175 + $0x16c8] sm:$0xff]
                %544 = vst [vmem:[%s176 + $0x5b8] sm:$0xff] %v543
                %v545 = vld [vmem:[%s175 + $0x1700] sm:$0xff]
                %546 = vst [vmem:[%s176 + $0x5c0] sm:$0xff] %v545
                %v547 = vld [vmem:[%s175 + $0x1708] sm:$0xff]
                %548 = vst [vmem:[%s176 + $0x5c8] sm:$0xff] %v547
                %v549 = vld [vmem:[%s175 + $0x1740] sm:$0xff]
                %550 = vst [vmem:[%s176 + $0x5d0] sm:$0xff] %v549
                %v551 = vld [vmem:[%s175 + $0x1748] sm:$0xff]
                %552 = vst [vmem:[%s176 + $0x5d8] sm:$0xff] %v551
                %v553 = vld [vmem:[%s175 + $0x1780] sm:$0xff]
                %554 = vst [vmem:[%s176 + $0x5e0] sm:$0xff] %v553
                %v555 = vld [vmem:[%s175 + $0x1788] sm:$0xff]
                %556 = vst [vmem:[%s176 + $0x5e8] sm:$0xff] %v555
                %v557 = vld [vmem:[%s175 + $0x17c0] sm:$0xff]
                %558 = vst [vmem:[%s176 + $0x5f0] sm:$0xff] %v557
                %v559 = vld [vmem:[%s175 + $0x17c8] sm:$0xff]
                %560 = vst [vmem:[%s176 + $0x5f8] sm:$0xff] %v559
                %v561 = vld [vmem:[%s175 + $0x1800] sm:$0xff]
                %562 = vst [vmem:[%s176 + $0x600] sm:$0xff] %v561
                %v563 = vld [vmem:[%s175 + $0x1808] sm:$0xff]
                %564 = vst [vmem:[%s176 + $0x608] sm:$0xff] %v563
                %v565 = vld [vmem:[%s175 + $0x1840] sm:$0xff]
                %566 = vst [vmem:[%s176 + $0x610] sm:$0xff] %v565
                %v567 = vld [vmem:[%s175 + $0x1848] sm:$0xff]
                %568 = vst [vmem:[%s176 + $0x618] sm:$0xff] %v567
                %v569 = vld [vmem:[%s175 + $0x1880] sm:$0xff]
                %570 = vst [vmem:[%s176 + $0x620] sm:$0xff] %v569
                %v571 = vld [vmem:[%s175 + $0x1888] sm:$0xff]
                %572 = vst [vmem:[%s176 + $0x628] sm:$0xff] %v571
                %v573 = vld [vmem:[%s175 + $0x18c0] sm:$0xff]
                %574 = vst [vmem:[%s176 + $0x630] sm:$0xff] %v573
                %v575 = vld [vmem:[%s175 + $0x18c8] sm:$0xff]
                %576 = vst [vmem:[%s176 + $0x638] sm:$0xff] %v575
                %v577 = vld [vmem:[%s175 + $0x1900] sm:$0xff]
                %578 = vst [vmem:[%s176 + $0x640] sm:$0xff] %v577
                %v579 = vld [vmem:[%s175 + $0x1908] sm:$0xff]
                %580 = vst [vmem:[%s176 + $0x648] sm:$0xff] %v579
                %v581 = vld [vmem:[%s175 + $0x1940] sm:$0xff]
                %582 = vst [vmem:[%s176 + $0x650] sm:$0xff] %v581
                %v583 = vld [vmem:[%s175 + $0x1948] sm:$0xff]
                %584 = vst [vmem:[%s176 + $0x658] sm:$0xff] %v583
                %v585 = vld [vmem:[%s175 + $0x1980] sm:$0xff]
                %586 = vst [vmem:[%s176 + $0x660] sm:$0xff] %v585
                %v587 = vld [vmem:[%s175 + $0x1988] sm:$0xff]
                %588 = vst [vmem:[%s176 + $0x668] sm:$0xff] %v587
                %v589 = vld [vmem:[%s175 + $0x19c0] sm:$0xff]
                %590 = vst [vmem:[%s176 + $0x670] sm:$0xff] %v589
                %v591 = vld [vmem:[%s175 + $0x19c8] sm:$0xff]
                %592 = vst [vmem:[%s176 + $0x678] sm:$0xff] %v591
                %v593 = vld [vmem:[%s175 + $0x1a00] sm:$0xff]
                %594 = vst [vmem:[%s176 + $0x680] sm:$0xff] %v593
                %v595 = vld [vmem:[%s175 + $0x1a08] sm:$0xff]
                %596 = vst [vmem:[%s176 + $0x688] sm:$0xff] %v595
                %v597 = vld [vmem:[%s175 + $0x1a40] sm:$0xff]
                %598 = vst [vmem:[%s176 + $0x690] sm:$0xff] %v597
                %v599 = vld [vmem:[%s175 + $0x1a48] sm:$0xff]
                %600 = vst [vmem:[%s176 + $0x698] sm:$0xff] %v599
                %v601 = vld [vmem:[%s175 + $0x1a80] sm:$0xff]
                %602 = vst [vmem:[%s176 + $0x6a0] sm:$0xff] %v601
                %v603 = vld [vmem:[%s175 + $0x1a88] sm:$0xff]
                %604 = vst [vmem:[%s176 + $0x6a8] sm:$0xff] %v603
                %v605 = vld [vmem:[%s175 + $0x1ac0] sm:$0xff]
                %606 = vst [vmem:[%s176 + $0x6b0] sm:$0xff] %v605
                %v607 = vld [vmem:[%s175 + $0x1ac8] sm:$0xff]
                %608 = vst [vmem:[%s176 + $0x6b8] sm:$0xff] %v607
              $region41: #{forward.10} parent=35 // loop_footer
                %s174 = sadd.s32 1, %s170
              $region42: #{forward.10} parent=35 // loop_footer_branch
                %169 = sbr.rel target = $region38
              $region43: #{forward.10} parent=35 // loop_exit
                _
            $region36: #{forward.10} parent=31 // pred_fallthru
              _
            // Predicated region
            $region44: #{forward.10} parent=31 // pred_check
              _
            $region45: #{forward.10} parent=31 // pred_check_branch
              %610 = sbr.rel target = $region47
            $region46: #{forward.10} parent=31 // pred_region
              _
            $region47: #{forward.10} parent=31 // pred_fallthru
              _
          $region32: #{forward.10} parent=27 // pred_fallthru
            _
          %611 = vnop
        $region28: #{forward.10} parent=23 // pred_fallthru
          _
        // Predicated region
        $region48: #{forward.10} parent=23 // pred_check
          %p612 = pneg %p98
        $region49: #{forward.10} parent=23 // pred_check_branch
          %614 = sbr.rel (%p612) target = $region51
        $region50: #{forward.10} parent=23 // pred_region
          %s615 = sand.u32 %s88, 1
          %s616 = sand.u32 %s88, 1
          %s617 = smul.addr %s616, 64
          %s618 = scalar_lea.vmem [#allocation3], %s617
          %s619 = smul.u32 4, %s10
          %s620 = smul.addr %s619, 4
          %s621 = scalar_lea.vmem %s3, %s620
          // Predicated region
          $region52: #{forward.10} parent=50 // pred_check
            _
          $region53: #{forward.10} parent=50 // pred_check_branch
            %623 = sbr.rel (0) target = $region55
          $region54: #{forward.10} parent=50 // pred_region
            // Predicated region
            $region56: #{forward.10} parent=54 // pred_check
              _
            $region57: #{forward.10} parent=54 // pred_check_branch
              %625 = sbr.rel (0) target = $region59
            $region58: #{forward.10} parent=54 // pred_region
              loop: start=0, step=1, limit=1
              $region60: #{forward.10} parent=58 // loop_pre_header
                _
              $region61: #{forward.10} parent=58 // loop_header
                %s627 = sphi 0, %s631
                %p628 = scmp.ge.s32.totalorder %s627, 1
                %s632 = sphi %s621, %s621
                %s633 = sphi %s618, %s618
              $region62: #{forward.10} parent=58 // loop_header_branch
                %630 = sbr.rel (%p628) target = $region66
              $region63: #{forward.10} parent=58 // loop_body
                %v634 = vld [vmem:[%s632] sm:$0xff]
                %635 = vst [vmem:[%s633] sm:$0xff] %v634
                %v636 = vld [vmem:[%s632 + $0x8] sm:$0xff]
                %637 = vst [vmem:[%s633 + $0x8] sm:$0xff] %v636
                %v638 = vld [vmem:[%s632 + $0x40] sm:$0xff]
                %639 = vst [vmem:[%s633 + $0x10] sm:$0xff] %v638
                %v640 = vld [vmem:[%s632 + $0x48] sm:$0xff]
                %641 = vst [vmem:[%s633 + $0x18] sm:$0xff] %v640
                %v642 = vld [vmem:[%s632 + $0x80] sm:$0xff]
                %643 = vst [vmem:[%s633 + $0x20] sm:$0xff] %v642
                %v644 = vld [vmem:[%s632 + $0x88] sm:$0xff]
                %645 = vst [vmem:[%s633 + $0x28] sm:$0xff] %v644
                %v646 = vld [vmem:[%s632 + $0xc0] sm:$0xff]
                %647 = vst [vmem:[%s633 + $0x30] sm:$0xff] %v646
                %v648 = vld [vmem:[%s632 + $0xc8] sm:$0xff]
                %649 = vst [vmem:[%s633 + $0x38] sm:$0xff] %v648
              $region64: #{forward.10} parent=58 // loop_footer
                %s631 = sadd.s32 1, %s627
              $region65: #{forward.10} parent=58 // loop_footer_branch
                %626 = sbr.rel target = $region61
              $region66: #{forward.10} parent=58 // loop_exit
                _
            $region59: #{forward.10} parent=54 // pred_fallthru
              _
            // Predicated region
            $region67: #{forward.10} parent=54 // pred_check
              _
            $region68: #{forward.10} parent=54 // pred_check_branch
              %651 = sbr.rel target = $region70
            $region69: #{forward.10} parent=54 // pred_region
              _
            $region70: #{forward.10} parent=54 // pred_fallthru
              _
          $region55: #{forward.10} parent=50 // pred_fallthru
            _
          %652 = vnop
        $region51: #{forward.10} parent=23 // pred_fallthru
          _
      $region24: #{forward.10} parent=5 // pred_fallthru
        _
      %p653 = scmp.le.s32.totalorder 1, %s10
      %p654 = scmp.lt.s32.totalorder %s10, 5
      %p655 = pnand %p653, %p654
      %p656 = pneg %p655
      // Predicated region
      $region71: #{forward.10} parent=5 // pred_check
        _
      $region72: #{forward.10} parent=5 // pred_check_branch
        %658 = sbr.rel (%p655) target = $region74
      $region73: #{forward.10} parent=5 // pred_region
        %s659 = ssub.s32 %s10, 1
        %s660 = sand.u32 %s65, 1
        %s661 = sand.u32 %s65, 1
        %s662 = smul.addr %s661, 1728
        %s663 = scalar_lea.vmem [#allocation2], %s662
        // Predicated region
        $region75: #{forward.10} parent=73 // pred_check
          %p664 = pneg %p78
        $region76: #{forward.10} parent=73 // pred_check_branch
          %666 = sbr.rel (%p664) target = $region78
        $region77: #{forward.10} parent=73 // pred_region
          _
        $region78: #{forward.10} parent=73 // pred_fallthru
          _
        %s667 = sand.u32 %s91, 1
        %s668 = sand.u32 %s91, 1
        %s669 = smul.addr %s668, 64
        %s670 = scalar_lea.vmem [#allocation3], %s669
        // Predicated region
        $region79: #{forward.10} parent=73 // pred_check
          %p671 = pneg %p104
        $region80: #{forward.10} parent=73 // pred_check_branch
          %673 = sbr.rel (%p671) target = $region82
        $region81: #{forward.10} parent=73 // pred_region
          _
        $region82: #{forward.10} parent=73 // pred_fallthru
          _
        %p674 = pneg %p31
        %p675 = pneg %p28
        %p676 = pneg %p52
        %p677 = pneg %p49
        %s678 = sand.u32 %s65, 1
        %s679 = sand.u32 %s65, 1
        %s680 = smul.addr %s679, 1728
        %s681 = scalar_lea.vmem [#allocation2], %s680
        %p682 = pneg %p78
        %p683 = pneg %p75
        %s684 = sand.u32 %s91, 1
        %s685 = sand.u32 %s91, 1
        %s686 = smul.addr %s685, 64
        %s687 = scalar_lea.vmem [#allocation3], %s686
        %p688 = pneg %p104
        %p689 = pneg %p101
        %p690 = pneg %p130
        %p691 = pneg %p127
        %s692 = sand.u32 %s117, 1
        %s693 = sand.u32 %s117, 1
        %s694 = smul.addr %s693, 64
        %s695 = scalar_lea.vmem [#allocation4], %s694
        %s696 = smul.u32 4, %s15
        %s697 = smul.u32 4, %s15
        %s698 = smul.u32 4, %s15
        %v700 = vld [vmem:[%s0] sm:$0xff]
        %v701 = vld [vmem:[%s0 + $0x8] sm:$0xff]
        %v702 = vld [vmem:[%s0 + $0x10] sm:$0xff]
        %v703 = vld [vmem:[%s0 + $0x18] sm:$0xf]
        %v704 = vld [vmem:[%s0 + $0x1c] sm:$0xff]
        %v705 = vld [vmem:[%s0 + $0x24] sm:$0xff]
        %v706 = vld [vmem:[%s0 + $0x2c] sm:$0xff]
        %v707 = vld [vmem:[%s0 + $0x34] sm:$0xf]
        %v708 = vld [vmem:[%s0 + $0x38] sm:$0xff]
        %v709 = vld [vmem:[%s0 + $0x40] sm:$0xff]
        %v710 = vld [vmem:[%s0 + $0x48] sm:$0xff]
        %v711 = vld [vmem:[%s0 + $0x50] sm:$0xf]
        %v712 = vld [vmem:[%s0 + $0x54] sm:$0xff]
        %v713 = vld [vmem:[%s0 + $0x5c] sm:$0xff]
        %v714 = vld [vmem:[%s0 + $0x64] sm:$0xff]
        %v715 = vld [vmem:[%s0 + $0x6c] sm:$0xf]
        %v716 = vld [vmem:[%s663] sm:$0xff]
        %v717 = vld [vmem:[%s663 + $0x8] sm:$0xff]
        %v718 = vld [vmem:[%s663 + $0x10] sm:$0xff]
        %v719 = vld [vmem:[%s663 + $0x18] sm:$0xff]
        %v720 = vld [vmem:[%s663 + $0x20] sm:$0xff]
        %v721 = vld [vmem:[%s663 + $0x28] sm:$0xff]
        %v722 = vld [vmem:[%s663 + $0x30] sm:$0xff]
        %v723 = vld [vmem:[%s663 + $0x38] sm:$0xff]
        %v724 = vld [vmem:[%s663 + $0x40] sm:$0xff]
        %v725 = vld [vmem:[%s663 + $0x48] sm:$0xff]
        %v726 = vld [vmem:[%s663 + $0x50] sm:$0xff]
        %v727 = vld [vmem:[%s663 + $0x58] sm:$0xff]
        %v728 = vld [vmem:[%s663 + $0x60] sm:$0xff]
        %v729 = vld [vmem:[%s663 + $0x68] sm:$0xff]
        %v730 = vld [vmem:[%s663 + $0x70] sm:$0xff]
        %v731 = vld [vmem:[%s663 + $0x78] sm:$0xff]
        %v732 = vld [vmem:[%s663 + $0x80] sm:$0xff]
        %v733 = vld [vmem:[%s663 + $0x88] sm:$0xff]
        %v734 = vld [vmem:[%s663 + $0x90] sm:$0xff]
        %v735 = vld [vmem:[%s663 + $0x98] sm:$0xff]
        %v736 = vld [vmem:[%s663 + $0xa0] sm:$0xff]
        %v737 = vld [vmem:[%s663 + $0xa8] sm:$0xff]
        %v738 = vld [vmem:[%s663 + $0xb0] sm:$0xff]
        %v739 = vld [vmem:[%s663 + $0xb8] sm:$0xff]
        %v740 = vld [vmem:[%s663 + $0xc0] sm:$0xff]
        %v741 = vld [vmem:[%s663 + $0xc8] sm:$0xff]
        %v742 = vld [vmem:[%s663 + $0xd0] sm:$0xff]
        %v743 = vld [vmem:[%s663 + $0xd8] sm:$0xff]
        %v744 = vld [vmem:[%s663 + $0xe0] sm:$0xff]
        %v745 = vld [vmem:[%s663 + $0xe8] sm:$0xff]
        %v746 = vld [vmem:[%s663 + $0xf0] sm:$0xff]
        %v747 = vld [vmem:[%s663 + $0xf8] sm:$0xff]
        %v748 = vld [vmem:[%s663 + $0x100] sm:$0xff]
        %v749 = vld [vmem:[%s663 + $0x108] sm:$0xff]
        %v750 = vld [vmem:[%s663 + $0x110] sm:$0xff]
        %v751 = vld [vmem:[%s663 + $0x118] sm:$0xff]
        %v752 = vld [vmem:[%s663 + $0x120] sm:$0xff]
        %v753 = vld [vmem:[%s663 + $0x128] sm:$0xff]
        %v754 = vld [vmem:[%s663 + $0x130] sm:$0xff]
        %v755 = vld [vmem:[%s663 + $0x138] sm:$0xff]
        %v756 = vld [vmem:[%s663 + $0x140] sm:$0xff]
        %v757 = vld [vmem:[%s663 + $0x148] sm:$0xff]
        %v758 = vld [vmem:[%s663 + $0x150] sm:$0xff]
        %v759 = vld [vmem:[%s663 + $0x158] sm:$0xff]
        %v760 = vld [vmem:[%s663 + $0x160] sm:$0xff]
        %v761 = vld [vmem:[%s663 + $0x168] sm:$0xff]
        %v762 = vld [vmem:[%s663 + $0x170] sm:$0xff]
        %v763 = vld [vmem:[%s663 + $0x178] sm:$0xff]
        %v764 = vld [vmem:[%s663 + $0x180] sm:$0xff]
        %v765 = vld [vmem:[%s663 + $0x188] sm:$0xff]
        %v766 = vld [vmem:[%s663 + $0x190] sm:$0xff]
        %v767 = vld [vmem:[%s663 + $0x198] sm:$0xff]
        %v768 = vld [vmem:[%s663 + $0x1a0] sm:$0xff]
        %v769 = vld [vmem:[%s663 + $0x1a8] sm:$0xff]
        %v770 = vld [vmem:[%s663 + $0x1b0] sm:$0xff]
        %v771 = vld [vmem:[%s663 + $0x1b8] sm:$0xff]
        %v772 = vld [vmem:[%s663 + $0x1c0] sm:$0xff]
        %v773 = vld [vmem:[%s663 + $0x1c8] sm:$0xff]
        %v774 = vld [vmem:[%s663 + $0x1d0] sm:$0xff]
        %v775 = vld [vmem:[%s663 + $0x1d8] sm:$0xff]
        %v776 = vld [vmem:[%s663 + $0x1e0] sm:$0xff]
        %v777 = vld [vmem:[%s663 + $0x1e8] sm:$0xff]
        %v778 = vld [vmem:[%s663 + $0x1f0] sm:$0xff]
        %v779 = vld [vmem:[%s663 + $0x1f8] sm:$0xff]
        %v780 = vld [vmem:[%s663 + $0x200] sm:$0xff]
        %v781 = vld [vmem:[%s663 + $0x208] sm:$0xff]
        %v782 = vld [vmem:[%s663 + $0x210] sm:$0xff]
        %v783 = vld [vmem:[%s663 + $0x218] sm:$0xff]
        %v784 = vld [vmem:[%s663 + $0x220] sm:$0xff]
        %v785 = vld [vmem:[%s663 + $0x228] sm:$0xff]
        %v786 = vld [vmem:[%s663 + $0x230] sm:$0xff]
        %v787 = vld [vmem:[%s663 + $0x238] sm:$0xff]
        %v788 = vld [vmem:[%s663 + $0x240] sm:$0xff]
        %v789 = vld [vmem:[%s663 + $0x248] sm:$0xff]
        %v790 = vld [vmem:[%s663 + $0x250] sm:$0xff]
        %v791 = vld [vmem:[%s663 + $0x258] sm:$0xff]
        %v792 = vld [vmem:[%s663 + $0x260] sm:$0xff]
        %v793 = vld [vmem:[%s663 + $0x268] sm:$0xff]
        %v794 = vld [vmem:[%s663 + $0x270] sm:$0xff]
        %v795 = vld [vmem:[%s663 + $0x278] sm:$0xff]
        %v796 = vld [vmem:[%s663 + $0x280] sm:$0xff]
        %v797 = vld [vmem:[%s663 + $0x288] sm:$0xff]
        %v798 = vld [vmem:[%s663 + $0x290] sm:$0xff]
        %v799 = vld [vmem:[%s663 + $0x298] sm:$0xff]
        %v800 = vld [vmem:[%s663 + $0x2a0] sm:$0xff]
        %v801 = vld [vmem:[%s663 + $0x2a8] sm:$0xff]
        %v802 = vld [vmem:[%s663 + $0x2b0] sm:$0xff]
        %v803 = vld [vmem:[%s663 + $0x2b8] sm:$0xff]
        %v804 = vld [vmem:[%s663 + $0x2c0] sm:$0xff]
        %v805 = vld [vmem:[%s663 + $0x2c8] sm:$0xff]
        %v806 = vld [vmem:[%s663 + $0x2d0] sm:$0xff]
        %v807 = vld [vmem:[%s663 + $0x2d8] sm:$0xff]
        %v808 = vld [vmem:[%s663 + $0x2e0] sm:$0xff]
        %v809 = vld [vmem:[%s663 + $0x2e8] sm:$0xff]
        %v810 = vld [vmem:[%s663 + $0x2f0] sm:$0xff]
        %v811 = vld [vmem:[%s663 + $0x2f8] sm:$0xff]
        %v812 = vld [vmem:[%s663 + $0x300] sm:$0xff]
        %v813 = vld [vmem:[%s663 + $0x308] sm:$0xff]
        %v814 = vld [vmem:[%s663 + $0x310] sm:$0xff]
        %v815 = vld [vmem:[%s663 + $0x318] sm:$0xff]
        %v816 = vld [vmem:[%s663 + $0x320] sm:$0xff]
        %v817 = vld [vmem:[%s663 + $0x328] sm:$0xff]
        %v818 = vld [vmem:[%s663 + $0x330] sm:$0xff]
        %v819 = vld [vmem:[%s663 + $0x338] sm:$0xff]
        %v820 = vld [vmem:[%s663 + $0x340] sm:$0xff]
        %v821 = vld [vmem:[%s663 + $0x348] sm:$0xff]
        %v822 = vld [vmem:[%s663 + $0x350] sm:$0xff]
        %v823 = vld [vmem:[%s663 + $0x358] sm:$0xff]
        %v824 = vld [vmem:[%s663 + $0x360] sm:$0xff]
        %v825 = vld [vmem:[%s663 + $0x368] sm:$0xff]
        %v826 = vld [vmem:[%s663 + $0x370] sm:$0xff]
        %v827 = vld [vmem:[%s663 + $0x378] sm:$0xff]
        %v828 = vld [vmem:[%s663 + $0x380] sm:$0xff]
        %v829 = vld [vmem:[%s663 + $0x388] sm:$0xff]
        %v830 = vld [vmem:[%s663 + $0x390] sm:$0xff]
        %v831 = vld [vmem:[%s663 + $0x398] sm:$0xff]
        %v832 = vld [vmem:[%s663 + $0x3a0] sm:$0xff]
        %v833 = vld [vmem:[%s663 + $0x3a8] sm:$0xff]
        %v834 = vld [vmem:[%s663 + $0x3b0] sm:$0xff]
        %v835 = vld [vmem:[%s663 + $0x3b8] sm:$0xff]
        %v836 = vld [vmem:[%s663 + $0x3c0] sm:$0xff]
        %v837 = vld [vmem:[%s663 + $0x3c8] sm:$0xff]
        %v838 = vld [vmem:[%s663 + $0x3d0] sm:$0xff]
        %v839 = vld [vmem:[%s663 + $0x3d8] sm:$0xff]
        %v840 = vld [vmem:[%s663 + $0x3e0] sm:$0xff]
        %v841 = vld [vmem:[%s663 + $0x3e8] sm:$0xff]
        %v842 = vld [vmem:[%s663 + $0x3f0] sm:$0xff]
        %v843 = vld [vmem:[%s663 + $0x3f8] sm:$0xff]
        %v844 = vld [vmem:[%s663 + $0x400] sm:$0xff]
        %v845 = vld [vmem:[%s663 + $0x408] sm:$0xff]
        %v846 = vld [vmem:[%s663 + $0x410] sm:$0xff]
        %v847 = vld [vmem:[%s663 + $0x418] sm:$0xff]
        %v848 = vld [vmem:[%s663 + $0x420] sm:$0xff]
        %v849 = vld [vmem:[%s663 + $0x428] sm:$0xff]
        %v850 = vld [vmem:[%s663 + $0x430] sm:$0xff]
        %v851 = vld [vmem:[%s663 + $0x438] sm:$0xff]
        %v852 = vld [vmem:[%s663 + $0x440] sm:$0xff]
        %v853 = vld [vmem:[%s663 + $0x448] sm:$0xff]
        %v854 = vld [vmem:[%s663 + $0x450] sm:$0xff]
        %v855 = vld [vmem:[%s663 + $0x458] sm:$0xff]
        %v856 = vld [vmem:[%s663 + $0x460] sm:$0xff]
        %v857 = vld [vmem:[%s663 + $0x468] sm:$0xff]
        %v858 = vld [vmem:[%s663 + $0x470] sm:$0xff]
        %v859 = vld [vmem:[%s663 + $0x478] sm:$0xff]
        %v860 = vld [vmem:[%s663 + $0x480] sm:$0xff]
        %v861 = vld [vmem:[%s663 + $0x488] sm:$0xff]
        %v862 = vld [vmem:[%s663 + $0x490] sm:$0xff]
        %v863 = vld [vmem:[%s663 + $0x498] sm:$0xff]
        %v864 = vld [vmem:[%s663 + $0x4a0] sm:$0xff]
        %v865 = vld [vmem:[%s663 + $0x4a8] sm:$0xff]
        %v866 = vld [vmem:[%s663 + $0x4b0] sm:$0xff]
        %v867 = vld [vmem:[%s663 + $0x4b8] sm:$0xff]
        %v868 = vld [vmem:[%s663 + $0x4c0] sm:$0xff]
        %v869 = vld [vmem:[%s663 + $0x4c8] sm:$0xff]
        %v870 = vld [vmem:[%s663 + $0x4d0] sm:$0xff]
        %v871 = vld [vmem:[%s663 + $0x4d8] sm:$0xff]
        %v872 = vld [vmem:[%s663 + $0x4e0] sm:$0xff]
        %v873 = vld [vmem:[%s663 + $0x4e8] sm:$0xff]
        %v874 = vld [vmem:[%s663 + $0x4f0] sm:$0xff]
        %v875 = vld [vmem:[%s663 + $0x4f8] sm:$0xff]
        %v876 = vld [vmem:[%s663 + $0x500] sm:$0xff]
        %v877 = vld [vmem:[%s663 + $0x508] sm:$0xff]
        %v878 = vld [vmem:[%s663 + $0x510] sm:$0xff]
        %v879 = vld [vmem:[%s663 + $0x518] sm:$0xff]
        %v880 = vld [vmem:[%s663 + $0x520] sm:$0xff]
        %v881 = vld [vmem:[%s663 + $0x528] sm:$0xff]
        %v882 = vld [vmem:[%s663 + $0x530] sm:$0xff]
        %v883 = vld [vmem:[%s663 + $0x538] sm:$0xff]
        %v884 = vld [vmem:[%s663 + $0x540] sm:$0xff]
        %v885 = vld [vmem:[%s663 + $0x548] sm:$0xff]
        %v886 = vld [vmem:[%s663 + $0x550] sm:$0xff]
        %v887 = vld [vmem:[%s663 + $0x558] sm:$0xff]
        %v888 = vld [vmem:[%s663 + $0x560] sm:$0xff]
        %v889 = vld [vmem:[%s663 + $0x568] sm:$0xff]
        %v890 = vld [vmem:[%s663 + $0x570] sm:$0xff]
        %v891 = vld [vmem:[%s663 + $0x578] sm:$0xff]
        %v892 = vld [vmem:[%s663 + $0x580] sm:$0xff]
        %v893 = vld [vmem:[%s663 + $0x588] sm:$0xff]
        %v894 = vld [vmem:[%s663 + $0x590] sm:$0xff]
        %v895 = vld [vmem:[%s663 + $0x598] sm:$0xff]
        %v896 = vld [vmem:[%s663 + $0x5a0] sm:$0xff]
        %v897 = vld [vmem:[%s663 + $0x5a8] sm:$0xff]
        %v898 = vld [vmem:[%s663 + $0x5b0] sm:$0xff]
        %v899 = vld [vmem:[%s663 + $0x5b8] sm:$0xff]
        %v900 = vld [vmem:[%s663 + $0x5c0] sm:$0xff]
        %v901 = vld [vmem:[%s663 + $0x5c8] sm:$0xff]
        %v902 = vld [vmem:[%s663 + $0x5d0] sm:$0xff]
        %v903 = vld [vmem:[%s663 + $0x5d8] sm:$0xff]
        %v904 = vld [vmem:[%s663 + $0x5e0] sm:$0xff]
        %v905 = vld [vmem:[%s663 + $0x5e8] sm:$0xff]
        %v906 = vld [vmem:[%s663 + $0x5f0] sm:$0xff]
        %v907 = vld [vmem:[%s663 + $0x5f8] sm:$0xff]
        %v908 = vld [vmem:[%s663 + $0x600] sm:$0xff]
        %v909 = vld [vmem:[%s663 + $0x608] sm:$0xff]
        %v910 = vld [vmem:[%s663 + $0x610] sm:$0xff]
        %v911 = vld [vmem:[%s663 + $0x618] sm:$0xff]
        %v912 = vld [vmem:[%s663 + $0x620] sm:$0xff]
        %v913 = vld [vmem:[%s663 + $0x628] sm:$0xff]
        %v914 = vld [vmem:[%s663 + $0x630] sm:$0xff]
        %v915 = vld [vmem:[%s663 + $0x638] sm:$0xff]
        %v916 = vld [vmem:[%s663 + $0x640] sm:$0xff]
        %v917 = vld [vmem:[%s663 + $0x648] sm:$0xff]
        %v918 = vld [vmem:[%s663 + $0x650] sm:$0xff]
        %v919 = vld [vmem:[%s663 + $0x658] sm:$0xff]
        %v920 = vld [vmem:[%s663 + $0x660] sm:$0xff]
        %v921 = vld [vmem:[%s663 + $0x668] sm:$0xff]
        %v922 = vld [vmem:[%s663 + $0x670] sm:$0xff]
        %v923 = vld [vmem:[%s663 + $0x678] sm:$0xff]
        %v924 = vld [vmem:[%s663 + $0x680] sm:$0xff]
        %v925 = vld [vmem:[%s663 + $0x688] sm:$0xff]
        %v926 = vld [vmem:[%s663 + $0x690] sm:$0xff]
        %v927 = vld [vmem:[%s663 + $0x698] sm:$0xff]
        %v928 = vld [vmem:[%s663 + $0x6a0] sm:$0xff]
        %v929 = vld [vmem:[%s663 + $0x6a8] sm:$0xff]
        %v930 = vld [vmem:[%s663 + $0x6b0] sm:$0xff]
        %v931 = vld [vmem:[%s663 + $0x6b8] sm:$0xff]
        %v932 = vld [vmem:[%s1] sm:$0xff]
        %v933 = vld [vmem:[%s1 + $0x8] sm:$0xff]
        %v934 = vld [vmem:[%s1 + $0x10] sm:$0xff]
        %v935 = vld [vmem:[%s1 + $0x18] sm:$0xff]
        %937 = vset.pattern.permute.xlu0 0
        %938 = vperm.xlu0 %937, %v932
        %v939 = vpop.permute.xlu0 %938
        %942 = vset.pattern.permute.xlu0 0
        %943 = vperm.xlu0 %942, %v933
        %v944 = vpop.permute.xlu0 %943
        %947 = vset.pattern.permute.xlu0 0
        %948 = vperm.xlu0 %947, %v934
        %v949 = vpop.permute.xlu0 %948
        %952 = vset.pattern.permute.xlu0 0
        %953 = vperm.xlu0 %952, %v935
        %v954 = vpop.permute.xlu0 %953
        %v972 = vunpack.c.l.b16 %v700
        %v973 = vunpack.c.h.b16 %v700
        %v974 = vunpack.c.l.b16 %v701
        %v975 = vunpack.c.h.b16 %v701
        %v976 = vunpack.c.l.b16 %v702
        %v977 = vunpack.c.h.b16 %v702
        %v978 = vunpack.c.l.b16 %v703
        %v979 = vunpack.c.l.b16 %v704
        %v980 = vunpack.c.h.b16 %v704
        %v981 = vunpack.c.l.b16 %v705
        %v982 = vunpack.c.h.b16 %v705
        %v983 = vunpack.c.l.b16 %v706
        %v984 = vunpack.c.h.b16 %v706
        %v985 = vunpack.c.l.b16 %v707
        %v986 = vunpack.c.l.b16 %v708
        %v987 = vunpack.c.h.b16 %v708
        %v988 = vunpack.c.l.b16 %v709
        %v989 = vunpack.c.h.b16 %v709
        %v990 = vunpack.c.l.b16 %v710
        %v991 = vunpack.c.h.b16 %v710
        %v992 = vunpack.c.l.b16 %v711
        %v993 = vunpack.c.l.b16 %v712
        %v994 = vunpack.c.h.b16 %v712
        %v995 = vunpack.c.l.b16 %v713
        %v996 = vunpack.c.h.b16 %v713
        %v997 = vunpack.c.l.b16 %v714
        %v998 = vunpack.c.h.b16 %v714
        %v999 = vunpack.c.l.b16 %v715
        %v1000 = vpack.c.b16 %v979, %v972
        %v1001 = vpack.c.b16 %v980, %v973
        %v1002 = vpack.c.b16 %v981, %v974
        %v1003 = vpack.c.b16 %v982, %v975
        %v1004 = vpack.c.b16 %v983, %v976
        %v1005 = vpack.c.b16 %v984, %v977
        %v1006 = vpack.c.b16 %v985, %v978
        %v1007 = vpack.c.b16 %v993, %v986
        %v1008 = vpack.c.b16 %v994, %v987
        %v1009 = vpack.c.b16 %v995, %v988
        %v1010 = vpack.c.b16 %v996, %v989
        %v1011 = vpack.c.b16 %v997, %v990
        %v1012 = vpack.c.b16 %v998, %v991
        %v1013 = vpack.c.b16 %v999, %v992
        %v1242 = vunpack.c.l.b16 %v716
        %v1243 = vunpack.c.h.b16 %v716
        %v1244 = vunpack.c.l.b16 %v717
        %v1245 = vunpack.c.h.b16 %v717
        %v1246 = vunpack.c.l.b16 %v718
        %v1247 = vunpack.c.h.b16 %v718
        %v1248 = vunpack.c.l.b16 %v719
        %v1249 = vunpack.c.h.b16 %v719
        %v1250 = vunpack.c.l.b16 %v720
        %v1251 = vunpack.c.h.b16 %v720
        %v1252 = vunpack.c.l.b16 %v721
        %v1253 = vunpack.c.h.b16 %v721
        %v1254 = vunpack.c.l.b16 %v722
        %v1255 = vunpack.c.h.b16 %v722
        %v1256 = vunpack.c.l.b16 %v723
        %v1257 = vunpack.c.h.b16 %v723
        %v1258 = vunpack.c.l.b16 %v724
        %v1259 = vunpack.c.h.b16 %v724
        %v1260 = vunpack.c.l.b16 %v725
        %v1261 = vunpack.c.h.b16 %v725
        %v1262 = vunpack.c.l.b16 %v726
        %v1263 = vunpack.c.h.b16 %v726
        %v1264 = vunpack.c.l.b16 %v727
        %v1265 = vunpack.c.h.b16 %v727
        %v1266 = vunpack.c.l.b16 %v728
        %v1267 = vunpack.c.h.b16 %v728
        %v1268 = vunpack.c.l.b16 %v729
        %v1269 = vunpack.c.h.b16 %v729
        %v1270 = vunpack.c.l.b16 %v730
        %v1271 = vunpack.c.h.b16 %v730
        %v1272 = vunpack.c.l.b16 %v731
        %v1273 = vunpack.c.h.b16 %v731
        %v1274 = vunpack.c.l.b16 %v732
        %v1275 = vunpack.c.h.b16 %v732
        %v1276 = vunpack.c.l.b16 %v733
        %v1277 = vunpack.c.h.b16 %v733
        %v1278 = vunpack.c.l.b16 %v734
        %v1279 = vunpack.c.h.b16 %v734
        %v1280 = vunpack.c.l.b16 %v735
        %v1281 = vunpack.c.h.b16 %v735
        %v1282 = vunpack.c.l.b16 %v736
        %v1283 = vunpack.c.h.b16 %v736
        %v1284 = vunpack.c.l.b16 %v737
        %v1285 = vunpack.c.h.b16 %v737
        %v1286 = vunpack.c.l.b16 %v738
        %v1287 = vunpack.c.h.b16 %v738
        %v1288 = vunpack.c.l.b16 %v739
        %v1289 = vunpack.c.h.b16 %v739
        %v1290 = vunpack.c.l.b16 %v740
        %v1291 = vunpack.c.h.b16 %v740
        %v1292 = vunpack.c.l.b16 %v741
        %v1293 = vunpack.c.h.b16 %v741
        %v1294 = vunpack.c.l.b16 %v742
        %v1295 = vunpack.c.h.b16 %v742
        %v1296 = vunpack.c.l.b16 %v743
        %v1297 = vunpack.c.h.b16 %v743
        %v1298 = vunpack.c.l.b16 %v744
        %v1299 = vunpack.c.h.b16 %v744
        %v1300 = vunpack.c.l.b16 %v745
        %v1301 = vunpack.c.h.b16 %v745
        %v1302 = vunpack.c.l.b16 %v746
        %v1303 = vunpack.c.h.b16 %v746
        %v1304 = vunpack.c.l.b16 %v747
        %v1305 = vunpack.c.h.b16 %v747
        %v1306 = vunpack.c.l.b16 %v748
        %v1307 = vunpack.c.h.b16 %v748
        %v1308 = vunpack.c.l.b16 %v749
        %v1309 = vunpack.c.h.b16 %v749
        %v1310 = vunpack.c.l.b16 %v750
        %v1311 = vunpack.c.h.b16 %v750
        %v1312 = vunpack.c.l.b16 %v751
        %v1313 = vunpack.c.h.b16 %v751
        %v1314 = vunpack.c.l.b16 %v752
        %v1315 = vunpack.c.h.b16 %v752
        %v1316 = vunpack.c.l.b16 %v753
        %v1317 = vunpack.c.h.b16 %v753
        %v1318 = vunpack.c.l.b16 %v754
        %v1319 = vunpack.c.h.b16 %v754
        %v1320 = vunpack.c.l.b16 %v755
        %v1321 = vunpack.c.h.b16 %v755
        %v1322 = vunpack.c.l.b16 %v756
        %v1323 = vunpack.c.h.b16 %v756
        %v1324 = vunpack.c.l.b16 %v757
        %v1325 = vunpack.c.h.b16 %v757
        %v1326 = vunpack.c.l.b16 %v758
        %v1327 = vunpack.c.h.b16 %v758
        %v1328 = vunpack.c.l.b16 %v759
        %v1329 = vunpack.c.h.b16 %v759
        %v1330 = vunpack.c.l.b16 %v760
        %v1331 = vunpack.c.h.b16 %v760
        %v1332 = vunpack.c.l.b16 %v761
        %v1333 = vunpack.c.h.b16 %v761
        %v1334 = vunpack.c.l.b16 %v762
        %v1335 = vunpack.c.h.b16 %v762
        %v1336 = vunpack.c.l.b16 %v763
        %v1337 = vunpack.c.h.b16 %v763
        %v1338 = vunpack.c.l.b16 %v764
        %v1339 = vunpack.c.h.b16 %v764
        %v1340 = vunpack.c.l.b16 %v765
        %v1341 = vunpack.c.h.b16 %v765
        %v1342 = vunpack.c.l.b16 %v766
        %v1343 = vunpack.c.h.b16 %v766
        %v1344 = vunpack.c.l.b16 %v767
        %v1345 = vunpack.c.h.b16 %v767
        %v1346 = vunpack.c.l.b16 %v768
        %v1347 = vunpack.c.h.b16 %v768
        %v1348 = vunpack.c.l.b16 %v769
        %v1349 = vunpack.c.h.b16 %v769
        %v1350 = vunpack.c.l.b16 %v770
        %v1351 = vunpack.c.h.b16 %v770
        %v1352 = vunpack.c.l.b16 %v771
        %v1353 = vunpack.c.h.b16 %v771
        %v1354 = vunpack.c.l.b16 %v772
        %v1355 = vunpack.c.h.b16 %v772
        %v1356 = vunpack.c.l.b16 %v773
        %v1357 = vunpack.c.h.b16 %v773
        %v1358 = vunpack.c.l.b16 %v774
        %v1359 = vunpack.c.h.b16 %v774
        %v1360 = vunpack.c.l.b16 %v775
        %v1361 = vunpack.c.h.b16 %v775
        %v1362 = vunpack.c.l.b16 %v776
        %v1363 = vunpack.c.h.b16 %v776
        %v1364 = vunpack.c.l.b16 %v777
        %v1365 = vunpack.c.h.b16 %v777
        %v1366 = vunpack.c.l.b16 %v778
        %v1367 = vunpack.c.h.b16 %v778
        %v1368 = vunpack.c.l.b16 %v779
        %v1369 = vunpack.c.h.b16 %v779
        %v1370 = vunpack.c.l.b16 %v780
        %v1371 = vunpack.c.h.b16 %v780
        %v1372 = vunpack.c.l.b16 %v781
        %v1373 = vunpack.c.h.b16 %v781
        %v1374 = vunpack.c.l.b16 %v782
        %v1375 = vunpack.c.h.b16 %v782
        %v1376 = vunpack.c.l.b16 %v783
        %v1377 = vunpack.c.h.b16 %v783
        %v1378 = vunpack.c.l.b16 %v784
        %v1379 = vunpack.c.h.b16 %v784
        %v1380 = vunpack.c.l.b16 %v785
        %v1381 = vunpack.c.h.b16 %v785
        %v1382 = vunpack.c.l.b16 %v786
        %v1383 = vunpack.c.h.b16 %v786
        %v1384 = vunpack.c.l.b16 %v787
        %v1385 = vunpack.c.h.b16 %v787
        %v1386 = vunpack.c.l.b16 %v788
        %v1387 = vunpack.c.h.b16 %v788
        %v1388 = vunpack.c.l.b16 %v789
        %v1389 = vunpack.c.h.b16 %v789
        %v1390 = vunpack.c.l.b16 %v790
        %v1391 = vunpack.c.h.b16 %v790
        %v1392 = vunpack.c.l.b16 %v791
        %v1393 = vunpack.c.h.b16 %v791
        %v1394 = vunpack.c.l.b16 %v792
        %v1395 = vunpack.c.h.b16 %v792
        %v1396 = vunpack.c.l.b16 %v793
        %v1397 = vunpack.c.h.b16 %v793
        %v1398 = vunpack.c.l.b16 %v794
        %v1399 = vunpack.c.h.b16 %v794
        %v1400 = vunpack.c.l.b16 %v795
        %v1401 = vunpack.c.h.b16 %v795
        %v1402 = vunpack.c.l.b16 %v796
        %v1403 = vunpack.c.h.b16 %v796
        %v1404 = vunpack.c.l.b16 %v797
        %v1405 = vunpack.c.h.b16 %v797
        %v1406 = vunpack.c.l.b16 %v798
        %v1407 = vunpack.c.h.b16 %v798
        %v1408 = vunpack.c.l.b16 %v799
        %v1409 = vunpack.c.h.b16 %v799
        %v1410 = vunpack.c.l.b16 %v800
        %v1411 = vunpack.c.h.b16 %v800
        %v1412 = vunpack.c.l.b16 %v801
        %v1413 = vunpack.c.h.b16 %v801
        %v1414 = vunpack.c.l.b16 %v802
        %v1415 = vunpack.c.h.b16 %v802
        %v1416 = vunpack.c.l.b16 %v803
        %v1417 = vunpack.c.h.b16 %v803
        %v1418 = vunpack.c.l.b16 %v804
        %v1419 = vunpack.c.h.b16 %v804
        %v1420 = vunpack.c.l.b16 %v805
        %v1421 = vunpack.c.h.b16 %v805
        %v1422 = vunpack.c.l.b16 %v806
        %v1423 = vunpack.c.h.b16 %v806
        %v1424 = vunpack.c.l.b16 %v807
        %v1425 = vunpack.c.h.b16 %v807
        %v1426 = vunpack.c.l.b16 %v808
        %v1427 = vunpack.c.h.b16 %v808
        %v1428 = vunpack.c.l.b16 %v809
        %v1429 = vunpack.c.h.b16 %v809
        %v1430 = vunpack.c.l.b16 %v810
        %v1431 = vunpack.c.h.b16 %v810
        %v1432 = vunpack.c.l.b16 %v811
        %v1433 = vunpack.c.h.b16 %v811
        %v1434 = vunpack.c.l.b16 %v812
        %v1435 = vunpack.c.h.b16 %v812
        %v1436 = vunpack.c.l.b16 %v813
        %v1437 = vunpack.c.h.b16 %v813
        %v1438 = vunpack.c.l.b16 %v814
        %v1439 = vunpack.c.h.b16 %v814
        %v1440 = vunpack.c.l.b16 %v815
        %v1441 = vunpack.c.h.b16 %v815
        %v1442 = vunpack.c.l.b16 %v816
        %v1443 = vunpack.c.h.b16 %v816
        %v1444 = vunpack.c.l.b16 %v817
        %v1445 = vunpack.c.h.b16 %v817
        %v1446 = vunpack.c.l.b16 %v818
        %v1447 = vunpack.c.h.b16 %v818
        %v1448 = vunpack.c.l.b16 %v819
        %v1449 = vunpack.c.h.b16 %v819
        %v1450 = vunpack.c.l.b16 %v820
        %v1451 = vunpack.c.h.b16 %v820
        %v1452 = vunpack.c.l.b16 %v821
        %v1453 = vunpack.c.h.b16 %v821
        %v1454 = vunpack.c.l.b16 %v822
        %v1455 = vunpack.c.h.b16 %v822
        %v1456 = vunpack.c.l.b16 %v823
        %v1457 = vunpack.c.h.b16 %v823
        %v1458 = vunpack.c.l.b16 %v824
        %v1459 = vunpack.c.h.b16 %v824
        %v1460 = vunpack.c.l.b16 %v825
        %v1461 = vunpack.c.h.b16 %v825
        %v1462 = vunpack.c.l.b16 %v826
        %v1463 = vunpack.c.h.b16 %v826
        %v1464 = vunpack.c.l.b16 %v827
        %v1465 = vunpack.c.h.b16 %v827
        %v1466 = vunpack.c.l.b16 %v828
        %v1467 = vunpack.c.h.b16 %v828
        %v1468 = vunpack.c.l.b16 %v829
        %v1469 = vunpack.c.h.b16 %v829
        %v1470 = vunpack.c.l.b16 %v830
        %v1471 = vunpack.c.h.b16 %v830
        %v1472 = vunpack.c.l.b16 %v831
        %v1473 = vunpack.c.h.b16 %v831
        %v1474 = vunpack.c.l.b16 %v832
        %v1475 = vunpack.c.h.b16 %v832
        %v1476 = vunpack.c.l.b16 %v833
        %v1477 = vunpack.c.h.b16 %v833
        %v1478 = vunpack.c.l.b16 %v834
        %v1479 = vunpack.c.h.b16 %v834
        %v1480 = vunpack.c.l.b16 %v835
        %v1481 = vunpack.c.h.b16 %v835
        %v1482 = vunpack.c.l.b16 %v836
        %v1483 = vunpack.c.h.b16 %v836
        %v1484 = vunpack.c.l.b16 %v837
        %v1485 = vunpack.c.h.b16 %v837
        %v1486 = vunpack.c.l.b16 %v838
        %v1487 = vunpack.c.h.b16 %v838
        %v1488 = vunpack.c.l.b16 %v839
        %v1489 = vunpack.c.h.b16 %v839
        %v1490 = vunpack.c.l.b16 %v840
        %v1491 = vunpack.c.h.b16 %v840
        %v1492 = vunpack.c.l.b16 %v841
        %v1493 = vunpack.c.h.b16 %v841
        %v1494 = vunpack.c.l.b16 %v842
        %v1495 = vunpack.c.h.b16 %v842
        %v1496 = vunpack.c.l.b16 %v843
        %v1497 = vunpack.c.h.b16 %v843
        %v1498 = vunpack.c.l.b16 %v844
        %v1499 = vunpack.c.h.b16 %v844
        %v1500 = vunpack.c.l.b16 %v845
        %v1501 = vunpack.c.h.b16 %v845
        %v1502 = vunpack.c.l.b16 %v846
        %v1503 = vunpack.c.h.b16 %v846
        %v1504 = vunpack.c.l.b16 %v847
        %v1505 = vunpack.c.h.b16 %v847
        %v1506 = vunpack.c.l.b16 %v848
        %v1507 = vunpack.c.h.b16 %v848
        %v1508 = vunpack.c.l.b16 %v849
        %v1509 = vunpack.c.h.b16 %v849
        %v1510 = vunpack.c.l.b16 %v850
        %v1511 = vunpack.c.h.b16 %v850
        %v1512 = vunpack.c.l.b16 %v851
        %v1513 = vunpack.c.h.b16 %v851
        %v1514 = vunpack.c.l.b16 %v852
        %v1515 = vunpack.c.h.b16 %v852
        %v1516 = vunpack.c.l.b16 %v853
        %v1517 = vunpack.c.h.b16 %v853
        %v1518 = vunpack.c.l.b16 %v854
        %v1519 = vunpack.c.h.b16 %v854
        %v1520 = vunpack.c.l.b16 %v855
        %v1521 = vunpack.c.h.b16 %v855
        %v1522 = vunpack.c.l.b16 %v856
        %v1523 = vunpack.c.h.b16 %v856
        %v1524 = vunpack.c.l.b16 %v857
        %v1525 = vunpack.c.h.b16 %v857
        %v1526 = vunpack.c.l.b16 %v858
        %v1527 = vunpack.c.h.b16 %v858
        %v1528 = vunpack.c.l.b16 %v859
        %v1529 = vunpack.c.h.b16 %v859
        %v1530 = vunpack.c.l.b16 %v860
        %v1531 = vunpack.c.h.b16 %v860
        %v1532 = vunpack.c.l.b16 %v861
        %v1533 = vunpack.c.h.b16 %v861
        %v1534 = vunpack.c.l.b16 %v862
        %v1535 = vunpack.c.h.b16 %v862
        %v1536 = vunpack.c.l.b16 %v863
        %v1537 = vunpack.c.h.b16 %v863
        %v1538 = vunpack.c.l.b16 %v864
        %v1539 = vunpack.c.h.b16 %v864
        %v1540 = vunpack.c.l.b16 %v865
        %v1541 = vunpack.c.h.b16 %v865
        %v1542 = vunpack.c.l.b16 %v866
        %v1543 = vunpack.c.h.b16 %v866
        %v1544 = vunpack.c.l.b16 %v867
        %v1545 = vunpack.c.h.b16 %v867
        %v1546 = vunpack.c.l.b16 %v868
        %v1547 = vunpack.c.h.b16 %v868
        %v1548 = vunpack.c.l.b16 %v869
        %v1549 = vunpack.c.h.b16 %v869
        %v1550 = vunpack.c.l.b16 %v870
        %v1551 = vunpack.c.h.b16 %v870
        %v1552 = vunpack.c.l.b16 %v871
        %v1553 = vunpack.c.h.b16 %v871
        %v1554 = vunpack.c.l.b16 %v872
        %v1555 = vunpack.c.h.b16 %v872
        %v1556 = vunpack.c.l.b16 %v873
        %v1557 = vunpack.c.h.b16 %v873
        %v1558 = vunpack.c.l.b16 %v874
        %v1559 = vunpack.c.h.b16 %v874
        %v1560 = vunpack.c.l.b16 %v875
        %v1561 = vunpack.c.h.b16 %v875
        %v1562 = vunpack.c.l.b16 %v876
        %v1563 = vunpack.c.h.b16 %v876
        %v1564 = vunpack.c.l.b16 %v877
        %v1565 = vunpack.c.h.b16 %v877
        %v1566 = vunpack.c.l.b16 %v878
        %v1567 = vunpack.c.h.b16 %v878
        %v1568 = vunpack.c.l.b16 %v879
        %v1569 = vunpack.c.h.b16 %v879
        %v1570 = vunpack.c.l.b16 %v880
        %v1571 = vunpack.c.h.b16 %v880
        %v1572 = vunpack.c.l.b16 %v881
        %v1573 = vunpack.c.h.b16 %v881
        %v1574 = vunpack.c.l.b16 %v882
        %v1575 = vunpack.c.h.b16 %v882
        %v1576 = vunpack.c.l.b16 %v883
        %v1577 = vunpack.c.h.b16 %v883
        %v1578 = vunpack.c.l.b16 %v884
        %v1579 = vunpack.c.h.b16 %v884
        %v1580 = vunpack.c.l.b16 %v885
        %v1581 = vunpack.c.h.b16 %v885
        %v1582 = vunpack.c.l.b16 %v886
        %v1583 = vunpack.c.h.b16 %v886
        %v1584 = vunpack.c.l.b16 %v887
        %v1585 = vunpack.c.h.b16 %v887
        %v1586 = vunpack.c.l.b16 %v888
        %v1587 = vunpack.c.h.b16 %v888
        %v1588 = vunpack.c.l.b16 %v889
        %v1589 = vunpack.c.h.b16 %v889
        %v1590 = vunpack.c.l.b16 %v890
        %v1591 = vunpack.c.h.b16 %v890
        %v1592 = vunpack.c.l.b16 %v891
        %v1593 = vunpack.c.h.b16 %v891
        %v1594 = vunpack.c.l.b16 %v892
        %v1595 = vunpack.c.h.b16 %v892
        %v1596 = vunpack.c.l.b16 %v893
        %v1597 = vunpack.c.h.b16 %v893
        %v1598 = vunpack.c.l.b16 %v894
        %v1599 = vunpack.c.h.b16 %v894
        %v1600 = vunpack.c.l.b16 %v895
        %v1601 = vunpack.c.h.b16 %v895
        %v1602 = vunpack.c.l.b16 %v896
        %v1603 = vunpack.c.h.b16 %v896
        %v1604 = vunpack.c.l.b16 %v897
        %v1605 = vunpack.c.h.b16 %v897
        %v1606 = vunpack.c.l.b16 %v898
        %v1607 = vunpack.c.h.b16 %v898
        %v1608 = vunpack.c.l.b16 %v899
        %v1609 = vunpack.c.h.b16 %v899
        %v1610 = vunpack.c.l.b16 %v900
        %v1611 = vunpack.c.h.b16 %v900
        %v1612 = vunpack.c.l.b16 %v901
        %v1613 = vunpack.c.h.b16 %v901
        %v1614 = vunpack.c.l.b16 %v902
        %v1615 = vunpack.c.h.b16 %v902
        %v1616 = vunpack.c.l.b16 %v903
        %v1617 = vunpack.c.h.b16 %v903
        %v1618 = vunpack.c.l.b16 %v904
        %v1619 = vunpack.c.h.b16 %v904
        %v1620 = vunpack.c.l.b16 %v905
        %v1621 = vunpack.c.h.b16 %v905
        %v1622 = vunpack.c.l.b16 %v906
        %v1623 = vunpack.c.h.b16 %v906
        %v1624 = vunpack.c.l.b16 %v907
        %v1625 = vunpack.c.h.b16 %v907
        %v1626 = vunpack.c.l.b16 %v908
        %v1627 = vunpack.c.h.b16 %v908
        %v1628 = vunpack.c.l.b16 %v909
        %v1629 = vunpack.c.h.b16 %v909
        %v1630 = vunpack.c.l.b16 %v910
        %v1631 = vunpack.c.h.b16 %v910
        %v1632 = vunpack.c.l.b16 %v911
        %v1633 = vunpack.c.h.b16 %v911
        %v1634 = vunpack.c.l.b16 %v912
        %v1635 = vunpack.c.h.b16 %v912
        %v1636 = vunpack.c.l.b16 %v913
        %v1637 = vunpack.c.h.b16 %v913
        %v1638 = vunpack.c.l.b16 %v914
        %v1639 = vunpack.c.h.b16 %v914
        %v1640 = vunpack.c.l.b16 %v915
        %v1641 = vunpack.c.h.b16 %v915
        %v1642 = vunpack.c.l.b16 %v916
        %v1643 = vunpack.c.h.b16 %v916
        %v1644 = vunpack.c.l.b16 %v917
        %v1645 = vunpack.c.h.b16 %v917
        %v1646 = vunpack.c.l.b16 %v918
        %v1647 = vunpack.c.h.b16 %v918
        %v1648 = vunpack.c.l.b16 %v919
        %v1649 = vunpack.c.h.b16 %v919
        %v1650 = vunpack.c.l.b16 %v920
        %v1651 = vunpack.c.h.b16 %v920
        %v1652 = vunpack.c.l.b16 %v921
        %v1653 = vunpack.c.h.b16 %v921
        %v1654 = vunpack.c.l.b16 %v922
        %v1655 = vunpack.c.h.b16 %v922
        %v1656 = vunpack.c.l.b16 %v923
        %v1657 = vunpack.c.h.b16 %v923
        %v1658 = vunpack.c.l.b16 %v924
        %v1659 = vunpack.c.h.b16 %v924
        %v1660 = vunpack.c.l.b16 %v925
        %v1661 = vunpack.c.h.b16 %v925
        %v1662 = vunpack.c.l.b16 %v926
        %v1663 = vunpack.c.h.b16 %v926
        %v1664 = vunpack.c.l.b16 %v927
        %v1665 = vunpack.c.h.b16 %v927
        %v1666 = vunpack.c.l.b16 %v928
        %v1667 = vunpack.c.h.b16 %v928
        %v1668 = vunpack.c.l.b16 %v929
        %v1669 = vunpack.c.h.b16 %v929
        %v1670 = vunpack.c.l.b16 %v930
        %v1671 = vunpack.c.h.b16 %v930
        %v1672 = vunpack.c.l.b16 %v931
        %v1673 = vunpack.c.h.b16 %v931
        %v1674 = vpack.c.b16 %v1246, %v1242
        %v1675 = vpack.c.b16 %v1247, %v1243
        %v1676 = vpack.c.b16 %v1248, %v1244
        %v1677 = vpack.c.b16 %v1249, %v1245
        %v1678 = vpack.c.b16 %v1254, %v1250
        %v1679 = vpack.c.b16 %v1255, %v1251
        %v1680 = vpack.c.b16 %v1256, %v1252
        %v1681 = vpack.c.b16 %v1257, %v1253
        %v1682 = vpack.c.b16 %v1262, %v1258
        %v1683 = vpack.c.b16 %v1263, %v1259
        %v1684 = vpack.c.b16 %v1264, %v1260
        %v1685 = vpack.c.b16 %v1265, %v1261
        %v1686 = vpack.c.b16 %v1270, %v1266
        %v1687 = vpack.c.b16 %v1271, %v1267
        %v1688 = vpack.c.b16 %v1272, %v1268
        %v1689 = vpack.c.b16 %v1273, %v1269
        %v1690 = vpack.c.b16 %v1278, %v1274
        %v1691 = vpack.c.b16 %v1279, %v1275
        %v1692 = vpack.c.b16 %v1280, %v1276
        %v1693 = vpack.c.b16 %v1281, %v1277
        %v1694 = vpack.c.b16 %v1286, %v1282
        %v1695 = vpack.c.b16 %v1287, %v1283
        %v1696 = vpack.c.b16 %v1288, %v1284
        %v1697 = vpack.c.b16 %v1289, %v1285
        %v1698 = vpack.c.b16 %v1294, %v1290
        %v1699 = vpack.c.b16 %v1295, %v1291
        %v1700 = vpack.c.b16 %v1296, %v1292
        %v1701 = vpack.c.b16 %v1297, %v1293
        %v1702 = vpack.c.b16 %v1302, %v1298
        %v1703 = vpack.c.b16 %v1303, %v1299
        %v1704 = vpack.c.b16 %v1304, %v1300
        %v1705 = vpack.c.b16 %v1305, %v1301
        %v1706 = vpack.c.b16 %v1310, %v1306
        %v1707 = vpack.c.b16 %v1311, %v1307
        %v1708 = vpack.c.b16 %v1312, %v1308
        %v1709 = vpack.c.b16 %v1313, %v1309
        %v1710 = vpack.c.b16 %v1318, %v1314
        %v1711 = vpack.c.b16 %v1319, %v1315
        %v1712 = vpack.c.b16 %v1320, %v1316
        %v1713 = vpack.c.b16 %v1321, %v1317
        %v1714 = vpack.c.b16 %v1326, %v1322
        %v1715 = vpack.c.b16 %v1327, %v1323
        %v1716 = vpack.c.b16 %v1328, %v1324
        %v1717 = vpack.c.b16 %v1329, %v1325
        %v1718 = vpack.c.b16 %v1334, %v1330
        %v1719 = vpack.c.b16 %v1335, %v1331
        %v1720 = vpack.c.b16 %v1336, %v1332
        %v1721 = vpack.c.b16 %v1337, %v1333
        %v1722 = vpack.c.b16 %v1342, %v1338
        %v1723 = vpack.c.b16 %v1343, %v1339
        %v1724 = vpack.c.b16 %v1344, %v1340
        %v1725 = vpack.c.b16 %v1345, %v1341
        %v1726 = vpack.c.b16 %v1350, %v1346
        %v1727 = vpack.c.b16 %v1351, %v1347
        %v1728 = vpack.c.b16 %v1352, %v1348
        %v1729 = vpack.c.b16 %v1353, %v1349
        %v1730 = vpack.c.b16 %v1358, %v1354
        %v1731 = vpack.c.b16 %v1359, %v1355
        %v1732 = vpack.c.b16 %v1360, %v1356
        %v1733 = vpack.c.b16 %v1361, %v1357
        %v1734 = vpack.c.b16 %v1366, %v1362
        %v1735 = vpack.c.b16 %v1367, %v1363
        %v1736 = vpack.c.b16 %v1368, %v1364
        %v1737 = vpack.c.b16 %v1369, %v1365
        %v1738 = vpack.c.b16 %v1374, %v1370
        %v1739 = vpack.c.b16 %v1375, %v1371
        %v1740 = vpack.c.b16 %v1376, %v1372
        %v1741 = vpack.c.b16 %v1377, %v1373
        %v1742 = vpack.c.b16 %v1382, %v1378
        %v1743 = vpack.c.b16 %v1383, %v1379
        %v1744 = vpack.c.b16 %v1384, %v1380
        %v1745 = vpack.c.b16 %v1385, %v1381
        %v1746 = vpack.c.b16 %v1390, %v1386
        %v1747 = vpack.c.b16 %v1391, %v1387
        %v1748 = vpack.c.b16 %v1392, %v1388
        %v1749 = vpack.c.b16 %v1393, %v1389
        %v1750 = vpack.c.b16 %v1398, %v1394
        %v1751 = vpack.c.b16 %v1399, %v1395
        %v1752 = vpack.c.b16 %v1400, %v1396
        %v1753 = vpack.c.b16 %v1401, %v1397
        %v1754 = vpack.c.b16 %v1406, %v1402
        %v1755 = vpack.c.b16 %v1407, %v1403
        %v1756 = vpack.c.b16 %v1408, %v1404
        %v1757 = vpack.c.b16 %v1409, %v1405
        %v1758 = vpack.c.b16 %v1414, %v1410
        %v1759 = vpack.c.b16 %v1415, %v1411
        %v1760 = vpack.c.b16 %v1416, %v1412
        %v1761 = vpack.c.b16 %v1417, %v1413
        %v1762 = vpack.c.b16 %v1422, %v1418
        %v1763 = vpack.c.b16 %v1423, %v1419
        %v1764 = vpack.c.b16 %v1424, %v1420
        %v1765 = vpack.c.b16 %v1425, %v1421
        %v1766 = vpack.c.b16 %v1430, %v1426
        %v1767 = vpack.c.b16 %v1431, %v1427
        %v1768 = vpack.c.b16 %v1432, %v1428
        %v1769 = vpack.c.b16 %v1433, %v1429
        %v1770 = vpack.c.b16 %v1438, %v1434
        %v1771 = vpack.c.b16 %v1439, %v1435
        %v1772 = vpack.c.b16 %v1440, %v1436
        %v1773 = vpack.c.b16 %v1441, %v1437
        %v1774 = vpack.c.b16 %v1446, %v1442
        %v1775 = vpack.c.b16 %v1447, %v1443
        %v1776 = vpack.c.b16 %v1448, %v1444
        %v1777 = vpack.c.b16 %v1449, %v1445
        %v1778 = vpack.c.b16 %v1454, %v1450
        %v1779 = vpack.c.b16 %v1455, %v1451
        %v1780 = vpack.c.b16 %v1456, %v1452
        %v1781 = vpack.c.b16 %v1457, %v1453
        %v1782 = vpack.c.b16 %v1462, %v1458
        %v1783 = vpack.c.b16 %v1463, %v1459
        %v1784 = vpack.c.b16 %v1464, %v1460
        %v1785 = vpack.c.b16 %v1465, %v1461
        %v1786 = vpack.c.b16 %v1470, %v1466
        %v1787 = vpack.c.b16 %v1471, %v1467
        %v1788 = vpack.c.b16 %v1472, %v1468
        %v1789 = vpack.c.b16 %v1473, %v1469
        %v1790 = vpack.c.b16 %v1478, %v1474
        %v1791 = vpack.c.b16 %v1479, %v1475
        %v1792 = vpack.c.b16 %v1480, %v1476
        %v1793 = vpack.c.b16 %v1481, %v1477
        %v1794 = vpack.c.b16 %v1486, %v1482
        %v1795 = vpack.c.b16 %v1487, %v1483
        %v1796 = vpack.c.b16 %v1488, %v1484
        %v1797 = vpack.c.b16 %v1489, %v1485
        %v1798 = vpack.c.b16 %v1494, %v1490
        %v1799 = vpack.c.b16 %v1495, %v1491
        %v1800 = vpack.c.b16 %v1496, %v1492
        %v1801 = vpack.c.b16 %v1497, %v1493
        %v1802 = vpack.c.b16 %v1502, %v1498
        %v1803 = vpack.c.b16 %v1503, %v1499
        %v1804 = vpack.c.b16 %v1504, %v1500
        %v1805 = vpack.c.b16 %v1505, %v1501
        %v1806 = vpack.c.b16 %v1510, %v1506
        %v1807 = vpack.c.b16 %v1511, %v1507
        %v1808 = vpack.c.b16 %v1512, %v1508
        %v1809 = vpack.c.b16 %v1513, %v1509
        %v1810 = vpack.c.b16 %v1518, %v1514
        %v1811 = vpack.c.b16 %v1519, %v1515
        %v1812 = vpack.c.b16 %v1520, %v1516
        %v1813 = vpack.c.b16 %v1521, %v1517
        %v1814 = vpack.c.b16 %v1526, %v1522
        %v1815 = vpack.c.b16 %v1527, %v1523
        %v1816 = vpack.c.b16 %v1528, %v1524
        %v1817 = vpack.c.b16 %v1529, %v1525
        %v1818 = vpack.c.b16 %v1534, %v1530
        %v1819 = vpack.c.b16 %v1535, %v1531
        %v1820 = vpack.c.b16 %v1536, %v1532
        %v1821 = vpack.c.b16 %v1537, %v1533
        %v1822 = vpack.c.b16 %v1542, %v1538
        %v1823 = vpack.c.b16 %v1543, %v1539
        %v1824 = vpack.c.b16 %v1544, %v1540
        %v1825 = vpack.c.b16 %v1545, %v1541
        %v1826 = vpack.c.b16 %v1550, %v1546
        %v1827 = vpack.c.b16 %v1551, %v1547
        %v1828 = vpack.c.b16 %v1552, %v1548
        %v1829 = vpack.c.b16 %v1553, %v1549
        %v1830 = vpack.c.b16 %v1558, %v1554
        %v1831 = vpack.c.b16 %v1559, %v1555
        %v1832 = vpack.c.b16 %v1560, %v1556
        %v1833 = vpack.c.b16 %v1561, %v1557
        %v1834 = vpack.c.b16 %v1566, %v1562
        %v1835 = vpack.c.b16 %v1567, %v1563
        %v1836 = vpack.c.b16 %v1568, %v1564
        %v1837 = vpack.c.b16 %v1569, %v1565
        %v1838 = vpack.c.b16 %v1574, %v1570
        %v1839 = vpack.c.b16 %v1575, %v1571
        %v1840 = vpack.c.b16 %v1576, %v1572
        %v1841 = vpack.c.b16 %v1577, %v1573
        %v1842 = vpack.c.b16 %v1582, %v1578
        %v1843 = vpack.c.b16 %v1583, %v1579
        %v1844 = vpack.c.b16 %v1584, %v1580
        %v1845 = vpack.c.b16 %v1585, %v1581
        %v1846 = vpack.c.b16 %v1590, %v1586
        %v1847 = vpack.c.b16 %v1591, %v1587
        %v1848 = vpack.c.b16 %v1592, %v1588
        %v1849 = vpack.c.b16 %v1593, %v1589
        %v1850 = vpack.c.b16 %v1598, %v1594
        %v1851 = vpack.c.b16 %v1599, %v1595
        %v1852 = vpack.c.b16 %v1600, %v1596
        %v1853 = vpack.c.b16 %v1601, %v1597
        %v1854 = vpack.c.b16 %v1606, %v1602
        %v1855 = vpack.c.b16 %v1607, %v1603
        %v1856 = vpack.c.b16 %v1608, %v1604
        %v1857 = vpack.c.b16 %v1609, %v1605
        %v1858 = vpack.c.b16 %v1614, %v1610
        %v1859 = vpack.c.b16 %v1615, %v1611
        %v1860 = vpack.c.b16 %v1616, %v1612
        %v1861 = vpack.c.b16 %v1617, %v1613
        %v1862 = vpack.c.b16 %v1622, %v1618
        %v1863 = vpack.c.b16 %v1623, %v1619
        %v1864 = vpack.c.b16 %v1624, %v1620
        %v1865 = vpack.c.b16 %v1625, %v1621
        %v1866 = vpack.c.b16 %v1630, %v1626
        %v1867 = vpack.c.b16 %v1631, %v1627
        %v1868 = vpack.c.b16 %v1632, %v1628
        %v1869 = vpack.c.b16 %v1633, %v1629
        %v1870 = vpack.c.b16 %v1638, %v1634
        %v1871 = vpack.c.b16 %v1639, %v1635
        %v1872 = vpack.c.b16 %v1640, %v1636
        %v1873 = vpack.c.b16 %v1641, %v1637
        %v1874 = vpack.c.b16 %v1646, %v1642
        %v1875 = vpack.c.b16 %v1647, %v1643
        %v1876 = vpack.c.b16 %v1648, %v1644
        %v1877 = vpack.c.b16 %v1649, %v1645
        %v1878 = vpack.c.b16 %v1654, %v1650
        %v1879 = vpack.c.b16 %v1655, %v1651
        %v1880 = vpack.c.b16 %v1656, %v1652
        %v1881 = vpack.c.b16 %v1657, %v1653
        %v1882 = vpack.c.b16 %v1662, %v1658
        %v1883 = vpack.c.b16 %v1663, %v1659
        %v1884 = vpack.c.b16 %v1664, %v1660
        %v1885 = vpack.c.b16 %v1665, %v1661
        %v1886 = vpack.c.b16 %v1670, %v1666
        %v1887 = vpack.c.b16 %v1671, %v1667
        %v1888 = vpack.c.b16 %v1672, %v1668
        %v1889 = vpack.c.b16 %v1673, %v1669
        %vm2106 = vcmask 785408
        %v2108 = vsel %vm2106, %v1006, 0
        %v2111 = vsel %vm2106, %v1013, 0
        %2113 = vmatprep.subr.bf16.mxu0 %v1675
        %2114 = vmatpush1.bf16.msra.mxu0 %v1674
        %2115 = vmatprep.subr.bf16.mxu0 %v1679
        %2116 = vmatpush1.bf16.msra.mxu0 %v1678
        %2117 = vmatprep.subr.bf16.mxu0 %v1683
        %2118 = vmatpush1.bf16.msra.mxu0 %v1682
        %2119 = vmatprep.subr.bf16.mxu0 %v1687
        %2120 = vmatpush1.bf16.msra.mxu0 %v1686
        %2121 = vmatprep.subr.bf16.mxu0 %v1691
        %2122 = vmatpush1.bf16.msra.mxu0 %v1690
        %2123 = vmatprep.subr.bf16.mxu0 %v1695
        %2124 = vmatpush1.bf16.msra.mxu0 %v1694
        %2125 = vmatprep.subr.bf16.mxu0 %v1699
        %2126 = vmatpush1.bf16.msra.mxu0 %v1698
        %2127 = vmatprep.subr.bf16.mxu0 %v1703
        %2128 = vmatpush1.bf16.msra.mxu0 %v1702
        %2129 = vmatprep.subr.bf16.mxu0 %v1707
        %2130 = vmatpush1.bf16.msra.mxu0 %v1706
        %2131 = vmatprep.subr.bf16.mxu0 %v1711
        %2132 = vmatpush1.bf16.msra.mxu0 %v1710
        %2133 = vmatprep.subr.bf16.mxu0 %v1715
        %2134 = vmatpush1.bf16.msra.mxu0 %v1714
        %2135 = vmatprep.subr.bf16.mxu0 %v1719
        %2136 = vmatpush1.bf16.msra.mxu0 %v1718
        %2137 = vmatprep.subr.bf16.mxu0 %v1723
        %2138 = vmatpush1.bf16.msra.mxu0 %v1722
        %2139 = vmatprep.subr.bf16.mxu0 %v1727
        %2140 = vmatpush1.bf16.msra.mxu0 %v1726
        %2141 = vmatprep.subr.bf16.mxu0 %v1731
        %2142 = vmatpush1.bf16.msra.mxu0 %v1730
        %2143 = vmatprep.subr.bf16.mxu0 %v1735
        %2144 = vmatpush1.bf16.msra.mxu0 %v1734
        %2145 = vmatprep.mubr.bf16.mxu0 %v1001
        %2146 = vmatmul.mubr.bf16.gmra.mrb[0].mxu0 %v1000
        %v2147 = vpop.f32.mrb[0].mxu0
        %v2148 = vadd.f32 %v939, %v2147
        %v2149 = vpop.f32.mrb[0].mxu0
        %v2150 = vadd.f32 %v939, %v2149
        %v2151 = vpop.f32.mrb[0].mxu0
        %v2152 = vadd.f32 %v944, %v2151
        %v2153 = vpop.f32.mrb[0].mxu0
        %v2154 = vadd.f32 %v944, %v2153
        %2155 = vmatprep.mubr.bf16.mxu0 %v1008
        %2156 = vmatmul.mubr.bf16.gmra.mrb[0].mxu0 %v1007
        %v2157 = vpop.f32.mrb[0].mxu0
        %v2158 = vadd.f32 %v949, %v2157
        %v2159 = vpop.f32.mrb[0].mxu0
        %v2160 = vadd.f32 %v949, %v2159
        %v2161 = vpop.f32.mrb[0].mxu0
        %v2162 = vadd.f32 %v954, %v2161
        %v2163 = vpop.f32.mrb[0].mxu0
        %v2164 = vadd.f32 %v954, %v2163
        %2165 = vdwg.mxu0
        %2166 = vmatprep.subr.bf16.mxu0 %v1739
        %2167 = vmatpush1.bf16.msra.mxu0 %v1738
        %2168 = vmatprep.subr.bf16.mxu0 %v1743
        %2169 = vmatpush1.bf16.msra.mxu0 %v1742
        %2170 = vmatprep.subr.bf16.mxu0 %v1747
        %2171 = vmatpush1.bf16.msra.mxu0 %v1746
        %2172 = vmatprep.subr.bf16.mxu0 %v1751
        %2173 = vmatpush1.bf16.msra.mxu0 %v1750
        %2174 = vmatprep.subr.bf16.mxu0 %v1755
        %2175 = vmatpush1.bf16.msra.mxu0 %v1754
        %2176 = vmatprep.subr.bf16.mxu0 %v1759
        %2177 = vmatpush1.bf16.msra.mxu0 %v1758
        %2178 = vmatprep.subr.bf16.mxu0 %v1763
        %2179 = vmatpush1.bf16.msra.mxu0 %v1762
        %2180 = vmatprep.subr.bf16.mxu0 %v1767
        %2181 = vmatpush1.bf16.msra.mxu0 %v1766
        %2182 = vmatprep.subr.bf16.mxu0 %v1771
        %2183 = vmatpush1.bf16.msra.mxu0 %v1770
        %2184 = vmatprep.subr.bf16.mxu0 %v1775
        %2185 = vmatpush1.bf16.msra.mxu0 %v1774
        %2186 = vmatprep.subr.bf16.mxu0 %v1779
        %2187 = vmatpush1.bf16.msra.mxu0 %v1778
        %2188 = vmatprep.subr.bf16.mxu0 %v1783
        %2189 = vmatpush1.bf16.msra.mxu0 %v1782
        %2190 = vmatprep.subr.bf16.mxu0 %v1787
        %2191 = vmatpush1.bf16.msra.mxu0 %v1786
        %2192 = vmatprep.subr.bf16.mxu0 %v1791
        %2193 = vmatpush1.bf16.msra.mxu0 %v1790
        %2194 = vmatprep.subr.bf16.mxu0 %v1795
        %2195 = vmatpush1.bf16.msra.mxu0 %v1794
        %2196 = vmatprep.subr.bf16.mxu0 %v1799
        %2197 = vmatpush1.bf16.msra.mxu0 %v1798
        %2198 = vmatprep.mubr.bf16.mxu0 %v1003
        %2199 = vmatmul.mubr.bf16.gmra.mrb[0].mxu0 %v1002
        %v2200 = vpop.f32.mrb[0].mxu0
        %v2201 = vadd.f32 %v2148, %v2200
        %v2202 = vpop.f32.mrb[0].mxu0
        %v2203 = vadd.f32 %v2150, %v2202
        %v2204 = vpop.f32.mrb[0].mxu0
        %v2205 = vadd.f32 %v2152, %v2204
        %v2206 = vpop.f32.mrb[0].mxu0
        %v2207 = vadd.f32 %v2154, %v2206
        %2208 = vmatprep.mubr.bf16.mxu0 %v1010
        %2209 = vmatmul.mubr.bf16.gmra.mrb[0].mxu0 %v1009
        %v2210 = vpop.f32.mrb[0].mxu0
        %v2211 = vadd.f32 %v2158, %v2210
        %v2212 = vpop.f32.mrb[0].mxu0
        %v2213 = vadd.f32 %v2160, %v2212
        %v2214 = vpop.f32.mrb[0].mxu0
        %v2215 = vadd.f32 %v2162, %v2214
        %v2216 = vpop.f32.mrb[0].mxu0
        %v2217 = vadd.f32 %v2164, %v2216
        %2218 = vdwg.mxu0
        %2219 = vmatprep.subr.bf16.mxu0 %v1803
        %2220 = vmatpush1.bf16.msra.mxu0 %v1802
        %2221 = vmatprep.subr.bf16.mxu0 %v1807
        %2222 = vmatpush1.bf16.msra.mxu0 %v1806
        %2223 = vmatprep.subr.bf16.mxu0 %v1811
        %2224 = vmatpush1.bf16.msra.mxu0 %v1810
        %2225 = vmatprep.subr.bf16.mxu0 %v1815
        %2226 = vmatpush1.bf16.msra.mxu0 %v1814
        %2227 = vmatprep.subr.bf16.mxu0 %v1819
        %2228 = vmatpush1.bf16.msra.mxu0 %v1818
        %2229 = vmatprep.subr.bf16.mxu0 %v1823
        %2230 = vmatpush1.bf16.msra.mxu0 %v1822
        %2231 = vmatprep.subr.bf16.mxu0 %v1827
        %2232 = vmatpush1.bf16.msra.mxu0 %v1826
        %2233 = vmatprep.subr.bf16.mxu0 %v1831
        %2234 = vmatpush1.bf16.msra.mxu0 %v1830
        %2235 = vmatprep.subr.bf16.mxu0 %v1835
        %2236 = vmatpush1.bf16.msra.mxu0 %v1834
        %2237 = vmatprep.subr.bf16.mxu0 %v1839
        %2238 = vmatpush1.bf16.msra.mxu0 %v1838
        %2239 = vmatprep.subr.bf16.mxu0 %v1843
        %2240 = vmatpush1.bf16.msra.mxu0 %v1842
        %2241 = vmatprep.subr.bf16.mxu0 %v1847
        %2242 = vmatpush1.bf16.msra.mxu0 %v1846
        %2243 = vmatprep.subr.bf16.mxu0 %v1851
        %2244 = vmatpush1.bf16.msra.mxu0 %v1850
        %2245 = vmatprep.subr.bf16.mxu0 %v1855
        %2246 = vmatpush1.bf16.msra.mxu0 %v1854
        %2247 = vmatprep.subr.bf16.mxu0 %v1859
        %2248 = vmatpush1.bf16.msra.mxu0 %v1858
        %2249 = vmatprep.subr.bf16.mxu0 %v1863
        %2250 = vmatpush1.bf16.msra.mxu0 %v1862
        %2251 = vmatprep.mubr.bf16.mxu0 %v1005
        %2252 = vmatmul.mubr.bf16.gmra.mrb[0].mxu0 %v1004
        %v2253 = vpop.f32.mrb[0].mxu0
        %v2254 = vadd.f32 %v2201, %v2253
        %v2255 = vpop.f32.mrb[0].mxu0
        %v2256 = vadd.f32 %v2203, %v2255
        %v2257 = vpop.f32.mrb[0].mxu0
        %v2258 = vadd.f32 %v2205, %v2257
        %v2259 = vpop.f32.mrb[0].mxu0
        %v2260 = vadd.f32 %v2207, %v2259
        %2261 = vmatprep.mubr.bf16.mxu0 %v1012
        %2262 = vmatmul.mubr.bf16.gmra.mrb[0].mxu0 %v1011
        %v2263 = vpop.f32.mrb[0].mxu0
        %v2264 = vadd.f32 %v2211, %v2263
        %v2265 = vpop.f32.mrb[0].mxu0
        %v2266 = vadd.f32 %v2213, %v2265
        %v2267 = vpop.f32.mrb[0].mxu0
        %v2268 = vadd.f32 %v2215, %v2267
        %v2269 = vpop.f32.mrb[0].mxu0
        %v2270 = vadd.f32 %v2217, %v2269
        %2271 = vdwg.mxu0
        %2272 = vmatprep.subr.bf16.mxu0 %v1867
        %2273 = vmatpush1.bf16.msra.mxu0 %v1866
        %2274 = vmatprep.subr.bf16.mxu0 %v1871
        %2275 = vmatpush1.bf16.msra.mxu0 %v1870
        %2276 = vmatprep.subr.bf16.mxu0 %v1875
        %2277 = vmatpush1.bf16.msra.mxu0 %v1874
        %2278 = vmatprep.subr.bf16.mxu0 %v1879
        %2279 = vmatpush1.bf16.msra.mxu0 %v1878
        %2280 = vmatprep.subr.bf16.mxu0 %v1883
        %2281 = vmatpush1.bf16.msra.mxu0 %v1882
        %2282 = vmatprep.subr.bf16.mxu0 %v1887
        %2283 = vmatpush1.bf16.msra.mxu0 %v1886
        %2284 = vmatprep.subr.bf16.mxu0 0
        %2285 = vmatpush1.bf16.msra.mxu0 0
        %2286 = vmatprep.subr.bf16.mxu0 0
        %2287 = vmatpush1.bf16.msra.mxu0 0
        %2288 = vmatprep.subr.bf16.mxu0 0
        %2289 = vmatpush1.bf16.msra.mxu0 0
        %2290 = vmatprep.subr.bf16.mxu0 0
        %2291 = vmatpush1.bf16.msra.mxu0 0
        %2292 = vmatprep.subr.bf16.mxu0 0
        %2293 = vmatpush1.bf16.msra.mxu0 0
        %2294 = vmatprep.subr.bf16.mxu0 0
        %2295 = vmatpush1.bf16.msra.mxu0 0
        %2296 = vmatprep.subr.bf16.mxu0 0
        %2297 = vmatpush1.bf16.msra.mxu0 0
        %2298 = vmatprep.subr.bf16.mxu0 0
        %2299 = vmatpush1.bf16.msra.mxu0 0
        %2300 = vmatprep.subr.bf16.mxu0 0
        %2301 = vmatpush1.bf16.msra.mxu0 0
        %2302 = vmatprep.subr.bf16.mxu0 0
        %2303 = vmatpush1.bf16.msra.mxu0 0
        %2304 = vmatprep.mubr.bf16.mxu0 0
        %2305 = vmatmul.mubr.bf16.gmra.mrb[0].mxu0 %v2108
        %v2306 = vpop.f32.mrb[0].mxu0
        %v2307 = vadd.f32 %v2254, %v2306
        %v2308 = vpop.f32.mrb[0].mxu0
        %v2309 = vadd.f32 %v2256, %v2308
        %v2310 = vpop.f32.mrb[0].mxu0
        %v2311 = vadd.f32 %v2258, %v2310
        %v2312 = vpop.f32.mrb[0].mxu0
        %v2313 = vadd.f32 %v2260, %v2312
        %2314 = vmatprep.mubr.bf16.mxu0 0
        %2315 = vmatmul.mubr.bf16.gmra.mrb[0].mxu0 %v2111
        %v2316 = vpop.f32.mrb[0].mxu0
        %v2317 = vadd.f32 %v2264, %v2316
        %v2318 = vpop.f32.mrb[0].mxu0
        %v2319 = vadd.f32 %v2266, %v2318
        %v2320 = vpop.f32.mrb[0].mxu0
        %v2321 = vadd.f32 %v2268, %v2320
        %v2322 = vpop.f32.mrb[0].mxu0
        %v2323 = vadd.f32 %v2270, %v2322
        %2324 = vdwg.mxu0
        %2325 = vmatprep.subr.bf16.mxu0 %v1677
        %2326 = vmatpush1.bf16.msra.mxu0 %v1676
        %2327 = vmatprep.subr.bf16.mxu0 %v1681
        %2328 = vmatpush1.bf16.msra.mxu0 %v1680
        %2329 = vmatprep.subr.bf16.mxu0 %v1685
        %2330 = vmatpush1.bf16.msra.mxu0 %v1684
        %2331 = vmatprep.subr.bf16.mxu0 %v1689
        %2332 = vmatpush1.bf16.msra.mxu0 %v1688
        %2333 = vmatprep.subr.bf16.mxu0 %v1693
        %2334 = vmatpush1.bf16.msra.mxu0 %v1692
        %2335 = vmatprep.subr.bf16.mxu0 %v1697
        %2336 = vmatpush1.bf16.msra.mxu0 %v1696
        %2337 = vmatprep.subr.bf16.mxu0 %v1701
        %2338 = vmatpush1.bf16.msra.mxu0 %v1700
        %2339 = vmatprep.subr.bf16.mxu0 %v1705
        %2340 = vmatpush1.bf16.msra.mxu0 %v1704
        %2341 = vmatprep.subr.bf16.mxu0 %v1709
        %2342 = vmatpush1.bf16.msra.mxu0 %v1708
        %2343 = vmatprep.subr.bf16.mxu0 %v1713
        %2344 = vmatpush1.bf16.msra.mxu0 %v1712
        %2345 = vmatprep.subr.bf16.mxu0 %v1717
        %2346 = vmatpush1.bf16.msra.mxu0 %v1716
        %2347 = vmatprep.subr.bf16.mxu0 %v1721
        %2348 = vmatpush1.bf16.msra.mxu0 %v1720
        %2349 = vmatprep.subr.bf16.mxu0 %v1725
        %2350 = vmatpush1.bf16.msra.mxu0 %v1724
        %2351 = vmatprep.subr.bf16.mxu0 %v1729
        %2352 = vmatpush1.bf16.msra.mxu0 %v1728
        %2353 = vmatprep.subr.bf16.mxu0 %v1733
        %2354 = vmatpush1.bf16.msra.mxu0 %v1732
        %2355 = vmatprep.subr.bf16.mxu0 %v1737
        %2356 = vmatpush1.bf16.msra.mxu0 %v1736
        %2357 = vmatprep.mubr.bf16.mxu0 %v1001
        %2358 = vmatmul.mubr.bf16.gmra.mrb[0].mxu0 %v1000
        %v2359 = vpop.f32.mrb[0].mxu0
        %v2360 = vadd.f32 %v939, %v2359
        %v2361 = vpop.f32.mrb[0].mxu0
        %v2362 = vadd.f32 %v939, %v2361
        %v2363 = vpop.f32.mrb[0].mxu0
        %v2364 = vadd.f32 %v944, %v2363
        %v2365 = vpop.f32.mrb[0].mxu0
        %v2366 = vadd.f32 %v944, %v2365
        %2367 = vmatprep.mubr.bf16.mxu0 %v1008
        %2368 = vmatmul.mubr.bf16.gmra.mrb[0].mxu0 %v1007
        %v2369 = vpop.f32.mrb[0].mxu0
        %v2370 = vadd.f32 %v949, %v2369
        %v2371 = vpop.f32.mrb[0].mxu0
        %v2372 = vadd.f32 %v949, %v2371
        %v2373 = vpop.f32.mrb[0].mxu0
        %v2374 = vadd.f32 %v954, %v2373
        %v2375 = vpop.f32.mrb[0].mxu0
        %v2376 = vadd.f32 %v954, %v2375
        %2377 = vdwg.mxu0
        %2378 = vmatprep.subr.bf16.mxu0 %v1741
        %2379 = vmatpush1.bf16.msra.mxu0 %v1740
        %2380 = vmatprep.subr.bf16.mxu0 %v1745
        %2381 = vmatpush1.bf16.msra.mxu0 %v1744
        %2382 = vmatprep.subr.bf16.mxu0 %v1749
        %2383 = vmatpush1.bf16.msra.mxu0 %v1748
        %2384 = vmatprep.subr.bf16.mxu0 %v1753
        %2385 = vmatpush1.bf16.msra.mxu0 %v1752
        %2386 = vmatprep.subr.bf16.mxu0 %v1757
        %2387 = vmatpush1.bf16.msra.mxu0 %v1756
        %2388 = vmatprep.subr.bf16.mxu0 %v1761
        %2389 = vmatpush1.bf16.msra.mxu0 %v1760
        %2390 = vmatprep.subr.bf16.mxu0 %v1765
        %2391 = vmatpush1.bf16.msra.mxu0 %v1764
        %2392 = vmatprep.subr.bf16.mxu0 %v1769
        %2393 = vmatpush1.bf16.msra.mxu0 %v1768
        %2394 = vmatprep.subr.bf16.mxu0 %v1773
        %2395 = vmatpush1.bf16.msra.mxu0 %v1772
        %2396 = vmatprep.subr.bf16.mxu0 %v1777
        %2397 = vmatpush1.bf16.msra.mxu0 %v1776
        %2398 = vmatprep.subr.bf16.mxu0 %v1781
        %2399 = vmatpush1.bf16.msra.mxu0 %v1780
        %2400 = vmatprep.subr.bf16.mxu0 %v1785
        %2401 = vmatpush1.bf16.msra.mxu0 %v1784
        %2402 = vmatprep.subr.bf16.mxu0 %v1789
        %2403 = vmatpush1.bf16.msra.mxu0 %v1788
        %2404 = vmatprep.subr.bf16.mxu0 %v1793
        %2405 = vmatpush1.bf16.msra.mxu0 %v1792
        %2406 = vmatprep.subr.bf16.mxu0 %v1797
        %2407 = vmatpush1.bf16.msra.mxu0 %v1796
        %2408 = vmatprep.subr.bf16.mxu0 %v1801
        %2409 = vmatpush1.bf16.msra.mxu0 %v1800
        %2410 = vmatprep.mubr.bf16.mxu0 %v1003
        %2411 = vmatmul.mubr.bf16.gmra.mrb[0].mxu0 %v1002
        %v2412 = vpop.f32.mrb[0].mxu0
        %v2413 = vadd.f32 %v2360, %v2412
        %v2414 = vpop.f32.mrb[0].mxu0
        %v2415 = vadd.f32 %v2362, %v2414
        %v2416 = vpop.f32.mrb[0].mxu0
        %v2417 = vadd.f32 %v2364, %v2416
        %v2418 = vpop.f32.mrb[0].mxu0
        %v2419 = vadd.f32 %v2366, %v2418
        %2420 = vmatprep.mubr.bf16.mxu0 %v1010
        %2421 = vmatmul.mubr.bf16.gmra.mrb[0].mxu0 %v1009
        %v2422 = vpop.f32.mrb[0].mxu0
        %v2423 = vadd.f32 %v2370, %v2422
        %v2424 = vpop.f32.mrb[0].mxu0
        %v2425 = vadd.f32 %v2372, %v2424
        %v2426 = vpop.f32.mrb[0].mxu0
        %v2427 = vadd.f32 %v2374, %v2426
        %v2428 = vpop.f32.mrb[0].mxu0
        %v2429 = vadd.f32 %v2376, %v2428
        %2430 = vdwg.mxu0
        %2431 = vmatprep.subr.bf16.mxu0 %v1805
        %2432 = vmatpush1.bf16.msra.mxu0 %v1804
        %2433 = vmatprep.subr.bf16.mxu0 %v1809
        %2434 = vmatpush1.bf16.msra.mxu0 %v1808
        %2435 = vmatprep.subr.bf16.mxu0 %v1813
        %2436 = vmatpush1.bf16.msra.mxu0 %v1812
        %2437 = vmatprep.subr.bf16.mxu0 %v1817
        %2438 = vmatpush1.bf16.msra.mxu0 %v1816
        %2439 = vmatprep.subr.bf16.mxu0 %v1821
        %2440 = vmatpush1.bf16.msra.mxu0 %v1820
        %2441 = vmatprep.subr.bf16.mxu0 %v1825
        %2442 = vmatpush1.bf16.msra.mxu0 %v1824
        %2443 = vmatprep.subr.bf16.mxu0 %v1829
        %2444 = vmatpush1.bf16.msra.mxu0 %v1828
        %2445 = vmatprep.subr.bf16.mxu0 %v1833
        %2446 = vmatpush1.bf16.msra.mxu0 %v1832
        %2447 = vmatprep.subr.bf16.mxu0 %v1837
        %2448 = vmatpush1.bf16.msra.mxu0 %v1836
        %2449 = vmatprep.subr.bf16.mxu0 %v1841
        %2450 = vmatpush1.bf16.msra.mxu0 %v1840
        %2451 = vmatprep.subr.bf16.mxu0 %v1845
        %2452 = vmatpush1.bf16.msra.mxu0 %v1844
        %2453 = vmatprep.subr.bf16.mxu0 %v1849
        %2454 = vmatpush1.bf16.msra.mxu0 %v1848
        %2455 = vmatprep.subr.bf16.mxu0 %v1853
        %2456 = vmatpush1.bf16.msra.mxu0 %v1852
        %2457 = vmatprep.subr.bf16.mxu0 %v1857
        %2458 = vmatpush1.bf16.msra.mxu0 %v1856
        %2459 = vmatprep.subr.bf16.mxu0 %v1861
        %2460 = vmatpush1.bf16.msra.mxu0 %v1860
        %2461 = vmatprep.subr.bf16.mxu0 %v1865
        %2462 = vmatpush1.bf16.msra.mxu0 %v1864
        %2463 = vmatprep.mubr.bf16.mxu0 %v1005
        %2464 = vmatmul.mubr.bf16.gmra.mrb[0].mxu0 %v1004
        %v2465 = vpop.f32.mrb[0].mxu0
        %v2466 = vadd.f32 %v2413, %v2465
        %v2467 = vpop.f32.mrb[0].mxu0
        %v2468 = vadd.f32 %v2415, %v2467
        %v2469 = vpop.f32.mrb[0].mxu0
        %v2470 = vadd.f32 %v2417, %v2469
        %v2471 = vpop.f32.mrb[0].mxu0
        %v2472 = vadd.f32 %v2419, %v2471
        %2473 = vmatprep.mubr.bf16.mxu0 %v1012
        %2474 = vmatmul.mubr.bf16.gmra.mrb[0].mxu0 %v1011
        %v2475 = vpop.f32.mrb[0].mxu0
        %v2476 = vadd.f32 %v2423, %v2475
        %v2477 = vpop.f32.mrb[0].mxu0
        %v2478 = vadd.f32 %v2425, %v2477
        %v2479 = vpop.f32.mrb[0].mxu0
        %v2480 = vadd.f32 %v2427, %v2479
        %v2481 = vpop.f32.mrb[0].mxu0
        %v2482 = vadd.f32 %v2429, %v2481
        %2483 = vdwg.mxu0
        %2484 = vmatprep.subr.bf16.mxu0 %v1869
        %2485 = vmatpush1.bf16.msra.mxu0 %v1868
        %2486 = vmatprep.subr.bf16.mxu0 %v1873
        %2487 = vmatpush1.bf16.msra.mxu0 %v1872
        %2488 = vmatprep.subr.bf16.mxu0 %v1877
        %2489 = vmatpush1.bf16.msra.mxu0 %v1876
        %2490 = vmatprep.subr.bf16.mxu0 %v1881
        %2491 = vmatpush1.bf16.msra.mxu0 %v1880
        %2492 = vmatprep.subr.bf16.mxu0 %v1885
        %2493 = vmatpush1.bf16.msra.mxu0 %v1884
        %2494 = vmatprep.subr.bf16.mxu0 %v1889
        %2495 = vmatpush1.bf16.msra.mxu0 %v1888
        %2496 = vmatprep.subr.bf16.mxu0 0
        %2497 = vmatpush1.bf16.msra.mxu0 0
        %2498 = vmatprep.subr.bf16.mxu0 0
        %2499 = vmatpush1.bf16.msra.mxu0 0
        %2500 = vmatprep.subr.bf16.mxu0 0
        %2501 = vmatpush1.bf16.msra.mxu0 0
        %2502 = vmatprep.subr.bf16.mxu0 0
        %2503 = vmatpush1.bf16.msra.mxu0 0
        %2504 = vmatprep.subr.bf16.mxu0 0
        %2505 = vmatpush1.bf16.msra.mxu0 0
        %2506 = vmatprep.subr.bf16.mxu0 0
        %2507 = vmatpush1.bf16.msra.mxu0 0
        %2508 = vmatprep.subr.bf16.mxu0 0
        %2509 = vmatpush1.bf16.msra.mxu0 0
        %2510 = vmatprep.subr.bf16.mxu0 0
        %2511 = vmatpush1.bf16.msra.mxu0 0
        %2512 = vmatprep.subr.bf16.mxu0 0
        %2513 = vmatpush1.bf16.msra.mxu0 0
        %2514 = vmatprep.subr.bf16.mxu0 0
        %2515 = vmatpush1.bf16.msra.mxu0 0
        %2516 = vmatprep.mubr.bf16.mxu0 0
        %2517 = vmatmul.mubr.bf16.gmra.mrb[0].mxu0 %v2108
        %v2518 = vpop.f32.mrb[0].mxu0
        %v2519 = vadd.f32 %v2466, %v2518
        %v2520 = vpop.f32.mrb[0].mxu0
        %v2521 = vadd.f32 %v2468, %v2520
        %v2522 = vpop.f32.mrb[0].mxu0
        %v2523 = vadd.f32 %v2470, %v2522
        %v2524 = vpop.f32.mrb[0].mxu0
        %v2525 = vadd.f32 %v2472, %v2524
        %2526 = vmatprep.mubr.bf16.mxu0 0
        %2527 = vmatmul.mubr.bf16.gmra.mrb[0].mxu0 %v2111
        %v2528 = vpop.f32.mrb[0].mxu0
        %v2529 = vadd.f32 %v2476, %v2528
        %v2530 = vpop.f32.mrb[0].mxu0
        %v2531 = vadd.f32 %v2478, %v2530
        %v2532 = vpop.f32.mrb[0].mxu0
        %v2533 = vadd.f32 %v2480, %v2532
        %v2534 = vpop.f32.mrb[0].mxu0
        %v2535 = vadd.f32 %v2482, %v2534
        %2536 = vdwg.mxu0
        %v2537 = vld [vmem:[%s670] sm:$0xff]
        %v2538 = vld [vmem:[%s670 + $0x8] sm:$0xff]
        %v2539 = vld [vmem:[%s670 + $0x10] sm:$0xff]
        %v2540 = vld [vmem:[%s670 + $0x18] sm:$0xff]
        %v2541 = vld [vmem:[%s670 + $0x20] sm:$0xff]
        %v2542 = vld [vmem:[%s670 + $0x28] sm:$0xff]
        %v2543 = vld [vmem:[%s670 + $0x30] sm:$0xff]
        %v2544 = vld [vmem:[%s670 + $0x38] sm:$0xff]
        %v2545 = vunpack.c.l.bf16 %v2537
        %v2546 = vunpack.c.h.bf16 %v2537
        %v2547 = vunpack.c.l.bf16 %v2538
        %v2548 = vunpack.c.h.bf16 %v2538
        %v2549 = vunpack.c.l.bf16 %v2539
        %v2550 = vunpack.c.h.bf16 %v2539
        %v2551 = vunpack.c.l.bf16 %v2540
        %v2552 = vunpack.c.h.bf16 %v2540
        %v2553 = vunpack.c.l.bf16 %v2541
        %v2554 = vunpack.c.h.bf16 %v2541
        %v2555 = vunpack.c.l.bf16 %v2542
        %v2556 = vunpack.c.h.bf16 %v2542
        %v2557 = vunpack.c.l.bf16 %v2543
        %v2558 = vunpack.c.h.bf16 %v2543
        %v2559 = vunpack.c.l.bf16 %v2544
        %v2560 = vunpack.c.h.bf16 %v2544
        %v2561 = vadd.f32 %v2307, %v2545
        %v2562 = vadd.f32 %v2309, %v2546
        %v2563 = vadd.f32 %v2519, %v2547
        %v2564 = vadd.f32 %v2521, %v2548
        %v2565 = vadd.f32 %v2311, %v2549
        %v2566 = vadd.f32 %v2313, %v2550
        %v2567 = vadd.f32 %v2523, %v2551
        %v2568 = vadd.f32 %v2525, %v2552
        %v2569 = vadd.f32 %v2317, %v2553
        %v2570 = vadd.f32 %v2319, %v2554
        %v2571 = vadd.f32 %v2529, %v2555
        %v2572 = vadd.f32 %v2531, %v2556
        %v2573 = vadd.f32 %v2321, %v2557
        %v2574 = vadd.f32 %v2323, %v2558
        %v2575 = vadd.f32 %v2533, %v2559
        %v2576 = vadd.f32 %v2535, %v2560
        %v2577 = vpack.c.bf16 %v2565, %v2561
        %v2578 = vpack.c.bf16 %v2566, %v2562
        %v2579 = vpack.c.bf16 %v2567, %v2563
        %v2580 = vpack.c.bf16 %v2568, %v2564
        %v2581 = vpack.c.bf16 %v2573, %v2569
        %v2582 = vpack.c.bf16 %v2574, %v2570
        %v2583 = vpack.c.bf16 %v2575, %v2571
        %v2584 = vpack.c.bf16 %v2576, %v2572
        %v2593 = vunpack.c.l.b16 %v2577
        %v2594 = vunpack.c.l.b16 %v2578
        %v2595 = vunpack.c.l.b16 %v2579
        %v2596 = vunpack.c.l.b16 %v2580
        %v2597 = vunpack.c.h.b16 %v2577
        %v2598 = vunpack.c.h.b16 %v2578
        %v2599 = vunpack.c.h.b16 %v2579
        %v2600 = vunpack.c.h.b16 %v2580
        %v2601 = vunpack.c.l.b16 %v2581
        %v2602 = vunpack.c.l.b16 %v2582
        %v2603 = vunpack.c.l.b16 %v2583
        %v2604 = vunpack.c.l.b16 %v2584
        %v2605 = vunpack.c.h.b16 %v2581
        %v2606 = vunpack.c.h.b16 %v2582
        %v2607 = vunpack.c.h.b16 %v2583
        %v2608 = vunpack.c.h.b16 %v2584
        %v2609 = vpack.c.b16 %v2594, %v2593
        %v2610 = vpack.c.b16 %v2596, %v2595
        %v2611 = vpack.c.b16 %v2598, %v2597
        %v2612 = vpack.c.b16 %v2600, %v2599
        %v2613 = vpack.c.b16 %v2602, %v2601
        %v2614 = vpack.c.b16 %v2604, %v2603
        %v2615 = vpack.c.b16 %v2606, %v2605
        %v2616 = vpack.c.b16 %v2608, %v2607
        %2625 = vst [vmem:[%s695] sm:$0xff] %v2609
        %2626 = vst [vmem:[%s695 + $0x8] sm:$0xff] %v2610
        %2627 = vst [vmem:[%s695 + $0x10] sm:$0xff] %v2611
        %2628 = vst [vmem:[%s695 + $0x18] sm:$0xff] %v2612
        %2629 = vst [vmem:[%s695 + $0x20] sm:$0xff] %v2613
        %2630 = vst [vmem:[%s695 + $0x28] sm:$0xff] %v2614
        %2631 = vst [vmem:[%s695 + $0x30] sm:$0xff] %v2615
        %2632 = vst [vmem:[%s695 + $0x38] sm:$0xff] %v2616
        %s2633 = sand.u32 %s117, 1
        %s2634 = sand.u32 %s117, 1
        %s2635 = smul.addr %s2634, 64
        %s2636 = scalar_lea.vmem [#allocation4], %s2635
        // Predicated region
        $region83: #{forward.10} parent=73 // pred_check
          %p2637 = pneg %p127
        $region84: #{forward.10} parent=73 // pred_check_branch
          %2639 = sbr.rel (%p2637) target = $region86
        $region85: #{forward.10} parent=73 // pred_region
          %s2640 = smul.u32 4, %s15
          %s2641 = smul.addr %s2640, 4
          %s2642 = scalar_lea.vmem %s4, %s2641
          // Predicated region
          $region87: #{forward.10} parent=85 // pred_check
            _
          $region88: #{forward.10} parent=85 // pred_check_branch
            %2644 = sbr.rel (0) target = $region90
          $region89: #{forward.10} parent=85 // pred_region
            // Predicated region
            $region91: #{forward.10} parent=89 // pred_check
              _
            $region92: #{forward.10} parent=89 // pred_check_branch
              %2646 = sbr.rel (0) target = $region94
            $region93: #{forward.10} parent=89 // pred_region
              loop: start=0, step=1, limit=1
              $region95: #{forward.10} parent=93 // loop_pre_header
                _
              $region96: #{forward.10} parent=93 // loop_header
                %s2648 = sphi 0, %s2652
                %p2649 = scmp.ge.s32.totalorder %s2648, 1
                %s2653 = sphi %s2636, %s2636
                %s2654 = sphi %s2642, %s2642
              $region97: #{forward.10} parent=93 // loop_header_branch
                %2651 = sbr.rel (%p2649) target = $region101
              $region98: #{forward.10} parent=93 // loop_body
                %v2655 = vld [vmem:[%s2653] sm:$0xff]
                %2656 = vst [vmem:[%s2654] sm:$0xff] %v2655
                %v2657 = vld [vmem:[%s2653 + $0x8] sm:$0xff]
                %2658 = vst [vmem:[%s2654 + $0x8] sm:$0xff] %v2657
                %v2659 = vld [vmem:[%s2653 + $0x10] sm:$0xff]
                %2660 = vst [vmem:[%s2654 + $0x40] sm:$0xff] %v2659
                %v2661 = vld [vmem:[%s2653 + $0x18] sm:$0xff]
                %2662 = vst [vmem:[%s2654 + $0x48] sm:$0xff] %v2661
                %v2663 = vld [vmem:[%s2653 + $0x20] sm:$0xff]
                %2664 = vst [vmem:[%s2654 + $0x80] sm:$0xff] %v2663
                %v2665 = vld [vmem:[%s2653 + $0x28] sm:$0xff]
                %2666 = vst [vmem:[%s2654 + $0x88] sm:$0xff] %v2665
                %v2667 = vld [vmem:[%s2653 + $0x30] sm:$0xff]
                %2668 = vst [vmem:[%s2654 + $0xc0] sm:$0xff] %v2667
                %v2669 = vld [vmem:[%s2653 + $0x38] sm:$0xff]
                %2670 = vst [vmem:[%s2654 + $0xc8] sm:$0xff] %v2669
              $region99: #{forward.10} parent=93 // loop_footer
                %s2652 = sadd.s32 1, %s2648
              $region100: #{forward.10} parent=93 // loop_footer_branch
                %2647 = sbr.rel target = $region96
              $region101: #{forward.10} parent=93 // loop_exit
                _
            $region94: #{forward.10} parent=89 // pred_fallthru
              _
            // Predicated region
            $region102: #{forward.10} parent=89 // pred_check
              _
            $region103: #{forward.10} parent=89 // pred_check_branch
              %2672 = sbr.rel target = $region105
            $region104: #{forward.10} parent=89 // pred_region
              _
            $region105: #{forward.10} parent=89 // pred_fallthru
              _
          $region90: #{forward.10} parent=85 // pred_fallthru
            _
          %2673 = vnop
        $region86: #{forward.10} parent=73 // pred_fallthru
          _
      $region74: #{forward.10} parent=5 // pred_fallthru
        _
      %p2674 = scmp.le.s32.totalorder 2, %s10
      // Predicated region
      $region106: #{forward.10} parent=5 // pred_check
        %p2675 = pneg %p2674
      $region107: #{forward.10} parent=5 // pred_check_branch
        %2677 = sbr.rel (%p2675) target = $region109
      $region108: #{forward.10} parent=5 // pred_region
        %s2678 = ssub.s32 %s10, 2
        // Predicated region
        $region110: #{forward.10} parent=108 // pred_check
          %p2679 = pneg %p133
        $region111: #{forward.10} parent=108 // pred_check_branch
          %2681 = sbr.rel (%p2679) target = $region113
        $region112: #{forward.10} parent=108 // pred_region
          %s2682 = sand.u32 %s118, 1
          %s2683 = sand.u32 %s118, 1
          %s2684 = smul.addr %s2683, 64
          %s2685 = scalar_lea.vmem [#allocation4], %s2684
        $region113: #{forward.10} parent=108 // pred_fallthru
          _
      $region109: #{forward.10} parent=5 // pred_fallthru
        _
    $region6: #{forward.10} parent=1 // loop_footer
      %s14 = sadd.s32 1, %s10
    $region7: #{forward.10} parent=1 // loop_footer_branch
      %9 = sbr.rel target = $region3
    $region8: #{forward.10} parent=1 // loop_exit
      _

// kernel: forward.14
$region0: #{forward.14}
  #allocation0 [shape = 'u32[]', space=smem, size = 0x4, offset = 0x4, fixed_abs, tag = 'smem constant byte address 0x4 - core index']
  #allocation1 [shape = 'u32[144,128]{1,0:T(1,128)}', space=vmem, size = 0x12000, scoped, tag = 'internal scratch']
  %s0 = inlined_call_operand.vmem [shape: bf16[64,864], index: 0, kind: input, shape index: {}]
  %s1 = inlined_call_operand.vmem [shape: f32[64,1], index: 1, kind: input, shape index: {}]
  %s2 = inlined_call_operand.vmem [shape: bf16[864,2048], index: 2, kind: input, shape index: {}]
  %s3 = inlined_call_operand.vmem [shape: bf16[64,2048], index: 3, kind: output, shape index: {}]
  %s4 = sld [smem:[#allocation0]]
  $region87: #{forward.14} parent=0
    _
  %s6 = ssub.s32 1, %s4
  %s7 = scalar_select 0, %s6, %s4
  $region1: #{forward.14} parent=0
    #allocation2 [shape = 'u8[1769472]{0}', space=vmem, size = 0x1b0000, scoped, tag = 'input window, operand 2']
    #allocation3 [shape = 'u8[131072]{0}', space=vmem, size = 0x20000, scoped, tag = 'output window, operand 0']
    loop: start=0, step=1, limit=6
    $region2: #{forward.14} parent=1 // loop_pre_header
      _
    $region3: #{forward.14} parent=1 // loop_header
      %s9 = sphi 0, %s13
      %p10 = scmp.ge.s32.totalorder %s9, 6
      %s17 = sphi 0, %s17
      %s19 = sphi 0, %s17
      %s20 = sphi 0, %s19
      %s34 = sphi 0, %s20
      %s38 = sphi 0, %s38
      %s40 = sphi 0, %s38
      %s41 = sphi 0, %s40
      %s55 = sphi 0, %s41
      %s61 = sphi 0, %s63
      %s64 = sphi 0, %s61
      %s65 = sphi 0, %s64
      %s81 = sphi 0, %s65
      %s87 = sphi 0, %s89
      %s90 = sphi 0, %s87
      %s91 = sphi 0, %s90
      %s107 = sphi 0, %s91
    $region4: #{forward.14} parent=1 // loop_header_branch
      %12 = sbr.rel (%p10) target = $region8
    $region5: #{forward.14} parent=1 // loop_body
      %s14 = ssub.s32 %s9, 1
      %s15 = ssub.s32 %s9, 2
      %s16 = sadd.s32 %s9, 1
      %s18 = sadd.s32 %s17, 1
      %p21 = scmp.eq.s32.totalorder %s9, 3
      %p22 = scmp.ne.s32.totalorder %s17, %s19
      %p23 = scmp.eq.s32.totalorder %s9, 0
      %p24 = por %p22, %p23
      %p25 = scmp.ne.s32.totalorder %s17, %s19
      %p26 = scmp.eq.s32.totalorder %s14, 3
      %p27 = por %p25, %p26
      %p28 = scmp.ne.s32.totalorder %s19, %s20
      %p29 = scmp.eq.s32.totalorder %s14, 0
      %p30 = por %p28, %p29
      %p31 = scmp.ne.s32.totalorder %s19, %s20
      %p32 = scmp.eq.s32.totalorder %s15, 3
      %p33 = por %p31, %p32
      %p35 = scmp.ne.s32.totalorder %s20, %s34
      %p36 = scmp.eq.s32.totalorder %s15, 0
      %p37 = por %p35, %p36
      %s39 = sadd.s32 %s38, 1
      %p42 = scmp.eq.s32.totalorder %s9, 3
      %p43 = scmp.ne.s32.totalorder %s38, %s40
      %p44 = scmp.eq.s32.totalorder %s9, 0
      %p45 = por %p43, %p44
      %p46 = scmp.ne.s32.totalorder %s38, %s40
      %p47 = scmp.eq.s32.totalorder %s14, 3
      %p48 = por %p46, %p47
      %p49 = scmp.ne.s32.totalorder %s40, %s41
      %p50 = scmp.eq.s32.totalorder %s14, 0
      %p51 = por %p49, %p50
      %p52 = scmp.ne.s32.totalorder %s40, %s41
      %p53 = scmp.eq.s32.totalorder %s15, 3
      %p54 = por %p52, %p53
      %p56 = scmp.ne.s32.totalorder %s41, %s55
      %p57 = scmp.eq.s32.totalorder %s15, 0
      %p58 = por %p56, %p57
      %s59 = ssub.s32 %s9, %s16
      %p60 = scmp.eq.s32.totalorder %s59, 0
      %s62 = sadd.s32 %s61, 1
      %s63 = scalar_select %p60, %s61, %s62
      %p66 = pneg %p60
      %p67 = scmp.eq.s32.totalorder %s9, 3
      %p68 = por %p66, %p67
      %p69 = scmp.ne.s32.totalorder %s61, %s64
      %p70 = scmp.eq.s32.totalorder %s9, 0
      %p71 = por %p69, %p70
      %p72 = scmp.ne.s32.totalorder %s61, %s64
      %p73 = scmp.eq.s32.totalorder %s14, 3
      %p74 = por %p72, %p73
      %p75 = scmp.ne.s32.totalorder %s64, %s65
      %p76 = scmp.eq.s32.totalorder %s14, 0
      %p77 = por %p75, %p76
      %p78 = scmp.ne.s32.totalorder %s64, %s65
      %p79 = scmp.eq.s32.totalorder %s15, 3
      %p80 = por %p78, %p79
      %p82 = scmp.ne.s32.totalorder %s65, %s81
      %p83 = scmp.eq.s32.totalorder %s15, 0
      %p84 = por %p82, %p83
      %s85 = ssub.s32 %s9, %s16
      %p86 = scmp.eq.s32.totalorder %s85, 0
      %s88 = sadd.s32 %s87, 1
      %s89 = scalar_select %p86, %s87, %s88
      %p92 = pneg %p86
      %p93 = scmp.eq.s32.totalorder %s9, 3
      %p94 = por %p92, %p93
      %p95 = scmp.ne.s32.totalorder %s87, %s90
      %p96 = scmp.eq.s32.totalorder %s9, 0
      %p97 = por %p95, %p96
      %p98 = scmp.ne.s32.totalorder %s87, %s90
      %p99 = scmp.eq.s32.totalorder %s14, 3
      %p100 = por %p98, %p99
      %p101 = scmp.ne.s32.totalorder %s90, %s91
      %p102 = scmp.eq.s32.totalorder %s14, 0
      %p103 = por %p101, %p102
      %p104 = scmp.ne.s32.totalorder %s90, %s91
      %p105 = scmp.eq.s32.totalorder %s15, 3
      %p106 = por %p104, %p105
      %p108 = scmp.ne.s32.totalorder %s91, %s107
      %p109 = scmp.eq.s32.totalorder %s15, 0
      %p110 = por %p108, %p109
      %p111 = scmp.le.s32.totalorder 1, %s9
      %p112 = scmp.lt.s32.totalorder %s9, 5
      %p113 = pnand %p111, %p112
      %p114 = pneg %p113
      // Predicated region
      $region9: #{forward.14} parent=5 // pred_check
        _
      $region10: #{forward.14} parent=5 // pred_check_branch
        %116 = sbr.rel (%p113) target = $region12
      $region11: #{forward.14} parent=5 // pred_region
        %s117 = ssub.s32 %s9, 1
        // Predicated region
        $region13: #{forward.14} parent=11 // pred_check
          %p118 = pneg %p30
        $region14: #{forward.14} parent=11 // pred_check_branch
          %120 = sbr.rel (%p118) target = $region16
        $region15: #{forward.14} parent=11 // pred_region
          _
        $region16: #{forward.14} parent=11 // pred_fallthru
          _
        // Predicated region
        $region17: #{forward.14} parent=11 // pred_check
          %p121 = pneg %p51
        $region18: #{forward.14} parent=11 // pred_check_branch
          %123 = sbr.rel (%p121) target = $region20
        $region19: #{forward.14} parent=11 // pred_region
          _
        $region20: #{forward.14} parent=11 // pred_fallthru
          _
      $region12: #{forward.14} parent=5 // pred_fallthru
        _
      %p124 = scmp.lt.s32.totalorder %s9, 4
      // Predicated region
      $region21: #{forward.14} parent=5 // pred_check
        %p125 = pneg %p124
      $region22: #{forward.14} parent=5 // pred_check_branch
        %127 = sbr.rel (%p125) target = $region24
      $region23: #{forward.14} parent=5 // pred_region
        // Predicated region
        $region25: #{forward.14} parent=23 // pred_check
          %p128 = pneg %p71
        $region26: #{forward.14} parent=23 // pred_check_branch
          %130 = sbr.rel (%p128) target = $region28
        $region27: #{forward.14} parent=23 // pred_region
          %s131 = sand.u32 %s61, 1
          %s132 = sand.u32 %s61, 1
          %s133 = smul.addr %s132, 1728
          %s134 = scalar_lea.vmem [#allocation2], %s133
          %s135 = smul.u32 4, %s9
          %s136 = smul.addr %s135, 4
          %s137 = scalar_lea.vmem %s2, %s136
          // Predicated region
          $region29: #{forward.14} parent=27 // pred_check
            _
          $region30: #{forward.14} parent=27 // pred_check_branch
            %139 = sbr.rel (0) target = $region32
          $region31: #{forward.14} parent=27 // pred_region
            // Predicated region
            $region33: #{forward.14} parent=31 // pred_check
              _
            $region34: #{forward.14} parent=31 // pred_check_branch
              %141 = sbr.rel (0) target = $region36
            $region35: #{forward.14} parent=31 // pred_region
              loop: start=0, step=1, limit=1
              $region37: #{forward.14} parent=35 // loop_pre_header
                _
              $region38: #{forward.14} parent=35 // loop_header
                %s143 = sphi 0, %s147
                %p144 = scmp.ge.s32.totalorder %s143, 1
                %s148 = sphi %s137, %s137
                %s149 = sphi %s134, %s134
              $region39: #{forward.14} parent=35 // loop_header_branch
                %146 = sbr.rel (%p144) target = $region43
              $region40: #{forward.14} parent=35 // loop_body
                %v150 = vld [vmem:[%s148] sm:$0xff]
                %151 = vst [vmem:[%s149] sm:$0xff] %v150
                %v152 = vld [vmem:[%s148 + $0x8] sm:$0xff]
                %153 = vst [vmem:[%s149 + $0x8] sm:$0xff] %v152
                %v154 = vld [vmem:[%s148 + $0x40] sm:$0xff]
                %155 = vst [vmem:[%s149 + $0x10] sm:$0xff] %v154
                %v156 = vld [vmem:[%s148 + $0x48] sm:$0xff]
                %157 = vst [vmem:[%s149 + $0x18] sm:$0xff] %v156
                %v158 = vld [vmem:[%s148 + $0x80] sm:$0xff]
                %159 = vst [vmem:[%s149 + $0x20] sm:$0xff] %v158
                %v160 = vld [vmem:[%s148 + $0x88] sm:$0xff]
                %161 = vst [vmem:[%s149 + $0x28] sm:$0xff] %v160
                %v162 = vld [vmem:[%s148 + $0xc0] sm:$0xff]
                %163 = vst [vmem:[%s149 + $0x30] sm:$0xff] %v162
                %v164 = vld [vmem:[%s148 + $0xc8] sm:$0xff]
                %165 = vst [vmem:[%s149 + $0x38] sm:$0xff] %v164
                %v166 = vld [vmem:[%s148 + $0x100] sm:$0xff]
                %167 = vst [vmem:[%s149 + $0x40] sm:$0xff] %v166
                %v168 = vld [vmem:[%s148 + $0x108] sm:$0xff]
                %169 = vst [vmem:[%s149 + $0x48] sm:$0xff] %v168
                %v170 = vld [vmem:[%s148 + $0x140] sm:$0xff]
                %171 = vst [vmem:[%s149 + $0x50] sm:$0xff] %v170
                %v172 = vld [vmem:[%s148 + $0x148] sm:$0xff]
                %173 = vst [vmem:[%s149 + $0x58] sm:$0xff] %v172
                %v174 = vld [vmem:[%s148 + $0x180] sm:$0xff]
                %175 = vst [vmem:[%s149 + $0x60] sm:$0xff] %v174
                %v176 = vld [vmem:[%s148 + $0x188] sm:$0xff]
                %177 = vst [vmem:[%s149 + $0x68] sm:$0xff] %v176
                %v178 = vld [vmem:[%s148 + $0x1c0] sm:$0xff]
                %179 = vst [vmem:[%s149 + $0x70] sm:$0xff] %v178
                %v180 = vld [vmem:[%s148 + $0x1c8] sm:$0xff]
                %181 = vst [vmem:[%s149 + $0x78] sm:$0xff] %v180
                %v182 = vld [vmem:[%s148 + $0x200] sm:$0xff]
                %183 = vst [vmem:[%s149 + $0x80] sm:$0xff] %v182
                %v184 = vld [vmem:[%s148 + $0x208] sm:$0xff]
                %185 = vst [vmem:[%s149 + $0x88] sm:$0xff] %v184
                %v186 = vld [vmem:[%s148 + $0x240] sm:$0xff]
                %187 = vst [vmem:[%s149 + $0x90] sm:$0xff] %v186
                %v188 = vld [vmem:[%s148 + $0x248] sm:$0xff]
                %189 = vst [vmem:[%s149 + $0x98] sm:$0xff] %v188
                %v190 = vld [vmem:[%s148 + $0x280] sm:$0xff]
                %191 = vst [vmem:[%s149 + $0xa0] sm:$0xff] %v190
                %v192 = vld [vmem:[%s148 + $0x288] sm:$0xff]
                %193 = vst [vmem:[%s149 + $0xa8] sm:$0xff] %v192
                %v194 = vld [vmem:[%s148 + $0x2c0] sm:$0xff]
                %195 = vst [vmem:[%s149 + $0xb0] sm:$0xff] %v194
                %v196 = vld [vmem:[%s148 + $0x2c8] sm:$0xff]
                %197 = vst [vmem:[%s149 + $0xb8] sm:$0xff] %v196
                %v198 = vld [vmem:[%s148 + $0x300] sm:$0xff]
                %199 = vst [vmem:[%s149 + $0xc0] sm:$0xff] %v198
                %v200 = vld [vmem:[%s148 + $0x308] sm:$0xff]
                %201 = vst [vmem:[%s149 + $0xc8] sm:$0xff] %v200
                %v202 = vld [vmem:[%s148 + $0x340] sm:$0xff]
                %203 = vst [vmem:[%s149 + $0xd0] sm:$0xff] %v202
                %v204 = vld [vmem:[%s148 + $0x348] sm:$0xff]
                %205 = vst [vmem:[%s149 + $0xd8] sm:$0xff] %v204
                %v206 = vld [vmem:[%s148 + $0x380] sm:$0xff]
                %207 = vst [vmem:[%s149 + $0xe0] sm:$0xff] %v206
                %v208 = vld [vmem:[%s148 + $0x388] sm:$0xff]
                %209 = vst [vmem:[%s149 + $0xe8] sm:$0xff] %v208
                %v210 = vld [vmem:[%s148 + $0x3c0] sm:$0xff]
                %211 = vst [vmem:[%s149 + $0xf0] sm:$0xff] %v210
                %v212 = vld [vmem:[%s148 + $0x3c8] sm:$0xff]
                %213 = vst [vmem:[%s149 + $0xf8] sm:$0xff] %v212
                %v214 = vld [vmem:[%s148 + $0x400] sm:$0xff]
                %215 = vst [vmem:[%s149 + $0x100] sm:$0xff] %v214
                %v216 = vld [vmem:[%s148 + $0x408] sm:$0xff]
                %217 = vst [vmem:[%s149 + $0x108] sm:$0xff] %v216
                %v218 = vld [vmem:[%s148 + $0x440] sm:$0xff]
                %219 = vst [vmem:[%s149 + $0x110] sm:$0xff] %v218
                %v220 = vld [vmem:[%s148 + $0x448] sm:$0xff]
                %221 = vst [vmem:[%s149 + $0x118] sm:$0xff] %v220
                %v222 = vld [vmem:[%s148 + $0x480] sm:$0xff]
                %223 = vst [vmem:[%s149 + $0x120] sm:$0xff] %v222
                %v224 = vld [vmem:[%s148 + $0x488] sm:$0xff]
                %225 = vst [vmem:[%s149 + $0x128] sm:$0xff] %v224
                %v226 = vld [vmem:[%s148 + $0x4c0] sm:$0xff]
                %227 = vst [vmem:[%s149 + $0x130] sm:$0xff] %v226
                %v228 = vld [vmem:[%s148 + $0x4c8] sm:$0xff]
                %229 = vst [vmem:[%s149 + $0x138] sm:$0xff] %v228
                %v230 = vld [vmem:[%s148 + $0x500] sm:$0xff]
                %231 = vst [vmem:[%s149 + $0x140] sm:$0xff] %v230
                %v232 = vld [vmem:[%s148 + $0x508] sm:$0xff]
                %233 = vst [vmem:[%s149 + $0x148] sm:$0xff] %v232
                %v234 = vld [vmem:[%s148 + $0x540] sm:$0xff]
                %235 = vst [vmem:[%s149 + $0x150] sm:$0xff] %v234
                %v236 = vld [vmem:[%s148 + $0x548] sm:$0xff]
                %237 = vst [vmem:[%s149 + $0x158] sm:$0xff] %v236
                %v238 = vld [vmem:[%s148 + $0x580] sm:$0xff]
                %239 = vst [vmem:[%s149 + $0x160] sm:$0xff] %v238
                %v240 = vld [vmem:[%s148 + $0x588] sm:$0xff]
                %241 = vst [vmem:[%s149 + $0x168] sm:$0xff] %v240
                %v242 = vld [vmem:[%s148 + $0x5c0] sm:$0xff]
                %243 = vst [vmem:[%s149 + $0x170] sm:$0xff] %v242
                %v244 = vld [vmem:[%s148 + $0x5c8] sm:$0xff]
                %245 = vst [vmem:[%s149 + $0x178] sm:$0xff] %v244
                %v246 = vld [vmem:[%s148 + $0x600] sm:$0xff]
                %247 = vst [vmem:[%s149 + $0x180] sm:$0xff] %v246
                %v248 = vld [vmem:[%s148 + $0x608] sm:$0xff]
                %249 = vst [vmem:[%s149 + $0x188] sm:$0xff] %v248
                %v250 = vld [vmem:[%s148 + $0x640] sm:$0xff]
                %251 = vst [vmem:[%s149 + $0x190] sm:$0xff] %v250
                %v252 = vld [vmem:[%s148 + $0x648] sm:$0xff]
                %253 = vst [vmem:[%s149 + $0x198] sm:$0xff] %v252
                %v254 = vld [vmem:[%s148 + $0x680] sm:$0xff]
                %255 = vst [vmem:[%s149 + $0x1a0] sm:$0xff] %v254
                %v256 = vld [vmem:[%s148 + $0x688] sm:$0xff]
                %257 = vst [vmem:[%s149 + $0x1a8] sm:$0xff] %v256
                %v258 = vld [vmem:[%s148 + $0x6c0] sm:$0xff]
                %259 = vst [vmem:[%s149 + $0x1b0] sm:$0xff] %v258
                %v260 = vld [vmem:[%s148 + $0x6c8] sm:$0xff]
                %261 = vst [vmem:[%s149 + $0x1b8] sm:$0xff] %v260
                %v262 = vld [vmem:[%s148 + $0x700] sm:$0xff]
                %263 = vst [vmem:[%s149 + $0x1c0] sm:$0xff] %v262
                %v264 = vld [vmem:[%s148 + $0x708] sm:$0xff]
                %265 = vst [vmem:[%s149 + $0x1c8] sm:$0xff] %v264
                %v266 = vld [vmem:[%s148 + $0x740] sm:$0xff]
                %267 = vst [vmem:[%s149 + $0x1d0] sm:$0xff] %v266
                %v268 = vld [vmem:[%s148 + $0x748] sm:$0xff]
                %269 = vst [vmem:[%s149 + $0x1d8] sm:$0xff] %v268
                %v270 = vld [vmem:[%s148 + $0x780] sm:$0xff]
                %271 = vst [vmem:[%s149 + $0x1e0] sm:$0xff] %v270
                %v272 = vld [vmem:[%s148 + $0x788] sm:$0xff]
                %273 = vst [vmem:[%s149 + $0x1e8] sm:$0xff] %v272
                %v274 = vld [vmem:[%s148 + $0x7c0] sm:$0xff]
                %275 = vst [vmem:[%s149 + $0x1f0] sm:$0xff] %v274
                %v276 = vld [vmem:[%s148 + $0x7c8] sm:$0xff]
                %277 = vst [vmem:[%s149 + $0x1f8] sm:$0xff] %v276
                %v278 = vld [vmem:[%s148 + $0x800] sm:$0xff]
                %279 = vst [vmem:[%s149 + $0x200] sm:$0xff] %v278
                %v280 = vld [vmem:[%s148 + $0x808] sm:$0xff]
                %281 = vst [vmem:[%s149 + $0x208] sm:$0xff] %v280
                %v282 = vld [vmem:[%s148 + $0x840] sm:$0xff]
                %283 = vst [vmem:[%s149 + $0x210] sm:$0xff] %v282
                %v284 = vld [vmem:[%s148 + $0x848] sm:$0xff]
                %285 = vst [vmem:[%s149 + $0x218] sm:$0xff] %v284
                %v286 = vld [vmem:[%s148 + $0x880] sm:$0xff]
                %287 = vst [vmem:[%s149 + $0x220] sm:$0xff] %v286
                %v288 = vld [vmem:[%s148 + $0x888] sm:$0xff]
                %289 = vst [vmem:[%s149 + $0x228] sm:$0xff] %v288
                %v290 = vld [vmem:[%s148 + $0x8c0] sm:$0xff]
                %291 = vst [vmem:[%s149 + $0x230] sm:$0xff] %v290
                %v292 = vld [vmem:[%s148 + $0x8c8] sm:$0xff]
                %293 = vst [vmem:[%s149 + $0x238] sm:$0xff] %v292
                %v294 = vld [vmem:[%s148 + $0x900] sm:$0xff]
                %295 = vst [vmem:[%s149 + $0x240] sm:$0xff] %v294
                %v296 = vld [vmem:[%s148 + $0x908] sm:$0xff]
                %297 = vst [vmem:[%s149 + $0x248] sm:$0xff] %v296
                %v298 = vld [vmem:[%s148 + $0x940] sm:$0xff]
                %299 = vst [vmem:[%s149 + $0x250] sm:$0xff] %v298
                %v300 = vld [vmem:[%s148 + $0x948] sm:$0xff]
                %301 = vst [vmem:[%s149 + $0x258] sm:$0xff] %v300
                %v302 = vld [vmem:[%s148 + $0x980] sm:$0xff]
                %303 = vst [vmem:[%s149 + $0x260] sm:$0xff] %v302
                %v304 = vld [vmem:[%s148 + $0x988] sm:$0xff]
                %305 = vst [vmem:[%s149 + $0x268] sm:$0xff] %v304
                %v306 = vld [vmem:[%s148 + $0x9c0] sm:$0xff]
                %307 = vst [vmem:[%s149 + $0x270] sm:$0xff] %v306
                %v308 = vld [vmem:[%s148 + $0x9c8] sm:$0xff]
                %309 = vst [vmem:[%s149 + $0x278] sm:$0xff] %v308
                %v310 = vld [vmem:[%s148 + $0xa00] sm:$0xff]
                %311 = vst [vmem:[%s149 + $0x280] sm:$0xff] %v310
                %v312 = vld [vmem:[%s148 + $0xa08] sm:$0xff]
                %313 = vst [vmem:[%s149 + $0x288] sm:$0xff] %v312
                %v314 = vld [vmem:[%s148 + $0xa40] sm:$0xff]
                %315 = vst [vmem:[%s149 + $0x290] sm:$0xff] %v314
                %v316 = vld [vmem:[%s148 + $0xa48] sm:$0xff]
                %317 = vst [vmem:[%s149 + $0x298] sm:$0xff] %v316
                %v318 = vld [vmem:[%s148 + $0xa80] sm:$0xff]
                %319 = vst [vmem:[%s149 + $0x2a0] sm:$0xff] %v318
                %v320 = vld [vmem:[%s148 + $0xa88] sm:$0xff]
                %321 = vst [vmem:[%s149 + $0x2a8] sm:$0xff] %v320
                %v322 = vld [vmem:[%s148 + $0xac0] sm:$0xff]
                %323 = vst [vmem:[%s149 + $0x2b0] sm:$0xff] %v322
                %v324 = vld [vmem:[%s148 + $0xac8] sm:$0xff]
                %325 = vst [vmem:[%s149 + $0x2b8] sm:$0xff] %v324
                %v326 = vld [vmem:[%s148 + $0xb00] sm:$0xff]
                %327 = vst [vmem:[%s149 + $0x2c0] sm:$0xff] %v326
                %v328 = vld [vmem:[%s148 + $0xb08] sm:$0xff]
                %329 = vst [vmem:[%s149 + $0x2c8] sm:$0xff] %v328
                %v330 = vld [vmem:[%s148 + $0xb40] sm:$0xff]
                %331 = vst [vmem:[%s149 + $0x2d0] sm:$0xff] %v330
                %v332 = vld [vmem:[%s148 + $0xb48] sm:$0xff]
                %333 = vst [vmem:[%s149 + $0x2d8] sm:$0xff] %v332
                %v334 = vld [vmem:[%s148 + $0xb80] sm:$0xff]
                %335 = vst [vmem:[%s149 + $0x2e0] sm:$0xff] %v334
                %v336 = vld [vmem:[%s148 + $0xb88] sm:$0xff]
                %337 = vst [vmem:[%s149 + $0x2e8] sm:$0xff] %v336
                %v338 = vld [vmem:[%s148 + $0xbc0] sm:$0xff]
                %339 = vst [vmem:[%s149 + $0x2f0] sm:$0xff] %v338
                %v340 = vld [vmem:[%s148 + $0xbc8] sm:$0xff]
                %341 = vst [vmem:[%s149 + $0x2f8] sm:$0xff] %v340
                %v342 = vld [vmem:[%s148 + $0xc00] sm:$0xff]
                %343 = vst [vmem:[%s149 + $0x300] sm:$0xff] %v342
                %v344 = vld [vmem:[%s148 + $0xc08] sm:$0xff]
                %345 = vst [vmem:[%s149 + $0x308] sm:$0xff] %v344
                %v346 = vld [vmem:[%s148 + $0xc40] sm:$0xff]
                %347 = vst [vmem:[%s149 + $0x310] sm:$0xff] %v346
                %v348 = vld [vmem:[%s148 + $0xc48] sm:$0xff]
                %349 = vst [vmem:[%s149 + $0x318] sm:$0xff] %v348
                %v350 = vld [vmem:[%s148 + $0xc80] sm:$0xff]
                %351 = vst [vmem:[%s149 + $0x320] sm:$0xff] %v350
                %v352 = vld [vmem:[%s148 + $0xc88] sm:$0xff]
                %353 = vst [vmem:[%s149 + $0x328] sm:$0xff] %v352
                %v354 = vld [vmem:[%s148 + $0xcc0] sm:$0xff]
                %355 = vst [vmem:[%s149 + $0x330] sm:$0xff] %v354
                %v356 = vld [vmem:[%s148 + $0xcc8] sm:$0xff]
                %357 = vst [vmem:[%s149 + $0x338] sm:$0xff] %v356
                %v358 = vld [vmem:[%s148 + $0xd00] sm:$0xff]
                %359 = vst [vmem:[%s149 + $0x340] sm:$0xff] %v358
                %v360 = vld [vmem:[%s148 + $0xd08] sm:$0xff]
                %361 = vst [vmem:[%s149 + $0x348] sm:$0xff] %v360
                %v362 = vld [vmem:[%s148 + $0xd40] sm:$0xff]
                %363 = vst [vmem:[%s149 + $0x350] sm:$0xff] %v362
                %v364 = vld [vmem:[%s148 + $0xd48] sm:$0xff]
                %365 = vst [vmem:[%s149 + $0x358] sm:$0xff] %v364
                %v366 = vld [vmem:[%s148 + $0xd80] sm:$0xff]
                %367 = vst [vmem:[%s149 + $0x360] sm:$0xff] %v366
                %v368 = vld [vmem:[%s148 + $0xd88] sm:$0xff]
                %369 = vst [vmem:[%s149 + $0x368] sm:$0xff] %v368
                %v370 = vld [vmem:[%s148 + $0xdc0] sm:$0xff]
                %371 = vst [vmem:[%s149 + $0x370] sm:$0xff] %v370
                %v372 = vld [vmem:[%s148 + $0xdc8] sm:$0xff]
                %373 = vst [vmem:[%s149 + $0x378] sm:$0xff] %v372
                %v374 = vld [vmem:[%s148 + $0xe00] sm:$0xff]
                %375 = vst [vmem:[%s149 + $0x380] sm:$0xff] %v374
                %v376 = vld [vmem:[%s148 + $0xe08] sm:$0xff]
                %377 = vst [vmem:[%s149 + $0x388] sm:$0xff] %v376
                %v378 = vld [vmem:[%s148 + $0xe40] sm:$0xff]
                %379 = vst [vmem:[%s149 + $0x390] sm:$0xff] %v378
                %v380 = vld [vmem:[%s148 + $0xe48] sm:$0xff]
                %381 = vst [vmem:[%s149 + $0x398] sm:$0xff] %v380
                %v382 = vld [vmem:[%s148 + $0xe80] sm:$0xff]
                %383 = vst [vmem:[%s149 + $0x3a0] sm:$0xff] %v382
                %v384 = vld [vmem:[%s148 + $0xe88] sm:$0xff]
                %385 = vst [vmem:[%s149 + $0x3a8] sm:$0xff] %v384
                %v386 = vld [vmem:[%s148 + $0xec0] sm:$0xff]
                %387 = vst [vmem:[%s149 + $0x3b0] sm:$0xff] %v386
                %v388 = vld [vmem:[%s148 + $0xec8] sm:$0xff]
                %389 = vst [vmem:[%s149 + $0x3b8] sm:$0xff] %v388
                %v390 = vld [vmem:[%s148 + $0xf00] sm:$0xff]
                %391 = vst [vmem:[%s149 + $0x3c0] sm:$0xff] %v390
                %v392 = vld [vmem:[%s148 + $0xf08] sm:$0xff]
                %393 = vst [vmem:[%s149 + $0x3c8] sm:$0xff] %v392
                %v394 = vld [vmem:[%s148 + $0xf40] sm:$0xff]
                %395 = vst [vmem:[%s149 + $0x3d0] sm:$0xff] %v394
                %v396 = vld [vmem:[%s148 + $0xf48] sm:$0xff]
                %397 = vst [vmem:[%s149 + $0x3d8] sm:$0xff] %v396
                %v398 = vld [vmem:[%s148 + $0xf80] sm:$0xff]
                %399 = vst [vmem:[%s149 + $0x3e0] sm:$0xff] %v398
                %v400 = vld [vmem:[%s148 + $0xf88] sm:$0xff]
                %401 = vst [vmem:[%s149 + $0x3e8] sm:$0xff] %v400
                %v402 = vld [vmem:[%s148 + $0xfc0] sm:$0xff]
                %403 = vst [vmem:[%s149 + $0x3f0] sm:$0xff] %v402
                %v404 = vld [vmem:[%s148 + $0xfc8] sm:$0xff]
                %405 = vst [vmem:[%s149 + $0x3f8] sm:$0xff] %v404
                %v406 = vld [vmem:[%s148 + $0x1000] sm:$0xff]
                %407 = vst [vmem:[%s149 + $0x400] sm:$0xff] %v406
                %v408 = vld [vmem:[%s148 + $0x1008] sm:$0xff]
                %409 = vst [vmem:[%s149 + $0x408] sm:$0xff] %v408
                %v410 = vld [vmem:[%s148 + $0x1040] sm:$0xff]
                %411 = vst [vmem:[%s149 + $0x410] sm:$0xff] %v410
                %v412 = vld [vmem:[%s148 + $0x1048] sm:$0xff]
                %413 = vst [vmem:[%s149 + $0x418] sm:$0xff] %v412
                %v414 = vld [vmem:[%s148 + $0x1080] sm:$0xff]
                %415 = vst [vmem:[%s149 + $0x420] sm:$0xff] %v414
                %v416 = vld [vmem:[%s148 + $0x1088] sm:$0xff]
                %417 = vst [vmem:[%s149 + $0x428] sm:$0xff] %v416
                %v418 = vld [vmem:[%s148 + $0x10c0] sm:$0xff]
                %419 = vst [vmem:[%s149 + $0x430] sm:$0xff] %v418
                %v420 = vld [vmem:[%s148 + $0x10c8] sm:$0xff]
                %421 = vst [vmem:[%s149 + $0x438] sm:$0xff] %v420
                %v422 = vld [vmem:[%s148 + $0x1100] sm:$0xff]
                %423 = vst [vmem:[%s149 + $0x440] sm:$0xff] %v422
                %v424 = vld [vmem:[%s148 + $0x1108] sm:$0xff]
                %425 = vst [vmem:[%s149 + $0x448] sm:$0xff] %v424
                %v426 = vld [vmem:[%s148 + $0x1140] sm:$0xff]
                %427 = vst [vmem:[%s149 + $0x450] sm:$0xff] %v426
                %v428 = vld [vmem:[%s148 + $0x1148] sm:$0xff]
                %429 = vst [vmem:[%s149 + $0x458] sm:$0xff] %v428
                %v430 = vld [vmem:[%s148 + $0x1180] sm:$0xff]
                %431 = vst [vmem:[%s149 + $0x460] sm:$0xff] %v430
                %v432 = vld [vmem:[%s148 + $0x1188] sm:$0xff]
                %433 = vst [vmem:[%s149 + $0x468] sm:$0xff] %v432
                %v434 = vld [vmem:[%s148 + $0x11c0] sm:$0xff]
                %435 = vst [vmem:[%s149 + $0x470] sm:$0xff] %v434
                %v436 = vld [vmem:[%s148 + $0x11c8] sm:$0xff]
                %437 = vst [vmem:[%s149 + $0x478] sm:$0xff] %v436
                %v438 = vld [vmem:[%s148 + $0x1200] sm:$0xff]
                %439 = vst [vmem:[%s149 + $0x480] sm:$0xff] %v438
                %v440 = vld [vmem:[%s148 + $0x1208] sm:$0xff]
                %441 = vst [vmem:[%s149 + $0x488] sm:$0xff] %v440
                %v442 = vld [vmem:[%s148 + $0x1240] sm:$0xff]
                %443 = vst [vmem:[%s149 + $0x490] sm:$0xff] %v442
                %v444 = vld [vmem:[%s148 + $0x1248] sm:$0xff]
                %445 = vst [vmem:[%s149 + $0x498] sm:$0xff] %v444
                %v446 = vld [vmem:[%s148 + $0x1280] sm:$0xff]
                %447 = vst [vmem:[%s149 + $0x4a0] sm:$0xff] %v446
                %v448 = vld [vmem:[%s148 + $0x1288] sm:$0xff]
                %449 = vst [vmem:[%s149 + $0x4a8] sm:$0xff] %v448
                %v450 = vld [vmem:[%s148 + $0x12c0] sm:$0xff]
                %451 = vst [vmem:[%s149 + $0x4b0] sm:$0xff] %v450
                %v452 = vld [vmem:[%s148 + $0x12c8] sm:$0xff]
                %453 = vst [vmem:[%s149 + $0x4b8] sm:$0xff] %v452
                %v454 = vld [vmem:[%s148 + $0x1300] sm:$0xff]
                %455 = vst [vmem:[%s149 + $0x4c0] sm:$0xff] %v454
                %v456 = vld [vmem:[%s148 + $0x1308] sm:$0xff]
                %457 = vst [vmem:[%s149 + $0x4c8] sm:$0xff] %v456
                %v458 = vld [vmem:[%s148 + $0x1340] sm:$0xff]
                %459 = vst [vmem:[%s149 + $0x4d0] sm:$0xff] %v458
                %v460 = vld [vmem:[%s148 + $0x1348] sm:$0xff]
                %461 = vst [vmem:[%s149 + $0x4d8] sm:$0xff] %v460
                %v462 = vld [vmem:[%s148 + $0x1380] sm:$0xff]
                %463 = vst [vmem:[%s149 + $0x4e0] sm:$0xff] %v462
                %v464 = vld [vmem:[%s148 + $0x1388] sm:$0xff]
                %465 = vst [vmem:[%s149 + $0x4e8] sm:$0xff] %v464
                %v466 = vld [vmem:[%s148 + $0x13c0] sm:$0xff]
                %467 = vst [vmem:[%s149 + $0x4f0] sm:$0xff] %v466
                %v468 = vld [vmem:[%s148 + $0x13c8] sm:$0xff]
                %469 = vst [vmem:[%s149 + $0x4f8] sm:$0xff] %v468
                %v470 = vld [vmem:[%s148 + $0x1400] sm:$0xff]
                %471 = vst [vmem:[%s149 + $0x500] sm:$0xff] %v470
                %v472 = vld [vmem:[%s148 + $0x1408] sm:$0xff]
                %473 = vst [vmem:[%s149 + $0x508] sm:$0xff] %v472
                %v474 = vld [vmem:[%s148 + $0x1440] sm:$0xff]
                %475 = vst [vmem:[%s149 + $0x510] sm:$0xff] %v474
                %v476 = vld [vmem:[%s148 + $0x1448] sm:$0xff]
                %477 = vst [vmem:[%s149 + $0x518] sm:$0xff] %v476
                %v478 = vld [vmem:[%s148 + $0x1480] sm:$0xff]
                %479 = vst [vmem:[%s149 + $0x520] sm:$0xff] %v478
                %v480 = vld [vmem:[%s148 + $0x1488] sm:$0xff]
                %481 = vst [vmem:[%s149 + $0x528] sm:$0xff] %v480
                %v482 = vld [vmem:[%s148 + $0x14c0] sm:$0xff]
                %483 = vst [vmem:[%s149 + $0x530] sm:$0xff] %v482
                %v484 = vld [vmem:[%s148 + $0x14c8] sm:$0xff]
                %485 = vst [vmem:[%s149 + $0x538] sm:$0xff] %v484
                %v486 = vld [vmem:[%s148 + $0x1500] sm:$0xff]
                %487 = vst [vmem:[%s149 + $0x540] sm:$0xff] %v486
                %v488 = vld [vmem:[%s148 + $0x1508] sm:$0xff]
                %489 = vst [vmem:[%s149 + $0x548] sm:$0xff] %v488
                %v490 = vld [vmem:[%s148 + $0x1540] sm:$0xff]
                %491 = vst [vmem:[%s149 + $0x550] sm:$0xff] %v490
                %v492 = vld [vmem:[%s148 + $0x1548] sm:$0xff]
                %493 = vst [vmem:[%s149 + $0x558] sm:$0xff] %v492
                %v494 = vld [vmem:[%s148 + $0x1580] sm:$0xff]
                %495 = vst [vmem:[%s149 + $0x560] sm:$0xff] %v494
                %v496 = vld [vmem:[%s148 + $0x1588] sm:$0xff]
                %497 = vst [vmem:[%s149 + $0x568] sm:$0xff] %v496
                %v498 = vld [vmem:[%s148 + $0x15c0] sm:$0xff]
                %499 = vst [vmem:[%s149 + $0x570] sm:$0xff] %v498
                %v500 = vld [vmem:[%s148 + $0x15c8] sm:$0xff]
                %501 = vst [vmem:[%s149 + $0x578] sm:$0xff] %v500
                %v502 = vld [vmem:[%s148 + $0x1600] sm:$0xff]
                %503 = vst [vmem:[%s149 + $0x580] sm:$0xff] %v502
                %v504 = vld [vmem:[%s148 + $0x1608] sm:$0xff]
                %505 = vst [vmem:[%s149 + $0x588] sm:$0xff] %v504
                %v506 = vld [vmem:[%s148 + $0x1640] sm:$0xff]
                %507 = vst [vmem:[%s149 + $0x590] sm:$0xff] %v506
                %v508 = vld [vmem:[%s148 + $0x1648] sm:$0xff]
                %509 = vst [vmem:[%s149 + $0x598] sm:$0xff] %v508
                %v510 = vld [vmem:[%s148 + $0x1680] sm:$0xff]
                %511 = vst [vmem:[%s149 + $0x5a0] sm:$0xff] %v510
                %v512 = vld [vmem:[%s148 + $0x1688] sm:$0xff]
                %513 = vst [vmem:[%s149 + $0x5a8] sm:$0xff] %v512
                %v514 = vld [vmem:[%s148 + $0x16c0] sm:$0xff]
                %515 = vst [vmem:[%s149 + $0x5b0] sm:$0xff] %v514
                %v516 = vld [vmem:[%s148 + $0x16c8] sm:$0xff]
                %517 = vst [vmem:[%s149 + $0x5b8] sm:$0xff] %v516
                %v518 = vld [vmem:[%s148 + $0x1700] sm:$0xff]
                %519 = vst [vmem:[%s149 + $0x5c0] sm:$0xff] %v518
                %v520 = vld [vmem:[%s148 + $0x1708] sm:$0xff]
                %521 = vst [vmem:[%s149 + $0x5c8] sm:$0xff] %v520
                %v522 = vld [vmem:[%s148 + $0x1740] sm:$0xff]
                %523 = vst [vmem:[%s149 + $0x5d0] sm:$0xff] %v522
                %v524 = vld [vmem:[%s148 + $0x1748] sm:$0xff]
                %525 = vst [vmem:[%s149 + $0x5d8] sm:$0xff] %v524
                %v526 = vld [vmem:[%s148 + $0x1780] sm:$0xff]
                %527 = vst [vmem:[%s149 + $0x5e0] sm:$0xff] %v526
                %v528 = vld [vmem:[%s148 + $0x1788] sm:$0xff]
                %529 = vst [vmem:[%s149 + $0x5e8] sm:$0xff] %v528
                %v530 = vld [vmem:[%s148 + $0x17c0] sm:$0xff]
                %531 = vst [vmem:[%s149 + $0x5f0] sm:$0xff] %v530
                %v532 = vld [vmem:[%s148 + $0x17c8] sm:$0xff]
                %533 = vst [vmem:[%s149 + $0x5f8] sm:$0xff] %v532
                %v534 = vld [vmem:[%s148 + $0x1800] sm:$0xff]
                %535 = vst [vmem:[%s149 + $0x600] sm:$0xff] %v534
                %v536 = vld [vmem:[%s148 + $0x1808] sm:$0xff]
                %537 = vst [vmem:[%s149 + $0x608] sm:$0xff] %v536
                %v538 = vld [vmem:[%s148 + $0x1840] sm:$0xff]
                %539 = vst [vmem:[%s149 + $0x610] sm:$0xff] %v538
                %v540 = vld [vmem:[%s148 + $0x1848] sm:$0xff]
                %541 = vst [vmem:[%s149 + $0x618] sm:$0xff] %v540
                %v542 = vld [vmem:[%s148 + $0x1880] sm:$0xff]
                %543 = vst [vmem:[%s149 + $0x620] sm:$0xff] %v542
                %v544 = vld [vmem:[%s148 + $0x1888] sm:$0xff]
                %545 = vst [vmem:[%s149 + $0x628] sm:$0xff] %v544
                %v546 = vld [vmem:[%s148 + $0x18c0] sm:$0xff]
                %547 = vst [vmem:[%s149 + $0x630] sm:$0xff] %v546
                %v548 = vld [vmem:[%s148 + $0x18c8] sm:$0xff]
                %549 = vst [vmem:[%s149 + $0x638] sm:$0xff] %v548
                %v550 = vld [vmem:[%s148 + $0x1900] sm:$0xff]
                %551 = vst [vmem:[%s149 + $0x640] sm:$0xff] %v550
                %v552 = vld [vmem:[%s148 + $0x1908] sm:$0xff]
                %553 = vst [vmem:[%s149 + $0x648] sm:$0xff] %v552
                %v554 = vld [vmem:[%s148 + $0x1940] sm:$0xff]
                %555 = vst [vmem:[%s149 + $0x650] sm:$0xff] %v554
                %v556 = vld [vmem:[%s148 + $0x1948] sm:$0xff]
                %557 = vst [vmem:[%s149 + $0x658] sm:$0xff] %v556
                %v558 = vld [vmem:[%s148 + $0x1980] sm:$0xff]
                %559 = vst [vmem:[%s149 + $0x660] sm:$0xff] %v558
                %v560 = vld [vmem:[%s148 + $0x1988] sm:$0xff]
                %561 = vst [vmem:[%s149 + $0x668] sm:$0xff] %v560
                %v562 = vld [vmem:[%s148 + $0x19c0] sm:$0xff]
                %563 = vst [vmem:[%s149 + $0x670] sm:$0xff] %v562
                %v564 = vld [vmem:[%s148 + $0x19c8] sm:$0xff]
                %565 = vst [vmem:[%s149 + $0x678] sm:$0xff] %v564
                %v566 = vld [vmem:[%s148 + $0x1a00] sm:$0xff]
                %567 = vst [vmem:[%s149 + $0x680] sm:$0xff] %v566
                %v568 = vld [vmem:[%s148 + $0x1a08] sm:$0xff]
                %569 = vst [vmem:[%s149 + $0x688] sm:$0xff] %v568
                %v570 = vld [vmem:[%s148 + $0x1a40] sm:$0xff]
                %571 = vst [vmem:[%s149 + $0x690] sm:$0xff] %v570
                %v572 = vld [vmem:[%s148 + $0x1a48] sm:$0xff]
                %573 = vst [vmem:[%s149 + $0x698] sm:$0xff] %v572
                %v574 = vld [vmem:[%s148 + $0x1a80] sm:$0xff]
                %575 = vst [vmem:[%s149 + $0x6a0] sm:$0xff] %v574
                %v576 = vld [vmem:[%s148 + $0x1a88] sm:$0xff]
                %577 = vst [vmem:[%s149 + $0x6a8] sm:$0xff] %v576
                %v578 = vld [vmem:[%s148 + $0x1ac0] sm:$0xff]
                %579 = vst [vmem:[%s149 + $0x6b0] sm:$0xff] %v578
                %v580 = vld [vmem:[%s148 + $0x1ac8] sm:$0xff]
                %581 = vst [vmem:[%s149 + $0x6b8] sm:$0xff] %v580
              $region41: #{forward.14} parent=35 // loop_footer
                %s147 = sadd.s32 1, %s143
              $region42: #{forward.14} parent=35 // loop_footer_branch
                %142 = sbr.rel target = $region38
              $region43: #{forward.14} parent=35 // loop_exit
                _
            $region36: #{forward.14} parent=31 // pred_fallthru
              _
            // Predicated region
            $region44: #{forward.14} parent=31 // pred_check
              _
            $region45: #{forward.14} parent=31 // pred_check_branch
              %583 = sbr.rel target = $region47
            $region46: #{forward.14} parent=31 // pred_region
              _
            $region47: #{forward.14} parent=31 // pred_fallthru
              _
          $region32: #{forward.14} parent=27 // pred_fallthru
            _
          %584 = vnop
        $region28: #{forward.14} parent=23 // pred_fallthru
          _
      $region24: #{forward.14} parent=5 // pred_fallthru
        _
      %p585 = scmp.le.s32.totalorder 1, %s9
      %p586 = scmp.lt.s32.totalorder %s9, 5
      %p587 = pnand %p585, %p586
      %p588 = pneg %p587
      // Predicated region
      $region48: #{forward.14} parent=5 // pred_check
        _
      $region49: #{forward.14} parent=5 // pred_check_branch
        %590 = sbr.rel (%p587) target = $region51
      $region50: #{forward.14} parent=5 // pred_region
        %s591 = ssub.s32 %s9, 1
        %s592 = sand.u32 %s64, 1
        %s593 = sand.u32 %s64, 1
        %s594 = smul.addr %s593, 1728
        %s595 = scalar_lea.vmem [#allocation2], %s594
        // Predicated region
        $region52: #{forward.14} parent=50 // pred_check
          %p596 = pneg %p77
        $region53: #{forward.14} parent=50 // pred_check_branch
          %598 = sbr.rel (%p596) target = $region55
        $region54: #{forward.14} parent=50 // pred_region
          _
        $region55: #{forward.14} parent=50 // pred_fallthru
          _
        %p599 = pneg %p30
        %p600 = pneg %p27
        %p601 = pneg %p51
        %p602 = pneg %p48
        %s603 = sand.u32 %s64, 1
        %s604 = sand.u32 %s64, 1
        %s605 = smul.addr %s604, 1728
        %s606 = scalar_lea.vmem [#allocation2], %s605
        %p607 = pneg %p77
        %p608 = pneg %p74
        %p609 = pneg %p103
        %p610 = pneg %p100
        %s611 = sand.u32 %s90, 1
        %s612 = sand.u32 %s90, 1
        %s613 = smul.addr %s612, 128
        %s614 = scalar_lea.vmem [#allocation3], %s613
        %s615 = smul.u32 4, %s14
        %s616 = smul.u32 4, %s14
        %v618 = vld [vmem:[%s0] sm:$0xff]
        %v619 = vld [vmem:[%s0 + $0x8] sm:$0xff]
        %v620 = vld [vmem:[%s0 + $0x10] sm:$0xff]
        %v621 = vld [vmem:[%s0 + $0x18] sm:$0xf]
        %v622 = vld [vmem:[%s0 + $0x1c] sm:$0xff]
        %v623 = vld [vmem:[%s0 + $0x24] sm:$0xff]
        %v624 = vld [vmem:[%s0 + $0x2c] sm:$0xff]
        %v625 = vld [vmem:[%s0 + $0x34] sm:$0xf]
        %v626 = vld [vmem:[%s0 + $0x38] sm:$0xff]
        %v627 = vld [vmem:[%s0 + $0x40] sm:$0xff]
        %v628 = vld [vmem:[%s0 + $0x48] sm:$0xff]
        %v629 = vld [vmem:[%s0 + $0x50] sm:$0xf]
        %v630 = vld [vmem:[%s0 + $0x54] sm:$0xff]
        %v631 = vld [vmem:[%s0 + $0x5c] sm:$0xff]
        %v632 = vld [vmem:[%s0 + $0x64] sm:$0xff]
        %v633 = vld [vmem:[%s0 + $0x6c] sm:$0xf]
        %v634 = vld [vmem:[%s0 + $0x70] sm:$0xff]
        %v635 = vld [vmem:[%s0 + $0x78] sm:$0xff]
        %v636 = vld [vmem:[%s0 + $0x80] sm:$0xff]
        %v637 = vld [vmem:[%s0 + $0x88] sm:$0xf]
        %v638 = vld [vmem:[%s0 + $0x8c] sm:$0xff]
        %v639 = vld [vmem:[%s0 + $0x94] sm:$0xff]
        %v640 = vld [vmem:[%s0 + $0x9c] sm:$0xff]
        %v641 = vld [vmem:[%s0 + $0xa4] sm:$0xf]
        %v642 = vld [vmem:[%s0 + $0xa8] sm:$0xff]
        %v643 = vld [vmem:[%s0 + $0xb0] sm:$0xff]
        %v644 = vld [vmem:[%s0 + $0xb8] sm:$0xff]
        %v645 = vld [vmem:[%s0 + $0xc0] sm:$0xf]
        %v646 = vld [vmem:[%s0 + $0xc4] sm:$0xff]
        %v647 = vld [vmem:[%s0 + $0xcc] sm:$0xff]
        %v648 = vld [vmem:[%s0 + $0xd4] sm:$0xff]
        %v649 = vld [vmem:[%s0 + $0xdc] sm:$0xf]
        %v650 = vld [vmem:[%s595] sm:$0xff]
        %v651 = vld [vmem:[%s595 + $0x8] sm:$0xff]
        %v652 = vld [vmem:[%s595 + $0x10] sm:$0xff]
        %v653 = vld [vmem:[%s595 + $0x18] sm:$0xff]
        %v654 = vld [vmem:[%s595 + $0x20] sm:$0xff]
        %v655 = vld [vmem:[%s595 + $0x28] sm:$0xff]
        %v656 = vld [vmem:[%s595 + $0x30] sm:$0xff]
        %v657 = vld [vmem:[%s595 + $0x38] sm:$0xff]
        %v658 = vld [vmem:[%s595 + $0x40] sm:$0xff]
        %v659 = vld [vmem:[%s595 + $0x48] sm:$0xff]
        %v660 = vld [vmem:[%s595 + $0x50] sm:$0xff]
        %v661 = vld [vmem:[%s595 + $0x58] sm:$0xff]
        %v662 = vld [vmem:[%s595 + $0x60] sm:$0xff]
        %v663 = vld [vmem:[%s595 + $0x68] sm:$0xff]
        %v664 = vld [vmem:[%s595 + $0x70] sm:$0xff]
        %v665 = vld [vmem:[%s595 + $0x78] sm:$0xff]
        %v666 = vld [vmem:[%s595 + $0x80] sm:$0xff]
        %v667 = vld [vmem:[%s595 + $0x88] sm:$0xff]
        %v668 = vld [vmem:[%s595 + $0x90] sm:$0xff]
        %v669 = vld [vmem:[%s595 + $0x98] sm:$0xff]
        %v670 = vld [vmem:[%s595 + $0xa0] sm:$0xff]
        %v671 = vld [vmem:[%s595 + $0xa8] sm:$0xff]
        %v672 = vld [vmem:[%s595 + $0xb0] sm:$0xff]
        %v673 = vld [vmem:[%s595 + $0xb8] sm:$0xff]
        %v674 = vld [vmem:[%s595 + $0xc0] sm:$0xff]
        %v675 = vld [vmem:[%s595 + $0xc8] sm:$0xff]
        %v676 = vld [vmem:[%s595 + $0xd0] sm:$0xff]
        %v677 = vld [vmem:[%s595 + $0xd8] sm:$0xff]
        %v678 = vld [vmem:[%s595 + $0xe0] sm:$0xff]
        %v679 = vld [vmem:[%s595 + $0xe8] sm:$0xff]
        %v680 = vld [vmem:[%s595 + $0xf0] sm:$0xff]
        %v681 = vld [vmem:[%s595 + $0xf8] sm:$0xff]
        %v682 = vld [vmem:[%s595 + $0x100] sm:$0xff]
        %v683 = vld [vmem:[%s595 + $0x108] sm:$0xff]
        %v684 = vld [vmem:[%s595 + $0x110] sm:$0xff]
        %v685 = vld [vmem:[%s595 + $0x118] sm:$0xff]
        %v686 = vld [vmem:[%s595 + $0x120] sm:$0xff]
        %v687 = vld [vmem:[%s595 + $0x128] sm:$0xff]
        %v688 = vld [vmem:[%s595 + $0x130] sm:$0xff]
        %v689 = vld [vmem:[%s595 + $0x138] sm:$0xff]
        %v690 = vld [vmem:[%s595 + $0x140] sm:$0xff]
        %v691 = vld [vmem:[%s595 + $0x148] sm:$0xff]
        %v692 = vld [vmem:[%s595 + $0x150] sm:$0xff]
        %v693 = vld [vmem:[%s595 + $0x158] sm:$0xff]
        %v694 = vld [vmem:[%s595 + $0x160] sm:$0xff]
        %v695 = vld [vmem:[%s595 + $0x168] sm:$0xff]
        %v696 = vld [vmem:[%s595 + $0x170] sm:$0xff]
        %v697 = vld [vmem:[%s595 + $0x178] sm:$0xff]
        %v698 = vld [vmem:[%s595 + $0x180] sm:$0xff]
        %v699 = vld [vmem:[%s595 + $0x188] sm:$0xff]
        %v700 = vld [vmem:[%s595 + $0x190] sm:$0xff]
        %v701 = vld [vmem:[%s595 + $0x198] sm:$0xff]
        %v702 = vld [vmem:[%s595 + $0x1a0] sm:$0xff]
        %v703 = vld [vmem:[%s595 + $0x1a8] sm:$0xff]
        %v704 = vld [vmem:[%s595 + $0x1b0] sm:$0xff]
        %v705 = vld [vmem:[%s595 + $0x1b8] sm:$0xff]
        %v706 = vld [vmem:[%s595 + $0x1c0] sm:$0xff]
        %v707 = vld [vmem:[%s595 + $0x1c8] sm:$0xff]
        %v708 = vld [vmem:[%s595 + $0x1d0] sm:$0xff]
        %v709 = vld [vmem:[%s595 + $0x1d8] sm:$0xff]
        %v710 = vld [vmem:[%s595 + $0x1e0] sm:$0xff]
        %v711 = vld [vmem:[%s595 + $0x1e8] sm:$0xff]
        %v712 = vld [vmem:[%s595 + $0x1f0] sm:$0xff]
        %v713 = vld [vmem:[%s595 + $0x1f8] sm:$0xff]
        %v714 = vld [vmem:[%s595 + $0x200] sm:$0xff]
        %v715 = vld [vmem:[%s595 + $0x208] sm:$0xff]
        %v716 = vld [vmem:[%s595 + $0x210] sm:$0xff]
        %v717 = vld [vmem:[%s595 + $0x218] sm:$0xff]
        %v718 = vld [vmem:[%s595 + $0x220] sm:$0xff]
        %v719 = vld [vmem:[%s595 + $0x228] sm:$0xff]
        %v720 = vld [vmem:[%s595 + $0x230] sm:$0xff]
        %v721 = vld [vmem:[%s595 + $0x238] sm:$0xff]
        %v722 = vld [vmem:[%s595 + $0x240] sm:$0xff]
        %v723 = vld [vmem:[%s595 + $0x248] sm:$0xff]
        %v724 = vld [vmem:[%s595 + $0x250] sm:$0xff]
        %v725 = vld [vmem:[%s595 + $0x258] sm:$0xff]
        %v726 = vld [vmem:[%s595 + $0x260] sm:$0xff]
        %v727 = vld [vmem:[%s595 + $0x268] sm:$0xff]
        %v728 = vld [vmem:[%s595 + $0x270] sm:$0xff]
        %v729 = vld [vmem:[%s595 + $0x278] sm:$0xff]
        %v730 = vld [vmem:[%s595 + $0x280] sm:$0xff]
        %v731 = vld [vmem:[%s595 + $0x288] sm:$0xff]
        %v732 = vld [vmem:[%s595 + $0x290] sm:$0xff]
        %v733 = vld [vmem:[%s595 + $0x298] sm:$0xff]
        %v734 = vld [vmem:[%s595 + $0x2a0] sm:$0xff]
        %v735 = vld [vmem:[%s595 + $0x2a8] sm:$0xff]
        %v736 = vld [vmem:[%s595 + $0x2b0] sm:$0xff]
        %v737 = vld [vmem:[%s595 + $0x2b8] sm:$0xff]
        %v738 = vld [vmem:[%s595 + $0x2c0] sm:$0xff]
        %v739 = vld [vmem:[%s595 + $0x2c8] sm:$0xff]
        %v740 = vld [vmem:[%s595 + $0x2d0] sm:$0xff]
        %v741 = vld [vmem:[%s595 + $0x2d8] sm:$0xff]
        %v742 = vld [vmem:[%s595 + $0x2e0] sm:$0xff]
        %v743 = vld [vmem:[%s595 + $0x2e8] sm:$0xff]
        %v744 = vld [vmem:[%s595 + $0x2f0] sm:$0xff]
        %v745 = vld [vmem:[%s595 + $0x2f8] sm:$0xff]
        %v746 = vld [vmem:[%s595 + $0x300] sm:$0xff]
        %v747 = vld [vmem:[%s595 + $0x308] sm:$0xff]
        %v748 = vld [vmem:[%s595 + $0x310] sm:$0xff]
        %v749 = vld [vmem:[%s595 + $0x318] sm:$0xff]
        %v750 = vld [vmem:[%s595 + $0x320] sm:$0xff]
        %v751 = vld [vmem:[%s595 + $0x328] sm:$0xff]
        %v752 = vld [vmem:[%s595 + $0x330] sm:$0xff]
        %v753 = vld [vmem:[%s595 + $0x338] sm:$0xff]
        %v754 = vld [vmem:[%s595 + $0x340] sm:$0xff]
        %v755 = vld [vmem:[%s595 + $0x348] sm:$0xff]
        %v756 = vld [vmem:[%s595 + $0x350] sm:$0xff]
        %v757 = vld [vmem:[%s595 + $0x358] sm:$0xff]
        %v758 = vld [vmem:[%s595 + $0x360] sm:$0xff]
        %v759 = vld [vmem:[%s595 + $0x368] sm:$0xff]
        %v760 = vld [vmem:[%s595 + $0x370] sm:$0xff]
        %v761 = vld [vmem:[%s595 + $0x378] sm:$0xff]
        %v762 = vld [vmem:[%s595 + $0x380] sm:$0xff]
        %v763 = vld [vmem:[%s595 + $0x388] sm:$0xff]
        %v764 = vld [vmem:[%s595 + $0x390] sm:$0xff]
        %v765 = vld [vmem:[%s595 + $0x398] sm:$0xff]
        %v766 = vld [vmem:[%s595 + $0x3a0] sm:$0xff]
        %v767 = vld [vmem:[%s595 + $0x3a8] sm:$0xff]
        %v768 = vld [vmem:[%s595 + $0x3b0] sm:$0xff]
        %v769 = vld [vmem:[%s595 + $0x3b8] sm:$0xff]
        %v770 = vld [vmem:[%s595 + $0x3c0] sm:$0xff]
        %v771 = vld [vmem:[%s595 + $0x3c8] sm:$0xff]
        %v772 = vld [vmem:[%s595 + $0x3d0] sm:$0xff]
        %v773 = vld [vmem:[%s595 + $0x3d8] sm:$0xff]
        %v774 = vld [vmem:[%s595 + $0x3e0] sm:$0xff]
        %v775 = vld [vmem:[%s595 + $0x3e8] sm:$0xff]
        %v776 = vld [vmem:[%s595 + $0x3f0] sm:$0xff]
        %v777 = vld [vmem:[%s595 + $0x3f8] sm:$0xff]
        %v778 = vld [vmem:[%s595 + $0x400] sm:$0xff]
        %v779 = vld [vmem:[%s595 + $0x408] sm:$0xff]
        %v780 = vld [vmem:[%s595 + $0x410] sm:$0xff]
        %v781 = vld [vmem:[%s595 + $0x418] sm:$0xff]
        %v782 = vld [vmem:[%s595 + $0x420] sm:$0xff]
        %v783 = vld [vmem:[%s595 + $0x428] sm:$0xff]
        %v784 = vld [vmem:[%s595 + $0x430] sm:$0xff]
        %v785 = vld [vmem:[%s595 + $0x438] sm:$0xff]
        %v786 = vld [vmem:[%s595 + $0x440] sm:$0xff]
        %v787 = vld [vmem:[%s595 + $0x448] sm:$0xff]
        %v788 = vld [vmem:[%s595 + $0x450] sm:$0xff]
        %v789 = vld [vmem:[%s595 + $0x458] sm:$0xff]
        %v790 = vld [vmem:[%s595 + $0x460] sm:$0xff]
        %v791 = vld [vmem:[%s595 + $0x468] sm:$0xff]
        %v792 = vld [vmem:[%s595 + $0x470] sm:$0xff]
        %v793 = vld [vmem:[%s595 + $0x478] sm:$0xff]
        %v794 = vld [vmem:[%s595 + $0x480] sm:$0xff]
        %v795 = vld [vmem:[%s595 + $0x488] sm:$0xff]
        %v796 = vld [vmem:[%s595 + $0x490] sm:$0xff]
        %v797 = vld [vmem:[%s595 + $0x498] sm:$0xff]
        %v798 = vld [vmem:[%s595 + $0x4a0] sm:$0xff]
        %v799 = vld [vmem:[%s595 + $0x4a8] sm:$0xff]
        %v800 = vld [vmem:[%s595 + $0x4b0] sm:$0xff]
        %v801 = vld [vmem:[%s595 + $0x4b8] sm:$0xff]
        %v802 = vld [vmem:[%s595 + $0x4c0] sm:$0xff]
        %v803 = vld [vmem:[%s595 + $0x4c8] sm:$0xff]
        %v804 = vld [vmem:[%s595 + $0x4d0] sm:$0xff]
        %v805 = vld [vmem:[%s595 + $0x4d8] sm:$0xff]
        %v806 = vld [vmem:[%s595 + $0x4e0] sm:$0xff]
        %v807 = vld [vmem:[%s595 + $0x4e8] sm:$0xff]
        %v808 = vld [vmem:[%s595 + $0x4f0] sm:$0xff]
        %v809 = vld [vmem:[%s595 + $0x4f8] sm:$0xff]
        %v810 = vld [vmem:[%s595 + $0x500] sm:$0xff]
        %v811 = vld [vmem:[%s595 + $0x508] sm:$0xff]
        %v812 = vld [vmem:[%s595 + $0x510] sm:$0xff]
        %v813 = vld [vmem:[%s595 + $0x518] sm:$0xff]
        %v814 = vld [vmem:[%s595 + $0x520] sm:$0xff]
        %v815 = vld [vmem:[%s595 + $0x528] sm:$0xff]
        %v816 = vld [vmem:[%s595 + $0x530] sm:$0xff]
        %v817 = vld [vmem:[%s595 + $0x538] sm:$0xff]
        %v818 = vld [vmem:[%s595 + $0x540] sm:$0xff]
        %v819 = vld [vmem:[%s595 + $0x548] sm:$0xff]
        %v820 = vld [vmem:[%s595 + $0x550] sm:$0xff]
        %v821 = vld [vmem:[%s595 + $0x558] sm:$0xff]
        %v822 = vld [vmem:[%s595 + $0x560] sm:$0xff]
        %v823 = vld [vmem:[%s595 + $0x568] sm:$0xff]
        %v824 = vld [vmem:[%s595 + $0x570] sm:$0xff]
        %v825 = vld [vmem:[%s595 + $0x578] sm:$0xff]
        %v826 = vld [vmem:[%s595 + $0x580] sm:$0xff]
        %v827 = vld [vmem:[%s595 + $0x588] sm:$0xff]
        %v828 = vld [vmem:[%s595 + $0x590] sm:$0xff]
        %v829 = vld [vmem:[%s595 + $0x598] sm:$0xff]
        %v830 = vld [vmem:[%s595 + $0x5a0] sm:$0xff]
        %v831 = vld [vmem:[%s595 + $0x5a8] sm:$0xff]
        %v832 = vld [vmem:[%s595 + $0x5b0] sm:$0xff]
        %v833 = vld [vmem:[%s595 + $0x5b8] sm:$0xff]
        %v834 = vld [vmem:[%s595 + $0x5c0] sm:$0xff]
        %v835 = vld [vmem:[%s595 + $0x5c8] sm:$0xff]
        %v836 = vld [vmem:[%s595 + $0x5d0] sm:$0xff]
        %v837 = vld [vmem:[%s595 + $0x5d8] sm:$0xff]
        %v838 = vld [vmem:[%s595 + $0x5e0] sm:$0xff]
        %v839 = vld [vmem:[%s595 + $0x5e8] sm:$0xff]
        %v840 = vld [vmem:[%s595 + $0x5f0] sm:$0xff]
        %v841 = vld [vmem:[%s595 + $0x5f8] sm:$0xff]
        %v842 = vld [vmem:[%s595 + $0x600] sm:$0xff]
        %v843 = vld [vmem:[%s595 + $0x608] sm:$0xff]
        %v844 = vld [vmem:[%s595 + $0x610] sm:$0xff]
        %v845 = vld [vmem:[%s595 + $0x618] sm:$0xff]
        %v846 = vld [vmem:[%s595 + $0x620] sm:$0xff]
        %v847 = vld [vmem:[%s595 + $0x628] sm:$0xff]
        %v848 = vld [vmem:[%s595 + $0x630] sm:$0xff]
        %v849 = vld [vmem:[%s595 + $0x638] sm:$0xff]
        %v850 = vld [vmem:[%s595 + $0x640] sm:$0xff]
        %v851 = vld [vmem:[%s595 + $0x648] sm:$0xff]
        %v852 = vld [vmem:[%s595 + $0x650] sm:$0xff]
        %v853 = vld [vmem:[%s595 + $0x658] sm:$0xff]
        %v854 = vld [vmem:[%s595 + $0x660] sm:$0xff]
        %v855 = vld [vmem:[%s595 + $0x668] sm:$0xff]
        %v856 = vld [vmem:[%s595 + $0x670] sm:$0xff]
        %v857 = vld [vmem:[%s595 + $0x678] sm:$0xff]
        %v858 = vld [vmem:[%s595 + $0x680] sm:$0xff]
        %v859 = vld [vmem:[%s595 + $0x688] sm:$0xff]
        %v860 = vld [vmem:[%s595 + $0x690] sm:$0xff]
        %v861 = vld [vmem:[%s595 + $0x698] sm:$0xff]
        %v862 = vld [vmem:[%s595 + $0x6a0] sm:$0xff]
        %v863 = vld [vmem:[%s595 + $0x6a8] sm:$0xff]
        %v864 = vld [vmem:[%s595 + $0x6b0] sm:$0xff]
        %v865 = vld [vmem:[%s595 + $0x6b8] sm:$0xff]
        %v866 = vld [vmem:[%s1] sm:$0xff]
        %v867 = vld [vmem:[%s1 + $0x8] sm:$0xff]
        %v868 = vld [vmem:[%s1 + $0x10] sm:$0xff]
        %v869 = vld [vmem:[%s1 + $0x18] sm:$0xff]
        %v870 = vld [vmem:[%s1 + $0x20] sm:$0xff]
        %v871 = vld [vmem:[%s1 + $0x28] sm:$0xff]
        %v872 = vld [vmem:[%s1 + $0x30] sm:$0xff]
        %v873 = vld [vmem:[%s1 + $0x38] sm:$0xff]
        %875 = vset.pattern.permute.xlu0 0
        %876 = vperm.xlu0 %875, %v866
        %v877 = vpop.permute.xlu0 %876
        %880 = vset.pattern.permute.xlu0 0
        %881 = vperm.xlu0 %880, %v867
        %v882 = vpop.permute.xlu0 %881
        %885 = vset.pattern.permute.xlu0 0
        %886 = vperm.xlu0 %885, %v868
        %v887 = vpop.permute.xlu0 %886
        %890 = vset.pattern.permute.xlu0 0
        %891 = vperm.xlu0 %890, %v869
        %v892 = vpop.permute.xlu0 %891
        %895 = vset.pattern.permute.xlu0 0
        %896 = vperm.xlu0 %895, %v870
        %v897 = vpop.permute.xlu0 %896
        %900 = vset.pattern.permute.xlu0 0
        %901 = vperm.xlu0 %900, %v871
        %v902 = vpop.permute.xlu0 %901
        %905 = vset.pattern.permute.xlu0 0
        %906 = vperm.xlu0 %905, %v872
        %v907 = vpop.permute.xlu0 %906
        %910 = vset.pattern.permute.xlu0 0
        %911 = vperm.xlu0 %910, %v873
        %v912 = vpop.permute.xlu0 %911
        %v946 = vunpack.c.l.b16 %v618
        %v947 = vunpack.c.h.b16 %v618
        %v948 = vunpack.c.l.b16 %v619
        %v949 = vunpack.c.h.b16 %v619
        %v950 = vunpack.c.l.b16 %v620
        %v951 = vunpack.c.h.b16 %v620
        %v952 = vunpack.c.l.b16 %v621
        %v953 = vunpack.c.l.b16 %v622
        %v954 = vunpack.c.h.b16 %v622
        %v955 = vunpack.c.l.b16 %v623
        %v956 = vunpack.c.h.b16 %v623
        %v957 = vunpack.c.l.b16 %v624
        %v958 = vunpack.c.h.b16 %v624
        %v959 = vunpack.c.l.b16 %v625
        %v960 = vunpack.c.l.b16 %v626
        %v961 = vunpack.c.h.b16 %v626
        %v962 = vunpack.c.l.b16 %v627
        %v963 = vunpack.c.h.b16 %v627
        %v964 = vunpack.c.l.b16 %v628
        %v965 = vunpack.c.h.b16 %v628
        %v966 = vunpack.c.l.b16 %v629
        %v967 = vunpack.c.l.b16 %v630
        %v968 = vunpack.c.h.b16 %v630
        %v969 = vunpack.c.l.b16 %v631
        %v970 = vunpack.c.h.b16 %v631
        %v971 = vunpack.c.l.b16 %v632
        %v972 = vunpack.c.h.b16 %v632
        %v973 = vunpack.c.l.b16 %v633
        %v974 = vunpack.c.l.b16 %v634
        %v975 = vunpack.c.h.b16 %v634
        %v976 = vunpack.c.l.b16 %v635
        %v977 = vunpack.c.h.b16 %v635
        %v978 = vunpack.c.l.b16 %v636
        %v979 = vunpack.c.h.b16 %v636
        %v980 = vunpack.c.l.b16 %v637
        %v981 = vunpack.c.l.b16 %v638
        %v982 = vunpack.c.h.b16 %v638
        %v983 = vunpack.c.l.b16 %v639
        %v984 = vunpack.c.h.b16 %v639
        %v985 = vunpack.c.l.b16 %v640
        %v986 = vunpack.c.h.b16 %v640
        %v987 = vunpack.c.l.b16 %v641
        %v988 = vunpack.c.l.b16 %v642
        %v989 = vunpack.c.h.b16 %v642
        %v990 = vunpack.c.l.b16 %v643
        %v991 = vunpack.c.h.b16 %v643
        %v992 = vunpack.c.l.b16 %v644
        %v993 = vunpack.c.h.b16 %v644
        %v994 = vunpack.c.l.b16 %v645
        %v995 = vunpack.c.l.b16 %v646
        %v996 = vunpack.c.h.b16 %v646
        %v997 = vunpack.c.l.b16 %v647
        %v998 = vunpack.c.h.b16 %v647
        %v999 = vunpack.c.l.b16 %v648
        %v1000 = vunpack.c.h.b16 %v648
        %v1001 = vunpack.c.l.b16 %v649
        %v1002 = vpack.c.b16 %v953, %v946
        %v1003 = vpack.c.b16 %v954, %v947
        %v1004 = vpack.c.b16 %v955, %v948
        %v1005 = vpack.c.b16 %v956, %v949
        %v1006 = vpack.c.b16 %v957, %v950
        %v1007 = vpack.c.b16 %v958, %v951
        %v1008 = vpack.c.b16 %v959, %v952
        %v1009 = vpack.c.b16 %v967, %v960
        %v1010 = vpack.c.b16 %v968, %v961
        %v1011 = vpack.c.b16 %v969, %v962
        %v1012 = vpack.c.b16 %v970, %v963
        %v1013 = vpack.c.b16 %v971, %v964
        %v1014 = vpack.c.b16 %v972, %v965
        %v1015 = vpack.c.b16 %v973, %v966
        %v1016 = vpack.c.b16 %v981, %v974
        %v1017 = vpack.c.b16 %v982, %v975
        %v1018 = vpack.c.b16 %v983, %v976
        %v1019 = vpack.c.b16 %v984, %v977
        %v1020 = vpack.c.b16 %v985, %v978
        %v1021 = vpack.c.b16 %v986, %v979
        %v1022 = vpack.c.b16 %v987, %v980
        %v1023 = vpack.c.b16 %v995, %v988
        %v1024 = vpack.c.b16 %v996, %v989
        %v1025 = vpack.c.b16 %v997, %v990
        %v1026 = vpack.c.b16 %v998, %v991
        %v1027 = vpack.c.b16 %v999, %v992
        %v1028 = vpack.c.b16 %v1000, %v993
        %v1029 = vpack.c.b16 %v1001, %v994
        %v1270 = vunpack.c.l.b16 %v650
        %v1271 = vunpack.c.h.b16 %v650
        %v1272 = vunpack.c.l.b16 %v651
        %v1273 = vunpack.c.h.b16 %v651
        %v1274 = vunpack.c.l.b16 %v652
        %v1275 = vunpack.c.h.b16 %v652
        %v1276 = vunpack.c.l.b16 %v653
        %v1277 = vunpack.c.h.b16 %v653
        %v1278 = vunpack.c.l.b16 %v654
        %v1279 = vunpack.c.h.b16 %v654
        %v1280 = vunpack.c.l.b16 %v655
        %v1281 = vunpack.c.h.b16 %v655
        %v1282 = vunpack.c.l.b16 %v656
        %v1283 = vunpack.c.h.b16 %v656
        %v1284 = vunpack.c.l.b16 %v657
        %v1285 = vunpack.c.h.b16 %v657
        %v1286 = vunpack.c.l.b16 %v658
        %v1287 = vunpack.c.h.b16 %v658
        %v1288 = vunpack.c.l.b16 %v659
        %v1289 = vunpack.c.h.b16 %v659
        %v1290 = vunpack.c.l.b16 %v660
        %v1291 = vunpack.c.h.b16 %v660
        %v1292 = vunpack.c.l.b16 %v661
        %v1293 = vunpack.c.h.b16 %v661
        %v1294 = vunpack.c.l.b16 %v662
        %v1295 = vunpack.c.h.b16 %v662
        %v1296 = vunpack.c.l.b16 %v663
        %v1297 = vunpack.c.h.b16 %v663
        %v1298 = vunpack.c.l.b16 %v664
        %v1299 = vunpack.c.h.b16 %v664
        %v1300 = vunpack.c.l.b16 %v665
        %v1301 = vunpack.c.h.b16 %v665
        %v1302 = vunpack.c.l.b16 %v666
        %v1303 = vunpack.c.h.b16 %v666
        %v1304 = vunpack.c.l.b16 %v667
        %v1305 = vunpack.c.h.b16 %v667
        %v1306 = vunpack.c.l.b16 %v668
        %v1307 = vunpack.c.h.b16 %v668
        %v1308 = vunpack.c.l.b16 %v669
        %v1309 = vunpack.c.h.b16 %v669
        %v1310 = vunpack.c.l.b16 %v670
        %v1311 = vunpack.c.h.b16 %v670
        %v1312 = vunpack.c.l.b16 %v671
        %v1313 = vunpack.c.h.b16 %v671
        %v1314 = vunpack.c.l.b16 %v672
        %v1315 = vunpack.c.h.b16 %v672
        %v1316 = vunpack.c.l.b16 %v673
        %v1317 = vunpack.c.h.b16 %v673
        %v1318 = vunpack.c.l.b16 %v674
        %v1319 = vunpack.c.h.b16 %v674
        %v1320 = vunpack.c.l.b16 %v675
        %v1321 = vunpack.c.h.b16 %v675
        %v1322 = vunpack.c.l.b16 %v676
        %v1323 = vunpack.c.h.b16 %v676
        %v1324 = vunpack.c.l.b16 %v677
        %v1325 = vunpack.c.h.b16 %v677
        %v1326 = vunpack.c.l.b16 %v678
        %v1327 = vunpack.c.h.b16 %v678
        %v1328 = vunpack.c.l.b16 %v679
        %v1329 = vunpack.c.h.b16 %v679
        %v1330 = vunpack.c.l.b16 %v680
        %v1331 = vunpack.c.h.b16 %v680
        %v1332 = vunpack.c.l.b16 %v681
        %v1333 = vunpack.c.h.b16 %v681
        %v1334 = vunpack.c.l.b16 %v682
        %v1335 = vunpack.c.h.b16 %v682
        %v1336 = vunpack.c.l.b16 %v683
        %v1337 = vunpack.c.h.b16 %v683
        %v1338 = vunpack.c.l.b16 %v684
        %v1339 = vunpack.c.h.b16 %v684
        %v1340 = vunpack.c.l.b16 %v685
        %v1341 = vunpack.c.h.b16 %v685
        %v1342 = vunpack.c.l.b16 %v686
        %v1343 = vunpack.c.h.b16 %v686
        %v1344 = vunpack.c.l.b16 %v687
        %v1345 = vunpack.c.h.b16 %v687
        %v1346 = vunpack.c.l.b16 %v688
        %v1347 = vunpack.c.h.b16 %v688
        %v1348 = vunpack.c.l.b16 %v689
        %v1349 = vunpack.c.h.b16 %v689
        %v1350 = vunpack.c.l.b16 %v690
        %v1351 = vunpack.c.h.b16 %v690
        %v1352 = vunpack.c.l.b16 %v691
        %v1353 = vunpack.c.h.b16 %v691
        %v1354 = vunpack.c.l.b16 %v692
        %v1355 = vunpack.c.h.b16 %v692
        %v1356 = vunpack.c.l.b16 %v693
        %v1357 = vunpack.c.h.b16 %v693
        %v1358 = vunpack.c.l.b16 %v694
        %v1359 = vunpack.c.h.b16 %v694
        %v1360 = vunpack.c.l.b16 %v695
        %v1361 = vunpack.c.h.b16 %v695
        %v1362 = vunpack.c.l.b16 %v696
        %v1363 = vunpack.c.h.b16 %v696
        %v1364 = vunpack.c.l.b16 %v697
        %v1365 = vunpack.c.h.b16 %v697
        %v1366 = vunpack.c.l.b16 %v698
        %v1367 = vunpack.c.h.b16 %v698
        %v1368 = vunpack.c.l.b16 %v699
        %v1369 = vunpack.c.h.b16 %v699
        %v1370 = vunpack.c.l.b16 %v700
        %v1371 = vunpack.c.h.b16 %v700
        %v1372 = vunpack.c.l.b16 %v701
        %v1373 = vunpack.c.h.b16 %v701
        %v1374 = vunpack.c.l.b16 %v702
        %v1375 = vunpack.c.h.b16 %v702
        %v1376 = vunpack.c.l.b16 %v703
        %v1377 = vunpack.c.h.b16 %v703
        %v1378 = vunpack.c.l.b16 %v704
        %v1379 = vunpack.c.h.b16 %v704
        %v1380 = vunpack.c.l.b16 %v705
        %v1381 = vunpack.c.h.b16 %v705
        %v1382 = vunpack.c.l.b16 %v706
        %v1383 = vunpack.c.h.b16 %v706
        %v1384 = vunpack.c.l.b16 %v707
        %v1385 = vunpack.c.h.b16 %v707
        %v1386 = vunpack.c.l.b16 %v708
        %v1387 = vunpack.c.h.b16 %v708
        %v1388 = vunpack.c.l.b16 %v709
        %v1389 = vunpack.c.h.b16 %v709
        %v1390 = vunpack.c.l.b16 %v710
        %v1391 = vunpack.c.h.b16 %v710
        %v1392 = vunpack.c.l.b16 %v711
        %v1393 = vunpack.c.h.b16 %v711
        %v1394 = vunpack.c.l.b16 %v712
        %v1395 = vunpack.c.h.b16 %v712
        %v1396 = vunpack.c.l.b16 %v713
        %v1397 = vunpack.c.h.b16 %v713
        %v1398 = vunpack.c.l.b16 %v714
        %v1399 = vunpack.c.h.b16 %v714
        %v1400 = vunpack.c.l.b16 %v715
        %v1401 = vunpack.c.h.b16 %v715
        %v1402 = vunpack.c.l.b16 %v716
        %v1403 = vunpack.c.h.b16 %v716
        %v1404 = vunpack.c.l.b16 %v717
        %v1405 = vunpack.c.h.b16 %v717
        %v1406 = vunpack.c.l.b16 %v718
        %v1407 = vunpack.c.h.b16 %v718
        %v1408 = vunpack.c.l.b16 %v719
        %v1409 = vunpack.c.h.b16 %v719
        %v1410 = vunpack.c.l.b16 %v720
        %v1411 = vunpack.c.h.b16 %v720
        %v1412 = vunpack.c.l.b16 %v721
        %v1413 = vunpack.c.h.b16 %v721
        %v1414 = vunpack.c.l.b16 %v722
        %v1415 = vunpack.c.h.b16 %v722
        %v1416 = vunpack.c.l.b16 %v723
        %v1417 = vunpack.c.h.b16 %v723
        %v1418 = vunpack.c.l.b16 %v724
        %v1419 = vunpack.c.h.b16 %v724
        %v1420 = vunpack.c.l.b16 %v725
        %v1421 = vunpack.c.h.b16 %v725
        %v1422 = vunpack.c.l.b16 %v726
        %v1423 = vunpack.c.h.b16 %v726
        %v1424 = vunpack.c.l.b16 %v727
        %v1425 = vunpack.c.h.b16 %v727
        %v1426 = vunpack.c.l.b16 %v728
        %v1427 = vunpack.c.h.b16 %v728
        %v1428 = vunpack.c.l.b16 %v729
        %v1429 = vunpack.c.h.b16 %v729
        %v1430 = vunpack.c.l.b16 %v730
        %v1431 = vunpack.c.h.b16 %v730
        %v1432 = vunpack.c.l.b16 %v731
        %v1433 = vunpack.c.h.b16 %v731
        %v1434 = vunpack.c.l.b16 %v732
        %v1435 = vunpack.c.h.b16 %v732
        %v1436 = vunpack.c.l.b16 %v733
        %v1437 = vunpack.c.h.b16 %v733
        %v1438 = vunpack.c.l.b16 %v734
        %v1439 = vunpack.c.h.b16 %v734
        %v1440 = vunpack.c.l.b16 %v735
        %v1441 = vunpack.c.h.b16 %v735
        %v1442 = vunpack.c.l.b16 %v736
        %v1443 = vunpack.c.h.b16 %v736
        %v1444 = vunpack.c.l.b16 %v737
        %v1445 = vunpack.c.h.b16 %v737
        %v1446 = vunpack.c.l.b16 %v738
        %v1447 = vunpack.c.h.b16 %v738
        %v1448 = vunpack.c.l.b16 %v739
        %v1449 = vunpack.c.h.b16 %v739
        %v1450 = vunpack.c.l.b16 %v740
        %v1451 = vunpack.c.h.b16 %v740
        %v1452 = vunpack.c.l.b16 %v741
        %v1453 = vunpack.c.h.b16 %v741
        %v1454 = vunpack.c.l.b16 %v742
        %v1455 = vunpack.c.h.b16 %v742
        %v1456 = vunpack.c.l.b16 %v743
        %v1457 = vunpack.c.h.b16 %v743
        %v1458 = vunpack.c.l.b16 %v744
        %v1459 = vunpack.c.h.b16 %v744
        %v1460 = vunpack.c.l.b16 %v745
        %v1461 = vunpack.c.h.b16 %v745
        %v1462 = vunpack.c.l.b16 %v746
        %v1463 = vunpack.c.h.b16 %v746
        %v1464 = vunpack.c.l.b16 %v747
        %v1465 = vunpack.c.h.b16 %v747
        %v1466 = vunpack.c.l.b16 %v748
        %v1467 = vunpack.c.h.b16 %v748
        %v1468 = vunpack.c.l.b16 %v749
        %v1469 = vunpack.c.h.b16 %v749
        %v1470 = vunpack.c.l.b16 %v750
        %v1471 = vunpack.c.h.b16 %v750
        %v1472 = vunpack.c.l.b16 %v751
        %v1473 = vunpack.c.h.b16 %v751
        %v1474 = vunpack.c.l.b16 %v752
        %v1475 = vunpack.c.h.b16 %v752
        %v1476 = vunpack.c.l.b16 %v753
        %v1477 = vunpack.c.h.b16 %v753
        %v1478 = vunpack.c.l.b16 %v754
        %v1479 = vunpack.c.h.b16 %v754
        %v1480 = vunpack.c.l.b16 %v755
        %v1481 = vunpack.c.h.b16 %v755
        %v1482 = vunpack.c.l.b16 %v756
        %v1483 = vunpack.c.h.b16 %v756
        %v1484 = vunpack.c.l.b16 %v757
        %v1485 = vunpack.c.h.b16 %v757
        %v1486 = vunpack.c.l.b16 %v758
        %v1487 = vunpack.c.h.b16 %v758
        %v1488 = vunpack.c.l.b16 %v759
        %v1489 = vunpack.c.h.b16 %v759
        %v1490 = vunpack.c.l.b16 %v760
        %v1491 = vunpack.c.h.b16 %v760
        %v1492 = vunpack.c.l.b16 %v761
        %v1493 = vunpack.c.h.b16 %v761
        %v1494 = vunpack.c.l.b16 %v762
        %v1495 = vunpack.c.h.b16 %v762
        %v1496 = vunpack.c.l.b16 %v763
        %v1497 = vunpack.c.h.b16 %v763
        %v1498 = vunpack.c.l.b16 %v764
        %v1499 = vunpack.c.h.b16 %v764
        %v1500 = vunpack.c.l.b16 %v765
        %v1501 = vunpack.c.h.b16 %v765
        %v1502 = vunpack.c.l.b16 %v766
        %v1503 = vunpack.c.h.b16 %v766
        %v1504 = vunpack.c.l.b16 %v767
        %v1505 = vunpack.c.h.b16 %v767
        %v1506 = vunpack.c.l.b16 %v768
        %v1507 = vunpack.c.h.b16 %v768
        %v1508 = vunpack.c.l.b16 %v769
        %v1509 = vunpack.c.h.b16 %v769
        %v1510 = vunpack.c.l.b16 %v770
        %v1511 = vunpack.c.h.b16 %v770
        %v1512 = vunpack.c.l.b16 %v771
        %v1513 = vunpack.c.h.b16 %v771
        %v1514 = vunpack.c.l.b16 %v772
        %v1515 = vunpack.c.h.b16 %v772
        %v1516 = vunpack.c.l.b16 %v773
        %v1517 = vunpack.c.h.b16 %v773
        %v1518 = vunpack.c.l.b16 %v774
        %v1519 = vunpack.c.h.b16 %v774
        %v1520 = vunpack.c.l.b16 %v775
        %v1521 = vunpack.c.h.b16 %v775
        %v1522 = vunpack.c.l.b16 %v776
        %v1523 = vunpack.c.h.b16 %v776
        %v1524 = vunpack.c.l.b16 %v777
        %v1525 = vunpack.c.h.b16 %v777
        %v1526 = vunpack.c.l.b16 %v778
        %v1527 = vunpack.c.h.b16 %v778
        %v1528 = vunpack.c.l.b16 %v779
        %v1529 = vunpack.c.h.b16 %v779
        %v1530 = vunpack.c.l.b16 %v780
        %v1531 = vunpack.c.h.b16 %v780
        %v1532 = vunpack.c.l.b16 %v781
        %v1533 = vunpack.c.h.b16 %v781
        %v1534 = vunpack.c.l.b16 %v782
        %v1535 = vunpack.c.h.b16 %v782
        %v1536 = vunpack.c.l.b16 %v783
        %v1537 = vunpack.c.h.b16 %v783
        %v1538 = vunpack.c.l.b16 %v784
        %v1539 = vunpack.c.h.b16 %v784
        %v1540 = vunpack.c.l.b16 %v785
        %v1541 = vunpack.c.h.b16 %v785
        %v1542 = vunpack.c.l.b16 %v786
        %v1543 = vunpack.c.h.b16 %v786
        %v1544 = vunpack.c.l.b16 %v787
        %v1545 = vunpack.c.h.b16 %v787
        %v1546 = vunpack.c.l.b16 %v788
        %v1547 = vunpack.c.h.b16 %v788
        %v1548 = vunpack.c.l.b16 %v789
        %v1549 = vunpack.c.h.b16 %v789
        %v1550 = vunpack.c.l.b16 %v790
        %v1551 = vunpack.c.h.b16 %v790
        %v1552 = vunpack.c.l.b16 %v791
        %v1553 = vunpack.c.h.b16 %v791
        %v1554 = vunpack.c.l.b16 %v792
        %v1555 = vunpack.c.h.b16 %v792
        %v1556 = vunpack.c.l.b16 %v793
        %v1557 = vunpack.c.h.b16 %v793
        %v1558 = vunpack.c.l.b16 %v794
        %v1559 = vunpack.c.h.b16 %v794
        %v1560 = vunpack.c.l.b16 %v795
        %v1561 = vunpack.c.h.b16 %v795
        %v1562 = vunpack.c.l.b16 %v796
        %v1563 = vunpack.c.h.b16 %v796
        %v1564 = vunpack.c.l.b16 %v797
        %v1565 = vunpack.c.h.b16 %v797
        %v1566 = vunpack.c.l.b16 %v798
        %v1567 = vunpack.c.h.b16 %v798
        %v1568 = vunpack.c.l.b16 %v799
        %v1569 = vunpack.c.h.b16 %v799
        %v1570 = vunpack.c.l.b16 %v800
        %v1571 = vunpack.c.h.b16 %v800
        %v1572 = vunpack.c.l.b16 %v801
        %v1573 = vunpack.c.h.b16 %v801
        %v1574 = vunpack.c.l.b16 %v802
        %v1575 = vunpack.c.h.b16 %v802
        %v1576 = vunpack.c.l.b16 %v803
        %v1577 = vunpack.c.h.b16 %v803
        %v1578 = vunpack.c.l.b16 %v804
        %v1579 = vunpack.c.h.b16 %v804
        %v1580 = vunpack.c.l.b16 %v805
        %v1581 = vunpack.c.h.b16 %v805
        %v1582 = vunpack.c.l.b16 %v806
        %v1583 = vunpack.c.h.b16 %v806
        %v1584 = vunpack.c.l.b16 %v807
        %v1585 = vunpack.c.h.b16 %v807
        %v1586 = vunpack.c.l.b16 %v808
        %v1587 = vunpack.c.h.b16 %v808
        %v1588 = vunpack.c.l.b16 %v809
        %v1589 = vunpack.c.h.b16 %v809
        %v1590 = vunpack.c.l.b16 %v810
        %v1591 = vunpack.c.h.b16 %v810
        %v1592 = vunpack.c.l.b16 %v811
        %v1593 = vunpack.c.h.b16 %v811
        %v1594 = vunpack.c.l.b16 %v812
        %v1595 = vunpack.c.h.b16 %v812
        %v1596 = vunpack.c.l.b16 %v813
        %v1597 = vunpack.c.h.b16 %v813
        %v1598 = vunpack.c.l.b16 %v814
        %v1599 = vunpack.c.h.b16 %v814
        %v1600 = vunpack.c.l.b16 %v815
        %v1601 = vunpack.c.h.b16 %v815
        %v1602 = vunpack.c.l.b16 %v816
        %v1603 = vunpack.c.h.b16 %v816
        %v1604 = vunpack.c.l.b16 %v817
        %v1605 = vunpack.c.h.b16 %v817
        %v1606 = vunpack.c.l.b16 %v818
        %v1607 = vunpack.c.h.b16 %v818
        %v1608 = vunpack.c.l.b16 %v819
        %v1609 = vunpack.c.h.b16 %v819
        %v1610 = vunpack.c.l.b16 %v820
        %v1611 = vunpack.c.h.b16 %v820
        %v1612 = vunpack.c.l.b16 %v821
        %v1613 = vunpack.c.h.b16 %v821
        %v1614 = vunpack.c.l.b16 %v822
        %v1615 = vunpack.c.h.b16 %v822
        %v1616 = vunpack.c.l.b16 %v823
        %v1617 = vunpack.c.h.b16 %v823
        %v1618 = vunpack.c.l.b16 %v824
        %v1619 = vunpack.c.h.b16 %v824
        %v1620 = vunpack.c.l.b16 %v825
        %v1621 = vunpack.c.h.b16 %v825
        %v1622 = vunpack.c.l.b16 %v826
        %v1623 = vunpack.c.h.b16 %v826
        %v1624 = vunpack.c.l.b16 %v827
        %v1625 = vunpack.c.h.b16 %v827
        %v1626 = vunpack.c.l.b16 %v828
        %v1627 = vunpack.c.h.b16 %v828
        %v1628 = vunpack.c.l.b16 %v829
        %v1629 = vunpack.c.h.b16 %v829
        %v1630 = vunpack.c.l.b16 %v830
        %v1631 = vunpack.c.h.b16 %v830
        %v1632 = vunpack.c.l.b16 %v831
        %v1633 = vunpack.c.h.b16 %v831
        %v1634 = vunpack.c.l.b16 %v832
        %v1635 = vunpack.c.h.b16 %v832
        %v1636 = vunpack.c.l.b16 %v833
        %v1637 = vunpack.c.h.b16 %v833
        %v1638 = vunpack.c.l.b16 %v834
        %v1639 = vunpack.c.h.b16 %v834
        %v1640 = vunpack.c.l.b16 %v835
        %v1641 = vunpack.c.h.b16 %v835
        %v1642 = vunpack.c.l.b16 %v836
        %v1643 = vunpack.c.h.b16 %v836
        %v1644 = vunpack.c.l.b16 %v837
        %v1645 = vunpack.c.h.b16 %v837
        %v1646 = vunpack.c.l.b16 %v838
        %v1647 = vunpack.c.h.b16 %v838
        %v1648 = vunpack.c.l.b16 %v839
        %v1649 = vunpack.c.h.b16 %v839
        %v1650 = vunpack.c.l.b16 %v840
        %v1651 = vunpack.c.h.b16 %v840
        %v1652 = vunpack.c.l.b16 %v841
        %v1653 = vunpack.c.h.b16 %v841
        %v1654 = vunpack.c.l.b16 %v842
        %v1655 = vunpack.c.h.b16 %v842
        %v1656 = vunpack.c.l.b16 %v843
        %v1657 = vunpack.c.h.b16 %v843
        %v1658 = vunpack.c.l.b16 %v844
        %v1659 = vunpack.c.h.b16 %v844
        %v1660 = vunpack.c.l.b16 %v845
        %v1661 = vunpack.c.h.b16 %v845
        %v1662 = vunpack.c.l.b16 %v846
        %v1663 = vunpack.c.h.b16 %v846
        %v1664 = vunpack.c.l.b16 %v847
        %v1665 = vunpack.c.h.b16 %v847
        %v1666 = vunpack.c.l.b16 %v848
        %v1667 = vunpack.c.h.b16 %v848
        %v1668 = vunpack.c.l.b16 %v849
        %v1669 = vunpack.c.h.b16 %v849
        %v1670 = vunpack.c.l.b16 %v850
        %v1671 = vunpack.c.h.b16 %v850
        %v1672 = vunpack.c.l.b16 %v851
        %v1673 = vunpack.c.h.b16 %v851
        %v1674 = vunpack.c.l.b16 %v852
        %v1675 = vunpack.c.h.b16 %v852
        %v1676 = vunpack.c.l.b16 %v853
        %v1677 = vunpack.c.h.b16 %v853
        %v1678 = vunpack.c.l.b16 %v854
        %v1679 = vunpack.c.h.b16 %v854
        %v1680 = vunpack.c.l.b16 %v855
        %v1681 = vunpack.c.h.b16 %v855
        %v1682 = vunpack.c.l.b16 %v856
        %v1683 = vunpack.c.h.b16 %v856
        %v1684 = vunpack.c.l.b16 %v857
        %v1685 = vunpack.c.h.b16 %v857
        %v1686 = vunpack.c.l.b16 %v858
        %v1687 = vunpack.c.h.b16 %v858
        %v1688 = vunpack.c.l.b16 %v859
        %v1689 = vunpack.c.h.b16 %v859
        %v1690 = vunpack.c.l.b16 %v860
        %v1691 = vunpack.c.h.b16 %v860
        %v1692 = vunpack.c.l.b16 %v861
        %v1693 = vunpack.c.h.b16 %v861
        %v1694 = vunpack.c.l.b16 %v862
        %v1695 = vunpack.c.h.b16 %v862
        %v1696 = vunpack.c.l.b16 %v863
        %v1697 = vunpack.c.h.b16 %v863
        %v1698 = vunpack.c.l.b16 %v864
        %v1699 = vunpack.c.h.b16 %v864
        %v1700 = vunpack.c.l.b16 %v865
        %v1701 = vunpack.c.h.b16 %v865
        %v1702 = vpack.c.b16 %v1274, %v1270
        %v1703 = vpack.c.b16 %v1275, %v1271
        %v1704 = vpack.c.b16 %v1276, %v1272
        %v1705 = vpack.c.b16 %v1277, %v1273
        %v1706 = vpack.c.b16 %v1282, %v1278
        %v1707 = vpack.c.b16 %v1283, %v1279
        %v1708 = vpack.c.b16 %v1284, %v1280
        %v1709 = vpack.c.b16 %v1285, %v1281
        %v1710 = vpack.c.b16 %v1290, %v1286
        %v1711 = vpack.c.b16 %v1291, %v1287
        %v1712 = vpack.c.b16 %v1292, %v1288
        %v1713 = vpack.c.b16 %v1293, %v1289
        %v1714 = vpack.c.b16 %v1298, %v1294
        %v1715 = vpack.c.b16 %v1299, %v1295
        %v1716 = vpack.c.b16 %v1300, %v1296
        %v1717 = vpack.c.b16 %v1301, %v1297
        %v1718 = vpack.c.b16 %v1306, %v1302
        %v1719 = vpack.c.b16 %v1307, %v1303
        %v1720 = vpack.c.b16 %v1308, %v1304
        %v1721 = vpack.c.b16 %v1309, %v1305
        %v1722 = vpack.c.b16 %v1314, %v1310
        %v1723 = vpack.c.b16 %v1315, %v1311
        %v1724 = vpack.c.b16 %v1316, %v1312
        %v1725 = vpack.c.b16 %v1317, %v1313
        %v1726 = vpack.c.b16 %v1322, %v1318
        %v1727 = vpack.c.b16 %v1323, %v1319
        %v1728 = vpack.c.b16 %v1324, %v1320
        %v1729 = vpack.c.b16 %v1325, %v1321
        %v1730 = vpack.c.b16 %v1330, %v1326
        %v1731 = vpack.c.b16 %v1331, %v1327
        %v1732 = vpack.c.b16 %v1332, %v1328
        %v1733 = vpack.c.b16 %v1333, %v1329
        %v1734 = vpack.c.b16 %v1338, %v1334
        %v1735 = vpack.c.b16 %v1339, %v1335
        %v1736 = vpack.c.b16 %v1340, %v1336
        %v1737 = vpack.c.b16 %v1341, %v1337
        %v1738 = vpack.c.b16 %v1346, %v1342
        %v1739 = vpack.c.b16 %v1347, %v1343
        %v1740 = vpack.c.b16 %v1348, %v1344
        %v1741 = vpack.c.b16 %v1349, %v1345
        %v1742 = vpack.c.b16 %v1354, %v1350
        %v1743 = vpack.c.b16 %v1355, %v1351
        %v1744 = vpack.c.b16 %v1356, %v1352
        %v1745 = vpack.c.b16 %v1357, %v1353
        %v1746 = vpack.c.b16 %v1362, %v1358
        %v1747 = vpack.c.b16 %v1363, %v1359
        %v1748 = vpack.c.b16 %v1364, %v1360
        %v1749 = vpack.c.b16 %v1365, %v1361
        %v1750 = vpack.c.b16 %v1370, %v1366
        %v1751 = vpack.c.b16 %v1371, %v1367
        %v1752 = vpack.c.b16 %v1372, %v1368
        %v1753 = vpack.c.b16 %v1373, %v1369
        %v1754 = vpack.c.b16 %v1378, %v1374
        %v1755 = vpack.c.b16 %v1379, %v1375
        %v1756 = vpack.c.b16 %v1380, %v1376
        %v1757 = vpack.c.b16 %v1381, %v1377
        %v1758 = vpack.c.b16 %v1386, %v1382
        %v1759 = vpack.c.b16 %v1387, %v1383
        %v1760 = vpack.c.b16 %v1388, %v1384
        %v1761 = vpack.c.b16 %v1389, %v1385
        %v1762 = vpack.c.b16 %v1394, %v1390
        %v1763 = vpack.c.b16 %v1395, %v1391
        %v1764 = vpack.c.b16 %v1396, %v1392
        %v1765 = vpack.c.b16 %v1397, %v1393
        %v1766 = vpack.c.b16 %v1402, %v1398
        %v1767 = vpack.c.b16 %v1403, %v1399
        %v1768 = vpack.c.b16 %v1404, %v1400
        %v1769 = vpack.c.b16 %v1405, %v1401
        %v1770 = vpack.c.b16 %v1410, %v1406
        %v1771 = vpack.c.b16 %v1411, %v1407
        %v1772 = vpack.c.b16 %v1412, %v1408
        %v1773 = vpack.c.b16 %v1413, %v1409
        %v1774 = vpack.c.b16 %v1418, %v1414
        %v1775 = vpack.c.b16 %v1419, %v1415
        %v1776 = vpack.c.b16 %v1420, %v1416
        %v1777 = vpack.c.b16 %v1421, %v1417
        %v1778 = vpack.c.b16 %v1426, %v1422
        %v1779 = vpack.c.b16 %v1427, %v1423
        %v1780 = vpack.c.b16 %v1428, %v1424
        %v1781 = vpack.c.b16 %v1429, %v1425
        %v1782 = vpack.c.b16 %v1434, %v1430
        %v1783 = vpack.c.b16 %v1435, %v1431
        %v1784 = vpack.c.b16 %v1436, %v1432
        %v1785 = vpack.c.b16 %v1437, %v1433
        %v1786 = vpack.c.b16 %v1442, %v1438
        %v1787 = vpack.c.b16 %v1443, %v1439
        %v1788 = vpack.c.b16 %v1444, %v1440
        %v1789 = vpack.c.b16 %v1445, %v1441
        %v1790 = vpack.c.b16 %v1450, %v1446
        %v1791 = vpack.c.b16 %v1451, %v1447
        %v1792 = vpack.c.b16 %v1452, %v1448
        %v1793 = vpack.c.b16 %v1453, %v1449
        %v1794 = vpack.c.b16 %v1458, %v1454
        %v1795 = vpack.c.b16 %v1459, %v1455
        %v1796 = vpack.c.b16 %v1460, %v1456
        %v1797 = vpack.c.b16 %v1461, %v1457
        %v1798 = vpack.c.b16 %v1466, %v1462
        %v1799 = vpack.c.b16 %v1467, %v1463
        %v1800 = vpack.c.b16 %v1468, %v1464
        %v1801 = vpack.c.b16 %v1469, %v1465
        %v1802 = vpack.c.b16 %v1474, %v1470
        %v1803 = vpack.c.b16 %v1475, %v1471
        %v1804 = vpack.c.b16 %v1476, %v1472
        %v1805 = vpack.c.b16 %v1477, %v1473
        %v1806 = vpack.c.b16 %v1482, %v1478
        %v1807 = vpack.c.b16 %v1483, %v1479
        %v1808 = vpack.c.b16 %v1484, %v1480
        %v1809 = vpack.c.b16 %v1485, %v1481
        %v1810 = vpack.c.b16 %v1490, %v1486
        %v1811 = vpack.c.b16 %v1491, %v1487
        %v1812 = vpack.c.b16 %v1492, %v1488
        %v1813 = vpack.c.b16 %v1493, %v1489
        %v1814 = vpack.c.b16 %v1498, %v1494
        %v1815 = vpack.c.b16 %v1499, %v1495
        %v1816 = vpack.c.b16 %v1500, %v1496
        %v1817 = vpack.c.b16 %v1501, %v1497
        %v1818 = vpack.c.b16 %v1506, %v1502
        %v1819 = vpack.c.b16 %v1507, %v1503
        %v1820 = vpack.c.b16 %v1508, %v1504
        %v1821 = vpack.c.b16 %v1509, %v1505
        %v1822 = vpack.c.b16 %v1514, %v1510
        %v1823 = vpack.c.b16 %v1515, %v1511
        %v1824 = vpack.c.b16 %v1516, %v1512
        %v1825 = vpack.c.b16 %v1517, %v1513
        %v1826 = vpack.c.b16 %v1522, %v1518
        %v1827 = vpack.c.b16 %v1523, %v1519
        %v1828 = vpack.c.b16 %v1524, %v1520
        %v1829 = vpack.c.b16 %v1525, %v1521
        %v1830 = vpack.c.b16 %v1530, %v1526
        %v1831 = vpack.c.b16 %v1531, %v1527
        %v1832 = vpack.c.b16 %v1532, %v1528
        %v1833 = vpack.c.b16 %v1533, %v1529
        %v1834 = vpack.c.b16 %v1538, %v1534
        %v1835 = vpack.c.b16 %v1539, %v1535
        %v1836 = vpack.c.b16 %v1540, %v1536
        %v1837 = vpack.c.b16 %v1541, %v1537
        %v1838 = vpack.c.b16 %v1546, %v1542
        %v1839 = vpack.c.b16 %v1547, %v1543
        %v1840 = vpack.c.b16 %v1548, %v1544
        %v1841 = vpack.c.b16 %v1549, %v1545
        %v1842 = vpack.c.b16 %v1554, %v1550
        %v1843 = vpack.c.b16 %v1555, %v1551
        %v1844 = vpack.c.b16 %v1556, %v1552
        %v1845 = vpack.c.b16 %v1557, %v1553
        %v1846 = vpack.c.b16 %v1562, %v1558
        %v1847 = vpack.c.b16 %v1563, %v1559
        %v1848 = vpack.c.b16 %v1564, %v1560
        %v1849 = vpack.c.b16 %v1565, %v1561
        %v1850 = vpack.c.b16 %v1570, %v1566
        %v1851 = vpack.c.b16 %v1571, %v1567
        %v1852 = vpack.c.b16 %v1572, %v1568
        %v1853 = vpack.c.b16 %v1573, %v1569
        %v1854 = vpack.c.b16 %v1578, %v1574
        %v1855 = vpack.c.b16 %v1579, %v1575
        %v1856 = vpack.c.b16 %v1580, %v1576
        %v1857 = vpack.c.b16 %v1581, %v1577
        %v1858 = vpack.c.b16 %v1586, %v1582
        %v1859 = vpack.c.b16 %v1587, %v1583
        %v1860 = vpack.c.b16 %v1588, %v1584
        %v1861 = vpack.c.b16 %v1589, %v1585
        %v1862 = vpack.c.b16 %v1594, %v1590
        %v1863 = vpack.c.b16 %v1595, %v1591
        %v1864 = vpack.c.b16 %v1596, %v1592
        %v1865 = vpack.c.b16 %v1597, %v1593
        %v1866 = vpack.c.b16 %v1602, %v1598
        %v1867 = vpack.c.b16 %v1603, %v1599
        %v1868 = vpack.c.b16 %v1604, %v1600
        %v1869 = vpack.c.b16 %v1605, %v1601
        %v1870 = vpack.c.b16 %v1610, %v1606
        %v1871 = vpack.c.b16 %v1611, %v1607
        %v1872 = vpack.c.b16 %v1612, %v1608
        %v1873 = vpack.c.b16 %v1613, %v1609
        %v1874 = vpack.c.b16 %v1618, %v1614
        %v1875 = vpack.c.b16 %v1619, %v1615
        %v1876 = vpack.c.b16 %v1620, %v1616
        %v1877 = vpack.c.b16 %v1621, %v1617
        %v1878 = vpack.c.b16 %v1626, %v1622
        %v1879 = vpack.c.b16 %v1627, %v1623
        %v1880 = vpack.c.b16 %v1628, %v1624
        %v1881 = vpack.c.b16 %v1629, %v1625
        %v1882 = vpack.c.b16 %v1634, %v1630
        %v1883 = vpack.c.b16 %v1635, %v1631
        %v1884 = vpack.c.b16 %v1636, %v1632
        %v1885 = vpack.c.b16 %v1637, %v1633
        %v1886 = vpack.c.b16 %v1642, %v1638
        %v1887 = vpack.c.b16 %v1643, %v1639
        %v1888 = vpack.c.b16 %v1644, %v1640
        %v1889 = vpack.c.b16 %v1645, %v1641
        %v1890 = vpack.c.b16 %v1650, %v1646
        %v1891 = vpack.c.b16 %v1651, %v1647
        %v1892 = vpack.c.b16 %v1652, %v1648
        %v1893 = vpack.c.b16 %v1653, %v1649
        %v1894 = vpack.c.b16 %v1658, %v1654
        %v1895 = vpack.c.b16 %v1659, %v1655
        %v1896 = vpack.c.b16 %v1660, %v1656
        %v1897 = vpack.c.b16 %v1661, %v1657
        %v1898 = vpack.c.b16 %v1666, %v1662
        %v1899 = vpack.c.b16 %v1667, %v1663
        %v1900 = vpack.c.b16 %v1668, %v1664
        %v1901 = vpack.c.b16 %v1669, %v1665
        %v1902 = vpack.c.b16 %v1674, %v1670
        %v1903 = vpack.c.b16 %v1675, %v1671
        %v1904 = vpack.c.b16 %v1676, %v1672
        %v1905 = vpack.c.b16 %v1677, %v1673
        %v1906 = vpack.c.b16 %v1682, %v1678
        %v1907 = vpack.c.b16 %v1683, %v1679
        %v1908 = vpack.c.b16 %v1684, %v1680
        %v1909 = vpack.c.b16 %v1685, %v1681
        %v1910 = vpack.c.b16 %v1690, %v1686
        %v1911 = vpack.c.b16 %v1691, %v1687
        %v1912 = vpack.c.b16 %v1692, %v1688
        %v1913 = vpack.c.b16 %v1693, %v1689
        %v1914 = vpack.c.b16 %v1698, %v1694
        %v1915 = vpack.c.b16 %v1699, %v1695
        %v1916 = vpack.c.b16 %v1700, %v1696
        %v1917 = vpack.c.b16 %v1701, %v1697
        %vm2134 = vcmask 785408
        %v2136 = vsel %vm2134, %v1008, 0
        %v2139 = vsel %vm2134, %v1015, 0
        %v2142 = vsel %vm2134, %v1022, 0
        %v2145 = vsel %vm2134, %v1029, 0
        %2147 = vmatprep.subr.bf16.mxu0 %v1703
        %2148 = vmatpush1.bf16.msra.mxu0 %v1702
        %2149 = vmatprep.subr.bf16.mxu0 %v1707
        %2150 = vmatpush1.bf16.msra.mxu0 %v1706
        %2151 = vmatprep.subr.bf16.mxu0 %v1711
        %2152 = vmatpush1.bf16.msra.mxu0 %v1710
        %2153 = vmatprep.subr.bf16.mxu0 %v1715
        %2154 = vmatpush1.bf16.msra.mxu0 %v1714
        %2155 = vmatprep.subr.bf16.mxu0 %v1719
        %2156 = vmatpush1.bf16.msra.mxu0 %v1718
        %2157 = vmatprep.subr.bf16.mxu0 %v1723
        %2158 = vmatpush1.bf16.msra.mxu0 %v1722
        %2159 = vmatprep.subr.bf16.mxu0 %v1727
        %2160 = vmatpush1.bf16.msra.mxu0 %v1726
        %2161 = vmatprep.subr.bf16.mxu0 %v1731
        %2162 = vmatpush1.bf16.msra.mxu0 %v1730
        %2163 = vmatprep.subr.bf16.mxu0 %v1735
        %2164 = vmatpush1.bf16.msra.mxu0 %v1734
        %2165 = vmatprep.subr.bf16.mxu0 %v1739
        %2166 = vmatpush1.bf16.msra.mxu0 %v1738
        %2167 = vmatprep.subr.bf16.mxu0 %v1743
        %2168 = vmatpush1.bf16.msra.mxu0 %v1742
        %2169 = vmatprep.subr.bf16.mxu0 %v1747
        %2170 = vmatpush1.bf16.msra.mxu0 %v1746
        %2171 = vmatprep.subr.bf16.mxu0 %v1751
        %2172 = vmatpush1.bf16.msra.mxu0 %v1750
        %2173 = vmatprep.subr.bf16.mxu0 %v1755
        %2174 = vmatpush1.bf16.msra.mxu0 %v1754
        %2175 = vmatprep.subr.bf16.mxu0 %v1759
        %2176 = vmatpush1.bf16.msra.mxu0 %v1758
        %2177 = vmatprep.subr.bf16.mxu0 %v1763
        %2178 = vmatpush1.bf16.msra.mxu0 %v1762
        %2179 = vmatprep.mubr.bf16.mxu0 %v1003
        %2180 = vmatmul.mubr.bf16.gmra.mrb[0].mxu0 %v1002
        %v2181 = vpop.f32.mrb[0].mxu0
        %v2182 = vadd.f32 %v877, %v2181
        %v2183 = vpop.f32.mrb[0].mxu0
        %v2184 = vadd.f32 %v877, %v2183
        %v2185 = vpop.f32.mrb[0].mxu0
        %v2186 = vadd.f32 %v882, %v2185
        %v2187 = vpop.f32.mrb[0].mxu0
        %v2188 = vadd.f32 %v882, %v2187
        %2189 = vmatprep.mubr.bf16.mxu0 %v1010
        %2190 = vmatmul.mubr.bf16.gmra.mrb[0].mxu0 %v1009
        %v2191 = vpop.f32.mrb[0].mxu0
        %v2192 = vadd.f32 %v887, %v2191
        %v2193 = vpop.f32.mrb[0].mxu0
        %v2194 = vadd.f32 %v887, %v2193
        %v2195 = vpop.f32.mrb[0].mxu0
        %v2196 = vadd.f32 %v892, %v2195
        %v2197 = vpop.f32.mrb[0].mxu0
        %v2198 = vadd.f32 %v892, %v2197
        %2199 = vmatprep.mubr.bf16.mxu0 %v1017
        %2200 = vmatmul.mubr.bf16.gmra.mrb[0].mxu0 %v1016
        %v2201 = vpop.f32.mrb[0].mxu0
        %v2202 = vadd.f32 %v897, %v2201
        %v2203 = vpop.f32.mrb[0].mxu0
        %v2204 = vadd.f32 %v897, %v2203
        %v2205 = vpop.f32.mrb[0].mxu0
        %v2206 = vadd.f32 %v902, %v2205
        %v2207 = vpop.f32.mrb[0].mxu0
        %v2208 = vadd.f32 %v902, %v2207
        %2209 = vmatprep.mubr.bf16.mxu0 %v1024
        %2210 = vmatmul.mubr.bf16.gmra.mrb[0].mxu0 %v1023
        %v2211 = vpop.f32.mrb[0].mxu0
        %v2212 = vadd.f32 %v907, %v2211
        %v2213 = vpop.f32.mrb[0].mxu0
        %v2214 = vadd.f32 %v907, %v2213
        %v2215 = vpop.f32.mrb[0].mxu0
        %v2216 = vadd.f32 %v912, %v2215
        %v2217 = vpop.f32.mrb[0].mxu0
        %v2218 = vadd.f32 %v912, %v2217
        %2219 = vdwg.mxu0
        %2220 = vmatprep.subr.bf16.mxu0 %v1767
        %2221 = vmatpush1.bf16.msra.mxu0 %v1766
        %2222 = vmatprep.subr.bf16.mxu0 %v1771
        %2223 = vmatpush1.bf16.msra.mxu0 %v1770
        %2224 = vmatprep.subr.bf16.mxu0 %v1775
        %2225 = vmatpush1.bf16.msra.mxu0 %v1774
        %2226 = vmatprep.subr.bf16.mxu0 %v1779
        %2227 = vmatpush1.bf16.msra.mxu0 %v1778
        %2228 = vmatprep.subr.bf16.mxu0 %v1783
        %2229 = vmatpush1.bf16.msra.mxu0 %v1782
        %2230 = vmatprep.subr.bf16.mxu0 %v1787
        %2231 = vmatpush1.bf16.msra.mxu0 %v1786
        %2232 = vmatprep.subr.bf16.mxu0 %v1791
        %2233 = vmatpush1.bf16.msra.mxu0 %v1790
        %2234 = vmatprep.subr.bf16.mxu0 %v1795
        %2235 = vmatpush1.bf16.msra.mxu0 %v1794
        %2236 = vmatprep.subr.bf16.mxu0 %v1799
        %2237 = vmatpush1.bf16.msra.mxu0 %v1798
        %2238 = vmatprep.subr.bf16.mxu0 %v1803
        %2239 = vmatpush1.bf16.msra.mxu0 %v1802
        %2240 = vmatprep.subr.bf16.mxu0 %v1807
        %2241 = vmatpush1.bf16.msra.mxu0 %v1806
        %2242 = vmatprep.subr.bf16.mxu0 %v1811
        %2243 = vmatpush1.bf16.msra.mxu0 %v1810
        %2244 = vmatprep.subr.bf16.mxu0 %v1815
        %2245 = vmatpush1.bf16.msra.mxu0 %v1814
        %2246 = vmatprep.subr.bf16.mxu0 %v1819
        %2247 = vmatpush1.bf16.msra.mxu0 %v1818
        %2248 = vmatprep.subr.bf16.mxu0 %v1823
        %2249 = vmatpush1.bf16.msra.mxu0 %v1822
        %2250 = vmatprep.subr.bf16.mxu0 %v1827
        %2251 = vmatpush1.bf16.msra.mxu0 %v1826
        %2252 = vmatprep.mubr.bf16.mxu0 %v1005
        %2253 = vmatmul.mubr.bf16.gmra.mrb[0].mxu0 %v1004
        %v2254 = vpop.f32.mrb[0].mxu0
        %v2255 = vadd.f32 %v2182, %v2254
        %v2256 = vpop.f32.mrb[0].mxu0
        %v2257 = vadd.f32 %v2184, %v2256
        %v2258 = vpop.f32.mrb[0].mxu0
        %v2259 = vadd.f32 %v2186, %v2258
        %v2260 = vpop.f32.mrb[0].mxu0
        %v2261 = vadd.f32 %v2188, %v2260
        %2262 = vmatprep.mubr.bf16.mxu0 %v1012
        %2263 = vmatmul.mubr.bf16.gmra.mrb[0].mxu0 %v1011
        %v2264 = vpop.f32.mrb[0].mxu0
        %v2265 = vadd.f32 %v2192, %v2264
        %v2266 = vpop.f32.mrb[0].mxu0
        %v2267 = vadd.f32 %v2194, %v2266
        %v2268 = vpop.f32.mrb[0].mxu0
        %v2269 = vadd.f32 %v2196, %v2268
        %v2270 = vpop.f32.mrb[0].mxu0
        %v2271 = vadd.f32 %v2198, %v2270
        %2272 = vmatprep.mubr.bf16.mxu0 %v1019
        %2273 = vmatmul.mubr.bf16.gmra.mrb[0].mxu0 %v1018
        %v2274 = vpop.f32.mrb[0].mxu0
        %v2275 = vadd.f32 %v2202, %v2274
        %v2276 = vpop.f32.mrb[0].mxu0
        %v2277 = vadd.f32 %v2204, %v2276
        %v2278 = vpop.f32.mrb[0].mxu0
        %v2279 = vadd.f32 %v2206, %v2278
        %v2280 = vpop.f32.mrb[0].mxu0
        %v2281 = vadd.f32 %v2208, %v2280
        %2282 = vmatprep.mubr.bf16.mxu0 %v1026
        %2283 = vmatmul.mubr.bf16.gmra.mrb[0].mxu0 %v1025
        %v2284 = vpop.f32.mrb[0].mxu0
        %v2285 = vadd.f32 %v2212, %v2284
        %v2286 = vpop.f32.mrb[0].mxu0
        %v2287 = vadd.f32 %v2214, %v2286
        %v2288 = vpop.f32.mrb[0].mxu0
        %v2289 = vadd.f32 %v2216, %v2288
        %v2290 = vpop.f32.mrb[0].mxu0
        %v2291 = vadd.f32 %v2218, %v2290
        %2292 = vdwg.mxu0
        %2293 = vmatprep.subr.bf16.mxu0 %v1831
        %2294 = vmatpush1.bf16.msra.mxu0 %v1830
        %2295 = vmatprep.subr.bf16.mxu0 %v1835
        %2296 = vmatpush1.bf16.msra.mxu0 %v1834
        %2297 = vmatprep.subr.bf16.mxu0 %v1839
        %2298 = vmatpush1.bf16.msra.mxu0 %v1838
        %2299 = vmatprep.subr.bf16.mxu0 %v1843
        %2300 = vmatpush1.bf16.msra.mxu0 %v1842
        %2301 = vmatprep.subr.bf16.mxu0 %v1847
        %2302 = vmatpush1.bf16.msra.mxu0 %v1846
        %2303 = vmatprep.subr.bf16.mxu0 %v1851
        %2304 = vmatpush1.bf16.msra.mxu0 %v1850
        %2305 = vmatprep.subr.bf16.mxu0 %v1855
        %2306 = vmatpush1.bf16.msra.mxu0 %v1854
        %2307 = vmatprep.subr.bf16.mxu0 %v1859
        %2308 = vmatpush1.bf16.msra.mxu0 %v1858
        %2309 = vmatprep.subr.bf16.mxu0 %v1863
        %2310 = vmatpush1.bf16.msra.mxu0 %v1862
        %2311 = vmatprep.subr.bf16.mxu0 %v1867
        %2312 = vmatpush1.bf16.msra.mxu0 %v1866
        %2313 = vmatprep.subr.bf16.mxu0 %v1871
        %2314 = vmatpush1.bf16.msra.mxu0 %v1870
        %2315 = vmatprep.subr.bf16.mxu0 %v1875
        %2316 = vmatpush1.bf16.msra.mxu0 %v1874
        %2317 = vmatprep.subr.bf16.mxu0 %v1879
        %2318 = vmatpush1.bf16.msra.mxu0 %v1878
        %2319 = vmatprep.subr.bf16.mxu0 %v1883
        %2320 = vmatpush1.bf16.msra.mxu0 %v1882
        %2321 = vmatprep.subr.bf16.mxu0 %v1887
        %2322 = vmatpush1.bf16.msra.mxu0 %v1886
        %2323 = vmatprep.subr.bf16.mxu0 %v1891
        %2324 = vmatpush1.bf16.msra.mxu0 %v1890
        %2325 = vmatprep.mubr.bf16.mxu0 %v1007
        %2326 = vmatmul.mubr.bf16.gmra.mrb[0].mxu0 %v1006
        %v2327 = vpop.f32.mrb[0].mxu0
        %v2328 = vadd.f32 %v2255, %v2327
        %v2329 = vpop.f32.mrb[0].mxu0
        %v2330 = vadd.f32 %v2257, %v2329
        %v2331 = vpop.f32.mrb[0].mxu0
        %v2332 = vadd.f32 %v2259, %v2331
        %v2333 = vpop.f32.mrb[0].mxu0
        %v2334 = vadd.f32 %v2261, %v2333
        %2335 = vmatprep.mubr.bf16.mxu0 %v1014
        %2336 = vmatmul.mubr.bf16.gmra.mrb[0].mxu0 %v1013
        %v2337 = vpop.f32.mrb[0].mxu0
        %v2338 = vadd.f32 %v2265, %v2337
        %v2339 = vpop.f32.mrb[0].mxu0
        %v2340 = vadd.f32 %v2267, %v2339
        %v2341 = vpop.f32.mrb[0].mxu0
        %v2342 = vadd.f32 %v2269, %v2341
        %v2343 = vpop.f32.mrb[0].mxu0
        %v2344 = vadd.f32 %v2271, %v2343
        %2345 = vmatprep.mubr.bf16.mxu0 %v1021
        %2346 = vmatmul.mubr.bf16.gmra.mrb[0].mxu0 %v1020
        %v2347 = vpop.f32.mrb[0].mxu0
        %v2348 = vadd.f32 %v2275, %v2347
        %v2349 = vpop.f32.mrb[0].mxu0
        %v2350 = vadd.f32 %v2277, %v2349
        %v2351 = vpop.f32.mrb[0].mxu0
        %v2352 = vadd.f32 %v2279, %v2351
        %v2353 = vpop.f32.mrb[0].mxu0
        %v2354 = vadd.f32 %v2281, %v2353
        %2355 = vmatprep.mubr.bf16.mxu0 %v1028
        %2356 = vmatmul.mubr.bf16.gmra.mrb[0].mxu0 %v1027
        %v2357 = vpop.f32.mrb[0].mxu0
        %v2358 = vadd.f32 %v2285, %v2357
        %v2359 = vpop.f32.mrb[0].mxu0
        %v2360 = vadd.f32 %v2287, %v2359
        %v2361 = vpop.f32.mrb[0].mxu0
        %v2362 = vadd.f32 %v2289, %v2361
        %v2363 = vpop.f32.mrb[0].mxu0
        %v2364 = vadd.f32 %v2291, %v2363
        %2365 = vdwg.mxu0
        %2366 = vmatprep.subr.bf16.mxu0 %v1895
        %2367 = vmatpush1.bf16.msra.mxu0 %v1894
        %2368 = vmatprep.subr.bf16.mxu0 %v1899
        %2369 = vmatpush1.bf16.msra.mxu0 %v1898
        %2370 = vmatprep.subr.bf16.mxu0 %v1903
        %2371 = vmatpush1.bf16.msra.mxu0 %v1902
        %2372 = vmatprep.subr.bf16.mxu0 %v1907
        %2373 = vmatpush1.bf16.msra.mxu0 %v1906
        %2374 = vmatprep.subr.bf16.mxu0 %v1911
        %2375 = vmatpush1.bf16.msra.mxu0 %v1910
        %2376 = vmatprep.subr.bf16.mxu0 %v1915
        %2377 = vmatpush1.bf16.msra.mxu0 %v1914
        %2378 = vmatprep.subr.bf16.mxu0 0
        %2379 = vmatpush1.bf16.msra.mxu0 0
        %2380 = vmatprep.subr.bf16.mxu0 0
        %2381 = vmatpush1.bf16.msra.mxu0 0
        %2382 = vmatprep.subr.bf16.mxu0 0
        %2383 = vmatpush1.bf16.msra.mxu0 0
        %2384 = vmatprep.subr.bf16.mxu0 0
        %2385 = vmatpush1.bf16.msra.mxu0 0
        %2386 = vmatprep.subr.bf16.mxu0 0
        %2387 = vmatpush1.bf16.msra.mxu0 0
        %2388 = vmatprep.subr.bf16.mxu0 0
        %2389 = vmatpush1.bf16.msra.mxu0 0
        %2390 = vmatprep.subr.bf16.mxu0 0
        %2391 = vmatpush1.bf16.msra.mxu0 0
        %2392 = vmatprep.subr.bf16.mxu0 0
        %2393 = vmatpush1.bf16.msra.mxu0 0
        %2394 = vmatprep.subr.bf16.mxu0 0
        %2395 = vmatpush1.bf16.msra.mxu0 0
        %2396 = vmatprep.subr.bf16.mxu0 0
        %2397 = vmatpush1.bf16.msra.mxu0 0
        %2398 = vmatprep.mubr.bf16.mxu0 0
        %2399 = vmatmul.mubr.bf16.gmra.mrb[0].mxu0 %v2136
        %v2400 = vpop.f32.mrb[0].mxu0
        %v2401 = vadd.f32 %v2328, %v2400
        %v2402 = vpop.f32.mrb[0].mxu0
        %v2403 = vadd.f32 %v2330, %v2402
        %v2404 = vpop.f32.mrb[0].mxu0
        %v2405 = vadd.f32 %v2332, %v2404
        %v2406 = vpop.f32.mrb[0].mxu0
        %v2407 = vadd.f32 %v2334, %v2406
        %2408 = vmatprep.mubr.bf16.mxu0 0
        %2409 = vmatmul.mubr.bf16.gmra.mrb[0].mxu0 %v2139
        %v2410 = vpop.f32.mrb[0].mxu0
        %v2411 = vadd.f32 %v2338, %v2410
        %v2412 = vpop.f32.mrb[0].mxu0
        %v2413 = vadd.f32 %v2340, %v2412
        %v2414 = vpop.f32.mrb[0].mxu0
        %v2415 = vadd.f32 %v2342, %v2414
        %v2416 = vpop.f32.mrb[0].mxu0
        %v2417 = vadd.f32 %v2344, %v2416
        %2418 = vmatprep.mubr.bf16.mxu0 0
        %2419 = vmatmul.mubr.bf16.gmra.mrb[0].mxu0 %v2142
        %v2420 = vpop.f32.mrb[0].mxu0
        %v2421 = vadd.f32 %v2348, %v2420
        %v2422 = vpop.f32.mrb[0].mxu0
        %v2423 = vadd.f32 %v2350, %v2422
        %v2424 = vpop.f32.mrb[0].mxu0
        %v2425 = vadd.f32 %v2352, %v2424
        %v2426 = vpop.f32.mrb[0].mxu0
        %v2427 = vadd.f32 %v2354, %v2426
        %2428 = vmatprep.mubr.bf16.mxu0 0
        %2429 = vmatmul.mubr.bf16.gmra.mrb[0].mxu0 %v2145
        %v2430 = vpop.f32.mrb[0].mxu0
        %v2431 = vadd.f32 %v2358, %v2430
        %v2432 = vpop.f32.mrb[0].mxu0
        %v2433 = vadd.f32 %v2360, %v2432
        %v2434 = vpop.f32.mrb[0].mxu0
        %v2435 = vadd.f32 %v2362, %v2434
        %v2436 = vpop.f32.mrb[0].mxu0
        %v2437 = vadd.f32 %v2364, %v2436
        %2438 = vdwg.mxu0
        %2439 = vmatprep.subr.bf16.mxu0 %v1705
        %2440 = vmatpush1.bf16.msra.mxu0 %v1704
        %2441 = vmatprep.subr.bf16.mxu0 %v1709
        %2442 = vmatpush1.bf16.msra.mxu0 %v1708
        %2443 = vmatprep.subr.bf16.mxu0 %v1713
        %2444 = vmatpush1.bf16.msra.mxu0 %v1712
        %2445 = vmatprep.subr.bf16.mxu0 %v1717
        %2446 = vmatpush1.bf16.msra.mxu0 %v1716
        %2447 = vmatprep.subr.bf16.mxu0 %v1721
        %2448 = vmatpush1.bf16.msra.mxu0 %v1720
        %2449 = vmatprep.subr.bf16.mxu0 %v1725
        %2450 = vmatpush1.bf16.msra.mxu0 %v1724
        %2451 = vmatprep.subr.bf16.mxu0 %v1729
        %2452 = vmatpush1.bf16.msra.mxu0 %v1728
        %2453 = vmatprep.subr.bf16.mxu0 %v1733
        %2454 = vmatpush1.bf16.msra.mxu0 %v1732
        %2455 = vmatprep.subr.bf16.mxu0 %v1737
        %2456 = vmatpush1.bf16.msra.mxu0 %v1736
        %2457 = vmatprep.subr.bf16.mxu0 %v1741
        %2458 = vmatpush1.bf16.msra.mxu0 %v1740
        %2459 = vmatprep.subr.bf16.mxu0 %v1745
        %2460 = vmatpush1.bf16.msra.mxu0 %v1744
        %2461 = vmatprep.subr.bf16.mxu0 %v1749
        %2462 = vmatpush1.bf16.msra.mxu0 %v1748
        %2463 = vmatprep.subr.bf16.mxu0 %v1753
        %2464 = vmatpush1.bf16.msra.mxu0 %v1752
        %2465 = vmatprep.subr.bf16.mxu0 %v1757
        %2466 = vmatpush1.bf16.msra.mxu0 %v1756
        %2467 = vmatprep.subr.bf16.mxu0 %v1761
        %2468 = vmatpush1.bf16.msra.mxu0 %v1760
        %2469 = vmatprep.subr.bf16.mxu0 %v1765
        %2470 = vmatpush1.bf16.msra.mxu0 %v1764
        %2471 = vmatprep.mubr.bf16.mxu0 %v1003
        %2472 = vmatmul.mubr.bf16.gmra.mrb[0].mxu0 %v1002
        %v2473 = vpop.f32.mrb[0].mxu0
        %v2474 = vadd.f32 %v877, %v2473
        %v2475 = vpop.f32.mrb[0].mxu0
        %v2476 = vadd.f32 %v877, %v2475
        %v2477 = vpop.f32.mrb[0].mxu0
        %v2478 = vadd.f32 %v882, %v2477
        %v2479 = vpop.f32.mrb[0].mxu0
        %v2480 = vadd.f32 %v882, %v2479
        %2481 = vmatprep.mubr.bf16.mxu0 %v1010
        %2482 = vmatmul.mubr.bf16.gmra.mrb[0].mxu0 %v1009
        %v2483 = vpop.f32.mrb[0].mxu0
        %v2484 = vadd.f32 %v887, %v2483
        %v2485 = vpop.f32.mrb[0].mxu0
        %v2486 = vadd.f32 %v887, %v2485
        %v2487 = vpop.f32.mrb[0].mxu0
        %v2488 = vadd.f32 %v892, %v2487
        %v2489 = vpop.f32.mrb[0].mxu0
        %v2490 = vadd.f32 %v892, %v2489
        %2491 = vmatprep.mubr.bf16.mxu0 %v1017
        %2492 = vmatmul.mubr.bf16.gmra.mrb[0].mxu0 %v1016
        %v2493 = vpop.f32.mrb[0].mxu0
        %v2494 = vadd.f32 %v897, %v2493
        %v2495 = vpop.f32.mrb[0].mxu0
        %v2496 = vadd.f32 %v897, %v2495
        %v2497 = vpop.f32.mrb[0].mxu0
        %v2498 = vadd.f32 %v902, %v2497
        %v2499 = vpop.f32.mrb[0].mxu0
        %v2500 = vadd.f32 %v902, %v2499
        %2501 = vmatprep.mubr.bf16.mxu0 %v1024
        %2502 = vmatmul.mubr.bf16.gmra.mrb[0].mxu0 %v1023
        %v2503 = vpop.f32.mrb[0].mxu0
        %v2504 = vadd.f32 %v907, %v2503
        %v2505 = vpop.f32.mrb[0].mxu0
        %v2506 = vadd.f32 %v907, %v2505
        %v2507 = vpop.f32.mrb[0].mxu0
        %v2508 = vadd.f32 %v912, %v2507
        %v2509 = vpop.f32.mrb[0].mxu0
        %v2510 = vadd.f32 %v912, %v2509
        %2511 = vdwg.mxu0
        %2512 = vmatprep.subr.bf16.mxu0 %v1769
        %2513 = vmatpush1.bf16.msra.mxu0 %v1768
        %2514 = vmatprep.subr.bf16.mxu0 %v1773
        %2515 = vmatpush1.bf16.msra.mxu0 %v1772
        %2516 = vmatprep.subr.bf16.mxu0 %v1777
        %2517 = vmatpush1.bf16.msra.mxu0 %v1776
        %2518 = vmatprep.subr.bf16.mxu0 %v1781
        %2519 = vmatpush1.bf16.msra.mxu0 %v1780
        %2520 = vmatprep.subr.bf16.mxu0 %v1785
        %2521 = vmatpush1.bf16.msra.mxu0 %v1784
        %2522 = vmatprep.subr.bf16.mxu0 %v1789
        %2523 = vmatpush1.bf16.msra.mxu0 %v1788
        %2524 = vmatprep.subr.bf16.mxu0 %v1793
        %2525 = vmatpush1.bf16.msra.mxu0 %v1792
        %2526 = vmatprep.subr.bf16.mxu0 %v1797
        %2527 = vmatpush1.bf16.msra.mxu0 %v1796
        %2528 = vmatprep.subr.bf16.mxu0 %v1801
        %2529 = vmatpush1.bf16.msra.mxu0 %v1800
        %2530 = vmatprep.subr.bf16.mxu0 %v1805
        %2531 = vmatpush1.bf16.msra.mxu0 %v1804
        %2532 = vmatprep.subr.bf16.mxu0 %v1809
        %2533 = vmatpush1.bf16.msra.mxu0 %v1808
        %2534 = vmatprep.subr.bf16.mxu0 %v1813
        %2535 = vmatpush1.bf16.msra.mxu0 %v1812
        %2536 = vmatprep.subr.bf16.mxu0 %v1817
        %2537 = vmatpush1.bf16.msra.mxu0 %v1816
        %2538 = vmatprep.subr.bf16.mxu0 %v1821
        %2539 = vmatpush1.bf16.msra.mxu0 %v1820
        %2540 = vmatprep.subr.bf16.mxu0 %v1825
        %2541 = vmatpush1.bf16.msra.mxu0 %v1824
        %2542 = vmatprep.subr.bf16.mxu0 %v1829
        %2543 = vmatpush1.bf16.msra.mxu0 %v1828
        %2544 = vmatprep.mubr.bf16.mxu0 %v1005
        %2545 = vmatmul.mubr.bf16.gmra.mrb[0].mxu0 %v1004
        %v2546 = vpop.f32.mrb[0].mxu0
        %v2547 = vadd.f32 %v2474, %v2546
        %v2548 = vpop.f32.mrb[0].mxu0
        %v2549 = vadd.f32 %v2476, %v2548
        %v2550 = vpop.f32.mrb[0].mxu0
        %v2551 = vadd.f32 %v2478, %v2550
        %v2552 = vpop.f32.mrb[0].mxu0
        %v2553 = vadd.f32 %v2480, %v2552
        %2554 = vmatprep.mubr.bf16.mxu0 %v1012
        %2555 = vmatmul.mubr.bf16.gmra.mrb[0].mxu0 %v1011
        %v2556 = vpop.f32.mrb[0].mxu0
        %v2557 = vadd.f32 %v2484, %v2556
        %v2558 = vpop.f32.mrb[0].mxu0
        %v2559 = vadd.f32 %v2486, %v2558
        %v2560 = vpop.f32.mrb[0].mxu0
        %v2561 = vadd.f32 %v2488, %v2560
        %v2562 = vpop.f32.mrb[0].mxu0
        %v2563 = vadd.f32 %v2490, %v2562
        %2564 = vmatprep.mubr.bf16.mxu0 %v1019
        %2565 = vmatmul.mubr.bf16.gmra.mrb[0].mxu0 %v1018
        %v2566 = vpop.f32.mrb[0].mxu0
        %v2567 = vadd.f32 %v2494, %v2566
        %v2568 = vpop.f32.mrb[0].mxu0
        %v2569 = vadd.f32 %v2496, %v2568
        %v2570 = vpop.f32.mrb[0].mxu0
        %v2571 = vadd.f32 %v2498, %v2570
        %v2572 = vpop.f32.mrb[0].mxu0
        %v2573 = vadd.f32 %v2500, %v2572
        %2574 = vmatprep.mubr.bf16.mxu0 %v1026
        %2575 = vmatmul.mubr.bf16.gmra.mrb[0].mxu0 %v1025
        %v2576 = vpop.f32.mrb[0].mxu0
        %v2577 = vadd.f32 %v2504, %v2576
        %v2578 = vpop.f32.mrb[0].mxu0
        %v2579 = vadd.f32 %v2506, %v2578
        %v2580 = vpop.f32.mrb[0].mxu0
        %v2581 = vadd.f32 %v2508, %v2580
        %v2582 = vpop.f32.mrb[0].mxu0
        %v2583 = vadd.f32 %v2510, %v2582
        %2584 = vdwg.mxu0
        %2585 = vmatprep.subr.bf16.mxu0 %v1833
        %2586 = vmatpush1.bf16.msra.mxu0 %v1832
        %2587 = vmatprep.subr.bf16.mxu0 %v1837
        %2588 = vmatpush1.bf16.msra.mxu0 %v1836
        %2589 = vmatprep.subr.bf16.mxu0 %v1841
        %2590 = vmatpush1.bf16.msra.mxu0 %v1840
        %2591 = vmatprep.subr.bf16.mxu0 %v1845
        %2592 = vmatpush1.bf16.msra.mxu0 %v1844
        %2593 = vmatprep.subr.bf16.mxu0 %v1849
        %2594 = vmatpush1.bf16.msra.mxu0 %v1848
        %2595 = vmatprep.subr.bf16.mxu0 %v1853
        %2596 = vmatpush1.bf16.msra.mxu0 %v1852
        %2597 = vmatprep.subr.bf16.mxu0 %v1857
        %2598 = vmatpush1.bf16.msra.mxu0 %v1856
        %2599 = vmatprep.subr.bf16.mxu0 %v1861
        %2600 = vmatpush1.bf16.msra.mxu0 %v1860
        %2601 = vmatprep.subr.bf16.mxu0 %v1865
        %2602 = vmatpush1.bf16.msra.mxu0 %v1864
        %2603 = vmatprep.subr.bf16.mxu0 %v1869
        %2604 = vmatpush1.bf16.msra.mxu0 %v1868
        %2605 = vmatprep.subr.bf16.mxu0 %v1873
        %2606 = vmatpush1.bf16.msra.mxu0 %v1872
        %2607 = vmatprep.subr.bf16.mxu0 %v1877
        %2608 = vmatpush1.bf16.msra.mxu0 %v1876
        %2609 = vmatprep.subr.bf16.mxu0 %v1881
        %2610 = vmatpush1.bf16.msra.mxu0 %v1880
        %2611 = vmatprep.subr.bf16.mxu0 %v1885
        %2612 = vmatpush1.bf16.msra.mxu0 %v1884
        %2613 = vmatprep.subr.bf16.mxu0 %v1889
        %2614 = vmatpush1.bf16.msra.mxu0 %v1888
        %2615 = vmatprep.subr.bf16.mxu0 %v1893
        %2616 = vmatpush1.bf16.msra.mxu0 %v1892
        %2617 = vmatprep.mubr.bf16.mxu0 %v1007
        %2618 = vmatmul.mubr.bf16.gmra.mrb[0].mxu0 %v1006
        %v2619 = vpop.f32.mrb[0].mxu0
        %v2620 = vadd.f32 %v2547, %v2619
        %v2621 = vpop.f32.mrb[0].mxu0
        %v2622 = vadd.f32 %v2549, %v2621
        %v2623 = vpop.f32.mrb[0].mxu0
        %v2624 = vadd.f32 %v2551, %v2623
        %v2625 = vpop.f32.mrb[0].mxu0
        %v2626 = vadd.f32 %v2553, %v2625
        %2627 = vmatprep.mubr.bf16.mxu0 %v1014
        %2628 = vmatmul.mubr.bf16.gmra.mrb[0].mxu0 %v1013
        %v2629 = vpop.f32.mrb[0].mxu0
        %v2630 = vadd.f32 %v2557, %v2629
        %v2631 = vpop.f32.mrb[0].mxu0
        %v2632 = vadd.f32 %v2559, %v2631
        %v2633 = vpop.f32.mrb[0].mxu0
        %v2634 = vadd.f32 %v2561, %v2633
        %v2635 = vpop.f32.mrb[0].mxu0
        %v2636 = vadd.f32 %v2563, %v2635
        %2637 = vmatprep.mubr.bf16.mxu0 %v1021
        %2638 = vmatmul.mubr.bf16.gmra.mrb[0].mxu0 %v1020
        %v2639 = vpop.f32.mrb[0].mxu0
        %v2640 = vadd.f32 %v2567, %v2639
        %v2641 = vpop.f32.mrb[0].mxu0
        %v2642 = vadd.f32 %v2569, %v2641
        %v2643 = vpop.f32.mrb[0].mxu0
        %v2644 = vadd.f32 %v2571, %v2643
        %v2645 = vpop.f32.mrb[0].mxu0
        %v2646 = vadd.f32 %v2573, %v2645
        %2647 = vmatprep.mubr.bf16.mxu0 %v1028
        %2648 = vmatmul.mubr.bf16.gmra.mrb[0].mxu0 %v1027
        %v2649 = vpop.f32.mrb[0].mxu0
        %v2650 = vadd.f32 %v2577, %v2649
        %v2651 = vpop.f32.mrb[0].mxu0
        %v2652 = vadd.f32 %v2579, %v2651
        %v2653 = vpop.f32.mrb[0].mxu0
        %v2654 = vadd.f32 %v2581, %v2653
        %v2655 = vpop.f32.mrb[0].mxu0
        %v2656 = vadd.f32 %v2583, %v2655
        %2657 = vdwg.mxu0
        %2658 = vmatprep.subr.bf16.mxu0 %v1897
        %2659 = vmatpush1.bf16.msra.mxu0 %v1896
        %2660 = vmatprep.subr.bf16.mxu0 %v1901
        %2661 = vmatpush1.bf16.msra.mxu0 %v1900
        %2662 = vmatprep.subr.bf16.mxu0 %v1905
        %2663 = vmatpush1.bf16.msra.mxu0 %v1904
        %2664 = vmatprep.subr.bf16.mxu0 %v1909
        %2665 = vmatpush1.bf16.msra.mxu0 %v1908
        %2666 = vmatprep.subr.bf16.mxu0 %v1913
        %2667 = vmatpush1.bf16.msra.mxu0 %v1912
        %2668 = vmatprep.subr.bf16.mxu0 %v1917
        %2669 = vmatpush1.bf16.msra.mxu0 %v1916
        %2670 = vmatprep.subr.bf16.mxu0 0
        %2671 = vmatpush1.bf16.msra.mxu0 0
        %2672 = vmatprep.subr.bf16.mxu0 0
        %2673 = vmatpush1.bf16.msra.mxu0 0
        %2674 = vmatprep.subr.bf16.mxu0 0
        %2675 = vmatpush1.bf16.msra.mxu0 0
        %2676 = vmatprep.subr.bf16.mxu0 0
        %2677 = vmatpush1.bf16.msra.mxu0 0
        %2678 = vmatprep.subr.bf16.mxu0 0
        %2679 = vmatpush1.bf16.msra.mxu0 0
        %2680 = vmatprep.subr.bf16.mxu0 0
        %2681 = vmatpush1.bf16.msra.mxu0 0
        %2682 = vmatprep.subr.bf16.mxu0 0
        %2683 = vmatpush1.bf16.msra.mxu0 0
        %2684 = vmatprep.subr.bf16.mxu0 0
        %2685 = vmatpush1.bf16.msra.mxu0 0
        %2686 = vmatprep.subr.bf16.mxu0 0
        %2687 = vmatpush1.bf16.msra.mxu0 0
        %2688 = vmatprep.subr.bf16.mxu0 0
        %2689 = vmatpush1.bf16.msra.mxu0 0
        %2690 = vmatprep.mubr.bf16.mxu0 0
        %2691 = vmatmul.mubr.bf16.gmra.mrb[0].mxu0 %v2136
        %v2692 = vpop.f32.mrb[0].mxu0
        %v2693 = vadd.f32 %v2620, %v2692
        %v2694 = vpop.f32.mrb[0].mxu0
        %v2695 = vadd.f32 %v2622, %v2694
        %v2696 = vpop.f32.mrb[0].mxu0
        %v2697 = vadd.f32 %v2624, %v2696
        %v2698 = vpop.f32.mrb[0].mxu0
        %v2699 = vadd.f32 %v2626, %v2698
        %2700 = vmatprep.mubr.bf16.mxu0 0
        %2701 = vmatmul.mubr.bf16.gmra.mrb[0].mxu0 %v2139
        %v2702 = vpop.f32.mrb[0].mxu0
        %v2703 = vadd.f32 %v2630, %v2702
        %v2704 = vpop.f32.mrb[0].mxu0
        %v2705 = vadd.f32 %v2632, %v2704
        %v2706 = vpop.f32.mrb[0].mxu0
        %v2707 = vadd.f32 %v2634, %v2706
        %v2708 = vpop.f32.mrb[0].mxu0
        %v2709 = vadd.f32 %v2636, %v2708
        %2710 = vmatprep.mubr.bf16.mxu0 0
        %2711 = vmatmul.mubr.bf16.gmra.mrb[0].mxu0 %v2142
        %v2712 = vpop.f32.mrb[0].mxu0
        %v2713 = vadd.f32 %v2640, %v2712
        %v2714 = vpop.f32.mrb[0].mxu0
        %v2715 = vadd.f32 %v2642, %v2714
        %v2716 = vpop.f32.mrb[0].mxu0
        %v2717 = vadd.f32 %v2644, %v2716
        %v2718 = vpop.f32.mrb[0].mxu0
        %v2719 = vadd.f32 %v2646, %v2718
        %2720 = vmatprep.mubr.bf16.mxu0 0
        %2721 = vmatmul.mubr.bf16.gmra.mrb[0].mxu0 %v2145
        %v2722 = vpop.f32.mrb[0].mxu0
        %v2723 = vadd.f32 %v2650, %v2722
        %v2724 = vpop.f32.mrb[0].mxu0
        %v2725 = vadd.f32 %v2652, %v2724
        %v2726 = vpop.f32.mrb[0].mxu0
        %v2727 = vadd.f32 %v2654, %v2726
        %v2728 = vpop.f32.mrb[0].mxu0
        %v2729 = vadd.f32 %v2656, %v2728
        %2730 = vdwg.mxu0
        %v2731 = vpack.c.bf16 %v2405, %v2401
        %v2732 = vpack.c.bf16 %v2407, %v2403
        %v2733 = vpack.c.bf16 %v2697, %v2693
        %v2734 = vpack.c.bf16 %v2699, %v2695
        %v2735 = vpack.c.bf16 %v2415, %v2411
        %v2736 = vpack.c.bf16 %v2417, %v2413
        %v2737 = vpack.c.bf16 %v2707, %v2703
        %v2738 = vpack.c.bf16 %v2709, %v2705
        %v2739 = vpack.c.bf16 %v2425, %v2421
        %v2740 = vpack.c.bf16 %v2427, %v2423
        %v2741 = vpack.c.bf16 %v2717, %v2713
        %v2742 = vpack.c.bf16 %v2719, %v2715
        %v2743 = vpack.c.bf16 %v2435, %v2431
        %v2744 = vpack.c.bf16 %v2437, %v2433
        %v2745 = vpack.c.bf16 %v2727, %v2723
        %v2746 = vpack.c.bf16 %v2729, %v2725
        %v2763 = vunpack.c.l.b16 %v2731
        %v2764 = vunpack.c.l.b16 %v2732
        %v2765 = vunpack.c.l.b16 %v2733
        %v2766 = vunpack.c.l.b16 %v2734
        %v2767 = vunpack.c.h.b16 %v2731
        %v2768 = vunpack.c.h.b16 %v2732
        %v2769 = vunpack.c.h.b16 %v2733
        %v2770 = vunpack.c.h.b16 %v2734
        %v2771 = vunpack.c.l.b16 %v2735
        %v2772 = vunpack.c.l.b16 %v2736
        %v2773 = vunpack.c.l.b16 %v2737
        %v2774 = vunpack.c.l.b16 %v2738
        %v2775 = vunpack.c.h.b16 %v2735
        %v2776 = vunpack.c.h.b16 %v2736
        %v2777 = vunpack.c.h.b16 %v2737
        %v2778 = vunpack.c.h.b16 %v2738
        %v2779 = vunpack.c.l.b16 %v2739
        %v2780 = vunpack.c.l.b16 %v2740
        %v2781 = vunpack.c.l.b16 %v2741
        %v2782 = vunpack.c.l.b16 %v2742
        %v2783 = vunpack.c.h.b16 %v2739
        %v2784 = vunpack.c.h.b16 %v2740
        %v2785 = vunpack.c.h.b16 %v2741
        %v2786 = vunpack.c.h.b16 %v2742
        %v2787 = vunpack.c.l.b16 %v2743
        %v2788 = vunpack.c.l.b16 %v2744
        %v2789 = vunpack.c.l.b16 %v2745
        %v2790 = vunpack.c.l.b16 %v2746
        %v2791 = vunpack.c.h.b16 %v2743
        %v2792 = vunpack.c.h.b16 %v2744
        %v2793 = vunpack.c.h.b16 %v2745
        %v2794 = vunpack.c.h.b16 %v2746
        %v2795 = vpack.c.b16 %v2764, %v2763
        %v2796 = vpack.c.b16 %v2766, %v2765
        %v2797 = vpack.c.b16 %v2768, %v2767
        %v2798 = vpack.c.b16 %v2770, %v2769
        %v2799 = vpack.c.b16 %v2772, %v2771
        %v2800 = vpack.c.b16 %v2774, %v2773
        %v2801 = vpack.c.b16 %v2776, %v2775
        %v2802 = vpack.c.b16 %v2778, %v2777
        %v2803 = vpack.c.b16 %v2780, %v2779
        %v2804 = vpack.c.b16 %v2782, %v2781
        %v2805 = vpack.c.b16 %v2784, %v2783
        %v2806 = vpack.c.b16 %v2786, %v2785
        %v2807 = vpack.c.b16 %v2788, %v2787
        %v2808 = vpack.c.b16 %v2790, %v2789
        %v2809 = vpack.c.b16 %v2792, %v2791
        %v2810 = vpack.c.b16 %v2794, %v2793
        %2827 = vst [vmem:[%s614] sm:$0xff] %v2795
        %2828 = vst [vmem:[%s614 + $0x8] sm:$0xff] %v2796
        %2829 = vst [vmem:[%s614 + $0x10] sm:$0xff] %v2797
        %2830 = vst [vmem:[%s614 + $0x18] sm:$0xff] %v2798
        %2831 = vst [vmem:[%s614 + $0x20] sm:$0xff] %v2799
        %2832 = vst [vmem:[%s614 + $0x28] sm:$0xff] %v2800
        %2833 = vst [vmem:[%s614 + $0x30] sm:$0xff] %v2801
        %2834 = vst [vmem:[%s614 + $0x38] sm:$0xff] %v2802
        %2835 = vst [vmem:[%s614 + $0x40] sm:$0xff] %v2803
        %2836 = vst [vmem:[%s614 + $0x48] sm:$0xff] %v2804
        %2837 = vst [vmem:[%s614 + $0x50] sm:$0xff] %v2805
        %2838 = vst [vmem:[%s614 + $0x58] sm:$0xff] %v2806
        %2839 = vst [vmem:[%s614 + $0x60] sm:$0xff] %v2807
        %2840 = vst [vmem:[%s614 + $0x68] sm:$0xff] %v2808
        %2841 = vst [vmem:[%s614 + $0x70] sm:$0xff] %v2809
        %2842 = vst [vmem:[%s614 + $0x78] sm:$0xff] %v2810
        %s2843 = sand.u32 %s90, 1
        %s2844 = sand.u32 %s90, 1
        %s2845 = smul.addr %s2844, 128
        %s2846 = scalar_lea.vmem [#allocation3], %s2845
        // Predicated region
        $region56: #{forward.14} parent=50 // pred_check
          %p2847 = pneg %p100
        $region57: #{forward.14} parent=50 // pred_check_branch
          %2849 = sbr.rel (%p2847) target = $region59
        $region58: #{forward.14} parent=50 // pred_region
          %s2850 = smul.u32 4, %s14
          %s2851 = smul.addr %s2850, 4
          %s2852 = scalar_lea.vmem %s3, %s2851
          // Predicated region
          $region60: #{forward.14} parent=58 // pred_check
            _
          $region61: #{forward.14} parent=58 // pred_check_branch
            %2854 = sbr.rel (0) target = $region63
          $region62: #{forward.14} parent=58 // pred_region
            // Predicated region
            $region64: #{forward.14} parent=62 // pred_check
              _
            $region65: #{forward.14} parent=62 // pred_check_branch
              %2856 = sbr.rel (0) target = $region67
            $region66: #{forward.14} parent=62 // pred_region
              loop: start=0, step=1, limit=1
              $region68: #{forward.14} parent=66 // loop_pre_header
                _
              $region69: #{forward.14} parent=66 // loop_header
                %s2858 = sphi 0, %s2862
                %p2859 = scmp.ge.s32.totalorder %s2858, 1
                %s2863 = sphi %s2846, %s2846
                %s2864 = sphi %s2852, %s2852
              $region70: #{forward.14} parent=66 // loop_header_branch
                %2861 = sbr.rel (%p2859) target = $region74
              $region71: #{forward.14} parent=66 // loop_body
                %v2865 = vld [vmem:[%s2863] sm:$0xff]
                %2866 = vst [vmem:[%s2864] sm:$0xff] %v2865
                %v2867 = vld [vmem:[%s2863 + $0x8] sm:$0xff]
                %2868 = vst [vmem:[%s2864 + $0x8] sm:$0xff] %v2867
                %v2869 = vld [vmem:[%s2863 + $0x10] sm:$0xff]
                %2870 = vst [vmem:[%s2864 + $0x40] sm:$0xff] %v2869
                %v2871 = vld [vmem:[%s2863 + $0x18] sm:$0xff]
                %2872 = vst [vmem:[%s2864 + $0x48] sm:$0xff] %v2871
                %v2873 = vld [vmem:[%s2863 + $0x20] sm:$0xff]
                %2874 = vst [vmem:[%s2864 + $0x80] sm:$0xff] %v2873
                %v2875 = vld [vmem:[%s2863 + $0x28] sm:$0xff]
                %2876 = vst [vmem:[%s2864 + $0x88] sm:$0xff] %v2875
                %v2877 = vld [vmem:[%s2863 + $0x30] sm:$0xff]
                %2878 = vst [vmem:[%s2864 + $0xc0] sm:$0xff] %v2877
                %v2879 = vld [vmem:[%s2863 + $0x38] sm:$0xff]
                %2880 = vst [vmem:[%s2864 + $0xc8] sm:$0xff] %v2879
                %v2881 = vld [vmem:[%s2863 + $0x40] sm:$0xff]
                %2882 = vst [vmem:[%s2864 + $0x100] sm:$0xff] %v2881
                %v2883 = vld [vmem:[%s2863 + $0x48] sm:$0xff]
                %2884 = vst [vmem:[%s2864 + $0x108] sm:$0xff] %v2883
                %v2885 = vld [vmem:[%s2863 + $0x50] sm:$0xff]
                %2886 = vst [vmem:[%s2864 + $0x140] sm:$0xff] %v2885
                %v2887 = vld [vmem:[%s2863 + $0x58] sm:$0xff]
                %2888 = vst [vmem:[%s2864 + $0x148] sm:$0xff] %v2887
                %v2889 = vld [vmem:[%s2863 + $0x60] sm:$0xff]
                %2890 = vst [vmem:[%s2864 + $0x180] sm:$0xff] %v2889
                %v2891 = vld [vmem:[%s2863 + $0x68] sm:$0xff]
                %2892 = vst [vmem:[%s2864 + $0x188] sm:$0xff] %v2891
                %v2893 = vld [vmem:[%s2863 + $0x70] sm:$0xff]
                %2894 = vst [vmem:[%s2864 + $0x1c0] sm:$0xff] %v2893
                %v2895 = vld [vmem:[%s2863 + $0x78] sm:$0xff]
                %2896 = vst [vmem:[%s2864 + $0x1c8] sm:$0xff] %v2895
              $region72: #{forward.14} parent=66 // loop_footer
                %s2862 = sadd.s32 1, %s2858
              $region73: #{forward.14} parent=66 // loop_footer_branch
                %2857 = sbr.rel target = $region69
              $region74: #{forward.14} parent=66 // loop_exit
                _
            $region67: #{forward.14} parent=62 // pred_fallthru
              _
            // Predicated region
            $region75: #{forward.14} parent=62 // pred_check
              _
            $region76: #{forward.14} parent=62 // pred_check_branch
              %2898 = sbr.rel target = $region78
            $region77: #{forward.14} parent=62 // pred_region
              _
            $region78: #{forward.14} parent=62 // pred_fallthru
              _
          $region63: #{forward.14} parent=58 // pred_fallthru
            _
          %2899 = vnop
        $region59: #{forward.14} parent=50 // pred_fallthru
          _
      $region51: #{forward.14} parent=5 // pred_fallthru
        _
      %p2900 = scmp.le.s32.totalorder 2, %s9
      // Predicated region
      $region79: #{forward.14} parent=5 // pred_check
        %p2901 = pneg %p2900
      $region80: #{forward.14} parent=5 // pred_check_branch
        %2903 = sbr.rel (%p2901) target = $region82
      $region81: #{forward.14} parent=5 // pred_region
        %s2904 = ssub.s32 %s9, 2
        // Predicated region
        $region83: #{forward.14} parent=81 // pred_check
          %p2905 = pneg %p106
        $region84: #{forward.14} parent=81 // pred_check_branch
          %2907 = sbr.rel (%p2905) target = $region86
        $region85: #{forward.14} parent=81 // pred_region
          %s2908 = sand.u32 %s91, 1
          %s2909 = sand.u32 %s91, 1
          %s2910 = smul.addr %s2909, 128
          %s2911 = scalar_lea.vmem [#allocation3], %s2910
        $region86: #{forward.14} parent=81 // pred_fallthru
          _
      $region82: #{forward.14} parent=5 // pred_fallthru
        _
    $region6: #{forward.14} parent=1 // loop_footer
      %s13 = sadd.s32 1, %s9
    $region7: #{forward.14} parent=1 // loop_footer_branch
      %8 = sbr.rel target = $region3
    $region8: #{forward.14} parent=1 // loop_exit
      _

// kernel: forward.15
$region0: #{forward.15}
  #allocation0 [shape = 'u32[]', space=smem, size = 0x4, offset = 0x4, fixed_abs, tag = 'smem constant byte address 0x4 - core index']
  #allocation1 [shape = 'u32[144,128]{1,0:T(1,128)}', space=vmem, size = 0x12000, scoped, tag = 'internal scratch']
  %s0 = inlined_call_operand.vmem [shape: bf16[4,864], index: 0, kind: input, shape index: {}]
  %s1 = inlined_call_operand.vmem [shape: f32[4,1], index: 1, kind: input, shape index: {}]
  %s2 = inlined_call_operand.vmem [shape: bf16[864,4096], index: 2, kind: input, shape index: {}]
  %s3 = inlined_call_operand.vmem [shape: bf16[4,4096], index: 3, kind: output, shape index: {}]
  %s4 = sld [smem:[#allocation0]]
  $region68: #{forward.15} parent=0
    _
  %s6 = ssub.s32 1, %s4
  %s7 = scalar_select 0, %s6, %s4
  $region1: #{forward.15} parent=0
    #allocation2 [shape = 'u8[1769472]{0}', space=vmem, size = 0x1b0000, scoped, tag = 'input window, operand 2']
    loop: start=0, step=1, limit=10
    $region2: #{forward.15} parent=1 // loop_pre_header
      _
    $region3: #{forward.15} parent=1 // loop_header
      %s9 = sphi 0, %s13
      %p10 = scmp.ge.s32.totalorder %s9, 10
      %s17 = sphi 0, %s17
      %s19 = sphi 0, %s17
      %s20 = sphi 0, %s19
      %s34 = sphi 0, %s20
      %s38 = sphi 0, %s38
      %s40 = sphi 0, %s38
      %s41 = sphi 0, %s40
      %s55 = sphi 0, %s41
      %s61 = sphi 0, %s63
      %s64 = sphi 0, %s61
      %s65 = sphi 0, %s64
      %s81 = sphi 0, %s65
      %s87 = sphi 0, %s89
      %s90 = sphi 0, %s87
      %s91 = sphi 0, %s90
      %s107 = sphi 0, %s91
    $region4: #{forward.15} parent=1 // loop_header_branch
      %12 = sbr.rel (%p10) target = $region8
    $region5: #{forward.15} parent=1 // loop_body
      %s14 = ssub.s32 %s9, 1
      %s15 = ssub.s32 %s9, 2
      %s16 = sadd.s32 %s9, 1
      %s18 = sadd.s32 %s17, 1
      %p21 = scmp.eq.s32.totalorder %s9, 7
      %p22 = scmp.ne.s32.totalorder %s17, %s19
      %p23 = scmp.eq.s32.totalorder %s9, 0
      %p24 = por %p22, %p23
      %p25 = scmp.ne.s32.totalorder %s17, %s19
      %p26 = scmp.eq.s32.totalorder %s14, 7
      %p27 = por %p25, %p26
      %p28 = scmp.ne.s32.totalorder %s19, %s20
      %p29 = scmp.eq.s32.totalorder %s14, 0
      %p30 = por %p28, %p29
      %p31 = scmp.ne.s32.totalorder %s19, %s20
      %p32 = scmp.eq.s32.totalorder %s15, 7
      %p33 = por %p31, %p32
      %p35 = scmp.ne.s32.totalorder %s20, %s34
      %p36 = scmp.eq.s32.totalorder %s15, 0
      %p37 = por %p35, %p36
      %s39 = sadd.s32 %s38, 1
      %p42 = scmp.eq.s32.totalorder %s9, 7
      %p43 = scmp.ne.s32.totalorder %s38, %s40
      %p44 = scmp.eq.s32.totalorder %s9, 0
      %p45 = por %p43, %p44
      %p46 = scmp.ne.s32.totalorder %s38, %s40
      %p47 = scmp.eq.s32.totalorder %s14, 7
      %p48 = por %p46, %p47
      %p49 = scmp.ne.s32.totalorder %s40, %s41
      %p50 = scmp.eq.s32.totalorder %s14, 0
      %p51 = por %p49, %p50
      %p52 = scmp.ne.s32.totalorder %s40, %s41
      %p53 = scmp.eq.s32.totalorder %s15, 7
      %p54 = por %p52, %p53
      %p56 = scmp.ne.s32.totalorder %s41, %s55
      %p57 = scmp.eq.s32.totalorder %s15, 0
      %p58 = por %p56, %p57
      %s59 = ssub.s32 %s9, %s16
      %p60 = scmp.eq.s32.totalorder %s59, 0
      %s62 = sadd.s32 %s61, 1
      %s63 = scalar_select %p60, %s61, %s62
      %p66 = pneg %p60
      %p67 = scmp.eq.s32.totalorder %s9, 7
      %p68 = por %p66, %p67
      %p69 = scmp.ne.s32.totalorder %s61, %s64
      %p70 = scmp.eq.s32.totalorder %s9, 0
      %p71 = por %p69, %p70
      %p72 = scmp.ne.s32.totalorder %s61, %s64
      %p73 = scmp.eq.s32.totalorder %s14, 7
      %p74 = por %p72, %p73
      %p75 = scmp.ne.s32.totalorder %s64, %s65
      %p76 = scmp.eq.s32.totalorder %s14, 0
      %p77 = por %p75, %p76
      %p78 = scmp.ne.s32.totalorder %s64, %s65
      %p79 = scmp.eq.s32.totalorder %s15, 7
      %p80 = por %p78, %p79
      %p82 = scmp.ne.s32.totalorder %s65, %s81
      %p83 = scmp.eq.s32.totalorder %s15, 0
      %p84 = por %p82, %p83
      %s85 = ssub.s32 %s9, %s16
      %p86 = scmp.eq.s32.totalorder %s85, 0
      %s88 = sadd.s32 %s87, 1
      %s89 = scalar_select %p86, %s87, %s88
      %p92 = pneg %p86
      %p93 = scmp.eq.s32.totalorder %s9, 7
      %p94 = por %p92, %p93
      %p95 = scmp.ne.s32.totalorder %s87, %s90
      %p96 = scmp.eq.s32.totalorder %s9, 0
      %p97 = por %p95, %p96
      %p98 = scmp.ne.s32.totalorder %s87, %s90
      %p99 = scmp.eq.s32.totalorder %s14, 7
      %p100 = por %p98, %p99
      %p101 = scmp.ne.s32.totalorder %s90, %s91
      %p102 = scmp.eq.s32.totalorder %s14, 0
      %p103 = por %p101, %p102
      %p104 = scmp.ne.s32.totalorder %s90, %s91
      %p105 = scmp.eq.s32.totalorder %s15, 7
      %p106 = por %p104, %p105
      %p108 = scmp.ne.s32.totalorder %s91, %s107
      %p109 = scmp.eq.s32.totalorder %s15, 0
      %p110 = por %p108, %p109
      %p111 = scmp.le.s32.totalorder 1, %s9
      %p112 = scmp.lt.s32.totalorder %s9, 9
      %p113 = pnand %p111, %p112
      %p114 = pneg %p113
      // Predicated region
      $region9: #{forward.15} parent=5 // pred_check
        _
      $region10: #{forward.15} parent=5 // pred_check_branch
        %116 = sbr.rel (%p113) target = $region12
      $region11: #{forward.15} parent=5 // pred_region
        %s117 = ssub.s32 %s9, 1
        // Predicated region
        $region13: #{forward.15} parent=11 // pred_check
          %p118 = pneg %p30
        $region14: #{forward.15} parent=11 // pred_check_branch
          %120 = sbr.rel (%p118) target = $region16
        $region15: #{forward.15} parent=11 // pred_region
          _
        $region16: #{forward.15} parent=11 // pred_fallthru
          _
        // Predicated region
        $region17: #{forward.15} parent=11 // pred_check
          %p121 = pneg %p51
        $region18: #{forward.15} parent=11 // pred_check_branch
          %123 = sbr.rel (%p121) target = $region20
        $region19: #{forward.15} parent=11 // pred_region
          _
        $region20: #{forward.15} parent=11 // pred_fallthru
          _
      $region12: #{forward.15} parent=5 // pred_fallthru
        _
      %p124 = scmp.lt.s32.totalorder %s9, 8
      // Predicated region
      $region21: #{forward.15} parent=5 // pred_check
        %p125 = pneg %p124
      $region22: #{forward.15} parent=5 // pred_check_branch
        %127 = sbr.rel (%p125) target = $region24
      $region23: #{forward.15} parent=5 // pred_region
        // Predicated region
        $region25: #{forward.15} parent=23 // pred_check
          %p128 = pneg %p71
        $region26: #{forward.15} parent=23 // pred_check_branch
          %130 = sbr.rel (%p128) target = $region28
        $region27: #{forward.15} parent=23 // pred_region
          %s131 = sand.u32 %s61, 1
          %s132 = sand.u32 %s61, 1
          %s133 = smul.addr %s132, 1728
          %s134 = scalar_lea.vmem [#allocation2], %s133
          %s135 = smul.u32 4, %s9
          %s136 = smul.addr %s135, 4
          %s137 = scalar_lea.vmem %s2, %s136
          // Predicated region
          $region29: #{forward.15} parent=27 // pred_check
            _
          $region30: #{forward.15} parent=27 // pred_check_branch
            %139 = sbr.rel (0) target = $region32
          $region31: #{forward.15} parent=27 // pred_region
            // Predicated region
            $region33: #{forward.15} parent=31 // pred_check
              _
            $region34: #{forward.15} parent=31 // pred_check_branch
              %141 = sbr.rel (0) target = $region36
            $region35: #{forward.15} parent=31 // pred_region
              loop: start=0, step=1, limit=1
              $region37: #{forward.15} parent=35 // loop_pre_header
                _
              $region38: #{forward.15} parent=35 // loop_header
                %s143 = sphi 0, %s147
                %p144 = scmp.ge.s32.totalorder %s143, 1
                %s148 = sphi %s137, %s137
                %s149 = sphi %s134, %s134
              $region39: #{forward.15} parent=35 // loop_header_branch
                %146 = sbr.rel (%p144) target = $region43
              $region40: #{forward.15} parent=35 // loop_body
                %v150 = vld [vmem:[%s148] sm:$0xff]
                %151 = vst [vmem:[%s149] sm:$0xff] %v150
                %v152 = vld [vmem:[%s148 + $0x8] sm:$0xff]
                %153 = vst [vmem:[%s149 + $0x8] sm:$0xff] %v152
                %v154 = vld [vmem:[%s148 + $0x80] sm:$0xff]
                %155 = vst [vmem:[%s149 + $0x10] sm:$0xff] %v154
                %v156 = vld [vmem:[%s148 + $0x88] sm:$0xff]
                %157 = vst [vmem:[%s149 + $0x18] sm:$0xff] %v156
                %v158 = vld [vmem:[%s148 + $0x100] sm:$0xff]
                %159 = vst [vmem:[%s149 + $0x20] sm:$0xff] %v158
                %v160 = vld [vmem:[%s148 + $0x108] sm:$0xff]
                %161 = vst [vmem:[%s149 + $0x28] sm:$0xff] %v160
                %v162 = vld [vmem:[%s148 + $0x180] sm:$0xff]
                %163 = vst [vmem:[%s149 + $0x30] sm:$0xff] %v162
                %v164 = vld [vmem:[%s148 + $0x188] sm:$0xff]
                %165 = vst [vmem:[%s149 + $0x38] sm:$0xff] %v164
                %v166 = vld [vmem:[%s148 + $0x200] sm:$0xff]
                %167 = vst [vmem:[%s149 + $0x40] sm:$0xff] %v166
                %v168 = vld [vmem:[%s148 + $0x208] sm:$0xff]
                %169 = vst [vmem:[%s149 + $0x48] sm:$0xff] %v168
                %v170 = vld [vmem:[%s148 + $0x280] sm:$0xff]
                %171 = vst [vmem:[%s149 + $0x50] sm:$0xff] %v170
                %v172 = vld [vmem:[%s148 + $0x288] sm:$0xff]
                %173 = vst [vmem:[%s149 + $0x58] sm:$0xff] %v172
                %v174 = vld [vmem:[%s148 + $0x300] sm:$0xff]
                %175 = vst [vmem:[%s149 + $0x60] sm:$0xff] %v174
                %v176 = vld [vmem:[%s148 + $0x308] sm:$0xff]
                %177 = vst [vmem:[%s149 + $0x68] sm:$0xff] %v176
                %v178 = vld [vmem:[%s148 + $0x380] sm:$0xff]
                %179 = vst [vmem:[%s149 + $0x70] sm:$0xff] %v178
                %v180 = vld [vmem:[%s148 + $0x388] sm:$0xff]
                %181 = vst [vmem:[%s149 + $0x78] sm:$0xff] %v180
                %v182 = vld [vmem:[%s148 + $0x400] sm:$0xff]
                %183 = vst [vmem:[%s149 + $0x80] sm:$0xff] %v182
                %v184 = vld [vmem:[%s148 + $0x408] sm:$0xff]
                %185 = vst [vmem:[%s149 + $0x88] sm:$0xff] %v184
                %v186 = vld [vmem:[%s148 + $0x480] sm:$0xff]
                %187 = vst [vmem:[%s149 + $0x90] sm:$0xff] %v186
                %v188 = vld [vmem:[%s148 + $0x488] sm:$0xff]
                %189 = vst [vmem:[%s149 + $0x98] sm:$0xff] %v188
                %v190 = vld [vmem:[%s148 + $0x500] sm:$0xff]
                %191 = vst [vmem:[%s149 + $0xa0] sm:$0xff] %v190
                %v192 = vld [vmem:[%s148 + $0x508] sm:$0xff]
                %193 = vst [vmem:[%s149 + $0xa8] sm:$0xff] %v192
                %v194 = vld [vmem:[%s148 + $0x580] sm:$0xff]
                %195 = vst [vmem:[%s149 + $0xb0] sm:$0xff] %v194
                %v196 = vld [vmem:[%s148 + $0x588] sm:$0xff]
                %197 = vst [vmem:[%s149 + $0xb8] sm:$0xff] %v196
                %v198 = vld [vmem:[%s148 + $0x600] sm:$0xff]
                %199 = vst [vmem:[%s149 + $0xc0] sm:$0xff] %v198
                %v200 = vld [vmem:[%s148 + $0x608] sm:$0xff]
                %201 = vst [vmem:[%s149 + $0xc8] sm:$0xff] %v200
                %v202 = vld [vmem:[%s148 + $0x680] sm:$0xff]
                %203 = vst [vmem:[%s149 + $0xd0] sm:$0xff] %v202
                %v204 = vld [vmem:[%s148 + $0x688] sm:$0xff]
                %205 = vst [vmem:[%s149 + $0xd8] sm:$0xff] %v204
                %v206 = vld [vmem:[%s148 + $0x700] sm:$0xff]
                %207 = vst [vmem:[%s149 + $0xe0] sm:$0xff] %v206
                %v208 = vld [vmem:[%s148 + $0x708] sm:$0xff]
                %209 = vst [vmem:[%s149 + $0xe8] sm:$0xff] %v208
                %v210 = vld [vmem:[%s148 + $0x780] sm:$0xff]
                %211 = vst [vmem:[%s149 + $0xf0] sm:$0xff] %v210
                %v212 = vld [vmem:[%s148 + $0x788] sm:$0xff]
                %213 = vst [vmem:[%s149 + $0xf8] sm:$0xff] %v212
                %v214 = vld [vmem:[%s148 + $0x800] sm:$0xff]
                %215 = vst [vmem:[%s149 + $0x100] sm:$0xff] %v214
                %v216 = vld [vmem:[%s148 + $0x808] sm:$0xff]
                %217 = vst [vmem:[%s149 + $0x108] sm:$0xff] %v216
                %v218 = vld [vmem:[%s148 + $0x880] sm:$0xff]
                %219 = vst [vmem:[%s149 + $0x110] sm:$0xff] %v218
                %v220 = vld [vmem:[%s148 + $0x888] sm:$0xff]
                %221 = vst [vmem:[%s149 + $0x118] sm:$0xff] %v220
                %v222 = vld [vmem:[%s148 + $0x900] sm:$0xff]
                %223 = vst [vmem:[%s149 + $0x120] sm:$0xff] %v222
                %v224 = vld [vmem:[%s148 + $0x908] sm:$0xff]
                %225 = vst [vmem:[%s149 + $0x128] sm:$0xff] %v224
                %v226 = vld [vmem:[%s148 + $0x980] sm:$0xff]
                %227 = vst [vmem:[%s149 + $0x130] sm:$0xff] %v226
                %v228 = vld [vmem:[%s148 + $0x988] sm:$0xff]
                %229 = vst [vmem:[%s149 + $0x138] sm:$0xff] %v228
                %v230 = vld [vmem:[%s148 + $0xa00] sm:$0xff]
                %231 = vst [vmem:[%s149 + $0x140] sm:$0xff] %v230
                %v232 = vld [vmem:[%s148 + $0xa08] sm:$0xff]
                %233 = vst [vmem:[%s149 + $0x148] sm:$0xff] %v232
                %v234 = vld [vmem:[%s148 + $0xa80] sm:$0xff]
                %235 = vst [vmem:[%s149 + $0x150] sm:$0xff] %v234
                %v236 = vld [vmem:[%s148 + $0xa88] sm:$0xff]
                %237 = vst [vmem:[%s149 + $0x158] sm:$0xff] %v236
                %v238 = vld [vmem:[%s148 + $0xb00] sm:$0xff]
                %239 = vst [vmem:[%s149 + $0x160] sm:$0xff] %v238
                %v240 = vld [vmem:[%s148 + $0xb08] sm:$0xff]
                %241 = vst [vmem:[%s149 + $0x168] sm:$0xff] %v240
                %v242 = vld [vmem:[%s148 + $0xb80] sm:$0xff]
                %243 = vst [vmem:[%s149 + $0x170] sm:$0xff] %v242
                %v244 = vld [vmem:[%s148 + $0xb88] sm:$0xff]
                %245 = vst [vmem:[%s149 + $0x178] sm:$0xff] %v244
                %v246 = vld [vmem:[%s148 + $0xc00] sm:$0xff]
                %247 = vst [vmem:[%s149 + $0x180] sm:$0xff] %v246
                %v248 = vld [vmem:[%s148 + $0xc08] sm:$0xff]
                %249 = vst [vmem:[%s149 + $0x188] sm:$0xff] %v248
                %v250 = vld [vmem:[%s148 + $0xc80] sm:$0xff]
                %251 = vst [vmem:[%s149 + $0x190] sm:$0xff] %v250
                %v252 = vld [vmem:[%s148 + $0xc88] sm:$0xff]
                %253 = vst [vmem:[%s149 + $0x198] sm:$0xff] %v252
                %v254 = vld [vmem:[%s148 + $0xd00] sm:$0xff]
                %255 = vst [vmem:[%s149 + $0x1a0] sm:$0xff] %v254
                %v256 = vld [vmem:[%s148 + $0xd08] sm:$0xff]
                %257 = vst [vmem:[%s149 + $0x1a8] sm:$0xff] %v256
                %v258 = vld [vmem:[%s148 + $0xd80] sm:$0xff]
                %259 = vst [vmem:[%s149 + $0x1b0] sm:$0xff] %v258
                %v260 = vld [vmem:[%s148 + $0xd88] sm:$0xff]
                %261 = vst [vmem:[%s149 + $0x1b8] sm:$0xff] %v260
                %v262 = vld [vmem:[%s148 + $0xe00] sm:$0xff]
                %263 = vst [vmem:[%s149 + $0x1c0] sm:$0xff] %v262
                %v264 = vld [vmem:[%s148 + $0xe08] sm:$0xff]
                %265 = vst [vmem:[%s149 + $0x1c8] sm:$0xff] %v264
                %v266 = vld [vmem:[%s148 + $0xe80] sm:$0xff]
                %267 = vst [vmem:[%s149 + $0x1d0] sm:$0xff] %v266
                %v268 = vld [vmem:[%s148 + $0xe88] sm:$0xff]
                %269 = vst [vmem:[%s149 + $0x1d8] sm:$0xff] %v268
                %v270 = vld [vmem:[%s148 + $0xf00] sm:$0xff]
                %271 = vst [vmem:[%s149 + $0x1e0] sm:$0xff] %v270
                %v272 = vld [vmem:[%s148 + $0xf08] sm:$0xff]
                %273 = vst [vmem:[%s149 + $0x1e8] sm:$0xff] %v272
                %v274 = vld [vmem:[%s148 + $0xf80] sm:$0xff]
                %275 = vst [vmem:[%s149 + $0x1f0] sm:$0xff] %v274
                %v276 = vld [vmem:[%s148 + $0xf88] sm:$0xff]
                %277 = vst [vmem:[%s149 + $0x1f8] sm:$0xff] %v276
                %v278 = vld [vmem:[%s148 + $0x1000] sm:$0xff]
                %279 = vst [vmem:[%s149 + $0x200] sm:$0xff] %v278
                %v280 = vld [vmem:[%s148 + $0x1008] sm:$0xff]
                %281 = vst [vmem:[%s149 + $0x208] sm:$0xff] %v280
                %v282 = vld [vmem:[%s148 + $0x1080] sm:$0xff]
                %283 = vst [vmem:[%s149 + $0x210] sm:$0xff] %v282
                %v284 = vld [vmem:[%s148 + $0x1088] sm:$0xff]
                %285 = vst [vmem:[%s149 + $0x218] sm:$0xff] %v284
                %v286 = vld [vmem:[%s148 + $0x1100] sm:$0xff]
                %287 = vst [vmem:[%s149 + $0x220] sm:$0xff] %v286
                %v288 = vld [vmem:[%s148 + $0x1108] sm:$0xff]
                %289 = vst [vmem:[%s149 + $0x228] sm:$0xff] %v288
                %v290 = vld [vmem:[%s148 + $0x1180] sm:$0xff]
                %291 = vst [vmem:[%s149 + $0x230] sm:$0xff] %v290
                %v292 = vld [vmem:[%s148 + $0x1188] sm:$0xff]
                %293 = vst [vmem:[%s149 + $0x238] sm:$0xff] %v292
                %v294 = vld [vmem:[%s148 + $0x1200] sm:$0xff]
                %295 = vst [vmem:[%s149 + $0x240] sm:$0xff] %v294
                %v296 = vld [vmem:[%s148 + $0x1208] sm:$0xff]
                %297 = vst [vmem:[%s149 + $0x248] sm:$0xff] %v296
                %v298 = vld [vmem:[%s148 + $0x1280] sm:$0xff]
                %299 = vst [vmem:[%s149 + $0x250] sm:$0xff] %v298
                %v300 = vld [vmem:[%s148 + $0x1288] sm:$0xff]
                %301 = vst [vmem:[%s149 + $0x258] sm:$0xff] %v300
                %v302 = vld [vmem:[%s148 + $0x1300] sm:$0xff]
                %303 = vst [vmem:[%s149 + $0x260] sm:$0xff] %v302
                %v304 = vld [vmem:[%s148 + $0x1308] sm:$0xff]
                %305 = vst [vmem:[%s149 + $0x268] sm:$0xff] %v304
                %v306 = vld [vmem:[%s148 + $0x1380] sm:$0xff]
                %307 = vst [vmem:[%s149 + $0x270] sm:$0xff] %v306
                %v308 = vld [vmem:[%s148 + $0x1388] sm:$0xff]
                %309 = vst [vmem:[%s149 + $0x278] sm:$0xff] %v308
                %v310 = vld [vmem:[%s148 + $0x1400] sm:$0xff]
                %311 = vst [vmem:[%s149 + $0x280] sm:$0xff] %v310
                %v312 = vld [vmem:[%s148 + $0x1408] sm:$0xff]
                %313 = vst [vmem:[%s149 + $0x288] sm:$0xff] %v312
                %v314 = vld [vmem:[%s148 + $0x1480] sm:$0xff]
                %315 = vst [vmem:[%s149 + $0x290] sm:$0xff] %v314
                %v316 = vld [vmem:[%s148 + $0x1488] sm:$0xff]
                %317 = vst [vmem:[%s149 + $0x298] sm:$0xff] %v316
                %v318 = vld [vmem:[%s148 + $0x1500] sm:$0xff]
                %319 = vst [vmem:[%s149 + $0x2a0] sm:$0xff] %v318
                %v320 = vld [vmem:[%s148 + $0x1508] sm:$0xff]
                %321 = vst [vmem:[%s149 + $0x2a8] sm:$0xff] %v320
                %v322 = vld [vmem:[%s148 + $0x1580] sm:$0xff]
                %323 = vst [vmem:[%s149 + $0x2b0] sm:$0xff] %v322
                %v324 = vld [vmem:[%s148 + $0x1588] sm:$0xff]
                %325 = vst [vmem:[%s149 + $0x2b8] sm:$0xff] %v324
                %v326 = vld [vmem:[%s148 + $0x1600] sm:$0xff]
                %327 = vst [vmem:[%s149 + $0x2c0] sm:$0xff] %v326
                %v328 = vld [vmem:[%s148 + $0x1608] sm:$0xff]
                %329 = vst [vmem:[%s149 + $0x2c8] sm:$0xff] %v328
                %v330 = vld [vmem:[%s148 + $0x1680] sm:$0xff]
                %331 = vst [vmem:[%s149 + $0x2d0] sm:$0xff] %v330
                %v332 = vld [vmem:[%s148 + $0x1688] sm:$0xff]
                %333 = vst [vmem:[%s149 + $0x2d8] sm:$0xff] %v332
                %v334 = vld [vmem:[%s148 + $0x1700] sm:$0xff]
                %335 = vst [vmem:[%s149 + $0x2e0] sm:$0xff] %v334
                %v336 = vld [vmem:[%s148 + $0x1708] sm:$0xff]
                %337 = vst [vmem:[%s149 + $0x2e8] sm:$0xff] %v336
                %v338 = vld [vmem:[%s148 + $0x1780] sm:$0xff]
                %339 = vst [vmem:[%s149 + $0x2f0] sm:$0xff] %v338
                %v340 = vld [vmem:[%s148 + $0x1788] sm:$0xff]
                %341 = vst [vmem:[%s149 + $0x2f8] sm:$0xff] %v340
                %v342 = vld [vmem:[%s148 + $0x1800] sm:$0xff]
                %343 = vst [vmem:[%s149 + $0x300] sm:$0xff] %v342
                %v344 = vld [vmem:[%s148 + $0x1808] sm:$0xff]
                %345 = vst [vmem:[%s149 + $0x308] sm:$0xff] %v344
                %v346 = vld [vmem:[%s148 + $0x1880] sm:$0xff]
                %347 = vst [vmem:[%s149 + $0x310] sm:$0xff] %v346
                %v348 = vld [vmem:[%s148 + $0x1888] sm:$0xff]
                %349 = vst [vmem:[%s149 + $0x318] sm:$0xff] %v348
                %v350 = vld [vmem:[%s148 + $0x1900] sm:$0xff]
                %351 = vst [vmem:[%s149 + $0x320] sm:$0xff] %v350
                %v352 = vld [vmem:[%s148 + $0x1908] sm:$0xff]
                %353 = vst [vmem:[%s149 + $0x328] sm:$0xff] %v352
                %v354 = vld [vmem:[%s148 + $0x1980] sm:$0xff]
                %355 = vst [vmem:[%s149 + $0x330] sm:$0xff] %v354
                %v356 = vld [vmem:[%s148 + $0x1988] sm:$0xff]
                %357 = vst [vmem:[%s149 + $0x338] sm:$0xff] %v356
                %v358 = vld [vmem:[%s148 + $0x1a00] sm:$0xff]
                %359 = vst [vmem:[%s149 + $0x340] sm:$0xff] %v358
                %v360 = vld [vmem:[%s148 + $0x1a08] sm:$0xff]
                %361 = vst [vmem:[%s149 + $0x348] sm:$0xff] %v360
                %v362 = vld [vmem:[%s148 + $0x1a80] sm:$0xff]
                %363 = vst [vmem:[%s149 + $0x350] sm:$0xff] %v362
                %v364 = vld [vmem:[%s148 + $0x1a88] sm:$0xff]
                %365 = vst [vmem:[%s149 + $0x358] sm:$0xff] %v364
                %v366 = vld [vmem:[%s148 + $0x1b00] sm:$0xff]
                %367 = vst [vmem:[%s149 + $0x360] sm:$0xff] %v366
                %v368 = vld [vmem:[%s148 + $0x1b08] sm:$0xff]
                %369 = vst [vmem:[%s149 + $0x368] sm:$0xff] %v368
                %v370 = vld [vmem:[%s148 + $0x1b80] sm:$0xff]
                %371 = vst [vmem:[%s149 + $0x370] sm:$0xff] %v370
                %v372 = vld [vmem:[%s148 + $0x1b88] sm:$0xff]
                %373 = vst [vmem:[%s149 + $0x378] sm:$0xff] %v372
                %v374 = vld [vmem:[%s148 + $0x1c00] sm:$0xff]
                %375 = vst [vmem:[%s149 + $0x380] sm:$0xff] %v374
                %v376 = vld [vmem:[%s148 + $0x1c08] sm:$0xff]
                %377 = vst [vmem:[%s149 + $0x388] sm:$0xff] %v376
                %v378 = vld [vmem:[%s148 + $0x1c80] sm:$0xff]
                %379 = vst [vmem:[%s149 + $0x390] sm:$0xff] %v378
                %v380 = vld [vmem:[%s148 + $0x1c88] sm:$0xff]
                %381 = vst [vmem:[%s149 + $0x398] sm:$0xff] %v380
                %v382 = vld [vmem:[%s148 + $0x1d00] sm:$0xff]
                %383 = vst [vmem:[%s149 + $0x3a0] sm:$0xff] %v382
                %v384 = vld [vmem:[%s148 + $0x1d08] sm:$0xff]
                %385 = vst [vmem:[%s149 + $0x3a8] sm:$0xff] %v384
                %v386 = vld [vmem:[%s148 + $0x1d80] sm:$0xff]
                %387 = vst [vmem:[%s149 + $0x3b0] sm:$0xff] %v386
                %v388 = vld [vmem:[%s148 + $0x1d88] sm:$0xff]
                %389 = vst [vmem:[%s149 + $0x3b8] sm:$0xff] %v388
                %v390 = vld [vmem:[%s148 + $0x1e00] sm:$0xff]
                %391 = vst [vmem:[%s149 + $0x3c0] sm:$0xff] %v390
                %v392 = vld [vmem:[%s148 + $0x1e08] sm:$0xff]
                %393 = vst [vmem:[%s149 + $0x3c8] sm:$0xff] %v392
                %v394 = vld [vmem:[%s148 + $0x1e80] sm:$0xff]
                %395 = vst [vmem:[%s149 + $0x3d0] sm:$0xff] %v394
                %v396 = vld [vmem:[%s148 + $0x1e88] sm:$0xff]
                %397 = vst [vmem:[%s149 + $0x3d8] sm:$0xff] %v396
                %v398 = vld [vmem:[%s148 + $0x1f00] sm:$0xff]
                %399 = vst [vmem:[%s149 + $0x3e0] sm:$0xff] %v398
                %v400 = vld [vmem:[%s148 + $0x1f08] sm:$0xff]
                %401 = vst [vmem:[%s149 + $0x3e8] sm:$0xff] %v400
                %v402 = vld [vmem:[%s148 + $0x1f80] sm:$0xff]
                %403 = vst [vmem:[%s149 + $0x3f0] sm:$0xff] %v402
                %v404 = vld [vmem:[%s148 + $0x1f88] sm:$0xff]
                %405 = vst [vmem:[%s149 + $0x3f8] sm:$0xff] %v404
                %v406 = vld [vmem:[%s148 + $0x2000] sm:$0xff]
                %407 = vst [vmem:[%s149 + $0x400] sm:$0xff] %v406
                %v408 = vld [vmem:[%s148 + $0x2008] sm:$0xff]
                %409 = vst [vmem:[%s149 + $0x408] sm:$0xff] %v408
                %v410 = vld [vmem:[%s148 + $0x2080] sm:$0xff]
                %411 = vst [vmem:[%s149 + $0x410] sm:$0xff] %v410
                %v412 = vld [vmem:[%s148 + $0x2088] sm:$0xff]
                %413 = vst [vmem:[%s149 + $0x418] sm:$0xff] %v412
                %v414 = vld [vmem:[%s148 + $0x2100] sm:$0xff]
                %415 = vst [vmem:[%s149 + $0x420] sm:$0xff] %v414
                %v416 = vld [vmem:[%s148 + $0x2108] sm:$0xff]
                %417 = vst [vmem:[%s149 + $0x428] sm:$0xff] %v416
                %v418 = vld [vmem:[%s148 + $0x2180] sm:$0xff]
                %419 = vst [vmem:[%s149 + $0x430] sm:$0xff] %v418
                %v420 = vld [vmem:[%s148 + $0x2188] sm:$0xff]
                %421 = vst [vmem:[%s149 + $0x438] sm:$0xff] %v420
                %v422 = vld [vmem:[%s148 + $0x2200] sm:$0xff]
                %423 = vst [vmem:[%s149 + $0x440] sm:$0xff] %v422
                %v424 = vld [vmem:[%s148 + $0x2208] sm:$0xff]
                %425 = vst [vmem:[%s149 + $0x448] sm:$0xff] %v424
                %v426 = vld [vmem:[%s148 + $0x2280] sm:$0xff]
                %427 = vst [vmem:[%s149 + $0x450] sm:$0xff] %v426
                %v428 = vld [vmem:[%s148 + $0x2288] sm:$0xff]
                %429 = vst [vmem:[%s149 + $0x458] sm:$0xff] %v428
                %v430 = vld [vmem:[%s148 + $0x2300] sm:$0xff]
                %431 = vst [vmem:[%s149 + $0x460] sm:$0xff] %v430
                %v432 = vld [vmem:[%s148 + $0x2308] sm:$0xff]
                %433 = vst [vmem:[%s149 + $0x468] sm:$0xff] %v432
                %v434 = vld [vmem:[%s148 + $0x2380] sm:$0xff]
                %435 = vst [vmem:[%s149 + $0x470] sm:$0xff] %v434
                %v436 = vld [vmem:[%s148 + $0x2388] sm:$0xff]
                %437 = vst [vmem:[%s149 + $0x478] sm:$0xff] %v436
                %v438 = vld [vmem:[%s148 + $0x2400] sm:$0xff]
                %439 = vst [vmem:[%s149 + $0x480] sm:$0xff] %v438
                %v440 = vld [vmem:[%s148 + $0x2408] sm:$0xff]
                %441 = vst [vmem:[%s149 + $0x488] sm:$0xff] %v440
                %v442 = vld [vmem:[%s148 + $0x2480] sm:$0xff]
                %443 = vst [vmem:[%s149 + $0x490] sm:$0xff] %v442
                %v444 = vld [vmem:[%s148 + $0x2488] sm:$0xff]
                %445 = vst [vmem:[%s149 + $0x498] sm:$0xff] %v444
                %v446 = vld [vmem:[%s148 + $0x2500] sm:$0xff]
                %447 = vst [vmem:[%s149 + $0x4a0] sm:$0xff] %v446
                %v448 = vld [vmem:[%s148 + $0x2508] sm:$0xff]
                %449 = vst [vmem:[%s149 + $0x4a8] sm:$0xff] %v448
                %v450 = vld [vmem:[%s148 + $0x2580] sm:$0xff]
                %451 = vst [vmem:[%s149 + $0x4b0] sm:$0xff] %v450
                %v452 = vld [vmem:[%s148 + $0x2588] sm:$0xff]
                %453 = vst [vmem:[%s149 + $0x4b8] sm:$0xff] %v452
                %v454 = vld [vmem:[%s148 + $0x2600] sm:$0xff]
                %455 = vst [vmem:[%s149 + $0x4c0] sm:$0xff] %v454
                %v456 = vld [vmem:[%s148 + $0x2608] sm:$0xff]
                %457 = vst [vmem:[%s149 + $0x4c8] sm:$0xff] %v456
                %v458 = vld [vmem:[%s148 + $0x2680] sm:$0xff]
                %459 = vst [vmem:[%s149 + $0x4d0] sm:$0xff] %v458
                %v460 = vld [vmem:[%s148 + $0x2688] sm:$0xff]
                %461 = vst [vmem:[%s149 + $0x4d8] sm:$0xff] %v460
                %v462 = vld [vmem:[%s148 + $0x2700] sm:$0xff]
                %463 = vst [vmem:[%s149 + $0x4e0] sm:$0xff] %v462
                %v464 = vld [vmem:[%s148 + $0x2708] sm:$0xff]
                %465 = vst [vmem:[%s149 + $0x4e8] sm:$0xff] %v464
                %v466 = vld [vmem:[%s148 + $0x2780] sm:$0xff]
                %467 = vst [vmem:[%s149 + $0x4f0] sm:$0xff] %v466
                %v468 = vld [vmem:[%s148 + $0x2788] sm:$0xff]
                %469 = vst [vmem:[%s149 + $0x4f8] sm:$0xff] %v468
                %v470 = vld [vmem:[%s148 + $0x2800] sm:$0xff]
                %471 = vst [vmem:[%s149 + $0x500] sm:$0xff] %v470
                %v472 = vld [vmem:[%s148 + $0x2808] sm:$0xff]
                %473 = vst [vmem:[%s149 + $0x508] sm:$0xff] %v472
                %v474 = vld [vmem:[%s148 + $0x2880] sm:$0xff]
                %475 = vst [vmem:[%s149 + $0x510] sm:$0xff] %v474
                %v476 = vld [vmem:[%s148 + $0x2888] sm:$0xff]
                %477 = vst [vmem:[%s149 + $0x518] sm:$0xff] %v476
                %v478 = vld [vmem:[%s148 + $0x2900] sm:$0xff]
                %479 = vst [vmem:[%s149 + $0x520] sm:$0xff] %v478
                %v480 = vld [vmem:[%s148 + $0x2908] sm:$0xff]
                %481 = vst [vmem:[%s149 + $0x528] sm:$0xff] %v480
                %v482 = vld [vmem:[%s148 + $0x2980] sm:$0xff]
                %483 = vst [vmem:[%s149 + $0x530] sm:$0xff] %v482
                %v484 = vld [vmem:[%s148 + $0x2988] sm:$0xff]
                %485 = vst [vmem:[%s149 + $0x538] sm:$0xff] %v484
                %v486 = vld [vmem:[%s148 + $0x2a00] sm:$0xff]
                %487 = vst [vmem:[%s149 + $0x540] sm:$0xff] %v486
                %v488 = vld [vmem:[%s148 + $0x2a08] sm:$0xff]
                %489 = vst [vmem:[%s149 + $0x548] sm:$0xff] %v488
                %v490 = vld [vmem:[%s148 + $0x2a80] sm:$0xff]
                %491 = vst [vmem:[%s149 + $0x550] sm:$0xff] %v490
                %v492 = vld [vmem:[%s148 + $0x2a88] sm:$0xff]
                %493 = vst [vmem:[%s149 + $0x558] sm:$0xff] %v492
                %v494 = vld [vmem:[%s148 + $0x2b00] sm:$0xff]
                %495 = vst [vmem:[%s149 + $0x560] sm:$0xff] %v494
                %v496 = vld [vmem:[%s148 + $0x2b08] sm:$0xff]
                %497 = vst [vmem:[%s149 + $0x568] sm:$0xff] %v496
                %v498 = vld [vmem:[%s148 + $0x2b80] sm:$0xff]
                %499 = vst [vmem:[%s149 + $0x570] sm:$0xff] %v498
                %v500 = vld [vmem:[%s148 + $0x2b88] sm:$0xff]
                %501 = vst [vmem:[%s149 + $0x578] sm:$0xff] %v500
                %v502 = vld [vmem:[%s148 + $0x2c00] sm:$0xff]
                %503 = vst [vmem:[%s149 + $0x580] sm:$0xff] %v502
                %v504 = vld [vmem:[%s148 + $0x2c08] sm:$0xff]
                %505 = vst [vmem:[%s149 + $0x588] sm:$0xff] %v504
                %v506 = vld [vmem:[%s148 + $0x2c80] sm:$0xff]
                %507 = vst [vmem:[%s149 + $0x590] sm:$0xff] %v506
                %v508 = vld [vmem:[%s148 + $0x2c88] sm:$0xff]
                %509 = vst [vmem:[%s149 + $0x598] sm:$0xff] %v508
                %v510 = vld [vmem:[%s148 + $0x2d00] sm:$0xff]
                %511 = vst [vmem:[%s149 + $0x5a0] sm:$0xff] %v510
                %v512 = vld [vmem:[%s148 + $0x2d08] sm:$0xff]
                %513 = vst [vmem:[%s149 + $0x5a8] sm:$0xff] %v512
                %v514 = vld [vmem:[%s148 + $0x2d80] sm:$0xff]
                %515 = vst [vmem:[%s149 + $0x5b0] sm:$0xff] %v514
                %v516 = vld [vmem:[%s148 + $0x2d88] sm:$0xff]
                %517 = vst [vmem:[%s149 + $0x5b8] sm:$0xff] %v516
                %v518 = vld [vmem:[%s148 + $0x2e00] sm:$0xff]
                %519 = vst [vmem:[%s149 + $0x5c0] sm:$0xff] %v518
                %v520 = vld [vmem:[%s148 + $0x2e08] sm:$0xff]
                %521 = vst [vmem:[%s149 + $0x5c8] sm:$0xff] %v520
                %v522 = vld [vmem:[%s148 + $0x2e80] sm:$0xff]
                %523 = vst [vmem:[%s149 + $0x5d0] sm:$0xff] %v522
                %v524 = vld [vmem:[%s148 + $0x2e88] sm:$0xff]
                %525 = vst [vmem:[%s149 + $0x5d8] sm:$0xff] %v524
                %v526 = vld [vmem:[%s148 + $0x2f00] sm:$0xff]
                %527 = vst [vmem:[%s149 + $0x5e0] sm:$0xff] %v526
                %v528 = vld [vmem:[%s148 + $0x2f08] sm:$0xff]
                %529 = vst [vmem:[%s149 + $0x5e8] sm:$0xff] %v528
                %v530 = vld [vmem:[%s148 + $0x2f80] sm:$0xff]
                %531 = vst [vmem:[%s149 + $0x5f0] sm:$0xff] %v530
                %v532 = vld [vmem:[%s148 + $0x2f88] sm:$0xff]
                %533 = vst [vmem:[%s149 + $0x5f8] sm:$0xff] %v532
                %v534 = vld [vmem:[%s148 + $0x3000] sm:$0xff]
                %535 = vst [vmem:[%s149 + $0x600] sm:$0xff] %v534
                %v536 = vld [vmem:[%s148 + $0x3008] sm:$0xff]
                %537 = vst [vmem:[%s149 + $0x608] sm:$0xff] %v536
                %v538 = vld [vmem:[%s148 + $0x3080] sm:$0xff]
                %539 = vst [vmem:[%s149 + $0x610] sm:$0xff] %v538
                %v540 = vld [vmem:[%s148 + $0x3088] sm:$0xff]
                %541 = vst [vmem:[%s149 + $0x618] sm:$0xff] %v540
                %v542 = vld [vmem:[%s148 + $0x3100] sm:$0xff]
                %543 = vst [vmem:[%s149 + $0x620] sm:$0xff] %v542
                %v544 = vld [vmem:[%s148 + $0x3108] sm:$0xff]
                %545 = vst [vmem:[%s149 + $0x628] sm:$0xff] %v544
                %v546 = vld [vmem:[%s148 + $0x3180] sm:$0xff]
                %547 = vst [vmem:[%s149 + $0x630] sm:$0xff] %v546
                %v548 = vld [vmem:[%s148 + $0x3188] sm:$0xff]
                %549 = vst [vmem:[%s149 + $0x638] sm:$0xff] %v548
                %v550 = vld [vmem:[%s148 + $0x3200] sm:$0xff]
                %551 = vst [vmem:[%s149 + $0x640] sm:$0xff] %v550
                %v552 = vld [vmem:[%s148 + $0x3208] sm:$0xff]
                %553 = vst [vmem:[%s149 + $0x648] sm:$0xff] %v552
                %v554 = vld [vmem:[%s148 + $0x3280] sm:$0xff]
                %555 = vst [vmem:[%s149 + $0x650] sm:$0xff] %v554
                %v556 = vld [vmem:[%s148 + $0x3288] sm:$0xff]
                %557 = vst [vmem:[%s149 + $0x658] sm:$0xff] %v556
                %v558 = vld [vmem:[%s148 + $0x3300] sm:$0xff]
                %559 = vst [vmem:[%s149 + $0x660] sm:$0xff] %v558
                %v560 = vld [vmem:[%s148 + $0x3308] sm:$0xff]
                %561 = vst [vmem:[%s149 + $0x668] sm:$0xff] %v560
                %v562 = vld [vmem:[%s148 + $0x3380] sm:$0xff]
                %563 = vst [vmem:[%s149 + $0x670] sm:$0xff] %v562
                %v564 = vld [vmem:[%s148 + $0x3388] sm:$0xff]
                %565 = vst [vmem:[%s149 + $0x678] sm:$0xff] %v564
                %v566 = vld [vmem:[%s148 + $0x3400] sm:$0xff]
                %567 = vst [vmem:[%s149 + $0x680] sm:$0xff] %v566
                %v568 = vld [vmem:[%s148 + $0x3408] sm:$0xff]
                %569 = vst [vmem:[%s149 + $0x688] sm:$0xff] %v568
                %v570 = vld [vmem:[%s148 + $0x3480] sm:$0xff]
                %571 = vst [vmem:[%s149 + $0x690] sm:$0xff] %v570
                %v572 = vld [vmem:[%s148 + $0x3488] sm:$0xff]
                %573 = vst [vmem:[%s149 + $0x698] sm:$0xff] %v572
                %v574 = vld [vmem:[%s148 + $0x3500] sm:$0xff]
                %575 = vst [vmem:[%s149 + $0x6a0] sm:$0xff] %v574
                %v576 = vld [vmem:[%s148 + $0x3508] sm:$0xff]
                %577 = vst [vmem:[%s149 + $0x6a8] sm:$0xff] %v576
                %v578 = vld [vmem:[%s148 + $0x3580] sm:$0xff]
                %579 = vst [vmem:[%s149 + $0x6b0] sm:$0xff] %v578
                %v580 = vld [vmem:[%s148 + $0x3588] sm:$0xff]
                %581 = vst [vmem:[%s149 + $0x6b8] sm:$0xff] %v580
              $region41: #{forward.15} parent=35 // loop_footer
                %s147 = sadd.s32 1, %s143
              $region42: #{forward.15} parent=35 // loop_footer_branch
                %142 = sbr.rel target = $region38
              $region43: #{forward.15} parent=35 // loop_exit
                _
            $region36: #{forward.15} parent=31 // pred_fallthru
              _
            // Predicated region
            $region44: #{forward.15} parent=31 // pred_check
              _
            $region45: #{forward.15} parent=31 // pred_check_branch
              %583 = sbr.rel target = $region47
            $region46: #{forward.15} parent=31 // pred_region
              _
            $region47: #{forward.15} parent=31 // pred_fallthru
              _
          $region32: #{forward.15} parent=27 // pred_fallthru
            _
          %584 = vnop
        $region28: #{forward.15} parent=23 // pred_fallthru
          _
      $region24: #{forward.15} parent=5 // pred_fallthru
        _
      %p585 = scmp.le.s32.totalorder 1, %s9
      %p586 = scmp.lt.s32.totalorder %s9, 9
      %p587 = pnand %p585, %p586
      %p588 = pneg %p587
      // Predicated region
      $region48: #{forward.15} parent=5 // pred_check
        _
      $region49: #{forward.15} parent=5 // pred_check_branch
        %590 = sbr.rel (%p587) target = $region51
      $region50: #{forward.15} parent=5 // pred_region
        %s591 = ssub.s32 %s9, 1
        %s592 = sand.u32 %s64, 1
        %s593 = sand.u32 %s64, 1
        %s594 = smul.addr %s593, 1728
        %s595 = scalar_lea.vmem [#allocation2], %s594
        // Predicated region
        $region52: #{forward.15} parent=50 // pred_check
          %p596 = pneg %p77
        $region53: #{forward.15} parent=50 // pred_check_branch
          %598 = sbr.rel (%p596) target = $region55
        $region54: #{forward.15} parent=50 // pred_region
          _
        $region55: #{forward.15} parent=50 // pred_fallthru
          _
        %p599 = pneg %p30
        %p600 = pneg %p27
        %p601 = pneg %p51
        %p602 = pneg %p48
        %s603 = sand.u32 %s64, 1
        %s604 = sand.u32 %s64, 1
        %s605 = smul.addr %s604, 1728
        %s606 = scalar_lea.vmem [#allocation2], %s605
        %p607 = pneg %p77
        %p608 = pneg %p74
        %p609 = pneg %p103
        %p610 = pneg %p100
        %s611 = smul.u32 4, %s14
        %p612 = scmp.lt.s32.totalorder %s611, 31
        %s613 = scalar_select %p612, %s611, 31
        %s614 = smul.addr %s613, 2
        %s615 = scalar_lea.vmem %s3, %s614
        %s616 = smul.u32 4, %s14
        %s617 = smul.u32 4, %s14
        %p618 = scmp.lt.s32.totalorder %s617, 31
        %s619 = scalar_select %p618, %s617, 31
        %s620 = smul.addr %s619, 2
        %s621 = scalar_lea.vmem %s3, %s620
        %s622 = smul.u32 4, %s14
        %v624 = vld [vmem:[%s0] sm:$0xff]
        %v625 = vld [vmem:[%s0 + $0x8] sm:$0x3f]
        %v626 = vld [vmem:[%s595] sm:$0xff]
        %v627 = vld [vmem:[%s595 + $0x8] sm:$0xff]
        %v628 = vld [vmem:[%s595 + $0x10] sm:$0xff]
        %v629 = vld [vmem:[%s595 + $0x18] sm:$0xff]
        %v630 = vld [vmem:[%s595 + $0x20] sm:$0xff]
        %v631 = vld [vmem:[%s595 + $0x28] sm:$0xff]
        %v632 = vld [vmem:[%s595 + $0x30] sm:$0xff]
        %v633 = vld [vmem:[%s595 + $0x38] sm:$0xff]
        %v634 = vld [vmem:[%s595 + $0x40] sm:$0xff]
        %v635 = vld [vmem:[%s595 + $0x48] sm:$0xff]
        %v636 = vld [vmem:[%s595 + $0x50] sm:$0xff]
        %v637 = vld [vmem:[%s595 + $0x58] sm:$0xff]
        %v638 = vld [vmem:[%s595 + $0x60] sm:$0xff]
        %v639 = vld [vmem:[%s595 + $0x68] sm:$0xff]
        %v640 = vld [vmem:[%s595 + $0x70] sm:$0xff]
        %v641 = vld [vmem:[%s595 + $0x78] sm:$0xff]
        %v642 = vld [vmem:[%s595 + $0x80] sm:$0xff]
        %v643 = vld [vmem:[%s595 + $0x88] sm:$0xff]
        %v644 = vld [vmem:[%s595 + $0x90] sm:$0xff]
        %v645 = vld [vmem:[%s595 + $0x98] sm:$0xff]
        %v646 = vld [vmem:[%s595 + $0xa0] sm:$0xff]
        %v647 = vld [vmem:[%s595 + $0xa8] sm:$0xff]
        %v648 = vld [vmem:[%s595 + $0xb0] sm:$0xff]
        %v649 = vld [vmem:[%s595 + $0xb8] sm:$0xff]
        %v650 = vld [vmem:[%s595 + $0xc0] sm:$0xff]
        %v651 = vld [vmem:[%s595 + $0xc8] sm:$0xff]
        %v652 = vld [vmem:[%s595 + $0xd0] sm:$0xff]
        %v653 = vld [vmem:[%s595 + $0xd8] sm:$0xff]
        %v654 = vld [vmem:[%s595 + $0xe0] sm:$0xff]
        %v655 = vld [vmem:[%s595 + $0xe8] sm:$0xff]
        %v656 = vld [vmem:[%s595 + $0xf0] sm:$0xff]
        %v657 = vld [vmem:[%s595 + $0xf8] sm:$0xff]
        %v658 = vld [vmem:[%s595 + $0x100] sm:$0xff]
        %v659 = vld [vmem:[%s595 + $0x108] sm:$0xff]
        %v660 = vld [vmem:[%s595 + $0x110] sm:$0xff]
        %v661 = vld [vmem:[%s595 + $0x118] sm:$0xff]
        %v662 = vld [vmem:[%s595 + $0x120] sm:$0xff]
        %v663 = vld [vmem:[%s595 + $0x128] sm:$0xff]
        %v664 = vld [vmem:[%s595 + $0x130] sm:$0xff]
        %v665 = vld [vmem:[%s595 + $0x138] sm:$0xff]
        %v666 = vld [vmem:[%s595 + $0x140] sm:$0xff]
        %v667 = vld [vmem:[%s595 + $0x148] sm:$0xff]
        %v668 = vld [vmem:[%s595 + $0x150] sm:$0xff]
        %v669 = vld [vmem:[%s595 + $0x158] sm:$0xff]
        %v670 = vld [vmem:[%s595 + $0x160] sm:$0xff]
        %v671 = vld [vmem:[%s595 + $0x168] sm:$0xff]
        %v672 = vld [vmem:[%s595 + $0x170] sm:$0xff]
        %v673 = vld [vmem:[%s595 + $0x178] sm:$0xff]
        %v674 = vld [vmem:[%s595 + $0x180] sm:$0xff]
        %v675 = vld [vmem:[%s595 + $0x188] sm:$0xff]
        %v676 = vld [vmem:[%s595 + $0x190] sm:$0xff]
        %v677 = vld [vmem:[%s595 + $0x198] sm:$0xff]
        %v678 = vld [vmem:[%s595 + $0x1a0] sm:$0xff]
        %v679 = vld [vmem:[%s595 + $0x1a8] sm:$0xff]
        %v680 = vld [vmem:[%s595 + $0x1b0] sm:$0xff]
        %v681 = vld [vmem:[%s595 + $0x1b8] sm:$0xff]
        %v682 = vld [vmem:[%s595 + $0x1c0] sm:$0xff]
        %v683 = vld [vmem:[%s595 + $0x1c8] sm:$0xff]
        %v684 = vld [vmem:[%s595 + $0x1d0] sm:$0xff]
        %v685 = vld [vmem:[%s595 + $0x1d8] sm:$0xff]
        %v686 = vld [vmem:[%s595 + $0x1e0] sm:$0xff]
        %v687 = vld [vmem:[%s595 + $0x1e8] sm:$0xff]
        %v688 = vld [vmem:[%s595 + $0x1f0] sm:$0xff]
        %v689 = vld [vmem:[%s595 + $0x1f8] sm:$0xff]
        %v690 = vld [vmem:[%s595 + $0x200] sm:$0xff]
        %v691 = vld [vmem:[%s595 + $0x208] sm:$0xff]
        %v692 = vld [vmem:[%s595 + $0x210] sm:$0xff]
        %v693 = vld [vmem:[%s595 + $0x218] sm:$0xff]
        %v694 = vld [vmem:[%s595 + $0x220] sm:$0xff]
        %v695 = vld [vmem:[%s595 + $0x228] sm:$0xff]
        %v696 = vld [vmem:[%s595 + $0x230] sm:$0xff]
        %v697 = vld [vmem:[%s595 + $0x238] sm:$0xff]
        %v698 = vld [vmem:[%s595 + $0x240] sm:$0xff]
        %v699 = vld [vmem:[%s595 + $0x248] sm:$0xff]
        %v700 = vld [vmem:[%s595 + $0x250] sm:$0xff]
        %v701 = vld [vmem:[%s595 + $0x258] sm:$0xff]
        %v702 = vld [vmem:[%s595 + $0x260] sm:$0xff]
        %v703 = vld [vmem:[%s595 + $0x268] sm:$0xff]
        %v704 = vld [vmem:[%s595 + $0x270] sm:$0xff]
        %v705 = vld [vmem:[%s595 + $0x278] sm:$0xff]
        %v706 = vld [vmem:[%s595 + $0x280] sm:$0xff]
        %v707 = vld [vmem:[%s595 + $0x288] sm:$0xff]
        %v708 = vld [vmem:[%s595 + $0x290] sm:$0xff]
        %v709 = vld [vmem:[%s595 + $0x298] sm:$0xff]
        %v710 = vld [vmem:[%s595 + $0x2a0] sm:$0xff]
        %v711 = vld [vmem:[%s595 + $0x2a8] sm:$0xff]
        %v712 = vld [vmem:[%s595 + $0x2b0] sm:$0xff]
        %v713 = vld [vmem:[%s595 + $0x2b8] sm:$0xff]
        %v714 = vld [vmem:[%s595 + $0x2c0] sm:$0xff]
        %v715 = vld [vmem:[%s595 + $0x2c8] sm:$0xff]
        %v716 = vld [vmem:[%s595 + $0x2d0] sm:$0xff]
        %v717 = vld [vmem:[%s595 + $0x2d8] sm:$0xff]
        %v718 = vld [vmem:[%s595 + $0x2e0] sm:$0xff]
        %v719 = vld [vmem:[%s595 + $0x2e8] sm:$0xff]
        %v720 = vld [vmem:[%s595 + $0x2f0] sm:$0xff]
        %v721 = vld [vmem:[%s595 + $0x2f8] sm:$0xff]
        %v722 = vld [vmem:[%s595 + $0x300] sm:$0xff]
        %v723 = vld [vmem:[%s595 + $0x308] sm:$0xff]
        %v724 = vld [vmem:[%s595 + $0x310] sm:$0xff]
        %v725 = vld [vmem:[%s595 + $0x318] sm:$0xff]
        %v726 = vld [vmem:[%s595 + $0x320] sm:$0xff]
        %v727 = vld [vmem:[%s595 + $0x328] sm:$0xff]
        %v728 = vld [vmem:[%s595 + $0x330] sm:$0xff]
        %v729 = vld [vmem:[%s595 + $0x338] sm:$0xff]
        %v730 = vld [vmem:[%s595 + $0x340] sm:$0xff]
        %v731 = vld [vmem:[%s595 + $0x348] sm:$0xff]
        %v732 = vld [vmem:[%s595 + $0x350] sm:$0xff]
        %v733 = vld [vmem:[%s595 + $0x358] sm:$0xff]
        %v734 = vld [vmem:[%s595 + $0x360] sm:$0xff]
        %v735 = vld [vmem:[%s595 + $0x368] sm:$0xff]
        %v736 = vld [vmem:[%s595 + $0x370] sm:$0xff]
        %v737 = vld [vmem:[%s595 + $0x378] sm:$0xff]
        %v738 = vld [vmem:[%s595 + $0x380] sm:$0xff]
        %v739 = vld [vmem:[%s595 + $0x388] sm:$0xff]
        %v740 = vld [vmem:[%s595 + $0x390] sm:$0xff]
        %v741 = vld [vmem:[%s595 + $0x398] sm:$0xff]
        %v742 = vld [vmem:[%s595 + $0x3a0] sm:$0xff]
        %v743 = vld [vmem:[%s595 + $0x3a8] sm:$0xff]
        %v744 = vld [vmem:[%s595 + $0x3b0] sm:$0xff]
        %v745 = vld [vmem:[%s595 + $0x3b8] sm:$0xff]
        %v746 = vld [vmem:[%s595 + $0x3c0] sm:$0xff]
        %v747 = vld [vmem:[%s595 + $0x3c8] sm:$0xff]
        %v748 = vld [vmem:[%s595 + $0x3d0] sm:$0xff]
        %v749 = vld [vmem:[%s595 + $0x3d8] sm:$0xff]
        %v750 = vld [vmem:[%s595 + $0x3e0] sm:$0xff]
        %v751 = vld [vmem:[%s595 + $0x3e8] sm:$0xff]
        %v752 = vld [vmem:[%s595 + $0x3f0] sm:$0xff]
        %v753 = vld [vmem:[%s595 + $0x3f8] sm:$0xff]
        %v754 = vld [vmem:[%s595 + $0x400] sm:$0xff]
        %v755 = vld [vmem:[%s595 + $0x408] sm:$0xff]
        %v756 = vld [vmem:[%s595 + $0x410] sm:$0xff]
        %v757 = vld [vmem:[%s595 + $0x418] sm:$0xff]
        %v758 = vld [vmem:[%s595 + $0x420] sm:$0xff]
        %v759 = vld [vmem:[%s595 + $0x428] sm:$0xff]
        %v760 = vld [vmem:[%s595 + $0x430] sm:$0xff]
        %v761 = vld [vmem:[%s595 + $0x438] sm:$0xff]
        %v762 = vld [vmem:[%s595 + $0x440] sm:$0xff]
        %v763 = vld [vmem:[%s595 + $0x448] sm:$0xff]
        %v764 = vld [vmem:[%s595 + $0x450] sm:$0xff]
        %v765 = vld [vmem:[%s595 + $0x458] sm:$0xff]
        %v766 = vld [vmem:[%s595 + $0x460] sm:$0xff]
        %v767 = vld [vmem:[%s595 + $0x468] sm:$0xff]
        %v768 = vld [vmem:[%s595 + $0x470] sm:$0xff]
        %v769 = vld [vmem:[%s595 + $0x478] sm:$0xff]
        %v770 = vld [vmem:[%s595 + $0x480] sm:$0xff]
        %v771 = vld [vmem:[%s595 + $0x488] sm:$0xff]
        %v772 = vld [vmem:[%s595 + $0x490] sm:$0xff]
        %v773 = vld [vmem:[%s595 + $0x498] sm:$0xff]
        %v774 = vld [vmem:[%s595 + $0x4a0] sm:$0xff]
        %v775 = vld [vmem:[%s595 + $0x4a8] sm:$0xff]
        %v776 = vld [vmem:[%s595 + $0x4b0] sm:$0xff]
        %v777 = vld [vmem:[%s595 + $0x4b8] sm:$0xff]
        %v778 = vld [vmem:[%s595 + $0x4c0] sm:$0xff]
        %v779 = vld [vmem:[%s595 + $0x4c8] sm:$0xff]
        %v780 = vld [vmem:[%s595 + $0x4d0] sm:$0xff]
        %v781 = vld [vmem:[%s595 + $0x4d8] sm:$0xff]
        %v782 = vld [vmem:[%s595 + $0x4e0] sm:$0xff]
        %v783 = vld [vmem:[%s595 + $0x4e8] sm:$0xff]
        %v784 = vld [vmem:[%s595 + $0x4f0] sm:$0xff]
        %v785 = vld [vmem:[%s595 + $0x4f8] sm:$0xff]
        %v786 = vld [vmem:[%s595 + $0x500] sm:$0xff]
        %v787 = vld [vmem:[%s595 + $0x508] sm:$0xff]
        %v788 = vld [vmem:[%s595 + $0x510] sm:$0xff]
        %v789 = vld [vmem:[%s595 + $0x518] sm:$0xff]
        %v790 = vld [vmem:[%s595 + $0x520] sm:$0xff]
        %v791 = vld [vmem:[%s595 + $0x528] sm:$0xff]
        %v792 = vld [vmem:[%s595 + $0x530] sm:$0xff]
        %v793 = vld [vmem:[%s595 + $0x538] sm:$0xff]
        %v794 = vld [vmem:[%s595 + $0x540] sm:$0xff]
        %v795 = vld [vmem:[%s595 + $0x548] sm:$0xff]
        %v796 = vld [vmem:[%s595 + $0x550] sm:$0xff]
        %v797 = vld [vmem:[%s595 + $0x558] sm:$0xff]
        %v798 = vld [vmem:[%s595 + $0x560] sm:$0xff]
        %v799 = vld [vmem:[%s595 + $0x568] sm:$0xff]
        %v800 = vld [vmem:[%s595 + $0x570] sm:$0xff]
        %v801 = vld [vmem:[%s595 + $0x578] sm:$0xff]
        %v802 = vld [vmem:[%s595 + $0x580] sm:$0xff]
        %v803 = vld [vmem:[%s595 + $0x588] sm:$0xff]
        %v804 = vld [vmem:[%s595 + $0x590] sm:$0xff]
        %v805 = vld [vmem:[%s595 + $0x598] sm:$0xff]
        %v806 = vld [vmem:[%s595 + $0x5a0] sm:$0xff]
        %v807 = vld [vmem:[%s595 + $0x5a8] sm:$0xff]
        %v808 = vld [vmem:[%s595 + $0x5b0] sm:$0xff]
        %v809 = vld [vmem:[%s595 + $0x5b8] sm:$0xff]
        %v810 = vld [vmem:[%s595 + $0x5c0] sm:$0xff]
        %v811 = vld [vmem:[%s595 + $0x5c8] sm:$0xff]
        %v812 = vld [vmem:[%s595 + $0x5d0] sm:$0xff]
        %v813 = vld [vmem:[%s595 + $0x5d8] sm:$0xff]
        %v814 = vld [vmem:[%s595 + $0x5e0] sm:$0xff]
        %v815 = vld [vmem:[%s595 + $0x5e8] sm:$0xff]
        %v816 = vld [vmem:[%s595 + $0x5f0] sm:$0xff]
        %v817 = vld [vmem:[%s595 + $0x5f8] sm:$0xff]
        %v818 = vld [vmem:[%s595 + $0x600] sm:$0xff]
        %v819 = vld [vmem:[%s595 + $0x608] sm:$0xff]
        %v820 = vld [vmem:[%s595 + $0x610] sm:$0xff]
        %v821 = vld [vmem:[%s595 + $0x618] sm:$0xff]
        %v822 = vld [vmem:[%s595 + $0x620] sm:$0xff]
        %v823 = vld [vmem:[%s595 + $0x628] sm:$0xff]
        %v824 = vld [vmem:[%s595 + $0x630] sm:$0xff]
        %v825 = vld [vmem:[%s595 + $0x638] sm:$0xff]
        %v826 = vld [vmem:[%s595 + $0x640] sm:$0xff]
        %v827 = vld [vmem:[%s595 + $0x648] sm:$0xff]
        %v828 = vld [vmem:[%s595 + $0x650] sm:$0xff]
        %v829 = vld [vmem:[%s595 + $0x658] sm:$0xff]
        %v830 = vld [vmem:[%s595 + $0x660] sm:$0xff]
        %v831 = vld [vmem:[%s595 + $0x668] sm:$0xff]
        %v832 = vld [vmem:[%s595 + $0x670] sm:$0xff]
        %v833 = vld [vmem:[%s595 + $0x678] sm:$0xff]
        %v834 = vld [vmem:[%s595 + $0x680] sm:$0xff]
        %v835 = vld [vmem:[%s595 + $0x688] sm:$0xff]
        %v836 = vld [vmem:[%s595 + $0x690] sm:$0xff]
        %v837 = vld [vmem:[%s595 + $0x698] sm:$0xff]
        %v838 = vld [vmem:[%s595 + $0x6a0] sm:$0xff]
        %v839 = vld [vmem:[%s595 + $0x6a8] sm:$0xff]
        %v840 = vld [vmem:[%s595 + $0x6b0] sm:$0xff]
        %v841 = vld [vmem:[%s595 + $0x6b8] sm:$0xff]
        %v842 = vld [vmem:[%s1] sm:$0xf]
        %844 = vset.pattern.permute.xlu0 0
        %845 = vperm.xlu0 %844, %v842
        %v846 = vpop.permute.xlu0 %845
        %v850 = vcombine.high %v624, %v624
        %v852 = vunpack.c.l.s4 1983009808
        %v853 = vunpack.c.0.s8 %v852
        %v854 = vlaneseq
        %v855 = vshrl.u32 %v854, 7
        %v856 = vsub.s32 %v853, %v855
        %v857 = vrot.slane %v624, %v856
        %v859 = vunpack.c.l.s4 1983009808
        %v860 = vunpack.c.0.s8 %v859
        %v861 = vlaneseq
        %v862 = vshrl.u32 %v861, 7
        %v863 = vsub.s32 %v860, %v862
        %v864 = vrot.slane %v850, %v863
        %v865 = vcombine.high %v857, %v857
        %v866 = vcombine.high %v864, %v864
        %v867 = vcombine.high %v625, %v625
        %v869 = vunpack.c.l.s4 1983009808
        %v870 = vunpack.c.0.s8 %v869
        %v871 = vlaneseq
        %v872 = vshrl.u32 %v871, 7
        %v873 = vsub.s32 %v870, %v872
        %v874 = vrot.slane %v625, %v873
        %v876 = vunpack.c.l.s4 1983009808
        %v877 = vunpack.c.0.s8 %v876
        %v878 = vlaneseq
        %v879 = vshrl.u32 %v878, 7
        %v880 = vsub.s32 %v877, %v879
        %v881 = vrot.slane %v867, %v880
        %v882 = vcombine.high %v874, %v874
        %v1105 = vunpack.c.l.b16 %v626
        %v1106 = vunpack.c.h.b16 %v626
        %v1107 = vunpack.c.l.b16 %v627
        %v1108 = vunpack.c.h.b16 %v627
        %v1109 = vunpack.c.l.b16 %v628
        %v1110 = vunpack.c.h.b16 %v628
        %v1111 = vunpack.c.l.b16 %v629
        %v1112 = vunpack.c.h.b16 %v629
        %v1113 = vunpack.c.l.b16 %v630
        %v1114 = vunpack.c.h.b16 %v630
        %v1115 = vunpack.c.l.b16 %v631
        %v1116 = vunpack.c.h.b16 %v631
        %v1117 = vunpack.c.l.b16 %v632
        %v1118 = vunpack.c.h.b16 %v632
        %v1119 = vunpack.c.l.b16 %v633
        %v1120 = vunpack.c.h.b16 %v633
        %v1121 = vunpack.c.l.b16 %v634
        %v1122 = vunpack.c.h.b16 %v634
        %v1123 = vunpack.c.l.b16 %v635
        %v1124 = vunpack.c.h.b16 %v635
        %v1125 = vunpack.c.l.b16 %v636
        %v1126 = vunpack.c.h.b16 %v636
        %v1127 = vunpack.c.l.b16 %v637
        %v1128 = vunpack.c.h.b16 %v637
        %v1129 = vunpack.c.l.b16 %v638
        %v1130 = vunpack.c.h.b16 %v638
        %v1131 = vunpack.c.l.b16 %v639
        %v1132 = vunpack.c.h.b16 %v639
        %v1133 = vunpack.c.l.b16 %v640
        %v1134 = vunpack.c.h.b16 %v640
        %v1135 = vunpack.c.l.b16 %v641
        %v1136 = vunpack.c.h.b16 %v641
        %v1137 = vunpack.c.l.b16 %v642
        %v1138 = vunpack.c.h.b16 %v642
        %v1139 = vunpack.c.l.b16 %v643
        %v1140 = vunpack.c.h.b16 %v643
        %v1141 = vunpack.c.l.b16 %v644
        %v1142 = vunpack.c.h.b16 %v644
        %v1143 = vunpack.c.l.b16 %v645
        %v1144 = vunpack.c.h.b16 %v645
        %v1145 = vunpack.c.l.b16 %v646
        %v1146 = vunpack.c.h.b16 %v646
        %v1147 = vunpack.c.l.b16 %v647
        %v1148 = vunpack.c.h.b16 %v647
        %v1149 = vunpack.c.l.b16 %v648
        %v1150 = vunpack.c.h.b16 %v648
        %v1151 = vunpack.c.l.b16 %v649
        %v1152 = vunpack.c.h.b16 %v649
        %v1153 = vunpack.c.l.b16 %v650
        %v1154 = vunpack.c.h.b16 %v650
        %v1155 = vunpack.c.l.b16 %v651
        %v1156 = vunpack.c.h.b16 %v651
        %v1157 = vunpack.c.l.b16 %v652
        %v1158 = vunpack.c.h.b16 %v652
        %v1159 = vunpack.c.l.b16 %v653
        %v1160 = vunpack.c.h.b16 %v653
        %v1161 = vunpack.c.l.b16 %v654
        %v1162 = vunpack.c.h.b16 %v654
        %v1163 = vunpack.c.l.b16 %v655
        %v1164 = vunpack.c.h.b16 %v655
        %v1165 = vunpack.c.l.b16 %v656
        %v1166 = vunpack.c.h.b16 %v656
        %v1167 = vunpack.c.l.b16 %v657
        %v1168 = vunpack.c.h.b16 %v657
        %v1169 = vunpack.c.l.b16 %v658
        %v1170 = vunpack.c.h.b16 %v658
        %v1171 = vunpack.c.l.b16 %v659
        %v1172 = vunpack.c.h.b16 %v659
        %v1173 = vunpack.c.l.b16 %v660
        %v1174 = vunpack.c.h.b16 %v660
        %v1175 = vunpack.c.l.b16 %v661
        %v1176 = vunpack.c.h.b16 %v661
        %v1177 = vunpack.c.l.b16 %v662
        %v1178 = vunpack.c.h.b16 %v662
        %v1179 = vunpack.c.l.b16 %v663
        %v1180 = vunpack.c.h.b16 %v663
        %v1181 = vunpack.c.l.b16 %v664
        %v1182 = vunpack.c.h.b16 %v664
        %v1183 = vunpack.c.l.b16 %v665
        %v1184 = vunpack.c.h.b16 %v665
        %v1185 = vunpack.c.l.b16 %v666
        %v1186 = vunpack.c.h.b16 %v666
        %v1187 = vunpack.c.l.b16 %v667
        %v1188 = vunpack.c.h.b16 %v667
        %v1189 = vunpack.c.l.b16 %v668
        %v1190 = vunpack.c.h.b16 %v668
        %v1191 = vunpack.c.l.b16 %v669
        %v1192 = vunpack.c.h.b16 %v669
        %v1193 = vunpack.c.l.b16 %v670
        %v1194 = vunpack.c.h.b16 %v670
        %v1195 = vunpack.c.l.b16 %v671
        %v1196 = vunpack.c.h.b16 %v671
        %v1197 = vunpack.c.l.b16 %v672
        %v1198 = vunpack.c.h.b16 %v672
        %v1199 = vunpack.c.l.b16 %v673
        %v1200 = vunpack.c.h.b16 %v673
        %v1201 = vunpack.c.l.b16 %v674
        %v1202 = vunpack.c.h.b16 %v674
        %v1203 = vunpack.c.l.b16 %v675
        %v1204 = vunpack.c.h.b16 %v675
        %v1205 = vunpack.c.l.b16 %v676
        %v1206 = vunpack.c.h.b16 %v676
        %v1207 = vunpack.c.l.b16 %v677
        %v1208 = vunpack.c.h.b16 %v677
        %v1209 = vunpack.c.l.b16 %v678
        %v1210 = vunpack.c.h.b16 %v678
        %v1211 = vunpack.c.l.b16 %v679
        %v1212 = vunpack.c.h.b16 %v679
        %v1213 = vunpack.c.l.b16 %v680
        %v1214 = vunpack.c.h.b16 %v680
        %v1215 = vunpack.c.l.b16 %v681
        %v1216 = vunpack.c.h.b16 %v681
        %v1217 = vunpack.c.l.b16 %v682
        %v1218 = vunpack.c.h.b16 %v682
        %v1219 = vunpack.c.l.b16 %v683
        %v1220 = vunpack.c.h.b16 %v683
        %v1221 = vunpack.c.l.b16 %v684
        %v1222 = vunpack.c.h.b16 %v684
        %v1223 = vunpack.c.l.b16 %v685
        %v1224 = vunpack.c.h.b16 %v685
        %v1225 = vunpack.c.l.b16 %v686
        %v1226 = vunpack.c.h.b16 %v686
        %v1227 = vunpack.c.l.b16 %v687
        %v1228 = vunpack.c.h.b16 %v687
        %v1229 = vunpack.c.l.b16 %v688
        %v1230 = vunpack.c.h.b16 %v688
        %v1231 = vunpack.c.l.b16 %v689
        %v1232 = vunpack.c.h.b16 %v689
        %v1233 = vunpack.c.l.b16 %v690
        %v1234 = vunpack.c.h.b16 %v690
        %v1235 = vunpack.c.l.b16 %v691
        %v1236 = vunpack.c.h.b16 %v691
        %v1237 = vunpack.c.l.b16 %v692
        %v1238 = vunpack.c.h.b16 %v692
        %v1239 = vunpack.c.l.b16 %v693
        %v1240 = vunpack.c.h.b16 %v693
        %v1241 = vunpack.c.l.b16 %v694
        %v1242 = vunpack.c.h.b16 %v694
        %v1243 = vunpack.c.l.b16 %v695
        %v1244 = vunpack.c.h.b16 %v695
        %v1245 = vunpack.c.l.b16 %v696
        %v1246 = vunpack.c.h.b16 %v696
        %v1247 = vunpack.c.l.b16 %v697
        %v1248 = vunpack.c.h.b16 %v697
        %v1249 = vunpack.c.l.b16 %v698
        %v1250 = vunpack.c.h.b16 %v698
        %v1251 = vunpack.c.l.b16 %v699
        %v1252 = vunpack.c.h.b16 %v699
        %v1253 = vunpack.c.l.b16 %v700
        %v1254 = vunpack.c.h.b16 %v700
        %v1255 = vunpack.c.l.b16 %v701
        %v1256 = vunpack.c.h.b16 %v701
        %v1257 = vunpack.c.l.b16 %v702
        %v1258 = vunpack.c.h.b16 %v702
        %v1259 = vunpack.c.l.b16 %v703
        %v1260 = vunpack.c.h.b16 %v703
        %v1261 = vunpack.c.l.b16 %v704
        %v1262 = vunpack.c.h.b16 %v704
        %v1263 = vunpack.c.l.b16 %v705
        %v1264 = vunpack.c.h.b16 %v705
        %v1265 = vunpack.c.l.b16 %v706
        %v1266 = vunpack.c.h.b16 %v706
        %v1267 = vunpack.c.l.b16 %v707
        %v1268 = vunpack.c.h.b16 %v707
        %v1269 = vunpack.c.l.b16 %v708
        %v1270 = vunpack.c.h.b16 %v708
        %v1271 = vunpack.c.l.b16 %v709
        %v1272 = vunpack.c.h.b16 %v709
        %v1273 = vunpack.c.l.b16 %v710
        %v1274 = vunpack.c.h.b16 %v710
        %v1275 = vunpack.c.l.b16 %v711
        %v1276 = vunpack.c.h.b16 %v711
        %v1277 = vunpack.c.l.b16 %v712
        %v1278 = vunpack.c.h.b16 %v712
        %v1279 = vunpack.c.l.b16 %v713
        %v1280 = vunpack.c.h.b16 %v713
        %v1281 = vunpack.c.l.b16 %v714
        %v1282 = vunpack.c.h.b16 %v714
        %v1283 = vunpack.c.l.b16 %v715
        %v1284 = vunpack.c.h.b16 %v715
        %v1285 = vunpack.c.l.b16 %v716
        %v1286 = vunpack.c.h.b16 %v716
        %v1287 = vunpack.c.l.b16 %v717
        %v1288 = vunpack.c.h.b16 %v717
        %v1289 = vunpack.c.l.b16 %v718
        %v1290 = vunpack.c.h.b16 %v718
        %v1291 = vunpack.c.l.b16 %v719
        %v1292 = vunpack.c.h.b16 %v719
        %v1293 = vunpack.c.l.b16 %v720
        %v1294 = vunpack.c.h.b16 %v720
        %v1295 = vunpack.c.l.b16 %v721
        %v1296 = vunpack.c.h.b16 %v721
        %v1297 = vunpack.c.l.b16 %v722
        %v1298 = vunpack.c.h.b16 %v722
        %v1299 = vunpack.c.l.b16 %v723
        %v1300 = vunpack.c.h.b16 %v723
        %v1301 = vunpack.c.l.b16 %v724
        %v1302 = vunpack.c.h.b16 %v724
        %v1303 = vunpack.c.l.b16 %v725
        %v1304 = vunpack.c.h.b16 %v725
        %v1305 = vunpack.c.l.b16 %v726
        %v1306 = vunpack.c.h.b16 %v726
        %v1307 = vunpack.c.l.b16 %v727
        %v1308 = vunpack.c.h.b16 %v727
        %v1309 = vunpack.c.l.b16 %v728
        %v1310 = vunpack.c.h.b16 %v728
        %v1311 = vunpack.c.l.b16 %v729
        %v1312 = vunpack.c.h.b16 %v729
        %v1313 = vunpack.c.l.b16 %v730
        %v1314 = vunpack.c.h.b16 %v730
        %v1315 = vunpack.c.l.b16 %v731
        %v1316 = vunpack.c.h.b16 %v731
        %v1317 = vunpack.c.l.b16 %v732
        %v1318 = vunpack.c.h.b16 %v732
        %v1319 = vunpack.c.l.b16 %v733
        %v1320 = vunpack.c.h.b16 %v733
        %v1321 = vunpack.c.l.b16 %v734
        %v1322 = vunpack.c.h.b16 %v734
        %v1323 = vunpack.c.l.b16 %v735
        %v1324 = vunpack.c.h.b16 %v735
        %v1325 = vunpack.c.l.b16 %v736
        %v1326 = vunpack.c.h.b16 %v736
        %v1327 = vunpack.c.l.b16 %v737
        %v1328 = vunpack.c.h.b16 %v737
        %v1329 = vunpack.c.l.b16 %v738
        %v1330 = vunpack.c.h.b16 %v738
        %v1331 = vunpack.c.l.b16 %v739
        %v1332 = vunpack.c.h.b16 %v739
        %v1333 = vunpack.c.l.b16 %v740
        %v1334 = vunpack.c.h.b16 %v740
        %v1335 = vunpack.c.l.b16 %v741
        %v1336 = vunpack.c.h.b16 %v741
        %v1337 = vunpack.c.l.b16 %v742
        %v1338 = vunpack.c.h.b16 %v742
        %v1339 = vunpack.c.l.b16 %v743
        %v1340 = vunpack.c.h.b16 %v743
        %v1341 = vunpack.c.l.b16 %v744
        %v1342 = vunpack.c.h.b16 %v744
        %v1343 = vunpack.c.l.b16 %v745
        %v1344 = vunpack.c.h.b16 %v745
        %v1345 = vunpack.c.l.b16 %v746
        %v1346 = vunpack.c.h.b16 %v746
        %v1347 = vunpack.c.l.b16 %v747
        %v1348 = vunpack.c.h.b16 %v747
        %v1349 = vunpack.c.l.b16 %v748
        %v1350 = vunpack.c.h.b16 %v748
        %v1351 = vunpack.c.l.b16 %v749
        %v1352 = vunpack.c.h.b16 %v749
        %v1353 = vunpack.c.l.b16 %v750
        %v1354 = vunpack.c.h.b16 %v750
        %v1355 = vunpack.c.l.b16 %v751
        %v1356 = vunpack.c.h.b16 %v751
        %v1357 = vunpack.c.l.b16 %v752
        %v1358 = vunpack.c.h.b16 %v752
        %v1359 = vunpack.c.l.b16 %v753
        %v1360 = vunpack.c.h.b16 %v753
        %v1361 = vunpack.c.l.b16 %v754
        %v1362 = vunpack.c.h.b16 %v754
        %v1363 = vunpack.c.l.b16 %v755
        %v1364 = vunpack.c.h.b16 %v755
        %v1365 = vunpack.c.l.b16 %v756
        %v1366 = vunpack.c.h.b16 %v756
        %v1367 = vunpack.c.l.b16 %v757
        %v1368 = vunpack.c.h.b16 %v757
        %v1369 = vunpack.c.l.b16 %v758
        %v1370 = vunpack.c.h.b16 %v758
        %v1371 = vunpack.c.l.b16 %v759
        %v1372 = vunpack.c.h.b16 %v759
        %v1373 = vunpack.c.l.b16 %v760
        %v1374 = vunpack.c.h.b16 %v760
        %v1375 = vunpack.c.l.b16 %v761
        %v1376 = vunpack.c.h.b16 %v761
        %v1377 = vunpack.c.l.b16 %v762
        %v1378 = vunpack.c.h.b16 %v762
        %v1379 = vunpack.c.l.b16 %v763
        %v1380 = vunpack.c.h.b16 %v763
        %v1381 = vunpack.c.l.b16 %v764
        %v1382 = vunpack.c.h.b16 %v764
        %v1383 = vunpack.c.l.b16 %v765
        %v1384 = vunpack.c.h.b16 %v765
        %v1385 = vunpack.c.l.b16 %v766
        %v1386 = vunpack.c.h.b16 %v766
        %v1387 = vunpack.c.l.b16 %v767
        %v1388 = vunpack.c.h.b16 %v767
        %v1389 = vunpack.c.l.b16 %v768
        %v1390 = vunpack.c.h.b16 %v768
        %v1391 = vunpack.c.l.b16 %v769
        %v1392 = vunpack.c.h.b16 %v769
        %v1393 = vunpack.c.l.b16 %v770
        %v1394 = vunpack.c.h.b16 %v770
        %v1395 = vunpack.c.l.b16 %v771
        %v1396 = vunpack.c.h.b16 %v771
        %v1397 = vunpack.c.l.b16 %v772
        %v1398 = vunpack.c.h.b16 %v772
        %v1399 = vunpack.c.l.b16 %v773
        %v1400 = vunpack.c.h.b16 %v773
        %v1401 = vunpack.c.l.b16 %v774
        %v1402 = vunpack.c.h.b16 %v774
        %v1403 = vunpack.c.l.b16 %v775
        %v1404 = vunpack.c.h.b16 %v775
        %v1405 = vunpack.c.l.b16 %v776
        %v1406 = vunpack.c.h.b16 %v776
        %v1407 = vunpack.c.l.b16 %v777
        %v1408 = vunpack.c.h.b16 %v777
        %v1409 = vunpack.c.l.b16 %v778
        %v1410 = vunpack.c.h.b16 %v778
        %v1411 = vunpack.c.l.b16 %v779
        %v1412 = vunpack.c.h.b16 %v779
        %v1413 = vunpack.c.l.b16 %v780
        %v1414 = vunpack.c.h.b16 %v780
        %v1415 = vunpack.c.l.b16 %v781
        %v1416 = vunpack.c.h.b16 %v781
        %v1417 = vunpack.c.l.b16 %v782
        %v1418 = vunpack.c.h.b16 %v782
        %v1419 = vunpack.c.l.b16 %v783
        %v1420 = vunpack.c.h.b16 %v783
        %v1421 = vunpack.c.l.b16 %v784
        %v1422 = vunpack.c.h.b16 %v784
        %v1423 = vunpack.c.l.b16 %v785
        %v1424 = vunpack.c.h.b16 %v785
        %v1425 = vunpack.c.l.b16 %v786
        %v1426 = vunpack.c.h.b16 %v786
        %v1427 = vunpack.c.l.b16 %v787
        %v1428 = vunpack.c.h.b16 %v787
        %v1429 = vunpack.c.l.b16 %v788
        %v1430 = vunpack.c.h.b16 %v788
        %v1431 = vunpack.c.l.b16 %v789
        %v1432 = vunpack.c.h.b16 %v789
        %v1433 = vunpack.c.l.b16 %v790
        %v1434 = vunpack.c.h.b16 %v790
        %v1435 = vunpack.c.l.b16 %v791
        %v1436 = vunpack.c.h.b16 %v791
        %v1437 = vunpack.c.l.b16 %v792
        %v1438 = vunpack.c.h.b16 %v792
        %v1439 = vunpack.c.l.b16 %v793
        %v1440 = vunpack.c.h.b16 %v793
        %v1441 = vunpack.c.l.b16 %v794
        %v1442 = vunpack.c.h.b16 %v794
        %v1443 = vunpack.c.l.b16 %v795
        %v1444 = vunpack.c.h.b16 %v795
        %v1445 = vunpack.c.l.b16 %v796
        %v1446 = vunpack.c.h.b16 %v796
        %v1447 = vunpack.c.l.b16 %v797
        %v1448 = vunpack.c.h.b16 %v797
        %v1449 = vunpack.c.l.b16 %v798
        %v1450 = vunpack.c.h.b16 %v798
        %v1451 = vunpack.c.l.b16 %v799
        %v1452 = vunpack.c.h.b16 %v799
        %v1453 = vunpack.c.l.b16 %v800
        %v1454 = vunpack.c.h.b16 %v800
        %v1455 = vunpack.c.l.b16 %v801
        %v1456 = vunpack.c.h.b16 %v801
        %v1457 = vunpack.c.l.b16 %v802
        %v1458 = vunpack.c.h.b16 %v802
        %v1459 = vunpack.c.l.b16 %v803
        %v1460 = vunpack.c.h.b16 %v803
        %v1461 = vunpack.c.l.b16 %v804
        %v1462 = vunpack.c.h.b16 %v804
        %v1463 = vunpack.c.l.b16 %v805
        %v1464 = vunpack.c.h.b16 %v805
        %v1465 = vunpack.c.l.b16 %v806
        %v1466 = vunpack.c.h.b16 %v806
        %v1467 = vunpack.c.l.b16 %v807
        %v1468 = vunpack.c.h.b16 %v807
        %v1469 = vunpack.c.l.b16 %v808
        %v1470 = vunpack.c.h.b16 %v808
        %v1471 = vunpack.c.l.b16 %v809
        %v1472 = vunpack.c.h.b16 %v809
        %v1473 = vunpack.c.l.b16 %v810
        %v1474 = vunpack.c.h.b16 %v810
        %v1475 = vunpack.c.l.b16 %v811
        %v1476 = vunpack.c.h.b16 %v811
        %v1477 = vunpack.c.l.b16 %v812
        %v1478 = vunpack.c.h.b16 %v812
        %v1479 = vunpack.c.l.b16 %v813
        %v1480 = vunpack.c.h.b16 %v813
        %v1481 = vunpack.c.l.b16 %v814
        %v1482 = vunpack.c.h.b16 %v814
        %v1483 = vunpack.c.l.b16 %v815
        %v1484 = vunpack.c.h.b16 %v815
        %v1485 = vunpack.c.l.b16 %v816
        %v1486 = vunpack.c.h.b16 %v816
        %v1487 = vunpack.c.l.b16 %v817
        %v1488 = vunpack.c.h.b16 %v817
        %v1489 = vunpack.c.l.b16 %v818
        %v1490 = vunpack.c.h.b16 %v818
        %v1491 = vunpack.c.l.b16 %v819
        %v1492 = vunpack.c.h.b16 %v819
        %v1493 = vunpack.c.l.b16 %v820
        %v1494 = vunpack.c.h.b16 %v820
        %v1495 = vunpack.c.l.b16 %v821
        %v1496 = vunpack.c.h.b16 %v821
        %v1497 = vunpack.c.l.b16 %v822
        %v1498 = vunpack.c.h.b16 %v822
        %v1499 = vunpack.c.l.b16 %v823
        %v1500 = vunpack.c.h.b16 %v823
        %v1501 = vunpack.c.l.b16 %v824
        %v1502 = vunpack.c.h.b16 %v824
        %v1503 = vunpack.c.l.b16 %v825
        %v1504 = vunpack.c.h.b16 %v825
        %v1505 = vunpack.c.l.b16 %v826
        %v1506 = vunpack.c.h.b16 %v826
        %v1507 = vunpack.c.l.b16 %v827
        %v1508 = vunpack.c.h.b16 %v827
        %v1509 = vunpack.c.l.b16 %v828
        %v1510 = vunpack.c.h.b16 %v828
        %v1511 = vunpack.c.l.b16 %v829
        %v1512 = vunpack.c.h.b16 %v829
        %v1513 = vunpack.c.l.b16 %v830
        %v1514 = vunpack.c.h.b16 %v830
        %v1515 = vunpack.c.l.b16 %v831
        %v1516 = vunpack.c.h.b16 %v831
        %v1517 = vunpack.c.l.b16 %v832
        %v1518 = vunpack.c.h.b16 %v832
        %v1519 = vunpack.c.l.b16 %v833
        %v1520 = vunpack.c.h.b16 %v833
        %v1521 = vunpack.c.l.b16 %v834
        %v1522 = vunpack.c.h.b16 %v834
        %v1523 = vunpack.c.l.b16 %v835
        %v1524 = vunpack.c.h.b16 %v835
        %v1525 = vunpack.c.l.b16 %v836
        %v1526 = vunpack.c.h.b16 %v836
        %v1527 = vunpack.c.l.b16 %v837
        %v1528 = vunpack.c.h.b16 %v837
        %v1529 = vunpack.c.l.b16 %v838
        %v1530 = vunpack.c.h.b16 %v838
        %v1531 = vunpack.c.l.b16 %v839
        %v1532 = vunpack.c.h.b16 %v839
        %v1533 = vunpack.c.l.b16 %v840
        %v1534 = vunpack.c.h.b16 %v840
        %v1535 = vunpack.c.l.b16 %v841
        %v1536 = vunpack.c.h.b16 %v841
        %v1537 = vpack.c.b16 %v1109, %v1105
        %v1538 = vpack.c.b16 %v1110, %v1106
        %v1539 = vpack.c.b16 %v1111, %v1107
        %v1540 = vpack.c.b16 %v1112, %v1108
        %v1541 = vpack.c.b16 %v1117, %v1113
        %v1542 = vpack.c.b16 %v1118, %v1114
        %v1543 = vpack.c.b16 %v1119, %v1115
        %v1544 = vpack.c.b16 %v1120, %v1116
        %v1545 = vpack.c.b16 %v1125, %v1121
        %v1546 = vpack.c.b16 %v1126, %v1122
        %v1547 = vpack.c.b16 %v1127, %v1123
        %v1548 = vpack.c.b16 %v1128, %v1124
        %v1549 = vpack.c.b16 %v1133, %v1129
        %v1550 = vpack.c.b16 %v1134, %v1130
        %v1551 = vpack.c.b16 %v1135, %v1131
        %v1552 = vpack.c.b16 %v1136, %v1132
        %v1553 = vpack.c.b16 %v1141, %v1137
        %v1554 = vpack.c.b16 %v1142, %v1138
        %v1555 = vpack.c.b16 %v1143, %v1139
        %v1556 = vpack.c.b16 %v1144, %v1140
        %v1557 = vpack.c.b16 %v1149, %v1145
        %v1558 = vpack.c.b16 %v1150, %v1146
        %v1559 = vpack.c.b16 %v1151, %v1147
        %v1560 = vpack.c.b16 %v1152, %v1148
        %v1561 = vpack.c.b16 %v1157, %v1153
        %v1562 = vpack.c.b16 %v1158, %v1154
        %v1563 = vpack.c.b16 %v1159, %v1155
        %v1564 = vpack.c.b16 %v1160, %v1156
        %v1565 = vpack.c.b16 %v1165, %v1161
        %v1566 = vpack.c.b16 %v1166, %v1162
        %v1567 = vpack.c.b16 %v1167, %v1163
        %v1568 = vpack.c.b16 %v1168, %v1164
        %v1569 = vpack.c.b16 %v1173, %v1169
        %v1570 = vpack.c.b16 %v1174, %v1170
        %v1571 = vpack.c.b16 %v1175, %v1171
        %v1572 = vpack.c.b16 %v1176, %v1172
        %v1573 = vpack.c.b16 %v1181, %v1177
        %v1574 = vpack.c.b16 %v1182, %v1178
        %v1575 = vpack.c.b16 %v1183, %v1179
        %v1576 = vpack.c.b16 %v1184, %v1180
        %v1577 = vpack.c.b16 %v1189, %v1185
        %v1578 = vpack.c.b16 %v1190, %v1186
        %v1579 = vpack.c.b16 %v1191, %v1187
        %v1580 = vpack.c.b16 %v1192, %v1188
        %v1581 = vpack.c.b16 %v1197, %v1193
        %v1582 = vpack.c.b16 %v1198, %v1194
        %v1583 = vpack.c.b16 %v1199, %v1195
        %v1584 = vpack.c.b16 %v1200, %v1196
        %v1585 = vpack.c.b16 %v1205, %v1201
        %v1586 = vpack.c.b16 %v1206, %v1202
        %v1587 = vpack.c.b16 %v1207, %v1203
        %v1588 = vpack.c.b16 %v1208, %v1204
        %v1589 = vpack.c.b16 %v1213, %v1209
        %v1590 = vpack.c.b16 %v1214, %v1210
        %v1591 = vpack.c.b16 %v1215, %v1211
        %v1592 = vpack.c.b16 %v1216, %v1212
        %v1593 = vpack.c.b16 %v1221, %v1217
        %v1594 = vpack.c.b16 %v1222, %v1218
        %v1595 = vpack.c.b16 %v1223, %v1219
        %v1596 = vpack.c.b16 %v1224, %v1220
        %v1597 = vpack.c.b16 %v1229, %v1225
        %v1598 = vpack.c.b16 %v1230, %v1226
        %v1599 = vpack.c.b16 %v1231, %v1227
        %v1600 = vpack.c.b16 %v1232, %v1228
        %v1601 = vpack.c.b16 %v1237, %v1233
        %v1602 = vpack.c.b16 %v1238, %v1234
        %v1603 = vpack.c.b16 %v1239, %v1235
        %v1604 = vpack.c.b16 %v1240, %v1236
        %v1605 = vpack.c.b16 %v1245, %v1241
        %v1606 = vpack.c.b16 %v1246, %v1242
        %v1607 = vpack.c.b16 %v1247, %v1243
        %v1608 = vpack.c.b16 %v1248, %v1244
        %v1609 = vpack.c.b16 %v1253, %v1249
        %v1610 = vpack.c.b16 %v1254, %v1250
        %v1611 = vpack.c.b16 %v1255, %v1251
        %v1612 = vpack.c.b16 %v1256, %v1252
        %v1613 = vpack.c.b16 %v1261, %v1257
        %v1614 = vpack.c.b16 %v1262, %v1258
        %v1615 = vpack.c.b16 %v1263, %v1259
        %v1616 = vpack.c.b16 %v1264, %v1260
        %v1617 = vpack.c.b16 %v1269, %v1265
        %v1618 = vpack.c.b16 %v1270, %v1266
        %v1619 = vpack.c.b16 %v1271, %v1267
        %v1620 = vpack.c.b16 %v1272, %v1268
        %v1621 = vpack.c.b16 %v1277, %v1273
        %v1622 = vpack.c.b16 %v1278, %v1274
        %v1623 = vpack.c.b16 %v1279, %v1275
        %v1624 = vpack.c.b16 %v1280, %v1276
        %v1625 = vpack.c.b16 %v1285, %v1281
        %v1626 = vpack.c.b16 %v1286, %v1282
        %v1627 = vpack.c.b16 %v1287, %v1283
        %v1628 = vpack.c.b16 %v1288, %v1284
        %v1629 = vpack.c.b16 %v1293, %v1289
        %v1630 = vpack.c.b16 %v1294, %v1290
        %v1631 = vpack.c.b16 %v1295, %v1291
        %v1632 = vpack.c.b16 %v1296, %v1292
        %v1633 = vpack.c.b16 %v1301, %v1297
        %v1634 = vpack.c.b16 %v1302, %v1298
        %v1635 = vpack.c.b16 %v1303, %v1299
        %v1636 = vpack.c.b16 %v1304, %v1300
        %v1637 = vpack.c.b16 %v1309, %v1305
        %v1638 = vpack.c.b16 %v1310, %v1306
        %v1639 = vpack.c.b16 %v1311, %v1307
        %v1640 = vpack.c.b16 %v1312, %v1308
        %v1641 = vpack.c.b16 %v1317, %v1313
        %v1642 = vpack.c.b16 %v1318, %v1314
        %v1643 = vpack.c.b16 %v1319, %v1315
        %v1644 = vpack.c.b16 %v1320, %v1316
        %v1645 = vpack.c.b16 %v1325, %v1321
        %v1646 = vpack.c.b16 %v1326, %v1322
        %v1647 = vpack.c.b16 %v1327, %v1323
        %v1648 = vpack.c.b16 %v1328, %v1324
        %v1649 = vpack.c.b16 %v1333, %v1329
        %v1650 = vpack.c.b16 %v1334, %v1330
        %v1651 = vpack.c.b16 %v1335, %v1331
        %v1652 = vpack.c.b16 %v1336, %v1332
        %v1653 = vpack.c.b16 %v1341, %v1337
        %v1654 = vpack.c.b16 %v1342, %v1338
        %v1655 = vpack.c.b16 %v1343, %v1339
        %v1656 = vpack.c.b16 %v1344, %v1340
        %v1657 = vpack.c.b16 %v1349, %v1345
        %v1658 = vpack.c.b16 %v1350, %v1346
        %v1659 = vpack.c.b16 %v1351, %v1347
        %v1660 = vpack.c.b16 %v1352, %v1348
        %v1661 = vpack.c.b16 %v1357, %v1353
        %v1662 = vpack.c.b16 %v1358, %v1354
        %v1663 = vpack.c.b16 %v1359, %v1355
        %v1664 = vpack.c.b16 %v1360, %v1356
        %v1665 = vpack.c.b16 %v1365, %v1361
        %v1666 = vpack.c.b16 %v1366, %v1362
        %v1667 = vpack.c.b16 %v1367, %v1363
        %v1668 = vpack.c.b16 %v1368, %v1364
        %v1669 = vpack.c.b16 %v1373, %v1369
        %v1670 = vpack.c.b16 %v1374, %v1370
        %v1671 = vpack.c.b16 %v1375, %v1371
        %v1672 = vpack.c.b16 %v1376, %v1372
        %v1673 = vpack.c.b16 %v1381, %v1377
        %v1674 = vpack.c.b16 %v1382, %v1378
        %v1675 = vpack.c.b16 %v1383, %v1379
        %v1676 = vpack.c.b16 %v1384, %v1380
        %v1677 = vpack.c.b16 %v1389, %v1385
        %v1678 = vpack.c.b16 %v1390, %v1386
        %v1679 = vpack.c.b16 %v1391, %v1387
        %v1680 = vpack.c.b16 %v1392, %v1388
        %v1681 = vpack.c.b16 %v1397, %v1393
        %v1682 = vpack.c.b16 %v1398, %v1394
        %v1683 = vpack.c.b16 %v1399, %v1395
        %v1684 = vpack.c.b16 %v1400, %v1396
        %v1685 = vpack.c.b16 %v1405, %v1401
        %v1686 = vpack.c.b16 %v1406, %v1402
        %v1687 = vpack.c.b16 %v1407, %v1403
        %v1688 = vpack.c.b16 %v1408, %v1404
        %v1689 = vpack.c.b16 %v1413, %v1409
        %v1690 = vpack.c.b16 %v1414, %v1410
        %v1691 = vpack.c.b16 %v1415, %v1411
        %v1692 = vpack.c.b16 %v1416, %v1412
        %v1693 = vpack.c.b16 %v1421, %v1417
        %v1694 = vpack.c.b16 %v1422, %v1418
        %v1695 = vpack.c.b16 %v1423, %v1419
        %v1696 = vpack.c.b16 %v1424, %v1420
        %v1697 = vpack.c.b16 %v1429, %v1425
        %v1698 = vpack.c.b16 %v1430, %v1426
        %v1699 = vpack.c.b16 %v1431, %v1427
        %v1700 = vpack.c.b16 %v1432, %v1428
        %v1701 = vpack.c.b16 %v1437, %v1433
        %v1702 = vpack.c.b16 %v1438, %v1434
        %v1703 = vpack.c.b16 %v1439, %v1435
        %v1704 = vpack.c.b16 %v1440, %v1436
        %v1705 = vpack.c.b16 %v1445, %v1441
        %v1706 = vpack.c.b16 %v1446, %v1442
        %v1707 = vpack.c.b16 %v1447, %v1443
        %v1708 = vpack.c.b16 %v1448, %v1444
        %v1709 = vpack.c.b16 %v1453, %v1449
        %v1710 = vpack.c.b16 %v1454, %v1450
        %v1711 = vpack.c.b16 %v1455, %v1451
        %v1712 = vpack.c.b16 %v1456, %v1452
        %v1713 = vpack.c.b16 %v1461, %v1457
        %v1714 = vpack.c.b16 %v1462, %v1458
        %v1715 = vpack.c.b16 %v1463, %v1459
        %v1716 = vpack.c.b16 %v1464, %v1460
        %v1717 = vpack.c.b16 %v1469, %v1465
        %v1718 = vpack.c.b16 %v1470, %v1466
        %v1719 = vpack.c.b16 %v1471, %v1467
        %v1720 = vpack.c.b16 %v1472, %v1468
        %v1721 = vpack.c.b16 %v1477, %v1473
        %v1722 = vpack.c.b16 %v1478, %v1474
        %v1723 = vpack.c.b16 %v1479, %v1475
        %v1724 = vpack.c.b16 %v1480, %v1476
        %v1725 = vpack.c.b16 %v1485, %v1481
        %v1726 = vpack.c.b16 %v1486, %v1482
        %v1727 = vpack.c.b16 %v1487, %v1483
        %v1728 = vpack.c.b16 %v1488, %v1484
        %v1729 = vpack.c.b16 %v1493, %v1489
        %v1730 = vpack.c.b16 %v1494, %v1490
        %v1731 = vpack.c.b16 %v1495, %v1491
        %v1732 = vpack.c.b16 %v1496, %v1492
        %v1733 = vpack.c.b16 %v1501, %v1497
        %v1734 = vpack.c.b16 %v1502, %v1498
        %v1735 = vpack.c.b16 %v1503, %v1499
        %v1736 = vpack.c.b16 %v1504, %v1500
        %v1737 = vpack.c.b16 %v1509, %v1505
        %v1738 = vpack.c.b16 %v1510, %v1506
        %v1739 = vpack.c.b16 %v1511, %v1507
        %v1740 = vpack.c.b16 %v1512, %v1508
        %v1741 = vpack.c.b16 %v1517, %v1513
        %v1742 = vpack.c.b16 %v1518, %v1514
        %v1743 = vpack.c.b16 %v1519, %v1515
        %v1744 = vpack.c.b16 %v1520, %v1516
        %v1745 = vpack.c.b16 %v1525, %v1521
        %v1746 = vpack.c.b16 %v1526, %v1522
        %v1747 = vpack.c.b16 %v1527, %v1523
        %v1748 = vpack.c.b16 %v1528, %v1524
        %v1749 = vpack.c.b16 %v1533, %v1529
        %v1750 = vpack.c.b16 %v1534, %v1530
        %v1751 = vpack.c.b16 %v1535, %v1531
        %v1752 = vpack.c.b16 %v1536, %v1532
        %vm1969 = vcmask 785408
        %v1971 = vsel %vm1969, %v881, 0
        %1973 = vmatprep.subr.bf16.mxu0 %v1538
        %1974 = vmatpush1.bf16.msra.mxu0 %v1537
        %1975 = vmatprep.subr.bf16.mxu0 %v1542
        %1976 = vmatpush1.bf16.msra.mxu0 %v1541
        %1977 = vmatprep.subr.bf16.mxu0 %v1546
        %1978 = vmatpush1.bf16.msra.mxu0 %v1545
        %1979 = vmatprep.subr.bf16.mxu0 %v1550
        %1980 = vmatpush1.bf16.msra.mxu0 %v1549
        %1981 = vmatprep.subr.bf16.mxu0 %v1554
        %1982 = vmatpush1.bf16.msra.mxu0 %v1553
        %1983 = vmatprep.subr.bf16.mxu0 %v1558
        %1984 = vmatpush1.bf16.msra.mxu0 %v1557
        %1985 = vmatprep.subr.bf16.mxu0 %v1562
        %1986 = vmatpush1.bf16.msra.mxu0 %v1561
        %1987 = vmatprep.subr.bf16.mxu0 %v1566
        %1988 = vmatpush1.bf16.msra.mxu0 %v1565
        %1989 = vmatprep.subr.bf16.mxu0 %v1570
        %1990 = vmatpush1.bf16.msra.mxu0 %v1569
        %1991 = vmatprep.subr.bf16.mxu0 %v1574
        %1992 = vmatpush1.bf16.msra.mxu0 %v1573
        %1993 = vmatprep.subr.bf16.mxu0 %v1578
        %1994 = vmatpush1.bf16.msra.mxu0 %v1577
        %1995 = vmatprep.subr.bf16.mxu0 %v1582
        %1996 = vmatpush1.bf16.msra.mxu0 %v1581
        %1997 = vmatprep.subr.bf16.mxu0 %v1586
        %1998 = vmatpush1.bf16.msra.mxu0 %v1585
        %1999 = vmatprep.subr.bf16.mxu0 %v1590
        %2000 = vmatpush1.bf16.msra.mxu0 %v1589
        %2001 = vmatprep.subr.bf16.mxu0 %v1594
        %2002 = vmatpush1.bf16.msra.mxu0 %v1593
        %2003 = vmatprep.subr.bf16.mxu0 %v1598
        %2004 = vmatpush1.bf16.msra.mxu0 %v1597
        %2005 = vmatprep.mubr.bf16.mxu0 %v865
        %2006 = vmatmul.mubr.bf16.gmra.mrb[0].mxu0 %v857
        %v2007 = vpop.f32.mrb[0].mxu0
        %v2008 = vadd.f32 %v846, %v2007
        %v2009 = vpop.f32.mrb[0].mxu0
        %v2010 = vadd.f32 %v846, %v2009
        %v2011 = vpop.f32.mrb[0].mxu0
        %v2012 = vpop.f32.mrb[0].mxu0
        %2013 = vdwg.mxu0
        %2014 = vmatprep.subr.bf16.mxu0 %v1602
        %2015 = vmatpush1.bf16.msra.mxu0 %v1601
        %2016 = vmatprep.subr.bf16.mxu0 %v1606
        %2017 = vmatpush1.bf16.msra.mxu0 %v1605
        %2018 = vmatprep.subr.bf16.mxu0 %v1610
        %2019 = vmatpush1.bf16.msra.mxu0 %v1609
        %2020 = vmatprep.subr.bf16.mxu0 %v1614
        %2021 = vmatpush1.bf16.msra.mxu0 %v1613
        %2022 = vmatprep.subr.bf16.mxu0 %v1618
        %2023 = vmatpush1.bf16.msra.mxu0 %v1617
        %2024 = vmatprep.subr.bf16.mxu0 %v1622
        %2025 = vmatpush1.bf16.msra.mxu0 %v1621
        %2026 = vmatprep.subr.bf16.mxu0 %v1626
        %2027 = vmatpush1.bf16.msra.mxu0 %v1625
        %2028 = vmatprep.subr.bf16.mxu0 %v1630
        %2029 = vmatpush1.bf16.msra.mxu0 %v1629
        %2030 = vmatprep.subr.bf16.mxu0 %v1634
        %2031 = vmatpush1.bf16.msra.mxu0 %v1633
        %2032 = vmatprep.subr.bf16.mxu0 %v1638
        %2033 = vmatpush1.bf16.msra.mxu0 %v1637
        %2034 = vmatprep.subr.bf16.mxu0 %v1642
        %2035 = vmatpush1.bf16.msra.mxu0 %v1641
        %2036 = vmatprep.subr.bf16.mxu0 %v1646
        %2037 = vmatpush1.bf16.msra.mxu0 %v1645
        %2038 = vmatprep.subr.bf16.mxu0 %v1650
        %2039 = vmatpush1.bf16.msra.mxu0 %v1649
        %2040 = vmatprep.subr.bf16.mxu0 %v1654
        %2041 = vmatpush1.bf16.msra.mxu0 %v1653
        %2042 = vmatprep.subr.bf16.mxu0 %v1658
        %2043 = vmatpush1.bf16.msra.mxu0 %v1657
        %2044 = vmatprep.subr.bf16.mxu0 %v1662
        %2045 = vmatpush1.bf16.msra.mxu0 %v1661
        %2046 = vmatprep.mubr.bf16.mxu0 %v866
        %2047 = vmatmul.mubr.bf16.gmra.mrb[0].mxu0 %v864
        %v2048 = vpop.f32.mrb[0].mxu0
        %v2049 = vadd.f32 %v2008, %v2048
        %v2050 = vpop.f32.mrb[0].mxu0
        %v2051 = vadd.f32 %v2010, %v2050
        %v2052 = vpop.f32.mrb[0].mxu0
        %v2053 = vpop.f32.mrb[0].mxu0
        %2054 = vdwg.mxu0
        %2055 = vmatprep.subr.bf16.mxu0 %v1666
        %2056 = vmatpush1.bf16.msra.mxu0 %v1665
        %2057 = vmatprep.subr.bf16.mxu0 %v1670
        %2058 = vmatpush1.bf16.msra.mxu0 %v1669
        %2059 = vmatprep.subr.bf16.mxu0 %v1674
        %2060 = vmatpush1.bf16.msra.mxu0 %v1673
        %2061 = vmatprep.subr.bf16.mxu0 %v1678
        %2062 = vmatpush1.bf16.msra.mxu0 %v1677
        %2063 = vmatprep.subr.bf16.mxu0 %v1682
        %2064 = vmatpush1.bf16.msra.mxu0 %v1681
        %2065 = vmatprep.subr.bf16.mxu0 %v1686
        %2066 = vmatpush1.bf16.msra.mxu0 %v1685
        %2067 = vmatprep.subr.bf16.mxu0 %v1690
        %2068 = vmatpush1.bf16.msra.mxu0 %v1689
        %2069 = vmatprep.subr.bf16.mxu0 %v1694
        %2070 = vmatpush1.bf16.msra.mxu0 %v1693
        %2071 = vmatprep.subr.bf16.mxu0 %v1698
        %2072 = vmatpush1.bf16.msra.mxu0 %v1697
        %2073 = vmatprep.subr.bf16.mxu0 %v1702
        %2074 = vmatpush1.bf16.msra.mxu0 %v1701
        %2075 = vmatprep.subr.bf16.mxu0 %v1706
        %2076 = vmatpush1.bf16.msra.mxu0 %v1705
        %2077 = vmatprep.subr.bf16.mxu0 %v1710
        %2078 = vmatpush1.bf16.msra.mxu0 %v1709
        %2079 = vmatprep.subr.bf16.mxu0 %v1714
        %2080 = vmatpush1.bf16.msra.mxu0 %v1713
        %2081 = vmatprep.subr.bf16.mxu0 %v1718
        %2082 = vmatpush1.bf16.msra.mxu0 %v1717
        %2083 = vmatprep.subr.bf16.mxu0 %v1722
        %2084 = vmatpush1.bf16.msra.mxu0 %v1721
        %2085 = vmatprep.subr.bf16.mxu0 %v1726
        %2086 = vmatpush1.bf16.msra.mxu0 %v1725
        %2087 = vmatprep.mubr.bf16.mxu0 %v882
        %2088 = vmatmul.mubr.bf16.gmra.mrb[0].mxu0 %v874
        %v2089 = vpop.f32.mrb[0].mxu0
        %v2090 = vadd.f32 %v2049, %v2089
        %v2091 = vpop.f32.mrb[0].mxu0
        %v2092 = vadd.f32 %v2051, %v2091
        %v2093 = vpop.f32.mrb[0].mxu0
        %v2094 = vpop.f32.mrb[0].mxu0
        %2095 = vdwg.mxu0
        %2096 = vmatprep.subr.bf16.mxu0 %v1730
        %2097 = vmatpush1.bf16.msra.mxu0 %v1729
        %2098 = vmatprep.subr.bf16.mxu0 %v1734
        %2099 = vmatpush1.bf16.msra.mxu0 %v1733
        %2100 = vmatprep.subr.bf16.mxu0 %v1738
        %2101 = vmatpush1.bf16.msra.mxu0 %v1737
        %2102 = vmatprep.subr.bf16.mxu0 %v1742
        %2103 = vmatpush1.bf16.msra.mxu0 %v1741
        %2104 = vmatprep.subr.bf16.mxu0 %v1746
        %2105 = vmatpush1.bf16.msra.mxu0 %v1745
        %2106 = vmatprep.subr.bf16.mxu0 %v1750
        %2107 = vmatpush1.bf16.msra.mxu0 %v1749
        %2108 = vmatprep.subr.bf16.mxu0 0
        %2109 = vmatpush1.bf16.msra.mxu0 0
        %2110 = vmatprep.subr.bf16.mxu0 0
        %2111 = vmatpush1.bf16.msra.mxu0 0
        %2112 = vmatprep.subr.bf16.mxu0 0
        %2113 = vmatpush1.bf16.msra.mxu0 0
        %2114 = vmatprep.subr.bf16.mxu0 0
        %2115 = vmatpush1.bf16.msra.mxu0 0
        %2116 = vmatprep.subr.bf16.mxu0 0
        %2117 = vmatpush1.bf16.msra.mxu0 0
        %2118 = vmatprep.subr.bf16.mxu0 0
        %2119 = vmatpush1.bf16.msra.mxu0 0
        %2120 = vmatprep.subr.bf16.mxu0 0
        %2121 = vmatpush1.bf16.msra.mxu0 0
        %2122 = vmatprep.subr.bf16.mxu0 0
        %2123 = vmatpush1.bf16.msra.mxu0 0
        %2124 = vmatprep.subr.bf16.mxu0 0
        %2125 = vmatpush1.bf16.msra.mxu0 0
        %2126 = vmatprep.subr.bf16.mxu0 0
        %2127 = vmatpush1.bf16.msra.mxu0 0
        %2128 = vmatprep.mubr.bf16.mxu0 0
        %2129 = vmatmul.mubr.bf16.gmra.mrb[0].mxu0 %v1971
        %v2130 = vpop.f32.mrb[0].mxu0
        %v2131 = vadd.f32 %v2090, %v2130
        %v2132 = vpop.f32.mrb[0].mxu0
        %v2133 = vadd.f32 %v2092, %v2132
        %v2134 = vpop.f32.mrb[0].mxu0
        %v2135 = vpop.f32.mrb[0].mxu0
        %2136 = vdwg.mxu0
        %2137 = vmatprep.subr.bf16.mxu0 %v1540
        %2138 = vmatpush1.bf16.msra.mxu0 %v1539
        %2139 = vmatprep.subr.bf16.mxu0 %v1544
        %2140 = vmatpush1.bf16.msra.mxu0 %v1543
        %2141 = vmatprep.subr.bf16.mxu0 %v1548
        %2142 = vmatpush1.bf16.msra.mxu0 %v1547
        %2143 = vmatprep.subr.bf16.mxu0 %v1552
        %2144 = vmatpush1.bf16.msra.mxu0 %v1551
        %2145 = vmatprep.subr.bf16.mxu0 %v1556
        %2146 = vmatpush1.bf16.msra.mxu0 %v1555
        %2147 = vmatprep.subr.bf16.mxu0 %v1560
        %2148 = vmatpush1.bf16.msra.mxu0 %v1559
        %2149 = vmatprep.subr.bf16.mxu0 %v1564
        %2150 = vmatpush1.bf16.msra.mxu0 %v1563
        %2151 = vmatprep.subr.bf16.mxu0 %v1568
        %2152 = vmatpush1.bf16.msra.mxu0 %v1567
        %2153 = vmatprep.subr.bf16.mxu0 %v1572
        %2154 = vmatpush1.bf16.msra.mxu0 %v1571
        %2155 = vmatprep.subr.bf16.mxu0 %v1576
        %2156 = vmatpush1.bf16.msra.mxu0 %v1575
        %2157 = vmatprep.subr.bf16.mxu0 %v1580
        %2158 = vmatpush1.bf16.msra.mxu0 %v1579
        %2159 = vmatprep.subr.bf16.mxu0 %v1584
        %2160 = vmatpush1.bf16.msra.mxu0 %v1583
        %2161 = vmatprep.subr.bf16.mxu0 %v1588
        %2162 = vmatpush1.bf16.msra.mxu0 %v1587
        %2163 = vmatprep.subr.bf16.mxu0 %v1592
        %2164 = vmatpush1.bf16.msra.mxu0 %v1591
        %2165 = vmatprep.subr.bf16.mxu0 %v1596
        %2166 = vmatpush1.bf16.msra.mxu0 %v1595
        %2167 = vmatprep.subr.bf16.mxu0 %v1600
        %2168 = vmatpush1.bf16.msra.mxu0 %v1599
        %2169 = vmatprep.mubr.bf16.mxu0 %v865
        %2170 = vmatmul.mubr.bf16.gmra.mrb[0].mxu0 %v857
        %v2171 = vpop.f32.mrb[0].mxu0
        %v2172 = vadd.f32 %v846, %v2171
        %v2173 = vpop.f32.mrb[0].mxu0
        %v2174 = vadd.f32 %v846, %v2173
        %v2175 = vpop.f32.mrb[0].mxu0
        %v2176 = vpop.f32.mrb[0].mxu0
        %2177 = vdwg.mxu0
        %2178 = vmatprep.subr.bf16.mxu0 %v1604
        %2179 = vmatpush1.bf16.msra.mxu0 %v1603
        %2180 = vmatprep.subr.bf16.mxu0 %v1608
        %2181 = vmatpush1.bf16.msra.mxu0 %v1607
        %2182 = vmatprep.subr.bf16.mxu0 %v1612
        %2183 = vmatpush1.bf16.msra.mxu0 %v1611
        %2184 = vmatprep.subr.bf16.mxu0 %v1616
        %2185 = vmatpush1.bf16.msra.mxu0 %v1615
        %2186 = vmatprep.subr.bf16.mxu0 %v1620
        %2187 = vmatpush1.bf16.msra.mxu0 %v1619
        %2188 = vmatprep.subr.bf16.mxu0 %v1624
        %2189 = vmatpush1.bf16.msra.mxu0 %v1623
        %2190 = vmatprep.subr.bf16.mxu0 %v1628
        %2191 = vmatpush1.bf16.msra.mxu0 %v1627
        %2192 = vmatprep.subr.bf16.mxu0 %v1632
        %2193 = vmatpush1.bf16.msra.mxu0 %v1631
        %2194 = vmatprep.subr.bf16.mxu0 %v1636
        %2195 = vmatpush1.bf16.msra.mxu0 %v1635
        %2196 = vmatprep.subr.bf16.mxu0 %v1640
        %2197 = vmatpush1.bf16.msra.mxu0 %v1639
        %2198 = vmatprep.subr.bf16.mxu0 %v1644
        %2199 = vmatpush1.bf16.msra.mxu0 %v1643
        %2200 = vmatprep.subr.bf16.mxu0 %v1648
        %2201 = vmatpush1.bf16.msra.mxu0 %v1647
        %2202 = vmatprep.subr.bf16.mxu0 %v1652
        %2203 = vmatpush1.bf16.msra.mxu0 %v1651
        %2204 = vmatprep.subr.bf16.mxu0 %v1656
        %2205 = vmatpush1.bf16.msra.mxu0 %v1655
        %2206 = vmatprep.subr.bf16.mxu0 %v1660
        %2207 = vmatpush1.bf16.msra.mxu0 %v1659
        %2208 = vmatprep.subr.bf16.mxu0 %v1664
        %2209 = vmatpush1.bf16.msra.mxu0 %v1663
        %2210 = vmatprep.mubr.bf16.mxu0 %v866
        %2211 = vmatmul.mubr.bf16.gmra.mrb[0].mxu0 %v864
        %v2212 = vpop.f32.mrb[0].mxu0
        %v2213 = vadd.f32 %v2172, %v2212
        %v2214 = vpop.f32.mrb[0].mxu0
        %v2215 = vadd.f32 %v2174, %v2214
        %v2216 = vpop.f32.mrb[0].mxu0
        %v2217 = vpop.f32.mrb[0].mxu0
        %2218 = vdwg.mxu0
        %2219 = vmatprep.subr.bf16.mxu0 %v1668
        %2220 = vmatpush1.bf16.msra.mxu0 %v1667
        %2221 = vmatprep.subr.bf16.mxu0 %v1672
        %2222 = vmatpush1.bf16.msra.mxu0 %v1671
        %2223 = vmatprep.subr.bf16.mxu0 %v1676
        %2224 = vmatpush1.bf16.msra.mxu0 %v1675
        %2225 = vmatprep.subr.bf16.mxu0 %v1680
        %2226 = vmatpush1.bf16.msra.mxu0 %v1679
        %2227 = vmatprep.subr.bf16.mxu0 %v1684
        %2228 = vmatpush1.bf16.msra.mxu0 %v1683
        %2229 = vmatprep.subr.bf16.mxu0 %v1688
        %2230 = vmatpush1.bf16.msra.mxu0 %v1687
        %2231 = vmatprep.subr.bf16.mxu0 %v1692
        %2232 = vmatpush1.bf16.msra.mxu0 %v1691
        %2233 = vmatprep.subr.bf16.mxu0 %v1696
        %2234 = vmatpush1.bf16.msra.mxu0 %v1695
        %2235 = vmatprep.subr.bf16.mxu0 %v1700
        %2236 = vmatpush1.bf16.msra.mxu0 %v1699
        %2237 = vmatprep.subr.bf16.mxu0 %v1704
        %2238 = vmatpush1.bf16.msra.mxu0 %v1703
        %2239 = vmatprep.subr.bf16.mxu0 %v1708
        %2240 = vmatpush1.bf16.msra.mxu0 %v1707
        %2241 = vmatprep.subr.bf16.mxu0 %v1712
        %2242 = vmatpush1.bf16.msra.mxu0 %v1711
        %2243 = vmatprep.subr.bf16.mxu0 %v1716
        %2244 = vmatpush1.bf16.msra.mxu0 %v1715
        %2245 = vmatprep.subr.bf16.mxu0 %v1720
        %2246 = vmatpush1.bf16.msra.mxu0 %v1719
        %2247 = vmatprep.subr.bf16.mxu0 %v1724
        %2248 = vmatpush1.bf16.msra.mxu0 %v1723
        %2249 = vmatprep.subr.bf16.mxu0 %v1728
        %2250 = vmatpush1.bf16.msra.mxu0 %v1727
        %2251 = vmatprep.mubr.bf16.mxu0 %v882
        %2252 = vmatmul.mubr.bf16.gmra.mrb[0].mxu0 %v874
        %v2253 = vpop.f32.mrb[0].mxu0
        %v2254 = vadd.f32 %v2213, %v2253
        %v2255 = vpop.f32.mrb[0].mxu0
        %v2256 = vadd.f32 %v2215, %v2255
        %v2257 = vpop.f32.mrb[0].mxu0
        %v2258 = vpop.f32.mrb[0].mxu0
        %2259 = vdwg.mxu0
        %2260 = vmatprep.subr.bf16.mxu0 %v1732
        %2261 = vmatpush1.bf16.msra.mxu0 %v1731
        %2262 = vmatprep.subr.bf16.mxu0 %v1736
        %2263 = vmatpush1.bf16.msra.mxu0 %v1735
        %2264 = vmatprep.subr.bf16.mxu0 %v1740
        %2265 = vmatpush1.bf16.msra.mxu0 %v1739
        %2266 = vmatprep.subr.bf16.mxu0 %v1744
        %2267 = vmatpush1.bf16.msra.mxu0 %v1743
        %2268 = vmatprep.subr.bf16.mxu0 %v1748
        %2269 = vmatpush1.bf16.msra.mxu0 %v1747
        %2270 = vmatprep.subr.bf16.mxu0 %v1752
        %2271 = vmatpush1.bf16.msra.mxu0 %v1751
        %2272 = vmatprep.subr.bf16.mxu0 0
        %2273 = vmatpush1.bf16.msra.mxu0 0
        %2274 = vmatprep.subr.bf16.mxu0 0
        %2275 = vmatpush1.bf16.msra.mxu0 0
        %2276 = vmatprep.subr.bf16.mxu0 0
        %2277 = vmatpush1.bf16.msra.mxu0 0
        %2278 = vmatprep.subr.bf16.mxu0 0
        %2279 = vmatpush1.bf16.msra.mxu0 0
        %2280 = vmatprep.subr.bf16.mxu0 0
        %2281 = vmatpush1.bf16.msra.mxu0 0
        %2282 = vmatprep.subr.bf16.mxu0 0
        %2283 = vmatpush1.bf16.msra.mxu0 0
        %2284 = vmatprep.subr.bf16.mxu0 0
        %2285 = vmatpush1.bf16.msra.mxu0 0
        %2286 = vmatprep.subr.bf16.mxu0 0
        %2287 = vmatpush1.bf16.msra.mxu0 0
        %2288 = vmatprep.subr.bf16.mxu0 0
        %2289 = vmatpush1.bf16.msra.mxu0 0
        %2290 = vmatprep.subr.bf16.mxu0 0
        %2291 = vmatpush1.bf16.msra.mxu0 0
        %2292 = vmatprep.mubr.bf16.mxu0 0
        %2293 = vmatmul.mubr.bf16.gmra.mrb[0].mxu0 %v1971
        %v2294 = vpop.f32.mrb[0].mxu0
        %v2295 = vadd.f32 %v2254, %v2294
        %v2296 = vpop.f32.mrb[0].mxu0
        %v2297 = vadd.f32 %v2256, %v2296
        %v2298 = vpop.f32.mrb[0].mxu0
        %v2299 = vpop.f32.mrb[0].mxu0
        %2300 = vdwg.mxu0
        %v2301 = vpack.c.bf16 %v2131, %v2131
        %v2302 = vpack.c.bf16 %v2133, %v2133
        %v2303 = vpack.c.bf16 %v2295, %v2295
        %v2304 = vpack.c.bf16 %v2297, %v2297
        %v2309 = vcombine.low %v2301, %v2302
        %v2310 = vcombine.low %v2303, %v2304
        %v2312 = vunpack.c.l.s4 1983009808
        %v2313 = vunpack.c.0.s8 %v2312
        %v2314 = vlaneseq
        %v2315 = vshrl.u32 %v2314, 7
        %v2316 = vsub.s32 %v2313, %v2315
        %v2317 = vrot.slane %v2309, %v2316
        %v2319 = vunpack.c.l.s4 1983009808
        %v2320 = vunpack.c.0.s8 %v2319
        %v2321 = vlaneseq
        %v2322 = vshrl.u32 %v2321, 7
        %v2323 = vsub.s32 %v2320, %v2322
        %v2324 = vrot.slane %v2310, %v2323
        %v2325 = vcombine.low %v2317, %v2324
        %2327 = vst [vmem:[%s621] sm:$0xff] %v2325
        %s2328 = smul.u32 4, %s14
        %p2329 = scmp.lt.s32.totalorder %s2328, 31
        %s2330 = scalar_select %p2329, %s2328, 31
        %s2331 = smul.addr %s2330, 2
        %s2332 = scalar_lea.vmem %s3, %s2331
        // Predicated region
        $region56: #{forward.15} parent=50 // pred_check
          %p2333 = pneg %p100
        $region57: #{forward.15} parent=50 // pred_check_branch
          %2335 = sbr.rel (%p2333) target = $region59
        $region58: #{forward.15} parent=50 // pred_region
          %s2336 = smul.u32 4, %s14
        $region59: #{forward.15} parent=50 // pred_fallthru
          _
      $region51: #{forward.15} parent=5 // pred_fallthru
        _
      %p2337 = scmp.le.s32.totalorder 2, %s9
      // Predicated region
      $region60: #{forward.15} parent=5 // pred_check
        %p2338 = pneg %p2337
      $region61: #{forward.15} parent=5 // pred_check_branch
        %2340 = sbr.rel (%p2338) target = $region63
      $region62: #{forward.15} parent=5 // pred_region
        %s2341 = ssub.s32 %s9, 2
        // Predicated region
        $region64: #{forward.15} parent=62 // pred_check
          %p2342 = pneg %p106
        $region65: #{forward.15} parent=62 // pred_check_branch
          %2344 = sbr.rel (%p2342) target = $region67
        $region66: #{forward.15} parent=62 // pred_region
          %s2345 = smul.u32 4, %s15
          %p2346 = scmp.lt.s32.totalorder %s2345, 31
          %s2347 = scalar_select %p2346, %s2345, 31
          %s2348 = smul.addr %s2347, 2
          %s2349 = scalar_lea.vmem %s3, %s2348
        $region67: #{forward.15} parent=62 // pred_fallthru
          _
      $region63: #{forward.15} parent=5 // pred_fallthru
        _
    $region6: #{forward.15} parent=1 // loop_footer
      %s13 = sadd.s32 1, %s9
    $region7: #{forward.15} parent=1 // loop_footer_branch
      %8 = sbr.rel target = $region3
    $region8: #{forward.15} parent=1 // loop_exit
      _

</llo_original>
